<compile_context>
chip_gen: v7x
topology: tpu7x:2x2x1
jax: 0.10.0
libtpu: 0.0.40
codegen_flags: <defaults>
</compile_context>

<pallas_src>
import jax
import jax.numpy as jnp
from jax import lax
from jax.experimental import pallas as pl
from jax.experimental.pallas import tpu as pltpu


def _lfe_kernel(x_ref, w1_ref, w2_ref, s1_ref, b1_ref, s2_ref, b2_ref, o_ref):
    # x_ref : (B, 2, 2, 14, 14*C4) = (image, row-parity, col-parity, row,
    #                                 fused (col, patch_h, patch_w, cin)),  C4 = 4*cin
    # w*_ref: (m, 3, 3, 14*C4)     per-replica per-tap lane weights (tiled over col)
    # s*/b* : (m, 14*C4)           folded BatchNorm scale / bias (tiled over col)
    # o_ref : (B, 14, m*14*C4)     lane order (replica, col, patch_h, patch_w, cin)
    B = x_ref.shape[0]
    C14 = x_ref.shape[-1]
    m = w1_ref.shape[0]
    C4 = C14 // 14

    # Weights / BN loaded once per grid step; indexed (statically) per tap below.
    w1 = w1_ref[...]
    w2 = w2_ref[...]
    s1 = s1_ref[...]
    b1 = b1_ref[...]
    s2 = s2_ref[...]
    b2 = b2_ref[...]

    # ---- static shift helpers; the zero block realizes the conv's zero padding --------
    def col_m1(v):    # out[:, j] <- v[:, j-1], zero at j == 0   (lanes fused as j*C4 + k)
        z = jnp.zeros(v.shape[:-1] + (C4,), v.dtype)
        return jnp.concatenate([z, v[..., : C14 - C4]], axis=-1)

    def col_p1(v):    # out[:, j] <- v[:, j+1], zero at j == 13
        z = jnp.zeros(v.shape[:-1] + (C4,), v.dtype)
        return jnp.concatenate([v[..., C4:], z], axis=-1)

    def row_m1(v):    # out[i] <- v[i-1], zero at i == 0
        z = jnp.zeros((1,) + v.shape[1:], v.dtype)
        return jnp.concatenate([z, v[:-1]], axis=0)

    def row_p1(v):    # out[i] <- v[i+1], zero at i == 13
        z = jnp.zeros((1,) + v.shape[1:], v.dtype)
        return jnp.concatenate([v[1:], z], axis=0)

    # Static unroll over the image tile: one image's whole pipeline lives in registers;
    # exactly one (lane-dense) store per image.
    for bimg in range(B):
        # Parity slabs: x[rr, cr][i, j*C4 + k] = patch pixel (2*i+rr, 2*j+cr) of the
        # quadrant/channel encoded by k = (ph*2 + pw)*cin + c.
        x00 = x_ref[bimg, 0, 0]
        x01 = x_ref[bimg, 0, 1]
        x10 = x_ref[bimg, 1, 0]
        x11 = x_ref[bimg, 1, 1]
        # Shifted source variants for the stride-2 conv, computed once and reused for all
        # m replicas.  Tap (kh, kw) reads source pixel (2i+kh-1, 2j+kw-1):
        #   kh=0 -> parity 1, row i-1 ; kh=1 -> parity 0, row i ; kh=2 -> parity 1, row i
        #   kw=0 -> parity 1, col j-1 ; kw=1 -> parity 0, col j ; kw=2 -> parity 1, col j
        x01c = col_m1(x01)
        x11c = col_m1(x11)
        x10r = row_m1(x10)
        x11r = row_m1(x11)
        x11rc = row_m1(x11c)
        taps1 = ((0, 0, x11rc), (0, 1, x10r), (0, 2, x11r),
                 (1, 0, x01c), (1, 1, x00), (1, 2, x01),
                 (2, 0, x11c), (2, 1, x10), (2, 2, x11))

        outs = []
        for r in range(m):
            w1r = w1[r]                                   # (3, 3, C14)
            w2r = w2[r]

            # ---- conv 3x3, stride 2, pad 1 (28x28 patch -> 14x14), replica r ----------
            acc = None
            for kh, kw, src in taps1:
                t = src * w1r[kh, kw:kw + 1]              # (14, C14) * (1, C14)
                acc = t if acc is None else acc + t
            h = jnp.maximum(acc * s1[r:r + 1] + b1[r:r + 1], 0.0)     # BN1 + ReLU

            # ---- conv 3x3, stride 1, pad 1 (14x14 -> 14x14), replica r ----------------
            hl = col_m1(h)
            hr = col_p1(h)
            g0 = hl * w2r[0, 0:1] + h * w2r[0, 1:2] + hr * w2r[0, 2:3]
            g1 = hl * w2r[1, 0:1] + h * w2r[1, 1:2] + hr * w2r[1, 2:3]
            g2 = hl * w2r[2, 0:1] + h * w2r[2, 1:2] + hr * w2r[2, 2:3]
            acc2 = g1 + row_m1(g0) + row_p1(g2)
            outs.append(jnp.maximum(acc2 * s2[r:r + 1] + b2[r:r + 1], 0.0))  # BN2 + ReLU

        out_img = outs[0] if m == 1 else jnp.concatenate(outs, axis=-1)
        o_ref[bimg, :, :] = out_img                       # one store per image


def local_feature_extractor(x, kparams, *, batch_tile=None):
    """x: (N, inplanes, 56, 56) NCHW float32 -> (N, planes, 28, 28) NCHW."""
    N, cin, H, W = x.shape
    assert H == 56 and W == 56, "LocalFeatureExtractor expects 56x56 input"
    C4 = 4 * cin
    C14 = 14 * C4
    m = kparams["w1l"].shape[0]
    planes = m * cin

    # Batch tile: amortize per-step overhead; keep >= 2 grid steps for v7x's 2 TCs.
    if batch_tile is None:
        batch_tile = 1
        for b in range(1, min(N, 8) + 1):
            if N % b == 0 and (N // b >= 2 or b == N):
                batch_tile = b
    B = batch_tile
    assert N % B == 0

    # ---- single input layout pass: NCHW -> (N, rr, cr, row, fused(col, ph, pw, c)) ----
    xr = x.astype(jnp.float32).reshape(N, cin, 2, 14, 2, 2, 14, 2)
    #     dims: (N, c, ph, rq, rr, pw, cq, cr)
    xr = jnp.transpose(xr, (0, 4, 7, 3, 6, 2, 5, 1))   # (N, rr, cr, rq, cq, ph, pw, c)
    xr = xr.reshape(N, 2, 2, 14, C14)

    y = pl.pallas_call(
        _lfe_kernel,
        out_shape=jax.ShapeDtypeStruct((N, 14, m * C14), jnp.float32),
        grid_spec=pltpu.PrefetchScalarGridSpec(
            num_scalar_prefetch=0,
            grid=(N // B,),
            in_specs=[
                pl.BlockSpec((B, 2, 2, 14, C14), lambda n: (n, 0, 0, 0, 0)),
                pl.BlockSpec((m, 3, 3, C14), lambda n: (0, 0, 0, 0)),   # resident
                pl.BlockSpec((m, 3, 3, C14), lambda n: (0, 0, 0, 0)),   # resident
                pl.BlockSpec((m, C14), lambda n: (0, 0)),
                pl.BlockSpec((m, C14), lambda n: (0, 0)),
                pl.BlockSpec((m, C14), lambda n: (0, 0)),
                pl.BlockSpec((m, C14), lambda n: (0, 0)),
            ],
            out_specs=pl.BlockSpec((B, 14, m * C14), lambda n: (n, 0, 0)),
        ),
        compiler_params=pltpu.CompilerParams(
            dimension_semantics=("parallel",),
            # Blocks are a few MB even at B=8; 32 MiB is within every generation's
            # physical VMEM (v7x: 64 MiB) and leaves ample double-buffer headroom.
            vmem_limit_bytes=32 * 1024 * 1024),
    )(xr, kparams["w1l"], kparams["w2l"],
      kparams["s1l"], kparams["b1l"], kparams["s2l"], kparams["b2l"])

    # ---- single output layout pass: (N,14,m*14*C4) -> NCHW; realizes the quadrant cats -
    y = y.reshape(N, 14, m, 14, 2, 2, cin)            # (N, i, r, j, ph, pw, c)
    y = jnp.transpose(y, (0, 6, 2, 4, 1, 5, 3))       # (N, c, r, ph, i, pw, j)
    return y.reshape(N, planes, 28, 28)               # channel = c*m + r, row = 14*ph+i


def init_params(key, inplanes, planes, eps=1e-5):
    """Synthetic module-style params: conv weights (4,3,3,planes) [branch,kh,kw,oc];
    BatchNorm folded to scale/bias (4, planes).  Branch order = torch (11,21,12,22)."""
    assert planes % inplanes == 0
    ks = jax.random.split(key, 10)

    def conv_w(k):
        return 0.1 * jax.random.normal(k, (4, 3, 3, planes), jnp.float32)

    def bn(kg, kb, km, kv):
        gamma = 1.0 + 0.1 * jax.random.normal(kg, (4, planes), jnp.float32)
        beta = 0.1 * jax.random.normal(kb, (4, planes), jnp.float32)
        mean = 0.1 * jax.random.normal(km, (4, planes), jnp.float32)
        var = jnp.abs(jax.random.normal(kv, (4, planes), jnp.float32)) + 0.5
        scale = gamma * lax.rsqrt(var + eps)
        bias = beta - mean * scale
        return scale, bias

    w1, w2 = conv_w(ks[0]), conv_w(ks[1])
    s1, b1 = bn(ks[2], ks[3], ks[4], ks[5])
    s2, b2 = bn(ks[6], ks[7], ks[8], ks[9])
    return dict(w1=w1, w2=w2, s1=s1, b1=b1, s2=s2, b2=b2)


def prepare_kernel_params(params, inplanes, planes):
    """Repack per-branch weights / folded BN into per-replica lane vectors of width
    14*4*inplanes (tiled over the 14 quadrant columns that live on the lane axis).
    Lane order inside a column block: (patch_h, patch_w, cin); output channel = c*m + r;
    branch index = ph + 2*pw (torch patch order 11, 21, 12, 22)."""
    cin, m = inplanes, planes // inplanes
    C4 = 4 * cin

    def lane_w(w):                                    # (4,3,3,planes) -> (m,3,3,14*C4)
        w = w.reshape(2, 2, 3, 3, cin, m)             # (pw, ph, kh, kw, c, r)
        w = jnp.transpose(w, (5, 2, 3, 1, 0, 4))      # (r, kh, kw, ph, pw, c)
        w = w.reshape(m, 3, 3, 1, C4)
        w = jnp.broadcast_to(w, (m, 3, 3, 14, C4))
        return w.reshape(m, 3, 3, 14 * C4)

    def lane_v(v):                                    # (4, planes) -> (m, 14*C4)
        v = v.reshape(2, 2, cin, m)                   # (pw, ph, c, r)
        v = jnp.transpose(v, (3, 1, 0, 2))            # (r, ph, pw, c)
        v = v.reshape(m, 1, C4)
        v = jnp.broadcast_to(v, (m, 14, C4))
        return v.reshape(m, 14 * C4)

    return dict(
        w1l=lane_w(params["w1"]), w2l=lane_w(params["w2"]),
        s1l=lane_v(params["s1"]), b1l=lane_v(params["b1"]),
        s2l=lane_v(params["s2"]), b2l=lane_v(params["b2"]),
    )


def _ref_forward(x, params, inplanes, planes):
    """Pure-JAX reference mirroring the PyTorch forward (eval-mode BN)."""
    def dw(inp, w, stride, groups):
        wt = jnp.transpose(w, (2, 0, 1))[:, None, :, :]       # OIHW (planes,1,3,3)
        return lax.conv_general_dilated(
            inp, wt, (stride, stride), ((1, 1), (1, 1)),
            dimension_numbers=("NCHW", "OIHW", "NCHW"),
            feature_group_count=groups,
            precision=lax.Precision.HIGHEST)

    def branch(patch, i):
        s1 = params["s1"][i].reshape(1, -1, 1, 1)
        b1 = params["b1"][i].reshape(1, -1, 1, 1)
        s2 = params["s2"][i].reshape(1, -1, 1, 1)
        b2 = params["b2"][i].reshape(1, -1, 1, 1)
        h = dw(patch, params["w1"][i], 2, inplanes)
        h = jnp.maximum(h * s1 + b1, 0.0)
        h = dw(h, params["w2"][i], 1, planes)
        return jnp.maximum(h * s2 + b2, 0.0)

    p11 = x[:, :, 0:28, 0:28]
    p21 = x[:, :, 28:56, 0:28]
    p12 = x[:, :, 0:28, 28:56]
    p22 = x[:, :, 28:56, 28:56]
    o1, o2, o3, o4 = branch(p11, 0), branch(p21, 1), branch(p12, 2), branch(p22, 3)
    return jnp.concatenate([jnp.concatenate([o1, o2], axis=2),
                            jnp.concatenate([o3, o4], axis=2)], axis=3)


if __name__ == "__main__":
    key = jax.random.PRNGKey(0)
    kx, kp = jax.random.split(key)
    N, inplanes, planes = 8, 4, 8      # the forward's slicing requires 56x56 spatial
    x = jax.random.normal(kx, (N, inplanes, 56, 56), jnp.float32)
    params = init_params(kp, inplanes, planes)
    kparams = prepare_kernel_params(params, inplanes, planes)

    fwd = jax.jit(local_feature_extractor)
    out = jax.block_until_ready(fwd(x, kparams))
    assert out.shape == (N, planes, 28, 28), out.shape

    ref = jax.block_until_ready(_ref_forward(x, params, inplanes, planes))
    max_err = float(jnp.max(jnp.abs(out - ref)))
    assert jnp.allclose(out, ref, atol=2e-4, rtol=2e-4), max_err

    print("KERNEL_OK")
</pallas_src>

<mosaic_0001>
module attributes {stable_mosaic.version = 11 : i64} {
  func.func @_lfe_kernel(%arg0: i32, %arg1: memref<8x2x2x14x224xf32, #tpu.memory_space<vmem>>, %arg2: memref<2x3x3x224xf32, #tpu.memory_space<vmem>>, %arg3: memref<2x3x3x224xf32, #tpu.memory_space<vmem>>, %arg4: memref<2x224xf32, #tpu.memory_space<vmem>>, %arg5: memref<2x224xf32, #tpu.memory_space<vmem>>, %arg6: memref<2x224xf32, #tpu.memory_space<vmem>>, %arg7: memref<2x224xf32, #tpu.memory_space<vmem>>, %arg8: memref<8x14x448xf32, #tpu.memory_space<vmem>>) attributes {dimension_semantics = [#tpu.dimension_semantics<parallel>], iteration_bounds = array<i64: 1>, scalar_prefetch = 0 : i64, scratch_operands = 0 : i64, tpu.core_type = #tpu.core_type<tc>, window_params = [{transform_indices = @transform_0, window_bounds = array<i64: 8, 2, 2, 14, 224>}, {pipeline_mode = #tpu.pipeline_mode<synchronous>, transform_indices = @transform_1, window_bounds = array<i64: 2, 3, 3, 224>}, {pipeline_mode = #tpu.pipeline_mode<synchronous>, transform_indices = @transform_2, window_bounds = array<i64: 2, 3, 3, 224>}, {pipeline_mode = #tpu.pipeline_mode<synchronous>, transform_indices = @transform_3, window_bounds = array<i64: 2, 224>}, {pipeline_mode = #tpu.pipeline_mode<synchronous>, transform_indices = @transform_4, window_bounds = array<i64: 2, 224>}, {pipeline_mode = #tpu.pipeline_mode<synchronous>, transform_indices = @transform_5, window_bounds = array<i64: 2, 224>}, {pipeline_mode = #tpu.pipeline_mode<synchronous>, transform_indices = @transform_6, window_bounds = array<i64: 2, 224>}, {transform_indices = @transform_7, window_bounds = array<i64: 8, 14, 448>}]} {
    %c0 = arith.constant 0 : index
    %c0_0 = arith.constant 0 : index
    %c0_1 = arith.constant 0 : index
    %c0_2 = arith.constant 0 : index
    %0 = vector.load %arg2[%c0, %c0_0, %c0_1, %c0_2] : memref<2x3x3x224xf32, #tpu.memory_space<vmem>>, vector<2x3x3x224xf32>
    %c0_3 = arith.constant 0 : index
    %c0_4 = arith.constant 0 : index
    %c0_5 = arith.constant 0 : index
    %c0_6 = arith.constant 0 : index
    %1 = vector.load %arg3[%c0_3, %c0_4, %c0_5, %c0_6] : memref<2x3x3x224xf32, #tpu.memory_space<vmem>>, vector<2x3x3x224xf32>
    %c0_7 = arith.constant 0 : index
    %c0_8 = arith.constant 0 : index
    %2 = vector.load %arg4[%c0_7, %c0_8] : memref<2x224xf32, #tpu.memory_space<vmem>>, vector<2x224xf32>
    %c0_9 = arith.constant 0 : index
    %c0_10 = arith.constant 0 : index
    %3 = vector.load %arg5[%c0_9, %c0_10] : memref<2x224xf32, #tpu.memory_space<vmem>>, vector<2x224xf32>
    %c0_11 = arith.constant 0 : index
    %c0_12 = arith.constant 0 : index
    %4 = vector.load %arg6[%c0_11, %c0_12] : memref<2x224xf32, #tpu.memory_space<vmem>>, vector<2x224xf32>
    %c0_13 = arith.constant 0 : index
    %c0_14 = arith.constant 0 : index
    %5 = vector.load %arg7[%c0_13, %c0_14] : memref<2x224xf32, #tpu.memory_space<vmem>>, vector<2x224xf32>
    %c0_15 = arith.constant 0 : index
    %c0_16 = arith.constant 0 : index
    %c0_17 = arith.constant 0 : index
    %c0_18 = arith.constant 0 : index
    %c0_19 = arith.constant 0 : index
    %6 = vector.load %arg1[%c0_15, %c0_16, %c0_17, %c0_18, %c0_19] : memref<8x2x2x14x224xf32, #tpu.memory_space<vmem>>, vector<1x1x1x14x224xf32>
    %7 = vector.shape_cast %6 : vector<1x1x1x14x224xf32> to vector<14x224xf32>
    %c0_20 = arith.constant 0 : index
    %c0_21 = arith.constant 0 : index
    %c1 = arith.constant 1 : index
    %c0_22 = arith.constant 0 : index
    %c0_23 = arith.constant 0 : index
    %8 = vector.load %arg1[%c0_20, %c0_21, %c1, %c0_22, %c0_23] : memref<8x2x2x14x224xf32, #tpu.memory_space<vmem>>, vector<1x1x1x14x224xf32>
    %9 = vector.shape_cast %8 : vector<1x1x1x14x224xf32> to vector<14x224xf32>
    %c0_24 = arith.constant 0 : index
    %c1_25 = arith.constant 1 : index
    %c0_26 = arith.constant 0 : index
    %c0_27 = arith.constant 0 : index
    %c0_28 = arith.constant 0 : index
    %10 = vector.load %arg1[%c0_24, %c1_25, %c0_26, %c0_27, %c0_28] : memref<8x2x2x14x224xf32, #tpu.memory_space<vmem>>, vector<1x1x1x14x224xf32>
    %11 = vector.shape_cast %10 : vector<1x1x1x14x224xf32> to vector<14x224xf32>
    %c0_29 = arith.constant 0 : index
    %c1_30 = arith.constant 1 : index
    %c1_31 = arith.constant 1 : index
    %c0_32 = arith.constant 0 : index
    %c0_33 = arith.constant 0 : index
    %12 = vector.load %arg1[%c0_29, %c1_30, %c1_31, %c0_32, %c0_33] : memref<8x2x2x14x224xf32, #tpu.memory_space<vmem>>, vector<1x1x1x14x224xf32>
    %13 = vector.shape_cast %12 : vector<1x1x1x14x224xf32> to vector<14x224xf32>
    %cst = arith.constant 0.000000e+00 : f32
    %14 = vector.broadcast %cst : f32 to vector<14x16xf32>
    %15 = vector.extract_strided_slice %9 {offsets = [0, 0], sizes = [14, 208], strides = [1, 1]} : vector<14x224xf32> to vector<14x208xf32>
    %16 = tpu.concatenate %14, %15 in 1 : vector<14x16xf32>, vector<14x208xf32> -> vector<14x224xf32>
    %cst_34 = arith.constant 0.000000e+00 : f32
    %17 = vector.broadcast %cst_34 : f32 to vector<14x16xf32>
    %18 = vector.extract_strided_slice %13 {offsets = [0, 0], sizes = [14, 208], strides = [1, 1]} : vector<14x224xf32> to vector<14x208xf32>
    %19 = tpu.concatenate %17, %18 in 1 : vector<14x16xf32>, vector<14x208xf32> -> vector<14x224xf32>
    %cst_35 = arith.constant 0.000000e+00 : f32
    %20 = vector.broadcast %cst_35 : f32 to vector<1x224xf32>
    %21 = vector.extract_strided_slice %11 {offsets = [0, 0], sizes = [13, 224], strides = [1, 1]} : vector<14x224xf32> to vector<13x224xf32>
    %22 = tpu.concatenate %20, %21 in 0 : vector<1x224xf32>, vector<13x224xf32> -> vector<14x224xf32>
    %cst_36 = arith.constant 0.000000e+00 : f32
    %23 = vector.broadcast %cst_36 : f32 to vector<1x224xf32>
    %24 = vector.extract_strided_slice %13 {offsets = [0, 0], sizes = [13, 224], strides = [1, 1]} : vector<14x224xf32> to vector<13x224xf32>
    %25 = tpu.concatenate %23, %24 in 0 : vector<1x224xf32>, vector<13x224xf32> -> vector<14x224xf32>
    %cst_37 = arith.constant 0.000000e+00 : f32
    %26 = vector.broadcast %cst_37 : f32 to vector<1x224xf32>
    %27 = vector.extract_strided_slice %19 {offsets = [0, 0], sizes = [13, 224], strides = [1, 1]} : vector<14x224xf32> to vector<13x224xf32>
    %28 = tpu.concatenate %26, %27 in 0 : vector<1x224xf32>, vector<13x224xf32> -> vector<14x224xf32>
    %29 = vector.extract_strided_slice %0 {offsets = [0, 0, 0, 0], sizes = [1, 3, 3, 224], strides = [1, 1, 1, 1]} : vector<2x3x3x224xf32> to vector<1x3x3x224xf32>
    %30 = vector.shape_cast %29 : vector<1x3x3x224xf32> to vector<3x3x224xf32>
    %31 = vector.extract_strided_slice %1 {offsets = [0, 0, 0, 0], sizes = [1, 3, 3, 224], strides = [1, 1, 1, 1]} : vector<2x3x3x224xf32> to vector<1x3x3x224xf32>
    %32 = vector.shape_cast %31 : vector<1x3x3x224xf32> to vector<3x3x224xf32>
    %33 = vector.extract_strided_slice %30 {offsets = [0, 0, 0], sizes = [1, 1, 224], strides = [1, 1, 1]} : vector<3x3x224xf32> to vector<1x1x224xf32>
    %34 = vector.shape_cast %33 : vector<1x1x224xf32> to vector<1x224xf32>
    %35 = vector.broadcast %34 : vector<1x224xf32> to vector<14x224xf32>
    %36 = arith.mulf %28, %35 : vector<14x224xf32>
    %37 = vector.extract_strided_slice %30 {offsets = [0, 1, 0], sizes = [1, 1, 224], strides = [1, 1, 1]} : vector<3x3x224xf32> to vector<1x1x224xf32>
    %38 = vector.shape_cast %37 : vector<1x1x224xf32> to vector<1x224xf32>
    %39 = vector.broadcast %38 : vector<1x224xf32> to vector<14x224xf32>
    %40 = arith.mulf %22, %39 : vector<14x224xf32>
    %41 = arith.addf %36, %40 : vector<14x224xf32>
    %42 = vector.extract_strided_slice %30 {offsets = [0, 2, 0], sizes = [1, 1, 224], strides = [1, 1, 1]} : vector<3x3x224xf32> to vector<1x1x224xf32>
    %43 = vector.shape_cast %42 : vector<1x1x224xf32> to vector<1x224xf32>
    %44 = vector.broadcast %43 : vector<1x224xf32> to vector<14x224xf32>
    %45 = arith.mulf %25, %44 : vector<14x224xf32>
    %46 = arith.addf %41, %45 : vector<14x224xf32>
    %47 = vector.extract_strided_slice %30 {offsets = [1, 0, 0], sizes = [1, 1, 224], strides = [1, 1, 1]} : vector<3x3x224xf32> to vector<1x1x224xf32>
    %48 = vector.shape_cast %47 : vector<1x1x224xf32> to vector<1x224xf32>
    %49 = vector.broadcast %48 : vector<1x224xf32> to vector<14x224xf32>
    %50 = arith.mulf %16, %49 : vector<14x224xf32>
    %51 = arith.addf %46, %50 : vector<14x224xf32>
    %52 = vector.extract_strided_slice %30 {offsets = [1, 1, 0], sizes = [1, 1, 224], strides = [1, 1, 1]} : vector<3x3x224xf32> to vector<1x1x224xf32>
    %53 = vector.shape_cast %52 : vector<1x1x224xf32> to vector<1x224xf32>
    %54 = vector.broadcast %53 : vector<1x224xf32> to vector<14x224xf32>
    %55 = arith.mulf %7, %54 : vector<14x224xf32>
    %56 = arith.addf %51, %55 : vector<14x224xf32>
    %57 = vector.extract_strided_slice %30 {offsets = [1, 2, 0], sizes = [1, 1, 224], strides = [1, 1, 1]} : vector<3x3x224xf32> to vector<1x1x224xf32>
    %58 = vector.shape_cast %57 : vector<1x1x224xf32> to vector<1x224xf32>
    %59 = vector.broadcast %58 : vector<1x224xf32> to vector<14x224xf32>
    %60 = arith.mulf %9, %59 : vector<14x224xf32>
    %61 = arith.addf %56, %60 : vector<14x224xf32>
    %62 = vector.extract_strided_slice %30 {offsets = [2, 0, 0], sizes = [1, 1, 224], strides = [1, 1, 1]} : vector<3x3x224xf32> to vector<1x1x224xf32>
    %63 = vector.shape_cast %62 : vector<1x1x224xf32> to vector<1x224xf32>
    %64 = vector.broadcast %63 : vector<1x224xf32> to vector<14x224xf32>
    %65 = arith.mulf %19, %64 : vector<14x224xf32>
    %66 = arith.addf %61, %65 : vector<14x224xf32>
    %67 = vector.extract_strided_slice %30 {offsets = [2, 1, 0], sizes = [1, 1, 224], strides = [1, 1, 1]} : vector<3x3x224xf32> to vector<1x1x224xf32>
    %68 = vector.shape_cast %67 : vector<1x1x224xf32> to vector<1x224xf32>
    %69 = vector.broadcast %68 : vector<1x224xf32> to vector<14x224xf32>
    %70 = arith.mulf %11, %69 : vector<14x224xf32>
    %71 = arith.addf %66, %70 : vector<14x224xf32>
    %72 = vector.extract_strided_slice %30 {offsets = [2, 2, 0], sizes = [1, 1, 224], strides = [1, 1, 1]} : vector<3x3x224xf32> to vector<1x1x224xf32>
    %73 = vector.shape_cast %72 : vector<1x1x224xf32> to vector<1x224xf32>
    %74 = vector.broadcast %73 : vector<1x224xf32> to vector<14x224xf32>
    %75 = arith.mulf %13, %74 : vector<14x224xf32>
    %76 = arith.addf %71, %75 : vector<14x224xf32>
    %77 = vector.extract_strided_slice %2 {offsets = [0, 0], sizes = [1, 224], strides = [1, 1]} : vector<2x224xf32> to vector<1x224xf32>
    %78 = vector.broadcast %77 : vector<1x224xf32> to vector<14x224xf32>
    %79 = arith.mulf %76, %78 : vector<14x224xf32>
    %80 = vector.extract_strided_slice %3 {offsets = [0, 0], sizes = [1, 224], strides = [1, 1]} : vector<2x224xf32> to vector<1x224xf32>
    %81 = vector.broadcast %80 : vector<1x224xf32> to vector<14x224xf32>
    %82 = arith.addf %79, %81 : vector<14x224xf32>
    %cst_38 = arith.constant 0.000000e+00 : f32
    %83 = vector.broadcast %cst_38 : f32 to vector<14x224xf32>
    %84 = arith.maximumf %82, %83 : vector<14x224xf32>
    %cst_39 = arith.constant 0.000000e+00 : f32
    %85 = vector.broadcast %cst_39 : f32 to vector<14x16xf32>
    %86 = vector.extract_strided_slice %84 {offsets = [0, 0], sizes = [14, 208], strides = [1, 1]} : vector<14x224xf32> to vector<14x208xf32>
    %87 = tpu.concatenate %85, %86 in 1 : vector<14x16xf32>, vector<14x208xf32> -> vector<14x224xf32>
    %cst_40 = arith.constant 0.000000e+00 : f32
    %88 = vector.broadcast %cst_40 : f32 to vector<14x16xf32>
    %89 = vector.extract_strided_slice %84 {offsets = [0, 16], sizes = [14, 208], strides = [1, 1]} : vector<14x224xf32> to vector<14x208xf32>
    %90 = tpu.concatenate %89, %88 in 1 : vector<14x208xf32>, vector<14x16xf32> -> vector<14x224xf32>
    %91 = vector.extract_strided_slice %32 {offsets = [0, 0, 0], sizes = [1, 1, 224], strides = [1, 1, 1]} : vector<3x3x224xf32> to vector<1x1x224xf32>
    %92 = vector.shape_cast %91 : vector<1x1x224xf32> to vector<1x224xf32>
    %93 = vector.broadcast %92 : vector<1x224xf32> to vector<14x224xf32>
    %94 = arith.mulf %87, %93 : vector<14x224xf32>
    %95 = vector.extract_strided_slice %32 {offsets = [0, 1, 0], sizes = [1, 1, 224], strides = [1, 1, 1]} : vector<3x3x224xf32> to vector<1x1x224xf32>
    %96 = vector.shape_cast %95 : vector<1x1x224xf32> to vector<1x224xf32>
    %97 = vector.broadcast %96 : vector<1x224xf32> to vector<14x224xf32>
    %98 = arith.mulf %84, %97 : vector<14x224xf32>
    %99 = arith.addf %94, %98 : vector<14x224xf32>
    %100 = vector.extract_strided_slice %32 {offsets = [0, 2, 0], sizes = [1, 1, 224], strides = [1, 1, 1]} : vector<3x3x224xf32> to vector<1x1x224xf32>
    %101 = vector.shape_cast %100 : vector<1x1x224xf32> to vector<1x224xf32>
    %102 = vector.broadcast %101 : vector<1x224xf32> to vector<14x224xf32>
    %103 = arith.mulf %90, %102 : vector<14x224xf32>
    %104 = arith.addf %99, %103 : vector<14x224xf32>
    %105 = vector.extract_strided_slice %32 {offsets = [1, 0, 0], sizes = [1, 1, 224], strides = [1, 1, 1]} : vector<3x3x224xf32> to vector<1x1x224xf32>
    %106 = vector.shape_cast %105 : vector<1x1x224xf32> to vector<1x224xf32>
    %107 = vector.broadcast %106 : vector<1x224xf32> to vector<14x224xf32>
    %108 = arith.mulf %87, %107 : vector<14x224xf32>
    %109 = vector.extract_strided_slice %32 {offsets = [1, 1, 0], sizes = [1, 1, 224], strides = [1, 1, 1]} : vector<3x3x224xf32> to vector<1x1x224xf32>
    %110 = vector.shape_cast %109 : vector<1x1x224xf32> to vector<1x224xf32>
    %111 = vector.broadcast %110 : vector<1x224xf32> to vector<14x224xf32>
    %112 = arith.mulf %84, %111 : vector<14x224xf32>
    %113 = arith.addf %108, %112 : vector<14x224xf32>
    %114 = vector.extract_strided_slice %32 {offsets = [1, 2, 0], sizes = [1, 1, 224], strides = [1, 1, 1]} : vector<3x3x224xf32> to vector<1x1x224xf32>
    %115 = vector.shape_cast %114 : vector<1x1x224xf32> to vector<1x224xf32>
    %116 = vector.broadcast %115 : vector<1x224xf32> to vector<14x224xf32>
    %117 = arith.mulf %90, %116 : vector<14x224xf32>
    %118 = arith.addf %113, %117 : vector<14x224xf32>
    %119 = vector.extract_strided_slice %32 {offsets = [2, 0, 0], sizes = [1, 1, 224], strides = [1, 1, 1]} : vector<3x3x224xf32> to vector<1x1x224xf32>
    %120 = vector.shape_cast %119 : vector<1x1x224xf32> to vector<1x224xf32>
    %121 = vector.broadcast %120 : vector<1x224xf32> to vector<14x224xf32>
    %122 = arith.mulf %87, %121 : vector<14x224xf32>
    %123 = vector.extract_strided_slice %32 {offsets = [2, 1, 0], sizes = [1, 1, 224], strides = [1, 1, 1]} : vector<3x3x224xf32> to vector<1x1x224xf32>
    %124 = vector.shape_cast %123 : vector<1x1x224xf32> to vector<1x224xf32>
    %125 = vector.broadcast %124 : vector<1x224xf32> to vector<14x224xf32>
    %126 = arith.mulf %84, %125 : vector<14x224xf32>
    %127 = arith.addf %122, %126 : vector<14x224xf32>
    %128 = vector.extract_strided_slice %32 {offsets = [2, 2, 0], sizes = [1, 1, 224], strides = [1, 1, 1]} : vector<3x3x224xf32> to vector<1x1x224xf32>
    %129 = vector.shape_cast %128 : vector<1x1x224xf32> to vector<1x224xf32>
    %130 = vector.broadcast %129 : vector<1x224xf32> to vector<14x224xf32>
    %131 = arith.mulf %90, %130 : vector<14x224xf32>
    %132 = arith.addf %127, %131 : vector<14x224xf32>
    %cst_41 = arith.constant 0.000000e+00 : f32
    %133 = vector.broadcast %cst_41 : f32 to vector<1x224xf32>
    %134 = vector.extract_strided_slice %104 {offsets = [0, 0], sizes = [13, 224], strides = [1, 1]} : vector<14x224xf32> to vector<13x224xf32>
    %135 = tpu.concatenate %133, %134 in 0 : vector<1x224xf32>, vector<13x224xf32> -> vector<14x224xf32>
    %136 = arith.addf %118, %135 : vector<14x224xf32>
    %cst_42 = arith.constant 0.000000e+00 : f32
    %137 = vector.broadcast %cst_42 : f32 to vector<1x224xf32>
    %138 = vector.extract_strided_slice %132 {offsets = [1, 0], sizes = [13, 224], strides = [1, 1]} : vector<14x224xf32> to vector<13x224xf32>
    %139 = tpu.concatenate %138, %137 in 0 : vector<13x224xf32>, vector<1x224xf32> -> vector<14x224xf32>
    %140 = arith.addf %136, %139 : vector<14x224xf32>
    %141 = vector.extract_strided_slice %4 {offsets = [0, 0], sizes = [1, 224], strides = [1, 1]} : vector<2x224xf32> to vector<1x224xf32>
    %142 = vector.broadcast %141 : vector<1x224xf32> to vector<14x224xf32>
    %143 = arith.mulf %140, %142 : vector<14x224xf32>
    %144 = vector.extract_strided_slice %5 {offsets = [0, 0], sizes = [1, 224], strides = [1, 1]} : vector<2x224xf32> to vector<1x224xf32>
    %145 = vector.broadcast %144 : vector<1x224xf32> to vector<14x224xf32>
    %146 = arith.addf %143, %145 : vector<14x224xf32>
    %cst_43 = arith.constant 0.000000e+00 : f32
    %147 = vector.broadcast %cst_43 : f32 to vector<14x224xf32>
    %148 = arith.maximumf %146, %147 : vector<14x224xf32>
    %149 = vector.extract_strided_slice %0 {offsets = [1, 0, 0, 0], sizes = [1, 3, 3, 224], strides = [1, 1, 1, 1]} : vector<2x3x3x224xf32> to vector<1x3x3x224xf32>
    %150 = vector.shape_cast %149 : vector<1x3x3x224xf32> to vector<3x3x224xf32>
    %151 = vector.extract_strided_slice %1 {offsets = [1, 0, 0, 0], sizes = [1, 3, 3, 224], strides = [1, 1, 1, 1]} : vector<2x3x3x224xf32> to vector<1x3x3x224xf32>
    %152 = vector.shape_cast %151 : vector<1x3x3x224xf32> to vector<3x3x224xf32>
    %153 = vector.extract_strided_slice %150 {offsets = [0, 0, 0], sizes = [1, 1, 224], strides = [1, 1, 1]} : vector<3x3x224xf32> to vector<1x1x224xf32>
    %154 = vector.shape_cast %153 : vector<1x1x224xf32> to vector<1x224xf32>
    %155 = vector.broadcast %154 : vector<1x224xf32> to vector<14x224xf32>
    %156 = arith.mulf %28, %155 : vector<14x224xf32>
    %157 = vector.extract_strided_slice %150 {offsets = [0, 1, 0], sizes = [1, 1, 224], strides = [1, 1, 1]} : vector<3x3x224xf32> to vector<1x1x224xf32>
    %158 = vector.shape_cast %157 : vector<1x1x224xf32> to vector<1x224xf32>
    %159 = vector.broadcast %158 : vector<1x224xf32> to vector<14x224xf32>
    %160 = arith.mulf %22, %159 : vector<14x224xf32>
    %161 = arith.addf %156, %160 : vector<14x224xf32>
    %162 = vector.extract_strided_slice %150 {offsets = [0, 2, 0], sizes = [1, 1, 224], strides = [1, 1, 1]} : vector<3x3x224xf32> to vector<1x1x224xf32>
    %163 = vector.shape_cast %162 : vector<1x1x224xf32> to vector<1x224xf32>
    %164 = vector.broadcast %163 : vector<1x224xf32> to vector<14x224xf32>
    %165 = arith.mulf %25, %164 : vector<14x224xf32>
    %166 = arith.addf %161, %165 : vector<14x224xf32>
    %167 = vector.extract_strided_slice %150 {offsets = [1, 0, 0], sizes = [1, 1, 224], strides = [1, 1, 1]} : vector<3x3x224xf32> to vector<1x1x224xf32>
    %168 = vector.shape_cast %167 : vector<1x1x224xf32> to vector<1x224xf32>
    %169 = vector.broadcast %168 : vector<1x224xf32> to vector<14x224xf32>
    %170 = arith.mulf %16, %169 : vector<14x224xf32>
    %171 = arith.addf %166, %170 : vector<14x224xf32>
    %172 = vector.extract_strided_slice %150 {offsets = [1, 1, 0], sizes = [1, 1, 224], strides = [1, 1, 1]} : vector<3x3x224xf32> to vector<1x1x224xf32>
    %173 = vector.shape_cast %172 : vector<1x1x224xf32> to vector<1x224xf32>
    %174 = vector.broadcast %173 : vector<1x224xf32> to vector<14x224xf32>
    %175 = arith.mulf %7, %174 : vector<14x224xf32>
    %176 = arith.addf %171, %175 : vector<14x224xf32>
    %177 = vector.extract_strided_slice %150 {offsets = [1, 2, 0], sizes = [1, 1, 224], strides = [1, 1, 1]} : vector<3x3x224xf32> to vector<1x1x224xf32>
    %178 = vector.shape_cast %177 : vector<1x1x224xf32> to vector<1x224xf32>
    %179 = vector.broadcast %178 : vector<1x224xf32> to vector<14x224xf32>
    %180 = arith.mulf %9, %179 : vector<14x224xf32>
    %181 = arith.addf %176, %180 : vector<14x224xf32>
    %182 = vector.extract_strided_slice %150 {offsets = [2, 0, 0], sizes = [1, 1, 224], strides = [1, 1, 1]} : vector<3x3x224xf32> to vector<1x1x224xf32>
    %183 = vector.shape_cast %182 : vector<1x1x224xf32> to vector<1x224xf32>
    %184 = vector.broadcast %183 : vector<1x224xf32> to vector<14x224xf32>
    %185 = arith.mulf %19, %184 : vector<14x224xf32>
    %186 = arith.addf %181, %185 : vector<14x224xf32>
    %187 = vector.extract_strided_slice %150 {offsets = [2, 1, 0], sizes = [1, 1, 224], strides = [1, 1, 1]} : vector<3x3x224xf32> to vector<1x1x224xf32>
    %188 = vector.shape_cast %187 : vector<1x1x224xf32> to vector<1x224xf32>
    %189 = vector.broadcast %188 : vector<1x224xf32> to vector<14x224xf32>
    %190 = arith.mulf %11, %189 : vector<14x224xf32>
    %191 = arith.addf %186, %190 : vector<14x224xf32>
    %192 = vector.extract_strided_slice %150 {offsets = [2, 2, 0], sizes = [1, 1, 224], strides = [1, 1, 1]} : vector<3x3x224xf32> to vector<1x1x224xf32>
    %193 = vector.shape_cast %192 : vector<1x1x224xf32> to vector<1x224xf32>
    %194 = vector.broadcast %193 : vector<1x224xf32> to vector<14x224xf32>
    %195 = arith.mulf %13, %194 : vector<14x224xf32>
    %196 = arith.addf %191, %195 : vector<14x224xf32>
    %197 = vector.extract_strided_slice %2 {offsets = [1, 0], sizes = [1, 224], strides = [1, 1]} : vector<2x224xf32> to vector<1x224xf32>
    %198 = vector.broadcast %197 : vector<1x224xf32> to vector<14x224xf32>
    %199 = arith.mulf %196, %198 : vector<14x224xf32>
    %200 = vector.extract_strided_slice %3 {offsets = [1, 0], sizes = [1, 224], strides = [1, 1]} : vector<2x224xf32> to vector<1x224xf32>
    %201 = vector.broadcast %200 : vector<1x224xf32> to vector<14x224xf32>
    %202 = arith.addf %199, %201 : vector<14x224xf32>
    %cst_44 = arith.constant 0.000000e+00 : f32
    %203 = vector.broadcast %cst_44 : f32 to vector<14x224xf32>
    %204 = arith.maximumf %202, %203 : vector<14x224xf32>
    %cst_45 = arith.constant 0.000000e+00 : f32
    %205 = vector.broadcast %cst_45 : f32 to vector<14x16xf32>
    %206 = vector.extract_strided_slice %204 {offsets = [0, 0], sizes = [14, 208], strides = [1, 1]} : vector<14x224xf32> to vector<14x208xf32>
    %207 = tpu.concatenate %205, %206 in 1 : vector<14x16xf32>, vector<14x208xf32> -> vector<14x224xf32>
    %cst_46 = arith.constant 0.000000e+00 : f32
    %208 = vector.broadcast %cst_46 : f32 to vector<14x16xf32>
    %209 = vector.extract_strided_slice %204 {offsets = [0, 16], sizes = [14, 208], strides = [1, 1]} : vector<14x224xf32> to vector<14x208xf32>
    %210 = tpu.concatenate %209, %208 in 1 : vector<14x208xf32>, vector<14x16xf32> -> vector<14x224xf32>
    %211 = vector.extract_strided_slice %152 {offsets = [0, 0, 0], sizes = [1, 1, 224], strides = [1, 1, 1]} : vector<3x3x224xf32> to vector<1x1x224xf32>
    %212 = vector.shape_cast %211 : vector<1x1x224xf32> to vector<1x224xf32>
    %213 = vector.broadcast %212 : vector<1x224xf32> to vector<14x224xf32>
    %214 = arith.mulf %207, %213 : vector<14x224xf32>
    %215 = vector.extract_strided_slice %152 {offsets = [0, 1, 0], sizes = [1, 1, 224], strides = [1, 1, 1]} : vector<3x3x224xf32> to vector<1x1x224xf32>
    %216 = vector.shape_cast %215 : vector<1x1x224xf32> to vector<1x224xf32>
    %217 = vector.broadcast %216 : vector<1x224xf32> to vector<14x224xf32>
    %218 = arith.mulf %204, %217 : vector<14x224xf32>
    %219 = arith.addf %214, %218 : vector<14x224xf32>
    %220 = vector.extract_strided_slice %152 {offsets = [0, 2, 0], sizes = [1, 1, 224], strides = [1, 1, 1]} : vector<3x3x224xf32> to vector<1x1x224xf32>
    %221 = vector.shape_cast %220 : vector<1x1x224xf32> to vector<1x224xf32>
    %222 = vector.broadcast %221 : vector<1x224xf32> to vector<14x224xf32>
    %223 = arith.mulf %210, %222 : vector<14x224xf32>
    %224 = arith.addf %219, %223 : vector<14x224xf32>
    %225 = vector.extract_strided_slice %152 {offsets = [1, 0, 0], sizes = [1, 1, 224], strides = [1, 1, 1]} : vector<3x3x224xf32> to vector<1x1x224xf32>
    %226 = vector.shape_cast %225 : vector<1x1x224xf32> to vector<1x224xf32>
    %227 = vector.broadcast %226 : vector<1x224xf32> to vector<14x224xf32>
    %228 = arith.mulf %207, %227 : vector<14x224xf32>
    %229 = vector.extract_strided_slice %152 {offsets = [1, 1, 0], sizes = [1, 1, 224], strides = [1, 1, 1]} : vector<3x3x224xf32> to vector<1x1x224xf32>
    %230 = vector.shape_cast %229 : vector<1x1x224xf32> to vector<1x224xf32>
    %231 = vector.broadcast %230 : vector<1x224xf32> to vector<14x224xf32>
    %232 = arith.mulf %204, %231 : vector<14x224xf32>
    %233 = arith.addf %228, %232 : vector<14x224xf32>
    %234 = vector.extract_strided_slice %152 {offsets = [1, 2, 0], sizes = [1, 1, 224], strides = [1, 1, 1]} : vector<3x3x224xf32> to vector<1x1x224xf32>
    %235 = vector.shape_cast %234 : vector<1x1x224xf32> to vector<1x224xf32>
    %236 = vector.broadcast %235 : vector<1x224xf32> to vector<14x224xf32>
    %237 = arith.mulf %210, %236 : vector<14x224xf32>
    %238 = arith.addf %233, %237 : vector<14x224xf32>
    %239 = vector.extract_strided_slice %152 {offsets = [2, 0, 0], sizes = [1, 1, 224], strides = [1, 1, 1]} : vector<3x3x224xf32> to vector<1x1x224xf32>
    %240 = vector.shape_cast %239 : vector<1x1x224xf32> to vector<1x224xf32>
    %241 = vector.broadcast %240 : vector<1x224xf32> to vector<14x224xf32>
    %242 = arith.mulf %207, %241 : vector<14x224xf32>
    %243 = vector.extract_strided_slice %152 {offsets = [2, 1, 0], sizes = [1, 1, 224], strides = [1, 1, 1]} : vector<3x3x224xf32> to vector<1x1x224xf32>
    %244 = vector.shape_cast %243 : vector<1x1x224xf32> to vector<1x224xf32>
    %245 = vector.broadcast %244 : vector<1x224xf32> to vector<14x224xf32>
    %246 = arith.mulf %204, %245 : vector<14x224xf32>
    %247 = arith.addf %242, %246 : vector<14x224xf32>
    %248 = vector.extract_strided_slice %152 {offsets = [2, 2, 0], sizes = [1, 1, 224], strides = [1, 1, 1]} : vector<3x3x224xf32> to vector<1x1x224xf32>
    %249 = vector.shape_cast %248 : vector<1x1x224xf32> to vector<1x224xf32>
    %250 = vector.broadcast %249 : vector<1x224xf32> to vector<14x224xf32>
    %251 = arith.mulf %210, %250 : vector<14x224xf32>
    %252 = arith.addf %247, %251 : vector<14x224xf32>
    %cst_47 = arith.constant 0.000000e+00 : f32
    %253 = vector.broadcast %cst_47 : f32 to vector<1x224xf32>
    %254 = vector.extract_strided_slice %224 {offsets = [0, 0], sizes = [13, 224], strides = [1, 1]} : vector<14x224xf32> to vector<13x224xf32>
    %255 = tpu.concatenate %253, %254 in 0 : vector<1x224xf32>, vector<13x224xf32> -> vector<14x224xf32>
    %256 = arith.addf %238, %255 : vector<14x224xf32>
    %cst_48 = arith.constant 0.000000e+00 : f32
    %257 = vector.broadcast %cst_48 : f32 to vector<1x224xf32>
    %258 = vector.extract_strided_slice %252 {offsets = [1, 0], sizes = [13, 224], strides = [1, 1]} : vector<14x224xf32> to vector<13x224xf32>
    %259 = tpu.concatenate %258, %257 in 0 : vector<13x224xf32>, vector<1x224xf32> -> vector<14x224xf32>
    %260 = arith.addf %256, %259 : vector<14x224xf32>
    %261 = vector.extract_strided_slice %4 {offsets = [1, 0], sizes = [1, 224], strides = [1, 1]} : vector<2x224xf32> to vector<1x224xf32>
    %262 = vector.broadcast %261 : vector<1x224xf32> to vector<14x224xf32>
    %263 = arith.mulf %260, %262 : vector<14x224xf32>
    %264 = vector.extract_strided_slice %5 {offsets = [1, 0], sizes = [1, 224], strides = [1, 1]} : vector<2x224xf32> to vector<1x224xf32>
    %265 = vector.broadcast %264 : vector<1x224xf32> to vector<14x224xf32>
    %266 = arith.addf %263, %265 : vector<14x224xf32>
    %cst_49 = arith.constant 0.000000e+00 : f32
    %267 = vector.broadcast %cst_49 : f32 to vector<14x224xf32>
    %268 = arith.maximumf %266, %267 : vector<14x224xf32>
    %269 = tpu.concatenate %148, %268 in 1 : vector<14x224xf32>, vector<14x224xf32> -> vector<14x448xf32>
    %c0_50 = arith.constant 0 : index
    %c0_51 = arith.constant 0 : index
    %c0_52 = arith.constant 0 : index
    %270 = vector.load %arg8[%c0_50, %c0_51, %c0_52] : memref<8x14x448xf32, #tpu.memory_space<vmem>>, vector<1x14x448xf32>
    %271 = vector.shape_cast %270 : vector<1x14x448xf32> to vector<14x448xf32>
    %272 = vector.shape_cast %269 : vector<14x448xf32> to vector<1x14x448xf32>
    tpu.vector_store %arg8[%c0_50, %c0_51, %c0_52], %272 {strides = array<i32>} : memref<8x14x448xf32, #tpu.memory_space<vmem>>, vector<1x14x448xf32>,
    %c1_53 = arith.constant 1 : index
    %c0_54 = arith.constant 0 : index
    %c0_55 = arith.constant 0 : index
    %c0_56 = arith.constant 0 : index
    %c0_57 = arith.constant 0 : index
    %273 = vector.load %arg1[%c1_53, %c0_54, %c0_55, %c0_56, %c0_57] : memref<8x2x2x14x224xf32, #tpu.memory_space<vmem>>, vector<1x1x1x14x224xf32>
    %274 = vector.shape_cast %273 : vector<1x1x1x14x224xf32> to vector<14x224xf32>
    %c1_58 = arith.constant 1 : index
    %c0_59 = arith.constant 0 : index
    %c1_60 = arith.constant 1 : index
    %c0_61 = arith.constant 0 : index
    %c0_62 = arith.constant 0 : index
    %275 = vector.load %arg1[%c1_58, %c0_59, %c1_60, %c0_61, %c0_62] : memref<8x2x2x14x224xf32, #tpu.memory_space<vmem>>, vector<1x1x1x14x224xf32>
    %276 = vector.shape_cast %275 : vector<1x1x1x14x224xf32> to vector<14x224xf32>
    %c1_63 = arith.constant 1 : index
    %c1_64 = arith.constant 1 : index
    %c0_65 = arith.constant 0 : index
    %c0_66 = arith.constant 0 : index
    %c0_67 = arith.constant 0 : index
    %277 = vector.load %arg1[%c1_63, %c1_64, %c0_65, %c0_66, %c0_67] : memref<8x2x2x14x224xf32, #tpu.memory_space<vmem>>, vector<1x1x1x14x224xf32>
    %278 = vector.shape_cast %277 : vector<1x1x1x14x224xf32> to vector<14x224xf32>
    %c1_68 = arith.constant 1 : index
    %c1_69 = arith.constant 1 : index
    %c1_70 = arith.constant 1 : index
    %c0_71 = arith.constant 0 : index
    %c0_72 = arith.constant 0 : index
    %279 = vector.load %arg1[%c1_68, %c1_69, %c1_70, %c0_71, %c0_72] : memref<8x2x2x14x224xf32, #tpu.memory_space<vmem>>, vector<1x1x1x14x224xf32>
    %280 = vector.shape_cast %279 : vector<1x1x1x14x224xf32> to vector<14x224xf32>
    %cst_73 = arith.constant 0.000000e+00 : f32
    %281 = vector.broadcast %cst_73 : f32 to vector<14x16xf32>
    %282 = vector.extract_strided_slice %276 {offsets = [0, 0], sizes = [14, 208], strides = [1, 1]} : vector<14x224xf32> to vector<14x208xf32>
    %283 = tpu.concatenate %281, %282 in 1 : vector<14x16xf32>, vector<14x208xf32> -> vector<14x224xf32>
    %cst_74 = arith.constant 0.000000e+00 : f32
    %284 = vector.broadcast %cst_74 : f32 to vector<14x16xf32>
    %285 = vector.extract_strided_slice %280 {offsets = [0, 0], sizes = [14, 208], strides = [1, 1]} : vector<14x224xf32> to vector<14x208xf32>
    %286 = tpu.concatenate %284, %285 in 1 : vector<14x16xf32>, vector<14x208xf32> -> vector<14x224xf32>
    %cst_75 = arith.constant 0.000000e+00 : f32
    %287 = vector.broadcast %cst_75 : f32 to vector<1x224xf32>
    %288 = vector.extract_strided_slice %278 {offsets = [0, 0], sizes = [13, 224], strides = [1, 1]} : vector<14x224xf32> to vector<13x224xf32>
    %289 = tpu.concatenate %287, %288 in 0 : vector<1x224xf32>, vector<13x224xf32> -> vector<14x224xf32>
    %cst_76 = arith.constant 0.000000e+00 : f32
    %290 = vector.broadcast %cst_76 : f32 to vector<1x224xf32>
    %291 = vector.extract_strided_slice %280 {offsets = [0, 0], sizes = [13, 224], strides = [1, 1]} : vector<14x224xf32> to vector<13x224xf32>
    %292 = tpu.concatenate %290, %291 in 0 : vector<1x224xf32>, vector<13x224xf32> -> vector<14x224xf32>
    %cst_77 = arith.constant 0.000000e+00 : f32
    %293 = vector.broadcast %cst_77 : f32 to vector<1x224xf32>
    %294 = vector.extract_strided_slice %286 {offsets = [0, 0], sizes = [13, 224], strides = [1, 1]} : vector<14x224xf32> to vector<13x224xf32>
    %295 = tpu.concatenate %293, %294 in 0 : vector<1x224xf32>, vector<13x224xf32> -> vector<14x224xf32>
    %296 = vector.extract_strided_slice %0 {offsets = [0, 0, 0, 0], sizes = [1, 3, 3, 224], strides = [1, 1, 1, 1]} : vector<2x3x3x224xf32> to vector<1x3x3x224xf32>
    %297 = vector.shape_cast %296 : vector<1x3x3x224xf32> to vector<3x3x224xf32>
    %298 = vector.extract_strided_slice %1 {offsets = [0, 0, 0, 0], sizes = [1, 3, 3, 224], strides = [1, 1, 1, 1]} : vector<2x3x3x224xf32> to vector<1x3x3x224xf32>
    %299 = vector.shape_cast %298 : vector<1x3x3x224xf32> to vector<3x3x224xf32>
    %300 = vector.extract_strided_slice %297 {offsets = [0, 0, 0], sizes = [1, 1, 224], strides = [1, 1, 1]} : vector<3x3x224xf32> to vector<1x1x224xf32>
    %301 = vector.shape_cast %300 : vector<1x1x224xf32> to vector<1x224xf32>
    %302 = vector.broadcast %301 : vector<1x224xf32> to vector<14x224xf32>
    %303 = arith.mulf %295, %302 : vector<14x224xf32>
    %304 = vector.extract_strided_slice %297 {offsets = [0, 1, 0], sizes = [1, 1, 224], strides = [1, 1, 1]} : vector<3x3x224xf32> to vector<1x1x224xf32>
    %305 = vector.shape_cast %304 : vector<1x1x224xf32> to vector<1x224xf32>
    %306 = vector.broadcast %305 : vector<1x224xf32> to vector<14x224xf32>
    %307 = arith.mulf %289, %306 : vector<14x224xf32>
    %308 = arith.addf %303, %307 : vector<14x224xf32>
    %309 = vector.extract_strided_slice %297 {offsets = [0, 2, 0], sizes = [1, 1, 224], strides = [1, 1, 1]} : vector<3x3x224xf32> to vector<1x1x224xf32>
    %310 = vector.shape_cast %309 : vector<1x1x224xf32> to vector<1x224xf32>
    %311 = vector.broadcast %310 : vector<1x224xf32> to vector<14x224xf32>
    %312 = arith.mulf %292, %311 : vector<14x224xf32>
    %313 = arith.addf %308, %312 : vector<14x224xf32>
    %314 = vector.extract_strided_slice %297 {offsets = [1, 0, 0], sizes = [1, 1, 224], strides = [1, 1, 1]} : vector<3x3x224xf32> to vector<1x1x224xf32>
    %315 = vector.shape_cast %314 : vector<1x1x224xf32> to vector<1x224xf32>
    %316 = vector.broadcast %315 : vector<1x224xf32> to vector<14x224xf32>
    %317 = arith.mulf %283, %316 : vector<14x224xf32>
    %318 = arith.addf %313, %317 : vector<14x224xf32>
    %319 = vector.extract_strided_slice %297 {offsets = [1, 1, 0], sizes = [1, 1, 224], strides = [1, 1, 1]} : vector<3x3x224xf32> to vector<1x1x224xf32>
    %320 = vector.shape_cast %319 : vector<1x1x224xf32> to vector<1x224xf32>
    %321 = vector.broadcast %320 : vector<1x224xf32> to vector<14x224xf32>
    %322 = arith.mulf %274, %321 : vector<14x224xf32>
    %323 = arith.addf %318, %322 : vector<14x224xf32>
    %324 = vector.extract_strided_slice %297 {offsets = [1, 2, 0], sizes = [1, 1, 224], strides = [1, 1, 1]} : vector<3x3x224xf32> to vector<1x1x224xf32>
    %325 = vector.shape_cast %324 : vector<1x1x224xf32> to vector<1x224xf32>
    %326 = vector.broadcast %325 : vector<1x224xf32> to vector<14x224xf32>
    %327 = arith.mulf %276, %326 : vector<14x224xf32>
    %328 = arith.addf %323, %327 : vector<14x224xf32>
    %329 = vector.extract_strided_slice %297 {offsets = [2, 0, 0], sizes = [1, 1, 224], strides = [1, 1, 1]} : vector<3x3x224xf32> to vector<1x1x224xf32>
    %330 = vector.shape_cast %329 : vector<1x1x224xf32> to vector<1x224xf32>
    %331 = vector.broadcast %330 : vector<1x224xf32> to vector<14x224xf32>
    %332 = arith.mulf %286, %331 : vector<14x224xf32>
    %333 = arith.addf %328, %332 : vector<14x224xf32>
    %334 = vector.extract_strided_slice %297 {offsets = [2, 1, 0], sizes = [1, 1, 224], strides = [1, 1, 1]} : vector<3x3x224xf32> to vector<1x1x224xf32>
    %335 = vector.shape_cast %334 : vector<1x1x224xf32> to vector<1x224xf32>
    %336 = vector.broadcast %335 : vector<1x224xf32> to vector<14x224xf32>
    %337 = arith.mulf %278, %336 : vector<14x224xf32>
    %338 = arith.addf %333, %337 : vector<14x224xf32>
    %339 = vector.extract_strided_slice %297 {offsets = [2, 2, 0], sizes = [1, 1, 224], strides = [1, 1, 1]} : vector<3x3x224xf32> to vector<1x1x224xf32>
    %340 = vector.shape_cast %339 : vector<1x1x224xf32> to vector<1x224xf32>
    %341 = vector.broadcast %340 : vector<1x224xf32> to vector<14x224xf32>
    %342 = arith.mulf %280, %341 : vector<14x224xf32>
    %343 = arith.addf %338, %342 : vector<14x224xf32>
    %344 = vector.extract_strided_slice %2 {offsets = [0, 0], sizes = [1, 224], strides = [1, 1]} : vector<2x224xf32> to vector<1x224xf32>
    %345 = vector.broadcast %344 : vector<1x224xf32> to vector<14x224xf32>
    %346 = arith.mulf %343, %345 : vector<14x224xf32>
    %347 = vector.extract_strided_slice %3 {offsets = [0, 0], sizes = [1, 224], strides = [1, 1]} : vector<2x224xf32> to vector<1x224xf32>
    %348 = vector.broadcast %347 : vector<1x224xf32> to vector<14x224xf32>
    %349 = arith.addf %346, %348 : vector<14x224xf32>
    %cst_78 = arith.constant 0.000000e+00 : f32
    %350 = vector.broadcast %cst_78 : f32 to vector<14x224xf32>
    %351 = arith.maximumf %349, %350 : vector<14x224xf32>
    %cst_79 = arith.constant 0.000000e+00 : f32
    %352 = vector.broadcast %cst_79 : f32 to vector<14x16xf32>
    %353 = vector.extract_strided_slice %351 {offsets = [0, 0], sizes = [14, 208], strides = [1, 1]} : vector<14x224xf32> to vector<14x208xf32>
    %354 = tpu.concatenate %352, %353 in 1 : vector<14x16xf32>, vector<14x208xf32> -> vector<14x224xf32>
    %cst_80 = arith.constant 0.000000e+00 : f32
    %355 = vector.broadcast %cst_80 : f32 to vector<14x16xf32>
    %356 = vector.extract_strided_slice %351 {offsets = [0, 16], sizes = [14, 208], strides = [1, 1]} : vector<14x224xf32> to vector<14x208xf32>
    %357 = tpu.concatenate %356, %355 in 1 : vector<14x208xf32>, vector<14x16xf32> -> vector<14x224xf32>
    %358 = vector.extract_strided_slice %299 {offsets = [0, 0, 0], sizes = [1, 1, 224], strides = [1, 1, 1]} : vector<3x3x224xf32> to vector<1x1x224xf32>
    %359 = vector.shape_cast %358 : vector<1x1x224xf32> to vector<1x224xf32>
    %360 = vector.broadcast %359 : vector<1x224xf32> to vector<14x224xf32>
    %361 = arith.mulf %354, %360 : vector<14x224xf32>
    %362 = vector.extract_strided_slice %299 {offsets = [0, 1, 0], sizes = [1, 1, 224], strides = [1, 1, 1]} : vector<3x3x224xf32> to vector<1x1x224xf32>
    %363 = vector.shape_cast %362 : vector<1x1x224xf32> to vector<1x224xf32>
    %364 = vector.broadcast %363 : vector<1x224xf32> to vector<14x224xf32>
    %365 = arith.mulf %351, %364 : vector<14x224xf32>
    %366 = arith.addf %361, %365 : vector<14x224xf32>
    %367 = vector.extract_strided_slice %299 {offsets = [0, 2, 0], sizes = [1, 1, 224], strides = [1, 1, 1]} : vector<3x3x224xf32> to vector<1x1x224xf32>
    %368 = vector.shape_cast %367 : vector<1x1x224xf32> to vector<1x224xf32>
    %369 = vector.broadcast %368 : vector<1x224xf32> to vector<14x224xf32>
    %370 = arith.mulf %357, %369 : vector<14x224xf32>
    %371 = arith.addf %366, %370 : vector<14x224xf32>
    %372 = vector.extract_strided_slice %299 {offsets = [1, 0, 0], sizes = [1, 1, 224], strides = [1, 1, 1]} : vector<3x3x224xf32> to vector<1x1x224xf32>
    %373 = vector.shape_cast %372 : vector<1x1x224xf32> to vector<1x224xf32>
    %374 = vector.broadcast %373 : vector<1x224xf32> to vector<14x224xf32>
    %375 = arith.mulf %354, %374 : vector<14x224xf32>
    %376 = vector.extract_strided_slice %299 {offsets = [1, 1, 0], sizes = [1, 1, 224], strides = [1, 1, 1]} : vector<3x3x224xf32> to vector<1x1x224xf32>
    %377 = vector.shape_cast %376 : vector<1x1x224xf32> to vector<1x224xf32>
    %378 = vector.broadcast %377 : vector<1x224xf32> to vector<14x224xf32>
    %379 = arith.mulf %351, %378 : vector<14x224xf32>
    %380 = arith.addf %375, %379 : vector<14x224xf32>
    %381 = vector.extract_strided_slice %299 {offsets = [1, 2, 0], sizes = [1, 1, 224], strides = [1, 1, 1]} : vector<3x3x224xf32> to vector<1x1x224xf32>
    %382 = vector.shape_cast %381 : vector<1x1x224xf32> to vector<1x224xf32>
    %383 = vector.broadcast %382 : vector<1x224xf32> to vector<14x224xf32>
    %384 = arith.mulf %357, %383 : vector<14x224xf32>
    %385 = arith.addf %380, %384 : vector<14x224xf32>
    %386 = vector.extract_strided_slice %299 {offsets = [2, 0, 0], sizes = [1, 1, 224], strides = [1, 1, 1]} : vector<3x3x224xf32> to vector<1x1x224xf32>
    %387 = vector.shape_cast %386 : vector<1x1x224xf32> to vector<1x224xf32>
    %388 = vector.broadcast %387 : vector<1x224xf32> to vector<14x224xf32>
    %389 = arith.mulf %354, %388 : vector<14x224xf32>
    %390 = vector.extract_strided_slice %299 {offsets = [2, 1, 0], sizes = [1, 1, 224], strides = [1, 1, 1]} : vector<3x3x224xf32> to vector<1x1x224xf32>
    %391 = vector.shape_cast %390 : vector<1x1x224xf32> to vector<1x224xf32>
    %392 = vector.broadcast %391 : vector<1x224xf32> to vector<14x224xf32>
    %393 = arith.mulf %351, %392 : vector<14x224xf32>
    %394 = arith.addf %389, %393 : vector<14x224xf32>
    %395 = vector.extract_strided_slice %299 {offsets = [2, 2, 0], sizes = [1, 1, 224], strides = [1, 1, 1]} : vector<3x3x224xf32> to vector<1x1x224xf32>
    %396 = vector.shape_cast %395 : vector<1x1x224xf32> to vector<1x224xf32>
    %397 = vector.broadcast %396 : vector<1x224xf32> to vector<14x224xf32>
    %398 = arith.mulf %357, %397 : vector<14x224xf32>
    %399 = arith.addf %394, %398 : vector<14x224xf32>
    %cst_81 = arith.constant 0.000000e+00 : f32
    %400 = vector.broadcast %cst_81 : f32 to vector<1x224xf32>
    %401 = vector.extract_strided_slice %371 {offsets = [0, 0], sizes = [13, 224], strides = [1, 1]} : vector<14x224xf32> to vector<13x224xf32>
    %402 = tpu.concatenate %400, %401 in 0 : vector<1x224xf32>, vector<13x224xf32> -> vector<14x224xf32>
    %403 = arith.addf %385, %402 : vector<14x224xf32>
    %cst_82 = arith.constant 0.000000e+00 : f32
    %404 = vector.broadcast %cst_82 : f32 to vector<1x224xf32>
    %405 = vector.extract_strided_slice %399 {offsets = [1, 0], sizes = [13, 224], strides = [1, 1]} : vector<14x224xf32> to vector<13x224xf32>
    %406 = tpu.concatenate %405, %404 in 0 : vector<13x224xf32>, vector<1x224xf32> -> vector<14x224xf32>
    %407 = arith.addf %403, %406 : vector<14x224xf32>
    %408 = vector.extract_strided_slice %4 {offsets = [0, 0], sizes = [1, 224], strides = [1, 1]} : vector<2x224xf32> to vector<1x224xf32>
    %409 = vector.broadcast %408 : vector<1x224xf32> to vector<14x224xf32>
    %410 = arith.mulf %407, %409 : vector<14x224xf32>
    %411 = vector.extract_strided_slice %5 {offsets = [0, 0], sizes = [1, 224], strides = [1, 1]} : vector<2x224xf32> to vector<1x224xf32>
    %412 = vector.broadcast %411 : vector<1x224xf32> to vector<14x224xf32>
    %413 = arith.addf %410, %412 : vector<14x224xf32>
    %cst_83 = arith.constant 0.000000e+00 : f32
    %414 = vector.broadcast %cst_83 : f32 to vector<14x224xf32>
    %415 = arith.maximumf %413, %414 : vector<14x224xf32>
    %416 = vector.extract_strided_slice %0 {offsets = [1, 0, 0, 0], sizes = [1, 3, 3, 224], strides = [1, 1, 1, 1]} : vector<2x3x3x224xf32> to vector<1x3x3x224xf32>
    %417 = vector.shape_cast %416 : vector<1x3x3x224xf32> to vector<3x3x224xf32>
    %418 = vector.extract_strided_slice %1 {offsets = [1, 0, 0, 0], sizes = [1, 3, 3, 224], strides = [1, 1, 1, 1]} : vector<2x3x3x224xf32> to vector<1x3x3x224xf32>
    %419 = vector.shape_cast %418 : vector<1x3x3x224xf32> to vector<3x3x224xf32>
    %420 = vector.extract_strided_slice %417 {offsets = [0, 0, 0], sizes = [1, 1, 224], strides = [1, 1, 1]} : vector<3x3x224xf32> to vector<1x1x224xf32>
    %421 = vector.shape_cast %420 : vector<1x1x224xf32> to vector<1x224xf32>
    %422 = vector.broadcast %421 : vector<1x224xf32> to vector<14x224xf32>
    %423 = arith.mulf %295, %422 : vector<14x224xf32>
    %424 = vector.extract_strided_slice %417 {offsets = [0, 1, 0], sizes = [1, 1, 224], strides = [1, 1, 1]} : vector<3x3x224xf32> to vector<1x1x224xf32>
    %425 = vector.shape_cast %424 : vector<1x1x224xf32> to vector<1x224xf32>
    %426 = vector.broadcast %425 : vector<1x224xf32> to vector<14x224xf32>
    %427 = arith.mulf %289, %426 : vector<14x224xf32>
    %428 = arith.addf %423, %427 : vector<14x224xf32>
    %429 = vector.extract_strided_slice %417 {offsets = [0, 2, 0], sizes = [1, 1, 224], strides = [1, 1, 1]} : vector<3x3x224xf32> to vector<1x1x224xf32>
    %430 = vector.shape_cast %429 : vector<1x1x224xf32> to vector<1x224xf32>
    %431 = vector.broadcast %430 : vector<1x224xf32> to vector<14x224xf32>
    %432 = arith.mulf %292, %431 : vector<14x224xf32>
    %433 = arith.addf %428, %432 : vector<14x224xf32>
    %434 = vector.extract_strided_slice %417 {offsets = [1, 0, 0], sizes = [1, 1, 224], strides = [1, 1, 1]} : vector<3x3x224xf32> to vector<1x1x224xf32>
    %435 = vector.shape_cast %434 : vector<1x1x224xf32> to vector<1x224xf32>
    %436 = vector.broadcast %435 : vector<1x224xf32> to vector<14x224xf32>
    %437 = arith.mulf %283, %436 : vector<14x224xf32>
    %438 = arith.addf %433, %437 : vector<14x224xf32>
    %439 = vector.extract_strided_slice %417 {offsets = [1, 1, 0], sizes = [1, 1, 224], strides = [1, 1, 1]} : vector<3x3x224xf32> to vector<1x1x224xf32>
    %440 = vector.shape_cast %439 : vector<1x1x224xf32> to vector<1x224xf32>
    %441 = vector.broadcast %440 : vector<1x224xf32> to vector<14x224xf32>
    %442 = arith.mulf %274, %441 : vector<14x224xf32>
    %443 = arith.addf %438, %442 : vector<14x224xf32>
    %444 = vector.extract_strided_slice %417 {offsets = [1, 2, 0], sizes = [1, 1, 224], strides = [1, 1, 1]} : vector<3x3x224xf32> to vector<1x1x224xf32>
    %445 = vector.shape_cast %444 : vector<1x1x224xf32> to vector<1x224xf32>
    %446 = vector.broadcast %445 : vector<1x224xf32> to vector<14x224xf32>
    %447 = arith.mulf %276, %446 : vector<14x224xf32>
    %448 = arith.addf %443, %447 : vector<14x224xf32>
    %449 = vector.extract_strided_slice %417 {offsets = [2, 0, 0], sizes = [1, 1, 224], strides = [1, 1, 1]} : vector<3x3x224xf32> to vector<1x1x224xf32>
    %450 = vector.shape_cast %449 : vector<1x1x224xf32> to vector<1x224xf32>
    %451 = vector.broadcast %450 : vector<1x224xf32> to vector<14x224xf32>
    %452 = arith.mulf %286, %451 : vector<14x224xf32>
    %453 = arith.addf %448, %452 : vector<14x224xf32>
    %454 = vector.extract_strided_slice %417 {offsets = [2, 1, 0], sizes = [1, 1, 224], strides = [1, 1, 1]} : vector<3x3x224xf32> to vector<1x1x224xf32>
    %455 = vector.shape_cast %454 : vector<1x1x224xf32> to vector<1x224xf32>
    %456 = vector.broadcast %455 : vector<1x224xf32> to vector<14x224xf32>
    %457 = arith.mulf %278, %456 : vector<14x224xf32>
    %458 = arith.addf %453, %457 : vector<14x224xf32>
    %459 = vector.extract_strided_slice %417 {offsets = [2, 2, 0], sizes = [1, 1, 224], strides = [1, 1, 1]} : vector<3x3x224xf32> to vector<1x1x224xf32>
    %460 = vector.shape_cast %459 : vector<1x1x224xf32> to vector<1x224xf32>
    %461 = vector.broadcast %460 : vector<1x224xf32> to vector<14x224xf32>
    %462 = arith.mulf %280, %461 : vector<14x224xf32>
    %463 = arith.addf %458, %462 : vector<14x224xf32>
    %464 = vector.extract_strided_slice %2 {offsets = [1, 0], sizes = [1, 224], strides = [1, 1]} : vector<2x224xf32> to vector<1x224xf32>
    %465 = vector.broadcast %464 : vector<1x224xf32> to vector<14x224xf32>
    %466 = arith.mulf %463, %465 : vector<14x224xf32>
    %467 = vector.extract_strided_slice %3 {offsets = [1, 0], sizes = [1, 224], strides = [1, 1]} : vector<2x224xf32> to vector<1x224xf32>
    %468 = vector.broadcast %467 : vector<1x224xf32> to vector<14x224xf32>
    %469 = arith.addf %466, %468 : vector<14x224xf32>
    %cst_84 = arith.constant 0.000000e+00 : f32
    %470 = vector.broadcast %cst_84 : f32 to vector<14x224xf32>
    %471 = arith.maximumf %469, %470 : vector<14x224xf32>
    %cst_85 = arith.constant 0.000000e+00 : f32
    %472 = vector.broadcast %cst_85 : f32 to vector<14x16xf32>
    %473 = vector.extract_strided_slice %471 {offsets = [0, 0], sizes = [14, 208], strides = [1, 1]} : vector<14x224xf32> to vector<14x208xf32>
    %474 = tpu.concatenate %472, %473 in 1 : vector<14x16xf32>, vector<14x208xf32> -> vector<14x224xf32>
    %cst_86 = arith.constant 0.000000e+00 : f32
    %475 = vector.broadcast %cst_86 : f32 to vector<14x16xf32>
    %476 = vector.extract_strided_slice %471 {offsets = [0, 16], sizes = [14, 208], strides = [1, 1]} : vector<14x224xf32> to vector<14x208xf32>
    %477 = tpu.concatenate %476, %475 in 1 : vector<14x208xf32>, vector<14x16xf32> -> vector<14x224xf32>
    %478 = vector.extract_strided_slice %419 {offsets = [0, 0, 0], sizes = [1, 1, 224], strides = [1, 1, 1]} : vector<3x3x224xf32> to vector<1x1x224xf32>
    %479 = vector.shape_cast %478 : vector<1x1x224xf32> to vector<1x224xf32>
    %480 = vector.broadcast %479 : vector<1x224xf32> to vector<14x224xf32>
    %481 = arith.mulf %474, %480 : vector<14x224xf32>
    %482 = vector.extract_strided_slice %419 {offsets = [0, 1, 0], sizes = [1, 1, 224], strides = [1, 1, 1]} : vector<3x3x224xf32> to vector<1x1x224xf32>
    %483 = vector.shape_cast %482 : vector<1x1x224xf32> to vector<1x224xf32>
    %484 = vector.broadcast %483 : vector<1x224xf32> to vector<14x224xf32>
    %485 = arith.mulf %471, %484 : vector<14x224xf32>
    %486 = arith.addf %481, %485 : vector<14x224xf32>
    %487 = vector.extract_strided_slice %419 {offsets = [0, 2, 0], sizes = [1, 1, 224], strides = [1, 1, 1]} : vector<3x3x224xf32> to vector<1x1x224xf32>
    %488 = vector.shape_cast %487 : vector<1x1x224xf32> to vector<1x224xf32>
    %489 = vector.broadcast %488 : vector<1x224xf32> to vector<14x224xf32>
    %490 = arith.mulf %477, %489 : vector<14x224xf32>
    %491 = arith.addf %486, %490 : vector<14x224xf32>
    %492 = vector.extract_strided_slice %419 {offsets = [1, 0, 0], sizes = [1, 1, 224], strides = [1, 1, 1]} : vector<3x3x224xf32> to vector<1x1x224xf32>
    %493 = vector.shape_cast %492 : vector<1x1x224xf32> to vector<1x224xf32>
    %494 = vector.broadcast %493 : vector<1x224xf32> to vector<14x224xf32>
    %495 = arith.mulf %474, %494 : vector<14x224xf32>
    %496 = vector.extract_strided_slice %419 {offsets = [1, 1, 0], sizes = [1, 1, 224], strides = [1, 1, 1]} : vector<3x3x224xf32> to vector<1x1x224xf32>
    %497 = vector.shape_cast %496 : vector<1x1x224xf32> to vector<1x224xf32>
    %498 = vector.broadcast %497 : vector<1x224xf32> to vector<14x224xf32>
    %499 = arith.mulf %471, %498 : vector<14x224xf32>
    %500 = arith.addf %495, %499 : vector<14x224xf32>
    %501 = vector.extract_strided_slice %419 {offsets = [1, 2, 0], sizes = [1, 1, 224], strides = [1, 1, 1]} : vector<3x3x224xf32> to vector<1x1x224xf32>
    %502 = vector.shape_cast %501 : vector<1x1x224xf32> to vector<1x224xf32>
    %503 = vector.broadcast %502 : vector<1x224xf32> to vector<14x224xf32>
    %504 = arith.mulf %477, %503 : vector<14x224xf32>
    %505 = arith.addf %500, %504 : vector<14x224xf32>
    %506 = vector.extract_strided_slice %419 {offsets = [2, 0, 0], sizes = [1, 1, 224], strides = [1, 1, 1]} : vector<3x3x224xf32> to vector<1x1x224xf32>
    %507 = vector.shape_cast %506 : vector<1x1x224xf32> to vector<1x224xf32>
    %508 = vector.broadcast %507 : vector<1x224xf32> to vector<14x224xf32>
    %509 = arith.mulf %474, %508 : vector<14x224xf32>
    %510 = vector.extract_strided_slice %419 {offsets = [2, 1, 0], sizes = [1, 1, 224], strides = [1, 1, 1]} : vector<3x3x224xf32> to vector<1x1x224xf32>
    %511 = vector.shape_cast %510 : vector<1x1x224xf32> to vector<1x224xf32>
    %512 = vector.broadcast %511 : vector<1x224xf32> to vector<14x224xf32>
    %513 = arith.mulf %471, %512 : vector<14x224xf32>
    %514 = arith.addf %509, %513 : vector<14x224xf32>
    %515 = vector.extract_strided_slice %419 {offsets = [2, 2, 0], sizes = [1, 1, 224], strides = [1, 1, 1]} : vector<3x3x224xf32> to vector<1x1x224xf32>
    %516 = vector.shape_cast %515 : vector<1x1x224xf32> to vector<1x224xf32>
    %517 = vector.broadcast %516 : vector<1x224xf32> to vector<14x224xf32>
    %518 = arith.mulf %477, %517 : vector<14x224xf32>
    %519 = arith.addf %514, %518 : vector<14x224xf32>
    %cst_87 = arith.constant 0.000000e+00 : f32
    %520 = vector.broadcast %cst_87 : f32 to vector<1x224xf32>
    %521 = vector.extract_strided_slice %491 {offsets = [0, 0], sizes = [13, 224], strides = [1, 1]} : vector<14x224xf32> to vector<13x224xf32>
    %522 = tpu.concatenate %520, %521 in 0 : vector<1x224xf32>, vector<13x224xf32> -> vector<14x224xf32>
    %523 = arith.addf %505, %522 : vector<14x224xf32>
    %cst_88 = arith.constant 0.000000e+00 : f32
    %524 = vector.broadcast %cst_88 : f32 to vector<1x224xf32>
    %525 = vector.extract_strided_slice %519 {offsets = [1, 0], sizes = [13, 224], strides = [1, 1]} : vector<14x224xf32> to vector<13x224xf32>
    %526 = tpu.concatenate %525, %524 in 0 : vector<13x224xf32>, vector<1x224xf32> -> vector<14x224xf32>
    %527 = arith.addf %523, %526 : vector<14x224xf32>
    %528 = vector.extract_strided_slice %4 {offsets = [1, 0], sizes = [1, 224], strides = [1, 1]} : vector<2x224xf32> to vector<1x224xf32>
    %529 = vector.broadcast %528 : vector<1x224xf32> to vector<14x224xf32>
    %530 = arith.mulf %527, %529 : vector<14x224xf32>
    %531 = vector.extract_strided_slice %5 {offsets = [1, 0], sizes = [1, 224], strides = [1, 1]} : vector<2x224xf32> to vector<1x224xf32>
    %532 = vector.broadcast %531 : vector<1x224xf32> to vector<14x224xf32>
    %533 = arith.addf %530, %532 : vector<14x224xf32>
    %cst_89 = arith.constant 0.000000e+00 : f32
    %534 = vector.broadcast %cst_89 : f32 to vector<14x224xf32>
    %535 = arith.maximumf %533, %534 : vector<14x224xf32>
    %536 = tpu.concatenate %415, %535 in 1 : vector<14x224xf32>, vector<14x224xf32> -> vector<14x448xf32>
    %c1_90 = arith.constant 1 : index
    %c0_91 = arith.constant 0 : index
    %c0_92 = arith.constant 0 : index
    %537 = vector.load %arg8[%c1_90, %c0_91, %c0_92] : memref<8x14x448xf32, #tpu.memory_space<vmem>>, vector<1x14x448xf32>
    %538 = vector.shape_cast %537 : vector<1x14x448xf32> to vector<14x448xf32>
    %539 = vector.shape_cast %536 : vector<14x448xf32> to vector<1x14x448xf32>
    tpu.vector_store %arg8[%c1_90, %c0_91, %c0_92], %539 {strides = array<i32>} : memref<8x14x448xf32, #tpu.memory_space<vmem>>, vector<1x14x448xf32>,
    %c2 = arith.constant 2 : index
    %c0_93 = arith.constant 0 : index
    %c0_94 = arith.constant 0 : index
    %c0_95 = arith.constant 0 : index
    %c0_96 = arith.constant 0 : index
    %540 = vector.load %arg1[%c2, %c0_93, %c0_94, %c0_95, %c0_96] : memref<8x2x2x14x224xf32, #tpu.memory_space<vmem>>, vector<1x1x1x14x224xf32>
    %541 = vector.shape_cast %540 : vector<1x1x1x14x224xf32> to vector<14x224xf32>
    %c2_97 = arith.constant 2 : index
    %c0_98 = arith.constant 0 : index
    %c1_99 = arith.constant 1 : index
    %c0_100 = arith.constant 0 : index
    %c0_101 = arith.constant 0 : index
    %542 = vector.load %arg1[%c2_97, %c0_98, %c1_99, %c0_100, %c0_101] : memref<8x2x2x14x224xf32, #tpu.memory_space<vmem>>, vector<1x1x1x14x224xf32>
    %543 = vector.shape_cast %542 : vector<1x1x1x14x224xf32> to vector<14x224xf32>
    %c2_102 = arith.constant 2 : index
    %c1_103 = arith.constant 1 : index
    %c0_104 = arith.constant 0 : index
    %c0_105 = arith.constant 0 : index
    %c0_106 = arith.constant 0 : index
    %544 = vector.load %arg1[%c2_102, %c1_103, %c0_104, %c0_105, %c0_106] : memref<8x2x2x14x224xf32, #tpu.memory_space<vmem>>, vector<1x1x1x14x224xf32>
    %545 = vector.shape_cast %544 : vector<1x1x1x14x224xf32> to vector<14x224xf32>
    %c2_107 = arith.constant 2 : index
    %c1_108 = arith.constant 1 : index
    %c1_109 = arith.constant 1 : index
    %c0_110 = arith.constant 0 : index
    %c0_111 = arith.constant 0 : index
    %546 = vector.load %arg1[%c2_107, %c1_108, %c1_109, %c0_110, %c0_111] : memref<8x2x2x14x224xf32, #tpu.memory_space<vmem>>, vector<1x1x1x14x224xf32>
    %547 = vector.shape_cast %546 : vector<1x1x1x14x224xf32> to vector<14x224xf32>
    %cst_112 = arith.constant 0.000000e+00 : f32
    %548 = vector.broadcast %cst_112 : f32 to vector<14x16xf32>
    %549 = vector.extract_strided_slice %543 {offsets = [0, 0], sizes = [14, 208], strides = [1, 1]} : vector<14x224xf32> to vector<14x208xf32>
    %550 = tpu.concatenate %548, %549 in 1 : vector<14x16xf32>, vector<14x208xf32> -> vector<14x224xf32>
    %cst_113 = arith.constant 0.000000e+00 : f32
    %551 = vector.broadcast %cst_113 : f32 to vector<14x16xf32>
    %552 = vector.extract_strided_slice %547 {offsets = [0, 0], sizes = [14, 208], strides = [1, 1]} : vector<14x224xf32> to vector<14x208xf32>
    %553 = tpu.concatenate %551, %552 in 1 : vector<14x16xf32>, vector<14x208xf32> -> vector<14x224xf32>
    %cst_114 = arith.constant 0.000000e+00 : f32
    %554 = vector.broadcast %cst_114 : f32 to vector<1x224xf32>
    %555 = vector.extract_strided_slice %545 {offsets = [0, 0], sizes = [13, 224], strides = [1, 1]} : vector<14x224xf32> to vector<13x224xf32>
    %556 = tpu.concatenate %554, %555 in 0 : vector<1x224xf32>, vector<13x224xf32> -> vector<14x224xf32>
    %cst_115 = arith.constant 0.000000e+00 : f32
    %557 = vector.broadcast %cst_115 : f32 to vector<1x224xf32>
    %558 = vector.extract_strided_slice %547 {offsets = [0, 0], sizes = [13, 224], strides = [1, 1]} : vector<14x224xf32> to vector<13x224xf32>
    %559 = tpu.concatenate %557, %558 in 0 : vector<1x224xf32>, vector<13x224xf32> -> vector<14x224xf32>
    %cst_116 = arith.constant 0.000000e+00 : f32
    %560 = vector.broadcast %cst_116 : f32 to vector<1x224xf32>
    %561 = vector.extract_strided_slice %553 {offsets = [0, 0], sizes = [13, 224], strides = [1, 1]} : vector<14x224xf32> to vector<13x224xf32>
    %562 = tpu.concatenate %560, %561 in 0 : vector<1x224xf32>, vector<13x224xf32> -> vector<14x224xf32>
    %563 = vector.extract_strided_slice %0 {offsets = [0, 0, 0, 0], sizes = [1, 3, 3, 224], strides = [1, 1, 1, 1]} : vector<2x3x3x224xf32> to vector<1x3x3x224xf32>
    %564 = vector.shape_cast %563 : vector<1x3x3x224xf32> to vector<3x3x224xf32>
    %565 = vector.extract_strided_slice %1 {offsets = [0, 0, 0, 0], sizes = [1, 3, 3, 224], strides = [1, 1, 1, 1]} : vector<2x3x3x224xf32> to vector<1x3x3x224xf32>
    %566 = vector.shape_cast %565 : vector<1x3x3x224xf32> to vector<3x3x224xf32>
    %567 = vector.extract_strided_slice %564 {offsets = [0, 0, 0], sizes = [1, 1, 224], strides = [1, 1, 1]} : vector<3x3x224xf32> to vector<1x1x224xf32>
    %568 = vector.shape_cast %567 : vector<1x1x224xf32> to vector<1x224xf32>
    %569 = vector.broadcast %568 : vector<1x224xf32> to vector<14x224xf32>
    %570 = arith.mulf %562, %569 : vector<14x224xf32>
    %571 = vector.extract_strided_slice %564 {offsets = [0, 1, 0], sizes = [1, 1, 224], strides = [1, 1, 1]} : vector<3x3x224xf32> to vector<1x1x224xf32>
    %572 = vector.shape_cast %571 : vector<1x1x224xf32> to vector<1x224xf32>
    %573 = vector.broadcast %572 : vector<1x224xf32> to vector<14x224xf32>
    %574 = arith.mulf %556, %573 : vector<14x224xf32>
    %575 = arith.addf %570, %574 : vector<14x224xf32>
    %576 = vector.extract_strided_slice %564 {offsets = [0, 2, 0], sizes = [1, 1, 224], strides = [1, 1, 1]} : vector<3x3x224xf32> to vector<1x1x224xf32>
    %577 = vector.shape_cast %576 : vector<1x1x224xf32> to vector<1x224xf32>
    %578 = vector.broadcast %577 : vector<1x224xf32> to vector<14x224xf32>
    %579 = arith.mulf %559, %578 : vector<14x224xf32>
    %580 = arith.addf %575, %579 : vector<14x224xf32>
    %581 = vector.extract_strided_slice %564 {offsets = [1, 0, 0], sizes = [1, 1, 224], strides = [1, 1, 1]} : vector<3x3x224xf32> to vector<1x1x224xf32>
    %582 = vector.shape_cast %581 : vector<1x1x224xf32> to vector<1x224xf32>
    %583 = vector.broadcast %582 : vector<1x224xf32> to vector<14x224xf32>
    %584 = arith.mulf %550, %583 : vector<14x224xf32>
    %585 = arith.addf %580, %584 : vector<14x224xf32>
    %586 = vector.extract_strided_slice %564 {offsets = [1, 1, 0], sizes = [1, 1, 224], strides = [1, 1, 1]} : vector<3x3x224xf32> to vector<1x1x224xf32>
    %587 = vector.shape_cast %586 : vector<1x1x224xf32> to vector<1x224xf32>
    %588 = vector.broadcast %587 : vector<1x224xf32> to vector<14x224xf32>
    %589 = arith.mulf %541, %588 : vector<14x224xf32>
    %590 = arith.addf %585, %589 : vector<14x224xf32>
    %591 = vector.extract_strided_slice %564 {offsets = [1, 2, 0], sizes = [1, 1, 224], strides = [1, 1, 1]} : vector<3x3x224xf32> to vector<1x1x224xf32>
    %592 = vector.shape_cast %591 : vector<1x1x224xf32> to vector<1x224xf32>
    %593 = vector.broadcast %592 : vector<1x224xf32> to vector<14x224xf32>
    %594 = arith.mulf %543, %593 : vector<14x224xf32>
    %595 = arith.addf %590, %594 : vector<14x224xf32>
    %596 = vector.extract_strided_slice %564 {offsets = [2, 0, 0], sizes = [1, 1, 224], strides = [1, 1, 1]} : vector<3x3x224xf32> to vector<1x1x224xf32>
    %597 = vector.shape_cast %596 : vector<1x1x224xf32> to vector<1x224xf32>
    %598 = vector.broadcast %597 : vector<1x224xf32> to vector<14x224xf32>
    %599 = arith.mulf %553, %598 : vector<14x224xf32>
    %600 = arith.addf %595, %599 : vector<14x224xf32>
    %601 = vector.extract_strided_slice %564 {offsets = [2, 1, 0], sizes = [1, 1, 224], strides = [1, 1, 1]} : vector<3x3x224xf32> to vector<1x1x224xf32>
    %602 = vector.shape_cast %601 : vector<1x1x224xf32> to vector<1x224xf32>
    %603 = vector.broadcast %602 : vector<1x224xf32> to vector<14x224xf32>
    %604 = arith.mulf %545, %603 : vector<14x224xf32>
    %605 = arith.addf %600, %604 : vector<14x224xf32>
    %606 = vector.extract_strided_slice %564 {offsets = [2, 2, 0], sizes = [1, 1, 224], strides = [1, 1, 1]} : vector<3x3x224xf32> to vector<1x1x224xf32>
    %607 = vector.shape_cast %606 : vector<1x1x224xf32> to vector<1x224xf32>
    %608 = vector.broadcast %607 : vector<1x224xf32> to vector<14x224xf32>
    %609 = arith.mulf %547, %608 : vector<14x224xf32>
    %610 = arith.addf %605, %609 : vector<14x224xf32>
    %611 = vector.extract_strided_slice %2 {offsets = [0, 0], sizes = [1, 224], strides = [1, 1]} : vector<2x224xf32> to vector<1x224xf32>
    %612 = vector.broadcast %611 : vector<1x224xf32> to vector<14x224xf32>
    %613 = arith.mulf %610, %612 : vector<14x224xf32>
    %614 = vector.extract_strided_slice %3 {offsets = [0, 0], sizes = [1, 224], strides = [1, 1]} : vector<2x224xf32> to vector<1x224xf32>
    %615 = vector.broadcast %614 : vector<1x224xf32> to vector<14x224xf32>
    %616 = arith.addf %613, %615 : vector<14x224xf32>
    %cst_117 = arith.constant 0.000000e+00 : f32
    %617 = vector.broadcast %cst_117 : f32 to vector<14x224xf32>
    %618 = arith.maximumf %616, %617 : vector<14x224xf32>
    %cst_118 = arith.constant 0.000000e+00 : f32
    %619 = vector.broadcast %cst_118 : f32 to vector<14x16xf32>
    %620 = vector.extract_strided_slice %618 {offsets = [0, 0], sizes = [14, 208], strides = [1, 1]} : vector<14x224xf32> to vector<14x208xf32>
    %621 = tpu.concatenate %619, %620 in 1 : vector<14x16xf32>, vector<14x208xf32> -> vector<14x224xf32>
    %cst_119 = arith.constant 0.000000e+00 : f32
    %622 = vector.broadcast %cst_119 : f32 to vector<14x16xf32>
    %623 = vector.extract_strided_slice %618 {offsets = [0, 16], sizes = [14, 208], strides = [1, 1]} : vector<14x224xf32> to vector<14x208xf32>
    %624 = tpu.concatenate %623, %622 in 1 : vector<14x208xf32>, vector<14x16xf32> -> vector<14x224xf32>
    %625 = vector.extract_strided_slice %566 {offsets = [0, 0, 0], sizes = [1, 1, 224], strides = [1, 1, 1]} : vector<3x3x224xf32> to vector<1x1x224xf32>
    %626 = vector.shape_cast %625 : vector<1x1x224xf32> to vector<1x224xf32>
    %627 = vector.broadcast %626 : vector<1x224xf32> to vector<14x224xf32>
    %628 = arith.mulf %621, %627 : vector<14x224xf32>
    %629 = vector.extract_strided_slice %566 {offsets = [0, 1, 0], sizes = [1, 1, 224], strides = [1, 1, 1]} : vector<3x3x224xf32> to vector<1x1x224xf32>
    %630 = vector.shape_cast %629 : vector<1x1x224xf32> to vector<1x224xf32>
    %631 = vector.broadcast %630 : vector<1x224xf32> to vector<14x224xf32>
    %632 = arith.mulf %618, %631 : vector<14x224xf32>
    %633 = arith.addf %628, %632 : vector<14x224xf32>
    %634 = vector.extract_strided_slice %566 {offsets = [0, 2, 0], sizes = [1, 1, 224], strides = [1, 1, 1]} : vector<3x3x224xf32> to vector<1x1x224xf32>
    %635 = vector.shape_cast %634 : vector<1x1x224xf32> to vector<1x224xf32>
    %636 = vector.broadcast %635 : vector<1x224xf32> to vector<14x224xf32>
    %637 = arith.mulf %624, %636 : vector<14x224xf32>
    %638 = arith.addf %633, %637 : vector<14x224xf32>
    %639 = vector.extract_strided_slice %566 {offsets = [1, 0, 0], sizes = [1, 1, 224], strides = [1, 1, 1]} : vector<3x3x224xf32> to vector<1x1x224xf32>
    %640 = vector.shape_cast %639 : vector<1x1x224xf32> to vector<1x224xf32>
    %641 = vector.broadcast %640 : vector<1x224xf32> to vector<14x224xf32>
    %642 = arith.mulf %621, %641 : vector<14x224xf32>
    %643 = vector.extract_strided_slice %566 {offsets = [1, 1, 0], sizes = [1, 1, 224], strides = [1, 1, 1]} : vector<3x3x224xf32> to vector<1x1x224xf32>
    %644 = vector.shape_cast %643 : vector<1x1x224xf32> to vector<1x224xf32>
    %645 = vector.broadcast %644 : vector<1x224xf32> to vector<14x224xf32>
    %646 = arith.mulf %618, %645 : vector<14x224xf32>
    %647 = arith.addf %642, %646 : vector<14x224xf32>
    %648 = vector.extract_strided_slice %566 {offsets = [1, 2, 0], sizes = [1, 1, 224], strides = [1, 1, 1]} : vector<3x3x224xf32> to vector<1x1x224xf32>
    %649 = vector.shape_cast %648 : vector<1x1x224xf32> to vector<1x224xf32>
    %650 = vector.broadcast %649 : vector<1x224xf32> to vector<14x224xf32>
    %651 = arith.mulf %624, %650 : vector<14x224xf32>
    %652 = arith.addf %647, %651 : vector<14x224xf32>
    %653 = vector.extract_strided_slice %566 {offsets = [2, 0, 0], sizes = [1, 1, 224], strides = [1, 1, 1]} : vector<3x3x224xf32> to vector<1x1x224xf32>
    %654 = vector.shape_cast %653 : vector<1x1x224xf32> to vector<1x224xf32>
    %655 = vector.broadcast %654 : vector<1x224xf32> to vector<14x224xf32>
    %656 = arith.mulf %621, %655 : vector<14x224xf32>
    %657 = vector.extract_strided_slice %566 {offsets = [2, 1, 0], sizes = [1, 1, 224], strides = [1, 1, 1]} : vector<3x3x224xf32> to vector<1x1x224xf32>
    %658 = vector.shape_cast %657 : vector<1x1x224xf32> to vector<1x224xf32>
    %659 = vector.broadcast %658 : vector<1x224xf32> to vector<14x224xf32>
    %660 = arith.mulf %618, %659 : vector<14x224xf32>
    %661 = arith.addf %656, %660 : vector<14x224xf32>
    %662 = vector.extract_strided_slice %566 {offsets = [2, 2, 0], sizes = [1, 1, 224], strides = [1, 1, 1]} : vector<3x3x224xf32> to vector<1x1x224xf32>
    %663 = vector.shape_cast %662 : vector<1x1x224xf32> to vector<1x224xf32>
    %664 = vector.broadcast %663 : vector<1x224xf32> to vector<14x224xf32>
    %665 = arith.mulf %624, %664 : vector<14x224xf32>
    %666 = arith.addf %661, %665 : vector<14x224xf32>
    %cst_120 = arith.constant 0.000000e+00 : f32
    %667 = vector.broadcast %cst_120 : f32 to vector<1x224xf32>
    %668 = vector.extract_strided_slice %638 {offsets = [0, 0], sizes = [13, 224], strides = [1, 1]} : vector<14x224xf32> to vector<13x224xf32>
    %669 = tpu.concatenate %667, %668 in 0 : vector<1x224xf32>, vector<13x224xf32> -> vector<14x224xf32>
    %670 = arith.addf %652, %669 : vector<14x224xf32>
    %cst_121 = arith.constant 0.000000e+00 : f32
    %671 = vector.broadcast %cst_121 : f32 to vector<1x224xf32>
    %672 = vector.extract_strided_slice %666 {offsets = [1, 0], sizes = [13, 224], strides = [1, 1]} : vector<14x224xf32> to vector<13x224xf32>
    %673 = tpu.concatenate %672, %671 in 0 : vector<13x224xf32>, vector<1x224xf32> -> vector<14x224xf32>
    %674 = arith.addf %670, %673 : vector<14x224xf32>
    %675 = vector.extract_strided_slice %4 {offsets = [0, 0], sizes = [1, 224], strides = [1, 1]} : vector<2x224xf32> to vector<1x224xf32>
    %676 = vector.broadcast %675 : vector<1x224xf32> to vector<14x224xf32>
    %677 = arith.mulf %674, %676 : vector<14x224xf32>
    %678 = vector.extract_strided_slice %5 {offsets = [0, 0], sizes = [1, 224], strides = [1, 1]} : vector<2x224xf32> to vector<1x224xf32>
    %679 = vector.broadcast %678 : vector<1x224xf32> to vector<14x224xf32>
    %680 = arith.addf %677, %679 : vector<14x224xf32>
    %cst_122 = arith.constant 0.000000e+00 : f32
    %681 = vector.broadcast %cst_122 : f32 to vector<14x224xf32>
    %682 = arith.maximumf %680, %681 : vector<14x224xf32>
    %683 = vector.extract_strided_slice %0 {offsets = [1, 0, 0, 0], sizes = [1, 3, 3, 224], strides = [1, 1, 1, 1]} : vector<2x3x3x224xf32> to vector<1x3x3x224xf32>
    %684 = vector.shape_cast %683 : vector<1x3x3x224xf32> to vector<3x3x224xf32>
    %685 = vector.extract_strided_slice %1 {offsets = [1, 0, 0, 0], sizes = [1, 3, 3, 224], strides = [1, 1, 1, 1]} : vector<2x3x3x224xf32> to vector<1x3x3x224xf32>
    %686 = vector.shape_cast %685 : vector<1x3x3x224xf32> to vector<3x3x224xf32>
    %687 = vector.extract_strided_slice %684 {offsets = [0, 0, 0], sizes = [1, 1, 224], strides = [1, 1, 1]} : vector<3x3x224xf32> to vector<1x1x224xf32>
    %688 = vector.shape_cast %687 : vector<1x1x224xf32> to vector<1x224xf32>
    %689 = vector.broadcast %688 : vector<1x224xf32> to vector<14x224xf32>
    %690 = arith.mulf %562, %689 : vector<14x224xf32>
    %691 = vector.extract_strided_slice %684 {offsets = [0, 1, 0], sizes = [1, 1, 224], strides = [1, 1, 1]} : vector<3x3x224xf32> to vector<1x1x224xf32>
    %692 = vector.shape_cast %691 : vector<1x1x224xf32> to vector<1x224xf32>
    %693 = vector.broadcast %692 : vector<1x224xf32> to vector<14x224xf32>
    %694 = arith.mulf %556, %693 : vector<14x224xf32>
    %695 = arith.addf %690, %694 : vector<14x224xf32>
    %696 = vector.extract_strided_slice %684 {offsets = [0, 2, 0], sizes = [1, 1, 224], strides = [1, 1, 1]} : vector<3x3x224xf32> to vector<1x1x224xf32>
    %697 = vector.shape_cast %696 : vector<1x1x224xf32> to vector<1x224xf32>
    %698 = vector.broadcast %697 : vector<1x224xf32> to vector<14x224xf32>
    %699 = arith.mulf %559, %698 : vector<14x224xf32>
    %700 = arith.addf %695, %699 : vector<14x224xf32>
    %701 = vector.extract_strided_slice %684 {offsets = [1, 0, 0], sizes = [1, 1, 224], strides = [1, 1, 1]} : vector<3x3x224xf32> to vector<1x1x224xf32>
    %702 = vector.shape_cast %701 : vector<1x1x224xf32> to vector<1x224xf32>
    %703 = vector.broadcast %702 : vector<1x224xf32> to vector<14x224xf32>
    %704 = arith.mulf %550, %703 : vector<14x224xf32>
    %705 = arith.addf %700, %704 : vector<14x224xf32>
    %706 = vector.extract_strided_slice %684 {offsets = [1, 1, 0], sizes = [1, 1, 224], strides = [1, 1, 1]} : vector<3x3x224xf32> to vector<1x1x224xf32>
    %707 = vector.shape_cast %706 : vector<1x1x224xf32> to vector<1x224xf32>
    %708 = vector.broadcast %707 : vector<1x224xf32> to vector<14x224xf32>
    %709 = arith.mulf %541, %708 : vector<14x224xf32>
    %710 = arith.addf %705, %709 : vector<14x224xf32>
    %711 = vector.extract_strided_slice %684 {offsets = [1, 2, 0], sizes = [1, 1, 224], strides = [1, 1, 1]} : vector<3x3x224xf32> to vector<1x1x224xf32>
    %712 = vector.shape_cast %711 : vector<1x1x224xf32> to vector<1x224xf32>
    %713 = vector.broadcast %712 : vector<1x224xf32> to vector<14x224xf32>
    %714 = arith.mulf %543, %713 : vector<14x224xf32>
    %715 = arith.addf %710, %714 : vector<14x224xf32>
    %716 = vector.extract_strided_slice %684 {offsets = [2, 0, 0], sizes = [1, 1, 224], strides = [1, 1, 1]} : vector<3x3x224xf32> to vector<1x1x224xf32>
    %717 = vector.shape_cast %716 : vector<1x1x224xf32> to vector<1x224xf32>
    %718 = vector.broadcast %717 : vector<1x224xf32> to vector<14x224xf32>
    %719 = arith.mulf %553, %718 : vector<14x224xf32>
    %720 = arith.addf %715, %719 : vector<14x224xf32>
    %721 = vector.extract_strided_slice %684 {offsets = [2, 1, 0], sizes = [1, 1, 224], strides = [1, 1, 1]} : vector<3x3x224xf32> to vector<1x1x224xf32>
    %722 = vector.shape_cast %721 : vector<1x1x224xf32> to vector<1x224xf32>
    %723 = vector.broadcast %722 : vector<1x224xf32> to vector<14x224xf32>
    %724 = arith.mulf %545, %723 : vector<14x224xf32>
    %725 = arith.addf %720, %724 : vector<14x224xf32>
    %726 = vector.extract_strided_slice %684 {offsets = [2, 2, 0], sizes = [1, 1, 224], strides = [1, 1, 1]} : vector<3x3x224xf32> to vector<1x1x224xf32>
    %727 = vector.shape_cast %726 : vector<1x1x224xf32> to vector<1x224xf32>
    %728 = vector.broadcast %727 : vector<1x224xf32> to vector<14x224xf32>
    %729 = arith.mulf %547, %728 : vector<14x224xf32>
    %730 = arith.addf %725, %729 : vector<14x224xf32>
    %731 = vector.extract_strided_slice %2 {offsets = [1, 0], sizes = [1, 224], strides = [1, 1]} : vector<2x224xf32> to vector<1x224xf32>
    %732 = vector.broadcast %731 : vector<1x224xf32> to vector<14x224xf32>
    %733 = arith.mulf %730, %732 : vector<14x224xf32>
    %734 = vector.extract_strided_slice %3 {offsets = [1, 0], sizes = [1, 224], strides = [1, 1]} : vector<2x224xf32> to vector<1x224xf32>
    %735 = vector.broadcast %734 : vector<1x224xf32> to vector<14x224xf32>
    %736 = arith.addf %733, %735 : vector<14x224xf32>
    %cst_123 = arith.constant 0.000000e+00 : f32
    %737 = vector.broadcast %cst_123 : f32 to vector<14x224xf32>
    %738 = arith.maximumf %736, %737 : vector<14x224xf32>
    %cst_124 = arith.constant 0.000000e+00 : f32
    %739 = vector.broadcast %cst_124 : f32 to vector<14x16xf32>
    %740 = vector.extract_strided_slice %738 {offsets = [0, 0], sizes = [14, 208], strides = [1, 1]} : vector<14x224xf32> to vector<14x208xf32>
    %741 = tpu.concatenate %739, %740 in 1 : vector<14x16xf32>, vector<14x208xf32> -> vector<14x224xf32>
    %cst_125 = arith.constant 0.000000e+00 : f32
    %742 = vector.broadcast %cst_125 : f32 to vector<14x16xf32>
    %743 = vector.extract_strided_slice %738 {offsets = [0, 16], sizes = [14, 208], strides = [1, 1]} : vector<14x224xf32> to vector<14x208xf32>
    %744 = tpu.concatenate %743, %742 in 1 : vector<14x208xf32>, vector<14x16xf32> -> vector<14x224xf32>
    %745 = vector.extract_strided_slice %686 {offsets = [0, 0, 0], sizes = [1, 1, 224], strides = [1, 1, 1]} : vector<3x3x224xf32> to vector<1x1x224xf32>
    %746 = vector.shape_cast %745 : vector<1x1x224xf32> to vector<1x224xf32>
    %747 = vector.broadcast %746 : vector<1x224xf32> to vector<14x224xf32>
    %748 = arith.mulf %741, %747 : vector<14x224xf32>
    %749 = vector.extract_strided_slice %686 {offsets = [0, 1, 0], sizes = [1, 1, 224], strides = [1, 1, 1]} : vector<3x3x224xf32> to vector<1x1x224xf32>
    %750 = vector.shape_cast %749 : vector<1x1x224xf32> to vector<1x224xf32>
    %751 = vector.broadcast %750 : vector<1x224xf32> to vector<14x224xf32>
    %752 = arith.mulf %738, %751 : vector<14x224xf32>
    %753 = arith.addf %748, %752 : vector<14x224xf32>
    %754 = vector.extract_strided_slice %686 {offsets = [0, 2, 0], sizes = [1, 1, 224], strides = [1, 1, 1]} : vector<3x3x224xf32> to vector<1x1x224xf32>
    %755 = vector.shape_cast %754 : vector<1x1x224xf32> to vector<1x224xf32>
    %756 = vector.broadcast %755 : vector<1x224xf32> to vector<14x224xf32>
    %757 = arith.mulf %744, %756 : vector<14x224xf32>
    %758 = arith.addf %753, %757 : vector<14x224xf32>
    %759 = vector.extract_strided_slice %686 {offsets = [1, 0, 0], sizes = [1, 1, 224], strides = [1, 1, 1]} : vector<3x3x224xf32> to vector<1x1x224xf32>
    %760 = vector.shape_cast %759 : vector<1x1x224xf32> to vector<1x224xf32>
    %761 = vector.broadcast %760 : vector<1x224xf32> to vector<14x224xf32>
    %762 = arith.mulf %741, %761 : vector<14x224xf32>
    %763 = vector.extract_strided_slice %686 {offsets = [1, 1, 0], sizes = [1, 1, 224], strides = [1, 1, 1]} : vector<3x3x224xf32> to vector<1x1x224xf32>
    %764 = vector.shape_cast %763 : vector<1x1x224xf32> to vector<1x224xf32>
    %765 = vector.broadcast %764 : vector<1x224xf32> to vector<14x224xf32>
    %766 = arith.mulf %738, %765 : vector<14x224xf32>
    %767 = arith.addf %762, %766 : vector<14x224xf32>
    %768 = vector.extract_strided_slice %686 {offsets = [1, 2, 0], sizes = [1, 1, 224], strides = [1, 1, 1]} : vector<3x3x224xf32> to vector<1x1x224xf32>
    %769 = vector.shape_cast %768 : vector<1x1x224xf32> to vector<1x224xf32>
    %770 = vector.broadcast %769 : vector<1x224xf32> to vector<14x224xf32>
    %771 = arith.mulf %744, %770 : vector<14x224xf32>
    %772 = arith.addf %767, %771 : vector<14x224xf32>
    %773 = vector.extract_strided_slice %686 {offsets = [2, 0, 0], sizes = [1, 1, 224], strides = [1, 1, 1]} : vector<3x3x224xf32> to vector<1x1x224xf32>
    %774 = vector.shape_cast %773 : vector<1x1x224xf32> to vector<1x224xf32>
    %775 = vector.broadcast %774 : vector<1x224xf32> to vector<14x224xf32>
    %776 = arith.mulf %741, %775 : vector<14x224xf32>
    %777 = vector.extract_strided_slice %686 {offsets = [2, 1, 0], sizes = [1, 1, 224], strides = [1, 1, 1]} : vector<3x3x224xf32> to vector<1x1x224xf32>
    %778 = vector.shape_cast %777 : vector<1x1x224xf32> to vector<1x224xf32>
    %779 = vector.broadcast %778 : vector<1x224xf32> to vector<14x224xf32>
    %780 = arith.mulf %738, %779 : vector<14x224xf32>
    %781 = arith.addf %776, %780 : vector<14x224xf32>
    %782 = vector.extract_strided_slice %686 {offsets = [2, 2, 0], sizes = [1, 1, 224], strides = [1, 1, 1]} : vector<3x3x224xf32> to vector<1x1x224xf32>
    %783 = vector.shape_cast %782 : vector<1x1x224xf32> to vector<1x224xf32>
    %784 = vector.broadcast %783 : vector<1x224xf32> to vector<14x224xf32>
    %785 = arith.mulf %744, %784 : vector<14x224xf32>
    %786 = arith.addf %781, %785 : vector<14x224xf32>
    %cst_126 = arith.constant 0.000000e+00 : f32
    %787 = vector.broadcast %cst_126 : f32 to vector<1x224xf32>
    %788 = vector.extract_strided_slice %758 {offsets = [0, 0], sizes = [13, 224], strides = [1, 1]} : vector<14x224xf32> to vector<13x224xf32>
    %789 = tpu.concatenate %787, %788 in 0 : vector<1x224xf32>, vector<13x224xf32> -> vector<14x224xf32>
    %790 = arith.addf %772, %789 : vector<14x224xf32>
    %cst_127 = arith.constant 0.000000e+00 : f32
    %791 = vector.broadcast %cst_127 : f32 to vector<1x224xf32>
    %792 = vector.extract_strided_slice %786 {offsets = [1, 0], sizes = [13, 224], strides = [1, 1]} : vector<14x224xf32> to vector<13x224xf32>
    %793 = tpu.concatenate %792, %791 in 0 : vector<13x224xf32>, vector<1x224xf32> -> vector<14x224xf32>
    %794 = arith.addf %790, %793 : vector<14x224xf32>
    %795 = vector.extract_strided_slice %4 {offsets = [1, 0], sizes = [1, 224], strides = [1, 1]} : vector<2x224xf32> to vector<1x224xf32>
    %796 = vector.broadcast %795 : vector<1x224xf32> to vector<14x224xf32>
    %797 = arith.mulf %794, %796 : vector<14x224xf32>
    %798 = vector.extract_strided_slice %5 {offsets = [1, 0], sizes = [1, 224], strides = [1, 1]} : vector<2x224xf32> to vector<1x224xf32>
    %799 = vector.broadcast %798 : vector<1x224xf32> to vector<14x224xf32>
    %800 = arith.addf %797, %799 : vector<14x224xf32>
    %cst_128 = arith.constant 0.000000e+00 : f32
    %801 = vector.broadcast %cst_128 : f32 to vector<14x224xf32>
    %802 = arith.maximumf %800, %801 : vector<14x224xf32>
    %803 = tpu.concatenate %682, %802 in 1 : vector<14x224xf32>, vector<14x224xf32> -> vector<14x448xf32>
    %c2_129 = arith.constant 2 : index
    %c0_130 = arith.constant 0 : index
    %c0_131 = arith.constant 0 : index
    %804 = vector.load %arg8[%c2_129, %c0_130, %c0_131] : memref<8x14x448xf32, #tpu.memory_space<vmem>>, vector<1x14x448xf32>
    %805 = vector.shape_cast %804 : vector<1x14x448xf32> to vector<14x448xf32>
    %806 = vector.shape_cast %803 : vector<14x448xf32> to vector<1x14x448xf32>
    tpu.vector_store %arg8[%c2_129, %c0_130, %c0_131], %806 {strides = array<i32>} : memref<8x14x448xf32, #tpu.memory_space<vmem>>, vector<1x14x448xf32>,
    %c3 = arith.constant 3 : index
    %c0_132 = arith.constant 0 : index
    %c0_133 = arith.constant 0 : index
    %c0_134 = arith.constant 0 : index
    %c0_135 = arith.constant 0 : index
    %807 = vector.load %arg1[%c3, %c0_132, %c0_133, %c0_134, %c0_135] : memref<8x2x2x14x224xf32, #tpu.memory_space<vmem>>, vector<1x1x1x14x224xf32>
    %808 = vector.shape_cast %807 : vector<1x1x1x14x224xf32> to vector<14x224xf32>
    %c3_136 = arith.constant 3 : index
    %c0_137 = arith.constant 0 : index
    %c1_138 = arith.constant 1 : index
    %c0_139 = arith.constant 0 : index
    %c0_140 = arith.constant 0 : index
    %809 = vector.load %arg1[%c3_136, %c0_137, %c1_138, %c0_139, %c0_140] : memref<8x2x2x14x224xf32, #tpu.memory_space<vmem>>, vector<1x1x1x14x224xf32>
    %810 = vector.shape_cast %809 : vector<1x1x1x14x224xf32> to vector<14x224xf32>
    %c3_141 = arith.constant 3 : index
    %c1_142 = arith.constant 1 : index
    %c0_143 = arith.constant 0 : index
    %c0_144 = arith.constant 0 : index
    %c0_145 = arith.constant 0 : index
    %811 = vector.load %arg1[%c3_141, %c1_142, %c0_143, %c0_144, %c0_145] : memref<8x2x2x14x224xf32, #tpu.memory_space<vmem>>, vector<1x1x1x14x224xf32>
    %812 = vector.shape_cast %811 : vector<1x1x1x14x224xf32> to vector<14x224xf32>
    %c3_146 = arith.constant 3 : index
    %c1_147 = arith.constant 1 : index
    %c1_148 = arith.constant 1 : index
    %c0_149 = arith.constant 0 : index
    %c0_150 = arith.constant 0 : index
    %813 = vector.load %arg1[%c3_146, %c1_147, %c1_148, %c0_149, %c0_150] : memref<8x2x2x14x224xf32, #tpu.memory_space<vmem>>, vector<1x1x1x14x224xf32>
    %814 = vector.shape_cast %813 : vector<1x1x1x14x224xf32> to vector<14x224xf32>
    %cst_151 = arith.constant 0.000000e+00 : f32
    %815 = vector.broadcast %cst_151 : f32 to vector<14x16xf32>
    %816 = vector.extract_strided_slice %810 {offsets = [0, 0], sizes = [14, 208], strides = [1, 1]} : vector<14x224xf32> to vector<14x208xf32>
    %817 = tpu.concatenate %815, %816 in 1 : vector<14x16xf32>, vector<14x208xf32> -> vector<14x224xf32>
    %cst_152 = arith.constant 0.000000e+00 : f32
    %818 = vector.broadcast %cst_152 : f32 to vector<14x16xf32>
    %819 = vector.extract_strided_slice %814 {offsets = [0, 0], sizes = [14, 208], strides = [1, 1]} : vector<14x224xf32> to vector<14x208xf32>
    %820 = tpu.concatenate %818, %819 in 1 : vector<14x16xf32>, vector<14x208xf32> -> vector<14x224xf32>
    %cst_153 = arith.constant 0.000000e+00 : f32
    %821 = vector.broadcast %cst_153 : f32 to vector<1x224xf32>
    %822 = vector.extract_strided_slice %812 {offsets = [0, 0], sizes = [13, 224], strides = [1, 1]} : vector<14x224xf32> to vector<13x224xf32>
    %823 = tpu.concatenate %821, %822 in 0 : vector<1x224xf32>, vector<13x224xf32> -> vector<14x224xf32>
    %cst_154 = arith.constant 0.000000e+00 : f32
    %824 = vector.broadcast %cst_154 : f32 to vector<1x224xf32>
    %825 = vector.extract_strided_slice %814 {offsets = [0, 0], sizes = [13, 224], strides = [1, 1]} : vector<14x224xf32> to vector<13x224xf32>
    %826 = tpu.concatenate %824, %825 in 0 : vector<1x224xf32>, vector<13x224xf32> -> vector<14x224xf32>
    %cst_155 = arith.constant 0.000000e+00 : f32
    %827 = vector.broadcast %cst_155 : f32 to vector<1x224xf32>
    %828 = vector.extract_strided_slice %820 {offsets = [0, 0], sizes = [13, 224], strides = [1, 1]} : vector<14x224xf32> to vector<13x224xf32>
    %829 = tpu.concatenate %827, %828 in 0 : vector<1x224xf32>, vector<13x224xf32> -> vector<14x224xf32>
    %830 = vector.extract_strided_slice %0 {offsets = [0, 0, 0, 0], sizes = [1, 3, 3, 224], strides = [1, 1, 1, 1]} : vector<2x3x3x224xf32> to vector<1x3x3x224xf32>
    %831 = vector.shape_cast %830 : vector<1x3x3x224xf32> to vector<3x3x224xf32>
    %832 = vector.extract_strided_slice %1 {offsets = [0, 0, 0, 0], sizes = [1, 3, 3, 224], strides = [1, 1, 1, 1]} : vector<2x3x3x224xf32> to vector<1x3x3x224xf32>
    %833 = vector.shape_cast %832 : vector<1x3x3x224xf32> to vector<3x3x224xf32>
    %834 = vector.extract_strided_slice %831 {offsets = [0, 0, 0], sizes = [1, 1, 224], strides = [1, 1, 1]} : vector<3x3x224xf32> to vector<1x1x224xf32>
    %835 = vector.shape_cast %834 : vector<1x1x224xf32> to vector<1x224xf32>
    %836 = vector.broadcast %835 : vector<1x224xf32> to vector<14x224xf32>
    %837 = arith.mulf %829, %836 : vector<14x224xf32>
    %838 = vector.extract_strided_slice %831 {offsets = [0, 1, 0], sizes = [1, 1, 224], strides = [1, 1, 1]} : vector<3x3x224xf32> to vector<1x1x224xf32>
    %839 = vector.shape_cast %838 : vector<1x1x224xf32> to vector<1x224xf32>
    %840 = vector.broadcast %839 : vector<1x224xf32> to vector<14x224xf32>
    %841 = arith.mulf %823, %840 : vector<14x224xf32>
    %842 = arith.addf %837, %841 : vector<14x224xf32>
    %843 = vector.extract_strided_slice %831 {offsets = [0, 2, 0], sizes = [1, 1, 224], strides = [1, 1, 1]} : vector<3x3x224xf32> to vector<1x1x224xf32>
    %844 = vector.shape_cast %843 : vector<1x1x224xf32> to vector<1x224xf32>
    %845 = vector.broadcast %844 : vector<1x224xf32> to vector<14x224xf32>
    %846 = arith.mulf %826, %845 : vector<14x224xf32>
    %847 = arith.addf %842, %846 : vector<14x224xf32>
    %848 = vector.extract_strided_slice %831 {offsets = [1, 0, 0], sizes = [1, 1, 224], strides = [1, 1, 1]} : vector<3x3x224xf32> to vector<1x1x224xf32>
    %849 = vector.shape_cast %848 : vector<1x1x224xf32> to vector<1x224xf32>
    %850 = vector.broadcast %849 : vector<1x224xf32> to vector<14x224xf32>
    %851 = arith.mulf %817, %850 : vector<14x224xf32>
    %852 = arith.addf %847, %851 : vector<14x224xf32>
    %853 = vector.extract_strided_slice %831 {offsets = [1, 1, 0], sizes = [1, 1, 224], strides = [1, 1, 1]} : vector<3x3x224xf32> to vector<1x1x224xf32>
    %854 = vector.shape_cast %853 : vector<1x1x224xf32> to vector<1x224xf32>
    %855 = vector.broadcast %854 : vector<1x224xf32> to vector<14x224xf32>
    %856 = arith.mulf %808, %855 : vector<14x224xf32>
    %857 = arith.addf %852, %856 : vector<14x224xf32>
    %858 = vector.extract_strided_slice %831 {offsets = [1, 2, 0], sizes = [1, 1, 224], strides = [1, 1, 1]} : vector<3x3x224xf32> to vector<1x1x224xf32>
    %859 = vector.shape_cast %858 : vector<1x1x224xf32> to vector<1x224xf32>
    %860 = vector.broadcast %859 : vector<1x224xf32> to vector<14x224xf32>
    %861 = arith.mulf %810, %860 : vector<14x224xf32>
    %862 = arith.addf %857, %861 : vector<14x224xf32>
    %863 = vector.extract_strided_slice %831 {offsets = [2, 0, 0], sizes = [1, 1, 224], strides = [1, 1, 1]} : vector<3x3x224xf32> to vector<1x1x224xf32>
    %864 = vector.shape_cast %863 : vector<1x1x224xf32> to vector<1x224xf32>
    %865 = vector.broadcast %864 : vector<1x224xf32> to vector<14x224xf32>
    %866 = arith.mulf %820, %865 : vector<14x224xf32>
    %867 = arith.addf %862, %866 : vector<14x224xf32>
    %868 = vector.extract_strided_slice %831 {offsets = [2, 1, 0], sizes = [1, 1, 224], strides = [1, 1, 1]} : vector<3x3x224xf32> to vector<1x1x224xf32>
    %869 = vector.shape_cast %868 : vector<1x1x224xf32> to vector<1x224xf32>
    %870 = vector.broadcast %869 : vector<1x224xf32> to vector<14x224xf32>
    %871 = arith.mulf %812, %870 : vector<14x224xf32>
    %872 = arith.addf %867, %871 : vector<14x224xf32>
    %873 = vector.extract_strided_slice %831 {offsets = [2, 2, 0], sizes = [1, 1, 224], strides = [1, 1, 1]} : vector<3x3x224xf32> to vector<1x1x224xf32>
    %874 = vector.shape_cast %873 : vector<1x1x224xf32> to vector<1x224xf32>
    %875 = vector.broadcast %874 : vector<1x224xf32> to vector<14x224xf32>
    %876 = arith.mulf %814, %875 : vector<14x224xf32>
    %877 = arith.addf %872, %876 : vector<14x224xf32>
    %878 = vector.extract_strided_slice %2 {offsets = [0, 0], sizes = [1, 224], strides = [1, 1]} : vector<2x224xf32> to vector<1x224xf32>
    %879 = vector.broadcast %878 : vector<1x224xf32> to vector<14x224xf32>
    %880 = arith.mulf %877, %879 : vector<14x224xf32>
    %881 = vector.extract_strided_slice %3 {offsets = [0, 0], sizes = [1, 224], strides = [1, 1]} : vector<2x224xf32> to vector<1x224xf32>
    %882 = vector.broadcast %881 : vector<1x224xf32> to vector<14x224xf32>
    %883 = arith.addf %880, %882 : vector<14x224xf32>
    %cst_156 = arith.constant 0.000000e+00 : f32
    %884 = vector.broadcast %cst_156 : f32 to vector<14x224xf32>
    %885 = arith.maximumf %883, %884 : vector<14x224xf32>
    %cst_157 = arith.constant 0.000000e+00 : f32
    %886 = vector.broadcast %cst_157 : f32 to vector<14x16xf32>
    %887 = vector.extract_strided_slice %885 {offsets = [0, 0], sizes = [14, 208], strides = [1, 1]} : vector<14x224xf32> to vector<14x208xf32>
    %888 = tpu.concatenate %886, %887 in 1 : vector<14x16xf32>, vector<14x208xf32> -> vector<14x224xf32>
    %cst_158 = arith.constant 0.000000e+00 : f32
    %889 = vector.broadcast %cst_158 : f32 to vector<14x16xf32>
    %890 = vector.extract_strided_slice %885 {offsets = [0, 16], sizes = [14, 208], strides = [1, 1]} : vector<14x224xf32> to vector<14x208xf32>
    %891 = tpu.concatenate %890, %889 in 1 : vector<14x208xf32>, vector<14x16xf32> -> vector<14x224xf32>
    %892 = vector.extract_strided_slice %833 {offsets = [0, 0, 0], sizes = [1, 1, 224], strides = [1, 1, 1]} : vector<3x3x224xf32> to vector<1x1x224xf32>
    %893 = vector.shape_cast %892 : vector<1x1x224xf32> to vector<1x224xf32>
    %894 = vector.broadcast %893 : vector<1x224xf32> to vector<14x224xf32>
    %895 = arith.mulf %888, %894 : vector<14x224xf32>
    %896 = vector.extract_strided_slice %833 {offsets = [0, 1, 0], sizes = [1, 1, 224], strides = [1, 1, 1]} : vector<3x3x224xf32> to vector<1x1x224xf32>
    %897 = vector.shape_cast %896 : vector<1x1x224xf32> to vector<1x224xf32>
    %898 = vector.broadcast %897 : vector<1x224xf32> to vector<14x224xf32>
    %899 = arith.mulf %885, %898 : vector<14x224xf32>
    %900 = arith.addf %895, %899 : vector<14x224xf32>
    %901 = vector.extract_strided_slice %833 {offsets = [0, 2, 0], sizes = [1, 1, 224], strides = [1, 1, 1]} : vector<3x3x224xf32> to vector<1x1x224xf32>
    %902 = vector.shape_cast %901 : vector<1x1x224xf32> to vector<1x224xf32>
    %903 = vector.broadcast %902 : vector<1x224xf32> to vector<14x224xf32>
    %904 = arith.mulf %891, %903 : vector<14x224xf32>
    %905 = arith.addf %900, %904 : vector<14x224xf32>
    %906 = vector.extract_strided_slice %833 {offsets = [1, 0, 0], sizes = [1, 1, 224], strides = [1, 1, 1]} : vector<3x3x224xf32> to vector<1x1x224xf32>
    %907 = vector.shape_cast %906 : vector<1x1x224xf32> to vector<1x224xf32>
    %908 = vector.broadcast %907 : vector<1x224xf32> to vector<14x224xf32>
    %909 = arith.mulf %888, %908 : vector<14x224xf32>
    %910 = vector.extract_strided_slice %833 {offsets = [1, 1, 0], sizes = [1, 1, 224], strides = [1, 1, 1]} : vector<3x3x224xf32> to vector<1x1x224xf32>
    %911 = vector.shape_cast %910 : vector<1x1x224xf32> to vector<1x224xf32>
    %912 = vector.broadcast %911 : vector<1x224xf32> to vector<14x224xf32>
    %913 = arith.mulf %885, %912 : vector<14x224xf32>
    %914 = arith.addf %909, %913 : vector<14x224xf32>
    %915 = vector.extract_strided_slice %833 {offsets = [1, 2, 0], sizes = [1, 1, 224], strides = [1, 1, 1]} : vector<3x3x224xf32> to vector<1x1x224xf32>
    %916 = vector.shape_cast %915 : vector<1x1x224xf32> to vector<1x224xf32>
    %917 = vector.broadcast %916 : vector<1x224xf32> to vector<14x224xf32>
    %918 = arith.mulf %891, %917 : vector<14x224xf32>
    %919 = arith.addf %914, %918 : vector<14x224xf32>
    %920 = vector.extract_strided_slice %833 {offsets = [2, 0, 0], sizes = [1, 1, 224], strides = [1, 1, 1]} : vector<3x3x224xf32> to vector<1x1x224xf32>
    %921 = vector.shape_cast %920 : vector<1x1x224xf32> to vector<1x224xf32>
    %922 = vector.broadcast %921 : vector<1x224xf32> to vector<14x224xf32>
    %923 = arith.mulf %888, %922 : vector<14x224xf32>
    %924 = vector.extract_strided_slice %833 {offsets = [2, 1, 0], sizes = [1, 1, 224], strides = [1, 1, 1]} : vector<3x3x224xf32> to vector<1x1x224xf32>
    %925 = vector.shape_cast %924 : vector<1x1x224xf32> to vector<1x224xf32>
    %926 = vector.broadcast %925 : vector<1x224xf32> to vector<14x224xf32>
    %927 = arith.mulf %885, %926 : vector<14x224xf32>
    %928 = arith.addf %923, %927 : vector<14x224xf32>
    %929 = vector.extract_strided_slice %833 {offsets = [2, 2, 0], sizes = [1, 1, 224], strides = [1, 1, 1]} : vector<3x3x224xf32> to vector<1x1x224xf32>
    %930 = vector.shape_cast %929 : vector<1x1x224xf32> to vector<1x224xf32>
    %931 = vector.broadcast %930 : vector<1x224xf32> to vector<14x224xf32>
    %932 = arith.mulf %891, %931 : vector<14x224xf32>
    %933 = arith.addf %928, %932 : vector<14x224xf32>
    %cst_159 = arith.constant 0.000000e+00 : f32
    %934 = vector.broadcast %cst_159 : f32 to vector<1x224xf32>
    %935 = vector.extract_strided_slice %905 {offsets = [0, 0], sizes = [13, 224], strides = [1, 1]} : vector<14x224xf32> to vector<13x224xf32>
    %936 = tpu.concatenate %934, %935 in 0 : vector<1x224xf32>, vector<13x224xf32> -> vector<14x224xf32>
    %937 = arith.addf %919, %936 : vector<14x224xf32>
    %cst_160 = arith.constant 0.000000e+00 : f32
    %938 = vector.broadcast %cst_160 : f32 to vector<1x224xf32>
    %939 = vector.extract_strided_slice %933 {offsets = [1, 0], sizes = [13, 224], strides = [1, 1]} : vector<14x224xf32> to vector<13x224xf32>
    %940 = tpu.concatenate %939, %938 in 0 : vector<13x224xf32>, vector<1x224xf32> -> vector<14x224xf32>
    %941 = arith.addf %937, %940 : vector<14x224xf32>
    %942 = vector.extract_strided_slice %4 {offsets = [0, 0], sizes = [1, 224], strides = [1, 1]} : vector<2x224xf32> to vector<1x224xf32>
    %943 = vector.broadcast %942 : vector<1x224xf32> to vector<14x224xf32>
    %944 = arith.mulf %941, %943 : vector<14x224xf32>
    %945 = vector.extract_strided_slice %5 {offsets = [0, 0], sizes = [1, 224], strides = [1, 1]} : vector<2x224xf32> to vector<1x224xf32>
    %946 = vector.broadcast %945 : vector<1x224xf32> to vector<14x224xf32>
    %947 = arith.addf %944, %946 : vector<14x224xf32>
    %cst_161 = arith.constant 0.000000e+00 : f32
    %948 = vector.broadcast %cst_161 : f32 to vector<14x224xf32>
    %949 = arith.maximumf %947, %948 : vector<14x224xf32>
    %950 = vector.extract_strided_slice %0 {offsets = [1, 0, 0, 0], sizes = [1, 3, 3, 224], strides = [1, 1, 1, 1]} : vector<2x3x3x224xf32> to vector<1x3x3x224xf32>
    %951 = vector.shape_cast %950 : vector<1x3x3x224xf32> to vector<3x3x224xf32>
    %952 = vector.extract_strided_slice %1 {offsets = [1, 0, 0, 0], sizes = [1, 3, 3, 224], strides = [1, 1, 1, 1]} : vector<2x3x3x224xf32> to vector<1x3x3x224xf32>
    %953 = vector.shape_cast %952 : vector<1x3x3x224xf32> to vector<3x3x224xf32>
    %954 = vector.extract_strided_slice %951 {offsets = [0, 0, 0], sizes = [1, 1, 224], strides = [1, 1, 1]} : vector<3x3x224xf32> to vector<1x1x224xf32>
    %955 = vector.shape_cast %954 : vector<1x1x224xf32> to vector<1x224xf32>
    %956 = vector.broadcast %955 : vector<1x224xf32> to vector<14x224xf32>
    %957 = arith.mulf %829, %956 : vector<14x224xf32>
    %958 = vector.extract_strided_slice %951 {offsets = [0, 1, 0], sizes = [1, 1, 224], strides = [1, 1, 1]} : vector<3x3x224xf32> to vector<1x1x224xf32>
    %959 = vector.shape_cast %958 : vector<1x1x224xf32> to vector<1x224xf32>
    %960 = vector.broadcast %959 : vector<1x224xf32> to vector<14x224xf32>
    %961 = arith.mulf %823, %960 : vector<14x224xf32>
    %962 = arith.addf %957, %961 : vector<14x224xf32>
    %963 = vector.extract_strided_slice %951 {offsets = [0, 2, 0], sizes = [1, 1, 224], strides = [1, 1, 1]} : vector<3x3x224xf32> to vector<1x1x224xf32>
    %964 = vector.shape_cast %963 : vector<1x1x224xf32> to vector<1x224xf32>
    %965 = vector.broadcast %964 : vector<1x224xf32> to vector<14x224xf32>
    %966 = arith.mulf %826, %965 : vector<14x224xf32>
    %967 = arith.addf %962, %966 : vector<14x224xf32>
    %968 = vector.extract_strided_slice %951 {offsets = [1, 0, 0], sizes = [1, 1, 224], strides = [1, 1, 1]} : vector<3x3x224xf32> to vector<1x1x224xf32>
    %969 = vector.shape_cast %968 : vector<1x1x224xf32> to vector<1x224xf32>
    %970 = vector.broadcast %969 : vector<1x224xf32> to vector<14x224xf32>
    %971 = arith.mulf %817, %970 : vector<14x224xf32>
    %972 = arith.addf %967, %971 : vector<14x224xf32>
    %973 = vector.extract_strided_slice %951 {offsets = [1, 1, 0], sizes = [1, 1, 224], strides = [1, 1, 1]} : vector<3x3x224xf32> to vector<1x1x224xf32>
    %974 = vector.shape_cast %973 : vector<1x1x224xf32> to vector<1x224xf32>
    %975 = vector.broadcast %974 : vector<1x224xf32> to vector<14x224xf32>
    %976 = arith.mulf %808, %975 : vector<14x224xf32>
    %977 = arith.addf %972, %976 : vector<14x224xf32>
    %978 = vector.extract_strided_slice %951 {offsets = [1, 2, 0], sizes = [1, 1, 224], strides = [1, 1, 1]} : vector<3x3x224xf32> to vector<1x1x224xf32>
    %979 = vector.shape_cast %978 : vector<1x1x224xf32> to vector<1x224xf32>
    %980 = vector.broadcast %979 : vector<1x224xf32> to vector<14x224xf32>
    %981 = arith.mulf %810, %980 : vector<14x224xf32>
    %982 = arith.addf %977, %981 : vector<14x224xf32>
    %983 = vector.extract_strided_slice %951 {offsets = [2, 0, 0], sizes = [1, 1, 224], strides = [1, 1, 1]} : vector<3x3x224xf32> to vector<1x1x224xf32>
    %984 = vector.shape_cast %983 : vector<1x1x224xf32> to vector<1x224xf32>
    %985 = vector.broadcast %984 : vector<1x224xf32> to vector<14x224xf32>
    %986 = arith.mulf %820, %985 : vector<14x224xf32>
    %987 = arith.addf %982, %986 : vector<14x224xf32>
    %988 = vector.extract_strided_slice %951 {offsets = [2, 1, 0], sizes = [1, 1, 224], strides = [1, 1, 1]} : vector<3x3x224xf32> to vector<1x1x224xf32>
    %989 = vector.shape_cast %988 : vector<1x1x224xf32> to vector<1x224xf32>
    %990 = vector.broadcast %989 : vector<1x224xf32> to vector<14x224xf32>
    %991 = arith.mulf %812, %990 : vector<14x224xf32>
    %992 = arith.addf %987, %991 : vector<14x224xf32>
    %993 = vector.extract_strided_slice %951 {offsets = [2, 2, 0], sizes = [1, 1, 224], strides = [1, 1, 1]} : vector<3x3x224xf32> to vector<1x1x224xf32>
    %994 = vector.shape_cast %993 : vector<1x1x224xf32> to vector<1x224xf32>
    %995 = vector.broadcast %994 : vector<1x224xf32> to vector<14x224xf32>
    %996 = arith.mulf %814, %995 : vector<14x224xf32>
    %997 = arith.addf %992, %996 : vector<14x224xf32>
    %998 = vector.extract_strided_slice %2 {offsets = [1, 0], sizes = [1, 224], strides = [1, 1]} : vector<2x224xf32> to vector<1x224xf32>
    %999 = vector.broadcast %998 : vector<1x224xf32> to vector<14x224xf32>
    %1000 = arith.mulf %997, %999 : vector<14x224xf32>
    %1001 = vector.extract_strided_slice %3 {offsets = [1, 0], sizes = [1, 224], strides = [1, 1]} : vector<2x224xf32> to vector<1x224xf32>
    %1002 = vector.broadcast %1001 : vector<1x224xf32> to vector<14x224xf32>
    %1003 = arith.addf %1000, %1002 : vector<14x224xf32>
    %cst_162 = arith.constant 0.000000e+00 : f32
    %1004 = vector.broadcast %cst_162 : f32 to vector<14x224xf32>
    %1005 = arith.maximumf %1003, %1004 : vector<14x224xf32>
    %cst_163 = arith.constant 0.000000e+00 : f32
    %1006 = vector.broadcast %cst_163 : f32 to vector<14x16xf32>
    %1007 = vector.extract_strided_slice %1005 {offsets = [0, 0], sizes = [14, 208], strides = [1, 1]} : vector<14x224xf32> to vector<14x208xf32>
    %1008 = tpu.concatenate %1006, %1007 in 1 : vector<14x16xf32>, vector<14x208xf32> -> vector<14x224xf32>
    %cst_164 = arith.constant 0.000000e+00 : f32
    %1009 = vector.broadcast %cst_164 : f32 to vector<14x16xf32>
    %1010 = vector.extract_strided_slice %1005 {offsets = [0, 16], sizes = [14, 208], strides = [1, 1]} : vector<14x224xf32> to vector<14x208xf32>
    %1011 = tpu.concatenate %1010, %1009 in 1 : vector<14x208xf32>, vector<14x16xf32> -> vector<14x224xf32>
    %1012 = vector.extract_strided_slice %953 {offsets = [0, 0, 0], sizes = [1, 1, 224], strides = [1, 1, 1]} : vector<3x3x224xf32> to vector<1x1x224xf32>
    %1013 = vector.shape_cast %1012 : vector<1x1x224xf32> to vector<1x224xf32>
    %1014 = vector.broadcast %1013 : vector<1x224xf32> to vector<14x224xf32>
    %1015 = arith.mulf %1008, %1014 : vector<14x224xf32>
    %1016 = vector.extract_strided_slice %953 {offsets = [0, 1, 0], sizes = [1, 1, 224], strides = [1, 1, 1]} : vector<3x3x224xf32> to vector<1x1x224xf32>
    %1017 = vector.shape_cast %1016 : vector<1x1x224xf32> to vector<1x224xf32>
    %1018 = vector.broadcast %1017 : vector<1x224xf32> to vector<14x224xf32>
    %1019 = arith.mulf %1005, %1018 : vector<14x224xf32>
    %1020 = arith.addf %1015, %1019 : vector<14x224xf32>
    %1021 = vector.extract_strided_slice %953 {offsets = [0, 2, 0], sizes = [1, 1, 224], strides = [1, 1, 1]} : vector<3x3x224xf32> to vector<1x1x224xf32>
    %1022 = vector.shape_cast %1021 : vector<1x1x224xf32> to vector<1x224xf32>
    %1023 = vector.broadcast %1022 : vector<1x224xf32> to vector<14x224xf32>
    %1024 = arith.mulf %1011, %1023 : vector<14x224xf32>
    %1025 = arith.addf %1020, %1024 : vector<14x224xf32>
    %1026 = vector.extract_strided_slice %953 {offsets = [1, 0, 0], sizes = [1, 1, 224], strides = [1, 1, 1]} : vector<3x3x224xf32> to vector<1x1x224xf32>
    %1027 = vector.shape_cast %1026 : vector<1x1x224xf32> to vector<1x224xf32>
    %1028 = vector.broadcast %1027 : vector<1x224xf32> to vector<14x224xf32>
    %1029 = arith.mulf %1008, %1028 : vector<14x224xf32>
    %1030 = vector.extract_strided_slice %953 {offsets = [1, 1, 0], sizes = [1, 1, 224], strides = [1, 1, 1]} : vector<3x3x224xf32> to vector<1x1x224xf32>
    %1031 = vector.shape_cast %1030 : vector<1x1x224xf32> to vector<1x224xf32>
    %1032 = vector.broadcast %1031 : vector<1x224xf32> to vector<14x224xf32>
    %1033 = arith.mulf %1005, %1032 : vector<14x224xf32>
    %1034 = arith.addf %1029, %1033 : vector<14x224xf32>
    %1035 = vector.extract_strided_slice %953 {offsets = [1, 2, 0], sizes = [1, 1, 224], strides = [1, 1, 1]} : vector<3x3x224xf32> to vector<1x1x224xf32>
    %1036 = vector.shape_cast %1035 : vector<1x1x224xf32> to vector<1x224xf32>
    %1037 = vector.broadcast %1036 : vector<1x224xf32> to vector<14x224xf32>
    %1038 = arith.mulf %1011, %1037 : vector<14x224xf32>
    %1039 = arith.addf %1034, %1038 : vector<14x224xf32>
    %1040 = vector.extract_strided_slice %953 {offsets = [2, 0, 0], sizes = [1, 1, 224], strides = [1, 1, 1]} : vector<3x3x224xf32> to vector<1x1x224xf32>
    %1041 = vector.shape_cast %1040 : vector<1x1x224xf32> to vector<1x224xf32>
    %1042 = vector.broadcast %1041 : vector<1x224xf32> to vector<14x224xf32>
    %1043 = arith.mulf %1008, %1042 : vector<14x224xf32>
    %1044 = vector.extract_strided_slice %953 {offsets = [2, 1, 0], sizes = [1, 1, 224], strides = [1, 1, 1]} : vector<3x3x224xf32> to vector<1x1x224xf32>
    %1045 = vector.shape_cast %1044 : vector<1x1x224xf32> to vector<1x224xf32>
    %1046 = vector.broadcast %1045 : vector<1x224xf32> to vector<14x224xf32>
    %1047 = arith.mulf %1005, %1046 : vector<14x224xf32>
    %1048 = arith.addf %1043, %1047 : vector<14x224xf32>
    %1049 = vector.extract_strided_slice %953 {offsets = [2, 2, 0], sizes = [1, 1, 224], strides = [1, 1, 1]} : vector<3x3x224xf32> to vector<1x1x224xf32>
    %1050 = vector.shape_cast %1049 : vector<1x1x224xf32> to vector<1x224xf32>
    %1051 = vector.broadcast %1050 : vector<1x224xf32> to vector<14x224xf32>
    %1052 = arith.mulf %1011, %1051 : vector<14x224xf32>
    %1053 = arith.addf %1048, %1052 : vector<14x224xf32>
    %cst_165 = arith.constant 0.000000e+00 : f32
    %1054 = vector.broadcast %cst_165 : f32 to vector<1x224xf32>
    %1055 = vector.extract_strided_slice %1025 {offsets = [0, 0], sizes = [13, 224], strides = [1, 1]} : vector<14x224xf32> to vector<13x224xf32>
    %1056 = tpu.concatenate %1054, %1055 in 0 : vector<1x224xf32>, vector<13x224xf32> -> vector<14x224xf32>
    %1057 = arith.addf %1039, %1056 : vector<14x224xf32>
    %cst_166 = arith.constant 0.000000e+00 : f32
    %1058 = vector.broadcast %cst_166 : f32 to vector<1x224xf32>
    %1059 = vector.extract_strided_slice %1053 {offsets = [1, 0], sizes = [13, 224], strides = [1, 1]} : vector<14x224xf32> to vector<13x224xf32>
    %1060 = tpu.concatenate %1059, %1058 in 0 : vector<13x224xf32>, vector<1x224xf32> -> vector<14x224xf32>
    %1061 = arith.addf %1057, %1060 : vector<14x224xf32>
    %1062 = vector.extract_strided_slice %4 {offsets = [1, 0], sizes = [1, 224], strides = [1, 1]} : vector<2x224xf32> to vector<1x224xf32>
    %1063 = vector.broadcast %1062 : vector<1x224xf32> to vector<14x224xf32>
    %1064 = arith.mulf %1061, %1063 : vector<14x224xf32>
    %1065 = vector.extract_strided_slice %5 {offsets = [1, 0], sizes = [1, 224], strides = [1, 1]} : vector<2x224xf32> to vector<1x224xf32>
    %1066 = vector.broadcast %1065 : vector<1x224xf32> to vector<14x224xf32>
    %1067 = arith.addf %1064, %1066 : vector<14x224xf32>
    %cst_167 = arith.constant 0.000000e+00 : f32
    %1068 = vector.broadcast %cst_167 : f32 to vector<14x224xf32>
    %1069 = arith.maximumf %1067, %1068 : vector<14x224xf32>
    %1070 = tpu.concatenate %949, %1069 in 1 : vector<14x224xf32>, vector<14x224xf32> -> vector<14x448xf32>
    %c3_168 = arith.constant 3 : index
    %c0_169 = arith.constant 0 : index
    %c0_170 = arith.constant 0 : index
    %1071 = vector.load %arg8[%c3_168, %c0_169, %c0_170] : memref<8x14x448xf32, #tpu.memory_space<vmem>>, vector<1x14x448xf32>
    %1072 = vector.shape_cast %1071 : vector<1x14x448xf32> to vector<14x448xf32>
    %1073 = vector.shape_cast %1070 : vector<14x448xf32> to vector<1x14x448xf32>
    tpu.vector_store %arg8[%c3_168, %c0_169, %c0_170], %1073 {strides = array<i32>} : memref<8x14x448xf32, #tpu.memory_space<vmem>>, vector<1x14x448xf32>,
    %c4 = arith.constant 4 : index
    %c0_171 = arith.constant 0 : index
    %c0_172 = arith.constant 0 : index
    %c0_173 = arith.constant 0 : index
    %c0_174 = arith.constant 0 : index
    %1074 = vector.load %arg1[%c4, %c0_171, %c0_172, %c0_173, %c0_174] : memref<8x2x2x14x224xf32, #tpu.memory_space<vmem>>, vector<1x1x1x14x224xf32>
    %1075 = vector.shape_cast %1074 : vector<1x1x1x14x224xf32> to vector<14x224xf32>
    %c4_175 = arith.constant 4 : index
    %c0_176 = arith.constant 0 : index
    %c1_177 = arith.constant 1 : index
    %c0_178 = arith.constant 0 : index
    %c0_179 = arith.constant 0 : index
    %1076 = vector.load %arg1[%c4_175, %c0_176, %c1_177, %c0_178, %c0_179] : memref<8x2x2x14x224xf32, #tpu.memory_space<vmem>>, vector<1x1x1x14x224xf32>
    %1077 = vector.shape_cast %1076 : vector<1x1x1x14x224xf32> to vector<14x224xf32>
    %c4_180 = arith.constant 4 : index
    %c1_181 = arith.constant 1 : index
    %c0_182 = arith.constant 0 : index
    %c0_183 = arith.constant 0 : index
    %c0_184 = arith.constant 0 : index
    %1078 = vector.load %arg1[%c4_180, %c1_181, %c0_182, %c0_183, %c0_184] : memref<8x2x2x14x224xf32, #tpu.memory_space<vmem>>, vector<1x1x1x14x224xf32>
    %1079 = vector.shape_cast %1078 : vector<1x1x1x14x224xf32> to vector<14x224xf32>
    %c4_185 = arith.constant 4 : index
    %c1_186 = arith.constant 1 : index
    %c1_187 = arith.constant 1 : index
    %c0_188 = arith.constant 0 : index
    %c0_189 = arith.constant 0 : index
    %1080 = vector.load %arg1[%c4_185, %c1_186, %c1_187, %c0_188, %c0_189] : memref<8x2x2x14x224xf32, #tpu.memory_space<vmem>>, vector<1x1x1x14x224xf32>
    %1081 = vector.shape_cast %1080 : vector<1x1x1x14x224xf32> to vector<14x224xf32>
    %cst_190 = arith.constant 0.000000e+00 : f32
    %1082 = vector.broadcast %cst_190 : f32 to vector<14x16xf32>
    %1083 = vector.extract_strided_slice %1077 {offsets = [0, 0], sizes = [14, 208], strides = [1, 1]} : vector<14x224xf32> to vector<14x208xf32>
    %1084 = tpu.concatenate %1082, %1083 in 1 : vector<14x16xf32>, vector<14x208xf32> -> vector<14x224xf32>
    %cst_191 = arith.constant 0.000000e+00 : f32
    %1085 = vector.broadcast %cst_191 : f32 to vector<14x16xf32>
    %1086 = vector.extract_strided_slice %1081 {offsets = [0, 0], sizes = [14, 208], strides = [1, 1]} : vector<14x224xf32> to vector<14x208xf32>
    %1087 = tpu.concatenate %1085, %1086 in 1 : vector<14x16xf32>, vector<14x208xf32> -> vector<14x224xf32>
    %cst_192 = arith.constant 0.000000e+00 : f32
    %1088 = vector.broadcast %cst_192 : f32 to vector<1x224xf32>
    %1089 = vector.extract_strided_slice %1079 {offsets = [0, 0], sizes = [13, 224], strides = [1, 1]} : vector<14x224xf32> to vector<13x224xf32>
    %1090 = tpu.concatenate %1088, %1089 in 0 : vector<1x224xf32>, vector<13x224xf32> -> vector<14x224xf32>
    %cst_193 = arith.constant 0.000000e+00 : f32
    %1091 = vector.broadcast %cst_193 : f32 to vector<1x224xf32>
    %1092 = vector.extract_strided_slice %1081 {offsets = [0, 0], sizes = [13, 224], strides = [1, 1]} : vector<14x224xf32> to vector<13x224xf32>
    %1093 = tpu.concatenate %1091, %1092 in 0 : vector<1x224xf32>, vector<13x224xf32> -> vector<14x224xf32>
    %cst_194 = arith.constant 0.000000e+00 : f32
    %1094 = vector.broadcast %cst_194 : f32 to vector<1x224xf32>
    %1095 = vector.extract_strided_slice %1087 {offsets = [0, 0], sizes = [13, 224], strides = [1, 1]} : vector<14x224xf32> to vector<13x224xf32>
    %1096 = tpu.concatenate %1094, %1095 in 0 : vector<1x224xf32>, vector<13x224xf32> -> vector<14x224xf32>
    %1097 = vector.extract_strided_slice %0 {offsets = [0, 0, 0, 0], sizes = [1, 3, 3, 224], strides = [1, 1, 1, 1]} : vector<2x3x3x224xf32> to vector<1x3x3x224xf32>
    %1098 = vector.shape_cast %1097 : vector<1x3x3x224xf32> to vector<3x3x224xf32>
    %1099 = vector.extract_strided_slice %1 {offsets = [0, 0, 0, 0], sizes = [1, 3, 3, 224], strides = [1, 1, 1, 1]} : vector<2x3x3x224xf32> to vector<1x3x3x224xf32>
    %1100 = vector.shape_cast %1099 : vector<1x3x3x224xf32> to vector<3x3x224xf32>
    %1101 = vector.extract_strided_slice %1098 {offsets = [0, 0, 0], sizes = [1, 1, 224], strides = [1, 1, 1]} : vector<3x3x224xf32> to vector<1x1x224xf32>
    %1102 = vector.shape_cast %1101 : vector<1x1x224xf32> to vector<1x224xf32>
    %1103 = vector.broadcast %1102 : vector<1x224xf32> to vector<14x224xf32>
    %1104 = arith.mulf %1096, %1103 : vector<14x224xf32>
    %1105 = vector.extract_strided_slice %1098 {offsets = [0, 1, 0], sizes = [1, 1, 224], strides = [1, 1, 1]} : vector<3x3x224xf32> to vector<1x1x224xf32>
    %1106 = vector.shape_cast %1105 : vector<1x1x224xf32> to vector<1x224xf32>
    %1107 = vector.broadcast %1106 : vector<1x224xf32> to vector<14x224xf32>
    %1108 = arith.mulf %1090, %1107 : vector<14x224xf32>
    %1109 = arith.addf %1104, %1108 : vector<14x224xf32>
    %1110 = vector.extract_strided_slice %1098 {offsets = [0, 2, 0], sizes = [1, 1, 224], strides = [1, 1, 1]} : vector<3x3x224xf32> to vector<1x1x224xf32>
    %1111 = vector.shape_cast %1110 : vector<1x1x224xf32> to vector<1x224xf32>
    %1112 = vector.broadcast %1111 : vector<1x224xf32> to vector<14x224xf32>
    %1113 = arith.mulf %1093, %1112 : vector<14x224xf32>
    %1114 = arith.addf %1109, %1113 : vector<14x224xf32>
    %1115 = vector.extract_strided_slice %1098 {offsets = [1, 0, 0], sizes = [1, 1, 224], strides = [1, 1, 1]} : vector<3x3x224xf32> to vector<1x1x224xf32>
    %1116 = vector.shape_cast %1115 : vector<1x1x224xf32> to vector<1x224xf32>
    %1117 = vector.broadcast %1116 : vector<1x224xf32> to vector<14x224xf32>
    %1118 = arith.mulf %1084, %1117 : vector<14x224xf32>
    %1119 = arith.addf %1114, %1118 : vector<14x224xf32>
    %1120 = vector.extract_strided_slice %1098 {offsets = [1, 1, 0], sizes = [1, 1, 224], strides = [1, 1, 1]} : vector<3x3x224xf32> to vector<1x1x224xf32>
    %1121 = vector.shape_cast %1120 : vector<1x1x224xf32> to vector<1x224xf32>
    %1122 = vector.broadcast %1121 : vector<1x224xf32> to vector<14x224xf32>
    %1123 = arith.mulf %1075, %1122 : vector<14x224xf32>
    %1124 = arith.addf %1119, %1123 : vector<14x224xf32>
    %1125 = vector.extract_strided_slice %1098 {offsets = [1, 2, 0], sizes = [1, 1, 224], strides = [1, 1, 1]} : vector<3x3x224xf32> to vector<1x1x224xf32>
    %1126 = vector.shape_cast %1125 : vector<1x1x224xf32> to vector<1x224xf32>
    %1127 = vector.broadcast %1126 : vector<1x224xf32> to vector<14x224xf32>
    %1128 = arith.mulf %1077, %1127 : vector<14x224xf32>
    %1129 = arith.addf %1124, %1128 : vector<14x224xf32>
    %1130 = vector.extract_strided_slice %1098 {offsets = [2, 0, 0], sizes = [1, 1, 224], strides = [1, 1, 1]} : vector<3x3x224xf32> to vector<1x1x224xf32>
    %1131 = vector.shape_cast %1130 : vector<1x1x224xf32> to vector<1x224xf32>
    %1132 = vector.broadcast %1131 : vector<1x224xf32> to vector<14x224xf32>
    %1133 = arith.mulf %1087, %1132 : vector<14x224xf32>
    %1134 = arith.addf %1129, %1133 : vector<14x224xf32>
    %1135 = vector.extract_strided_slice %1098 {offsets = [2, 1, 0], sizes = [1, 1, 224], strides = [1, 1, 1]} : vector<3x3x224xf32> to vector<1x1x224xf32>
    %1136 = vector.shape_cast %1135 : vector<1x1x224xf32> to vector<1x224xf32>
    %1137 = vector.broadcast %1136 : vector<1x224xf32> to vector<14x224xf32>
    %1138 = arith.mulf %1079, %1137 : vector<14x224xf32>
    %1139 = arith.addf %1134, %1138 : vector<14x224xf32>
    %1140 = vector.extract_strided_slice %1098 {offsets = [2, 2, 0], sizes = [1, 1, 224], strides = [1, 1, 1]} : vector<3x3x224xf32> to vector<1x1x224xf32>
    %1141 = vector.shape_cast %1140 : vector<1x1x224xf32> to vector<1x224xf32>
    %1142 = vector.broadcast %1141 : vector<1x224xf32> to vector<14x224xf32>
    %1143 = arith.mulf %1081, %1142 : vector<14x224xf32>
    %1144 = arith.addf %1139, %1143 : vector<14x224xf32>
    %1145 = vector.extract_strided_slice %2 {offsets = [0, 0], sizes = [1, 224], strides = [1, 1]} : vector<2x224xf32> to vector<1x224xf32>
    %1146 = vector.broadcast %1145 : vector<1x224xf32> to vector<14x224xf32>
    %1147 = arith.mulf %1144, %1146 : vector<14x224xf32>
    %1148 = vector.extract_strided_slice %3 {offsets = [0, 0], sizes = [1, 224], strides = [1, 1]} : vector<2x224xf32> to vector<1x224xf32>
    %1149 = vector.broadcast %1148 : vector<1x224xf32> to vector<14x224xf32>
    %1150 = arith.addf %1147, %1149 : vector<14x224xf32>
    %cst_195 = arith.constant 0.000000e+00 : f32
    %1151 = vector.broadcast %cst_195 : f32 to vector<14x224xf32>
    %1152 = arith.maximumf %1150, %1151 : vector<14x224xf32>
    %cst_196 = arith.constant 0.000000e+00 : f32
    %1153 = vector.broadcast %cst_196 : f32 to vector<14x16xf32>
    %1154 = vector.extract_strided_slice %1152 {offsets = [0, 0], sizes = [14, 208], strides = [1, 1]} : vector<14x224xf32> to vector<14x208xf32>
    %1155 = tpu.concatenate %1153, %1154 in 1 : vector<14x16xf32>, vector<14x208xf32> -> vector<14x224xf32>
    %cst_197 = arith.constant 0.000000e+00 : f32
    %1156 = vector.broadcast %cst_197 : f32 to vector<14x16xf32>
    %1157 = vector.extract_strided_slice %1152 {offsets = [0, 16], sizes = [14, 208], strides = [1, 1]} : vector<14x224xf32> to vector<14x208xf32>
    %1158 = tpu.concatenate %1157, %1156 in 1 : vector<14x208xf32>, vector<14x16xf32> -> vector<14x224xf32>
    %1159 = vector.extract_strided_slice %1100 {offsets = [0, 0, 0], sizes = [1, 1, 224], strides = [1, 1, 1]} : vector<3x3x224xf32> to vector<1x1x224xf32>
    %1160 = vector.shape_cast %1159 : vector<1x1x224xf32> to vector<1x224xf32>
    %1161 = vector.broadcast %1160 : vector<1x224xf32> to vector<14x224xf32>
    %1162 = arith.mulf %1155, %1161 : vector<14x224xf32>
    %1163 = vector.extract_strided_slice %1100 {offsets = [0, 1, 0], sizes = [1, 1, 224], strides = [1, 1, 1]} : vector<3x3x224xf32> to vector<1x1x224xf32>
    %1164 = vector.shape_cast %1163 : vector<1x1x224xf32> to vector<1x224xf32>
    %1165 = vector.broadcast %1164 : vector<1x224xf32> to vector<14x224xf32>
    %1166 = arith.mulf %1152, %1165 : vector<14x224xf32>
    %1167 = arith.addf %1162, %1166 : vector<14x224xf32>
    %1168 = vector.extract_strided_slice %1100 {offsets = [0, 2, 0], sizes = [1, 1, 224], strides = [1, 1, 1]} : vector<3x3x224xf32> to vector<1x1x224xf32>
    %1169 = vector.shape_cast %1168 : vector<1x1x224xf32> to vector<1x224xf32>
    %1170 = vector.broadcast %1169 : vector<1x224xf32> to vector<14x224xf32>
    %1171 = arith.mulf %1158, %1170 : vector<14x224xf32>
    %1172 = arith.addf %1167, %1171 : vector<14x224xf32>
    %1173 = vector.extract_strided_slice %1100 {offsets = [1, 0, 0], sizes = [1, 1, 224], strides = [1, 1, 1]} : vector<3x3x224xf32> to vector<1x1x224xf32>
    %1174 = vector.shape_cast %1173 : vector<1x1x224xf32> to vector<1x224xf32>
    %1175 = vector.broadcast %1174 : vector<1x224xf32> to vector<14x224xf32>
    %1176 = arith.mulf %1155, %1175 : vector<14x224xf32>
    %1177 = vector.extract_strided_slice %1100 {offsets = [1, 1, 0], sizes = [1, 1, 224], strides = [1, 1, 1]} : vector<3x3x224xf32> to vector<1x1x224xf32>
    %1178 = vector.shape_cast %1177 : vector<1x1x224xf32> to vector<1x224xf32>
    %1179 = vector.broadcast %1178 : vector<1x224xf32> to vector<14x224xf32>
    %1180 = arith.mulf %1152, %1179 : vector<14x224xf32>
    %1181 = arith.addf %1176, %1180 : vector<14x224xf32>
    %1182 = vector.extract_strided_slice %1100 {offsets = [1, 2, 0], sizes = [1, 1, 224], strides = [1, 1, 1]} : vector<3x3x224xf32> to vector<1x1x224xf32>
    %1183 = vector.shape_cast %1182 : vector<1x1x224xf32> to vector<1x224xf32>
    %1184 = vector.broadcast %1183 : vector<1x224xf32> to vector<14x224xf32>
    %1185 = arith.mulf %1158, %1184 : vector<14x224xf32>
    %1186 = arith.addf %1181, %1185 : vector<14x224xf32>
    %1187 = vector.extract_strided_slice %1100 {offsets = [2, 0, 0], sizes = [1, 1, 224], strides = [1, 1, 1]} : vector<3x3x224xf32> to vector<1x1x224xf32>
    %1188 = vector.shape_cast %1187 : vector<1x1x224xf32> to vector<1x224xf32>
    %1189 = vector.broadcast %1188 : vector<1x224xf32> to vector<14x224xf32>
    %1190 = arith.mulf %1155, %1189 : vector<14x224xf32>
    %1191 = vector.extract_strided_slice %1100 {offsets = [2, 1, 0], sizes = [1, 1, 224], strides = [1, 1, 1]} : vector<3x3x224xf32> to vector<1x1x224xf32>
    %1192 = vector.shape_cast %1191 : vector<1x1x224xf32> to vector<1x224xf32>
    %1193 = vector.broadcast %1192 : vector<1x224xf32> to vector<14x224xf32>
    %1194 = arith.mulf %1152, %1193 : vector<14x224xf32>
    %1195 = arith.addf %1190, %1194 : vector<14x224xf32>
    %1196 = vector.extract_strided_slice %1100 {offsets = [2, 2, 0], sizes = [1, 1, 224], strides = [1, 1, 1]} : vector<3x3x224xf32> to vector<1x1x224xf32>
    %1197 = vector.shape_cast %1196 : vector<1x1x224xf32> to vector<1x224xf32>
    %1198 = vector.broadcast %1197 : vector<1x224xf32> to vector<14x224xf32>
    %1199 = arith.mulf %1158, %1198 : vector<14x224xf32>
    %1200 = arith.addf %1195, %1199 : vector<14x224xf32>
    %cst_198 = arith.constant 0.000000e+00 : f32
    %1201 = vector.broadcast %cst_198 : f32 to vector<1x224xf32>
    %1202 = vector.extract_strided_slice %1172 {offsets = [0, 0], sizes = [13, 224], strides = [1, 1]} : vector<14x224xf32> to vector<13x224xf32>
    %1203 = tpu.concatenate %1201, %1202 in 0 : vector<1x224xf32>, vector<13x224xf32> -> vector<14x224xf32>
    %1204 = arith.addf %1186, %1203 : vector<14x224xf32>
    %cst_199 = arith.constant 0.000000e+00 : f32
    %1205 = vector.broadcast %cst_199 : f32 to vector<1x224xf32>
    %1206 = vector.extract_strided_slice %1200 {offsets = [1, 0], sizes = [13, 224], strides = [1, 1]} : vector<14x224xf32> to vector<13x224xf32>
    %1207 = tpu.concatenate %1206, %1205 in 0 : vector<13x224xf32>, vector<1x224xf32> -> vector<14x224xf32>
    %1208 = arith.addf %1204, %1207 : vector<14x224xf32>
    %1209 = vector.extract_strided_slice %4 {offsets = [0, 0], sizes = [1, 224], strides = [1, 1]} : vector<2x224xf32> to vector<1x224xf32>
    %1210 = vector.broadcast %1209 : vector<1x224xf32> to vector<14x224xf32>
    %1211 = arith.mulf %1208, %1210 : vector<14x224xf32>
    %1212 = vector.extract_strided_slice %5 {offsets = [0, 0], sizes = [1, 224], strides = [1, 1]} : vector<2x224xf32> to vector<1x224xf32>
    %1213 = vector.broadcast %1212 : vector<1x224xf32> to vector<14x224xf32>
    %1214 = arith.addf %1211, %1213 : vector<14x224xf32>
    %cst_200 = arith.constant 0.000000e+00 : f32
    %1215 = vector.broadcast %cst_200 : f32 to vector<14x224xf32>
    %1216 = arith.maximumf %1214, %1215 : vector<14x224xf32>
    %1217 = vector.extract_strided_slice %0 {offsets = [1, 0, 0, 0], sizes = [1, 3, 3, 224], strides = [1, 1, 1, 1]} : vector<2x3x3x224xf32> to vector<1x3x3x224xf32>
    %1218 = vector.shape_cast %1217 : vector<1x3x3x224xf32> to vector<3x3x224xf32>
    %1219 = vector.extract_strided_slice %1 {offsets = [1, 0, 0, 0], sizes = [1, 3, 3, 224], strides = [1, 1, 1, 1]} : vector<2x3x3x224xf32> to vector<1x3x3x224xf32>
    %1220 = vector.shape_cast %1219 : vector<1x3x3x224xf32> to vector<3x3x224xf32>
    %1221 = vector.extract_strided_slice %1218 {offsets = [0, 0, 0], sizes = [1, 1, 224], strides = [1, 1, 1]} : vector<3x3x224xf32> to vector<1x1x224xf32>
    %1222 = vector.shape_cast %1221 : vector<1x1x224xf32> to vector<1x224xf32>
    %1223 = vector.broadcast %1222 : vector<1x224xf32> to vector<14x224xf32>
    %1224 = arith.mulf %1096, %1223 : vector<14x224xf32>
    %1225 = vector.extract_strided_slice %1218 {offsets = [0, 1, 0], sizes = [1, 1, 224], strides = [1, 1, 1]} : vector<3x3x224xf32> to vector<1x1x224xf32>
    %1226 = vector.shape_cast %1225 : vector<1x1x224xf32> to vector<1x224xf32>
    %1227 = vector.broadcast %1226 : vector<1x224xf32> to vector<14x224xf32>
    %1228 = arith.mulf %1090, %1227 : vector<14x224xf32>
    %1229 = arith.addf %1224, %1228 : vector<14x224xf32>
    %1230 = vector.extract_strided_slice %1218 {offsets = [0, 2, 0], sizes = [1, 1, 224], strides = [1, 1, 1]} : vector<3x3x224xf32> to vector<1x1x224xf32>
    %1231 = vector.shape_cast %1230 : vector<1x1x224xf32> to vector<1x224xf32>
    %1232 = vector.broadcast %1231 : vector<1x224xf32> to vector<14x224xf32>
    %1233 = arith.mulf %1093, %1232 : vector<14x224xf32>
    %1234 = arith.addf %1229, %1233 : vector<14x224xf32>
    %1235 = vector.extract_strided_slice %1218 {offsets = [1, 0, 0], sizes = [1, 1, 224], strides = [1, 1, 1]} : vector<3x3x224xf32> to vector<1x1x224xf32>
    %1236 = vector.shape_cast %1235 : vector<1x1x224xf32> to vector<1x224xf32>
    %1237 = vector.broadcast %1236 : vector<1x224xf32> to vector<14x224xf32>
    %1238 = arith.mulf %1084, %1237 : vector<14x224xf32>
    %1239 = arith.addf %1234, %1238 : vector<14x224xf32>
    %1240 = vector.extract_strided_slice %1218 {offsets = [1, 1, 0], sizes = [1, 1, 224], strides = [1, 1, 1]} : vector<3x3x224xf32> to vector<1x1x224xf32>
    %1241 = vector.shape_cast %1240 : vector<1x1x224xf32> to vector<1x224xf32>
    %1242 = vector.broadcast %1241 : vector<1x224xf32> to vector<14x224xf32>
    %1243 = arith.mulf %1075, %1242 : vector<14x224xf32>
    %1244 = arith.addf %1239, %1243 : vector<14x224xf32>
    %1245 = vector.extract_strided_slice %1218 {offsets = [1, 2, 0], sizes = [1, 1, 224], strides = [1, 1, 1]} : vector<3x3x224xf32> to vector<1x1x224xf32>
    %1246 = vector.shape_cast %1245 : vector<1x1x224xf32> to vector<1x224xf32>
    %1247 = vector.broadcast %1246 : vector<1x224xf32> to vector<14x224xf32>
    %1248 = arith.mulf %1077, %1247 : vector<14x224xf32>
    %1249 = arith.addf %1244, %1248 : vector<14x224xf32>
    %1250 = vector.extract_strided_slice %1218 {offsets = [2, 0, 0], sizes = [1, 1, 224], strides = [1, 1, 1]} : vector<3x3x224xf32> to vector<1x1x224xf32>
    %1251 = vector.shape_cast %1250 : vector<1x1x224xf32> to vector<1x224xf32>
    %1252 = vector.broadcast %1251 : vector<1x224xf32> to vector<14x224xf32>
    %1253 = arith.mulf %1087, %1252 : vector<14x224xf32>
    %1254 = arith.addf %1249, %1253 : vector<14x224xf32>
    %1255 = vector.extract_strided_slice %1218 {offsets = [2, 1, 0], sizes = [1, 1, 224], strides = [1, 1, 1]} : vector<3x3x224xf32> to vector<1x1x224xf32>
    %1256 = vector.shape_cast %1255 : vector<1x1x224xf32> to vector<1x224xf32>
    %1257 = vector.broadcast %1256 : vector<1x224xf32> to vector<14x224xf32>
    %1258 = arith.mulf %1079, %1257 : vector<14x224xf32>
    %1259 = arith.addf %1254, %1258 : vector<14x224xf32>
    %1260 = vector.extract_strided_slice %1218 {offsets = [2, 2, 0], sizes = [1, 1, 224], strides = [1, 1, 1]} : vector<3x3x224xf32> to vector<1x1x224xf32>
    %1261 = vector.shape_cast %1260 : vector<1x1x224xf32> to vector<1x224xf32>
    %1262 = vector.broadcast %1261 : vector<1x224xf32> to vector<14x224xf32>
    %1263 = arith.mulf %1081, %1262 : vector<14x224xf32>
    %1264 = arith.addf %1259, %1263 : vector<14x224xf32>
    %1265 = vector.extract_strided_slice %2 {offsets = [1, 0], sizes = [1, 224], strides = [1, 1]} : vector<2x224xf32> to vector<1x224xf32>
    %1266 = vector.broadcast %1265 : vector<1x224xf32> to vector<14x224xf32>
    %1267 = arith.mulf %1264, %1266 : vector<14x224xf32>
    %1268 = vector.extract_strided_slice %3 {offsets = [1, 0], sizes = [1, 224], strides = [1, 1]} : vector<2x224xf32> to vector<1x224xf32>
    %1269 = vector.broadcast %1268 : vector<1x224xf32> to vector<14x224xf32>
    %1270 = arith.addf %1267, %1269 : vector<14x224xf32>
    %cst_201 = arith.constant 0.000000e+00 : f32
    %1271 = vector.broadcast %cst_201 : f32 to vector<14x224xf32>
    %1272 = arith.maximumf %1270, %1271 : vector<14x224xf32>
    %cst_202 = arith.constant 0.000000e+00 : f32
    %1273 = vector.broadcast %cst_202 : f32 to vector<14x16xf32>
    %1274 = vector.extract_strided_slice %1272 {offsets = [0, 0], sizes = [14, 208], strides = [1, 1]} : vector<14x224xf32> to vector<14x208xf32>
    %1275 = tpu.concatenate %1273, %1274 in 1 : vector<14x16xf32>, vector<14x208xf32> -> vector<14x224xf32>
    %cst_203 = arith.constant 0.000000e+00 : f32
    %1276 = vector.broadcast %cst_203 : f32 to vector<14x16xf32>
    %1277 = vector.extract_strided_slice %1272 {offsets = [0, 16], sizes = [14, 208], strides = [1, 1]} : vector<14x224xf32> to vector<14x208xf32>
    %1278 = tpu.concatenate %1277, %1276 in 1 : vector<14x208xf32>, vector<14x16xf32> -> vector<14x224xf32>
    %1279 = vector.extract_strided_slice %1220 {offsets = [0, 0, 0], sizes = [1, 1, 224], strides = [1, 1, 1]} : vector<3x3x224xf32> to vector<1x1x224xf32>
    %1280 = vector.shape_cast %1279 : vector<1x1x224xf32> to vector<1x224xf32>
    %1281 = vector.broadcast %1280 : vector<1x224xf32> to vector<14x224xf32>
    %1282 = arith.mulf %1275, %1281 : vector<14x224xf32>
    %1283 = vector.extract_strided_slice %1220 {offsets = [0, 1, 0], sizes = [1, 1, 224], strides = [1, 1, 1]} : vector<3x3x224xf32> to vector<1x1x224xf32>
    %1284 = vector.shape_cast %1283 : vector<1x1x224xf32> to vector<1x224xf32>
    %1285 = vector.broadcast %1284 : vector<1x224xf32> to vector<14x224xf32>
    %1286 = arith.mulf %1272, %1285 : vector<14x224xf32>
    %1287 = arith.addf %1282, %1286 : vector<14x224xf32>
    %1288 = vector.extract_strided_slice %1220 {offsets = [0, 2, 0], sizes = [1, 1, 224], strides = [1, 1, 1]} : vector<3x3x224xf32> to vector<1x1x224xf32>
    %1289 = vector.shape_cast %1288 : vector<1x1x224xf32> to vector<1x224xf32>
    %1290 = vector.broadcast %1289 : vector<1x224xf32> to vector<14x224xf32>
    %1291 = arith.mulf %1278, %1290 : vector<14x224xf32>
    %1292 = arith.addf %1287, %1291 : vector<14x224xf32>
    %1293 = vector.extract_strided_slice %1220 {offsets = [1, 0, 0], sizes = [1, 1, 224], strides = [1, 1, 1]} : vector<3x3x224xf32> to vector<1x1x224xf32>
    %1294 = vector.shape_cast %1293 : vector<1x1x224xf32> to vector<1x224xf32>
    %1295 = vector.broadcast %1294 : vector<1x224xf32> to vector<14x224xf32>
    %1296 = arith.mulf %1275, %1295 : vector<14x224xf32>
    %1297 = vector.extract_strided_slice %1220 {offsets = [1, 1, 0], sizes = [1, 1, 224], strides = [1, 1, 1]} : vector<3x3x224xf32> to vector<1x1x224xf32>
    %1298 = vector.shape_cast %1297 : vector<1x1x224xf32> to vector<1x224xf32>
    %1299 = vector.broadcast %1298 : vector<1x224xf32> to vector<14x224xf32>
    %1300 = arith.mulf %1272, %1299 : vector<14x224xf32>
    %1301 = arith.addf %1296, %1300 : vector<14x224xf32>
    %1302 = vector.extract_strided_slice %1220 {offsets = [1, 2, 0], sizes = [1, 1, 224], strides = [1, 1, 1]} : vector<3x3x224xf32> to vector<1x1x224xf32>
    %1303 = vector.shape_cast %1302 : vector<1x1x224xf32> to vector<1x224xf32>
    %1304 = vector.broadcast %1303 : vector<1x224xf32> to vector<14x224xf32>
    %1305 = arith.mulf %1278, %1304 : vector<14x224xf32>
    %1306 = arith.addf %1301, %1305 : vector<14x224xf32>
    %1307 = vector.extract_strided_slice %1220 {offsets = [2, 0, 0], sizes = [1, 1, 224], strides = [1, 1, 1]} : vector<3x3x224xf32> to vector<1x1x224xf32>
    %1308 = vector.shape_cast %1307 : vector<1x1x224xf32> to vector<1x224xf32>
    %1309 = vector.broadcast %1308 : vector<1x224xf32> to vector<14x224xf32>
    %1310 = arith.mulf %1275, %1309 : vector<14x224xf32>
    %1311 = vector.extract_strided_slice %1220 {offsets = [2, 1, 0], sizes = [1, 1, 224], strides = [1, 1, 1]} : vector<3x3x224xf32> to vector<1x1x224xf32>
    %1312 = vector.shape_cast %1311 : vector<1x1x224xf32> to vector<1x224xf32>
    %1313 = vector.broadcast %1312 : vector<1x224xf32> to vector<14x224xf32>
    %1314 = arith.mulf %1272, %1313 : vector<14x224xf32>
    %1315 = arith.addf %1310, %1314 : vector<14x224xf32>
    %1316 = vector.extract_strided_slice %1220 {offsets = [2, 2, 0], sizes = [1, 1, 224], strides = [1, 1, 1]} : vector<3x3x224xf32> to vector<1x1x224xf32>
    %1317 = vector.shape_cast %1316 : vector<1x1x224xf32> to vector<1x224xf32>
    %1318 = vector.broadcast %1317 : vector<1x224xf32> to vector<14x224xf32>
    %1319 = arith.mulf %1278, %1318 : vector<14x224xf32>
    %1320 = arith.addf %1315, %1319 : vector<14x224xf32>
    %cst_204 = arith.constant 0.000000e+00 : f32
    %1321 = vector.broadcast %cst_204 : f32 to vector<1x224xf32>
    %1322 = vector.extract_strided_slice %1292 {offsets = [0, 0], sizes = [13, 224], strides = [1, 1]} : vector<14x224xf32> to vector<13x224xf32>
    %1323 = tpu.concatenate %1321, %1322 in 0 : vector<1x224xf32>, vector<13x224xf32> -> vector<14x224xf32>
    %1324 = arith.addf %1306, %1323 : vector<14x224xf32>
    %cst_205 = arith.constant 0.000000e+00 : f32
    %1325 = vector.broadcast %cst_205 : f32 to vector<1x224xf32>
    %1326 = vector.extract_strided_slice %1320 {offsets = [1, 0], sizes = [13, 224], strides = [1, 1]} : vector<14x224xf32> to vector<13x224xf32>
    %1327 = tpu.concatenate %1326, %1325 in 0 : vector<13x224xf32>, vector<1x224xf32> -> vector<14x224xf32>
    %1328 = arith.addf %1324, %1327 : vector<14x224xf32>
    %1329 = vector.extract_strided_slice %4 {offsets = [1, 0], sizes = [1, 224], strides = [1, 1]} : vector<2x224xf32> to vector<1x224xf32>
    %1330 = vector.broadcast %1329 : vector<1x224xf32> to vector<14x224xf32>
    %1331 = arith.mulf %1328, %1330 : vector<14x224xf32>
    %1332 = vector.extract_strided_slice %5 {offsets = [1, 0], sizes = [1, 224], strides = [1, 1]} : vector<2x224xf32> to vector<1x224xf32>
    %1333 = vector.broadcast %1332 : vector<1x224xf32> to vector<14x224xf32>
    %1334 = arith.addf %1331, %1333 : vector<14x224xf32>
    %cst_206 = arith.constant 0.000000e+00 : f32
    %1335 = vector.broadcast %cst_206 : f32 to vector<14x224xf32>
    %1336 = arith.maximumf %1334, %1335 : vector<14x224xf32>
    %1337 = tpu.concatenate %1216, %1336 in 1 : vector<14x224xf32>, vector<14x224xf32> -> vector<14x448xf32>
    %c4_207 = arith.constant 4 : index
    %c0_208 = arith.constant 0 : index
    %c0_209 = arith.constant 0 : index
    %1338 = vector.load %arg8[%c4_207, %c0_208, %c0_209] : memref<8x14x448xf32, #tpu.memory_space<vmem>>, vector<1x14x448xf32>
    %1339 = vector.shape_cast %1338 : vector<1x14x448xf32> to vector<14x448xf32>
    %1340 = vector.shape_cast %1337 : vector<14x448xf32> to vector<1x14x448xf32>
    tpu.vector_store %arg8[%c4_207, %c0_208, %c0_209], %1340 {strides = array<i32>} : memref<8x14x448xf32, #tpu.memory_space<vmem>>, vector<1x14x448xf32>,
    %c5 = arith.constant 5 : index
    %c0_210 = arith.constant 0 : index
    %c0_211 = arith.constant 0 : index
    %c0_212 = arith.constant 0 : index
    %c0_213 = arith.constant 0 : index
    %1341 = vector.load %arg1[%c5, %c0_210, %c0_211, %c0_212, %c0_213] : memref<8x2x2x14x224xf32, #tpu.memory_space<vmem>>, vector<1x1x1x14x224xf32>
    %1342 = vector.shape_cast %1341 : vector<1x1x1x14x224xf32> to vector<14x224xf32>
    %c5_214 = arith.constant 5 : index
    %c0_215 = arith.constant 0 : index
    %c1_216 = arith.constant 1 : index
    %c0_217 = arith.constant 0 : index
    %c0_218 = arith.constant 0 : index
    %1343 = vector.load %arg1[%c5_214, %c0_215, %c1_216, %c0_217, %c0_218] : memref<8x2x2x14x224xf32, #tpu.memory_space<vmem>>, vector<1x1x1x14x224xf32>
    %1344 = vector.shape_cast %1343 : vector<1x1x1x14x224xf32> to vector<14x224xf32>
    %c5_219 = arith.constant 5 : index
    %c1_220 = arith.constant 1 : index
    %c0_221 = arith.constant 0 : index
    %c0_222 = arith.constant 0 : index
    %c0_223 = arith.constant 0 : index
    %1345 = vector.load %arg1[%c5_219, %c1_220, %c0_221, %c0_222, %c0_223] : memref<8x2x2x14x224xf32, #tpu.memory_space<vmem>>, vector<1x1x1x14x224xf32>
    %1346 = vector.shape_cast %1345 : vector<1x1x1x14x224xf32> to vector<14x224xf32>
    %c5_224 = arith.constant 5 : index
    %c1_225 = arith.constant 1 : index
    %c1_226 = arith.constant 1 : index
    %c0_227 = arith.constant 0 : index
    %c0_228 = arith.constant 0 : index
    %1347 = vector.load %arg1[%c5_224, %c1_225, %c1_226, %c0_227, %c0_228] : memref<8x2x2x14x224xf32, #tpu.memory_space<vmem>>, vector<1x1x1x14x224xf32>
    %1348 = vector.shape_cast %1347 : vector<1x1x1x14x224xf32> to vector<14x224xf32>
    %cst_229 = arith.constant 0.000000e+00 : f32
    %1349 = vector.broadcast %cst_229 : f32 to vector<14x16xf32>
    %1350 = vector.extract_strided_slice %1344 {offsets = [0, 0], sizes = [14, 208], strides = [1, 1]} : vector<14x224xf32> to vector<14x208xf32>
    %1351 = tpu.concatenate %1349, %1350 in 1 : vector<14x16xf32>, vector<14x208xf32> -> vector<14x224xf32>
    %cst_230 = arith.constant 0.000000e+00 : f32
    %1352 = vector.broadcast %cst_230 : f32 to vector<14x16xf32>
    %1353 = vector.extract_strided_slice %1348 {offsets = [0, 0], sizes = [14, 208], strides = [1, 1]} : vector<14x224xf32> to vector<14x208xf32>
    %1354 = tpu.concatenate %1352, %1353 in 1 : vector<14x16xf32>, vector<14x208xf32> -> vector<14x224xf32>
    %cst_231 = arith.constant 0.000000e+00 : f32
    %1355 = vector.broadcast %cst_231 : f32 to vector<1x224xf32>
    %1356 = vector.extract_strided_slice %1346 {offsets = [0, 0], sizes = [13, 224], strides = [1, 1]} : vector<14x224xf32> to vector<13x224xf32>
    %1357 = tpu.concatenate %1355, %1356 in 0 : vector<1x224xf32>, vector<13x224xf32> -> vector<14x224xf32>
    %cst_232 = arith.constant 0.000000e+00 : f32
    %1358 = vector.broadcast %cst_232 : f32 to vector<1x224xf32>
    %1359 = vector.extract_strided_slice %1348 {offsets = [0, 0], sizes = [13, 224], strides = [1, 1]} : vector<14x224xf32> to vector<13x224xf32>
    %1360 = tpu.concatenate %1358, %1359 in 0 : vector<1x224xf32>, vector<13x224xf32> -> vector<14x224xf32>
    %cst_233 = arith.constant 0.000000e+00 : f32
    %1361 = vector.broadcast %cst_233 : f32 to vector<1x224xf32>
    %1362 = vector.extract_strided_slice %1354 {offsets = [0, 0], sizes = [13, 224], strides = [1, 1]} : vector<14x224xf32> to vector<13x224xf32>
    %1363 = tpu.concatenate %1361, %1362 in 0 : vector<1x224xf32>, vector<13x224xf32> -> vector<14x224xf32>
    %1364 = vector.extract_strided_slice %0 {offsets = [0, 0, 0, 0], sizes = [1, 3, 3, 224], strides = [1, 1, 1, 1]} : vector<2x3x3x224xf32> to vector<1x3x3x224xf32>
    %1365 = vector.shape_cast %1364 : vector<1x3x3x224xf32> to vector<3x3x224xf32>
    %1366 = vector.extract_strided_slice %1 {offsets = [0, 0, 0, 0], sizes = [1, 3, 3, 224], strides = [1, 1, 1, 1]} : vector<2x3x3x224xf32> to vector<1x3x3x224xf32>
    %1367 = vector.shape_cast %1366 : vector<1x3x3x224xf32> to vector<3x3x224xf32>
    %1368 = vector.extract_strided_slice %1365 {offsets = [0, 0, 0], sizes = [1, 1, 224], strides = [1, 1, 1]} : vector<3x3x224xf32> to vector<1x1x224xf32>
    %1369 = vector.shape_cast %1368 : vector<1x1x224xf32> to vector<1x224xf32>
    %1370 = vector.broadcast %1369 : vector<1x224xf32> to vector<14x224xf32>
    %1371 = arith.mulf %1363, %1370 : vector<14x224xf32>
    %1372 = vector.extract_strided_slice %1365 {offsets = [0, 1, 0], sizes = [1, 1, 224], strides = [1, 1, 1]} : vector<3x3x224xf32> to vector<1x1x224xf32>
    %1373 = vector.shape_cast %1372 : vector<1x1x224xf32> to vector<1x224xf32>
    %1374 = vector.broadcast %1373 : vector<1x224xf32> to vector<14x224xf32>
    %1375 = arith.mulf %1357, %1374 : vector<14x224xf32>
    %1376 = arith.addf %1371, %1375 : vector<14x224xf32>
    %1377 = vector.extract_strided_slice %1365 {offsets = [0, 2, 0], sizes = [1, 1, 224], strides = [1, 1, 1]} : vector<3x3x224xf32> to vector<1x1x224xf32>
    %1378 = vector.shape_cast %1377 : vector<1x1x224xf32> to vector<1x224xf32>
    %1379 = vector.broadcast %1378 : vector<1x224xf32> to vector<14x224xf32>
    %1380 = arith.mulf %1360, %1379 : vector<14x224xf32>
    %1381 = arith.addf %1376, %1380 : vector<14x224xf32>
    %1382 = vector.extract_strided_slice %1365 {offsets = [1, 0, 0], sizes = [1, 1, 224], strides = [1, 1, 1]} : vector<3x3x224xf32> to vector<1x1x224xf32>
    %1383 = vector.shape_cast %1382 : vector<1x1x224xf32> to vector<1x224xf32>
    %1384 = vector.broadcast %1383 : vector<1x224xf32> to vector<14x224xf32>
    %1385 = arith.mulf %1351, %1384 : vector<14x224xf32>
    %1386 = arith.addf %1381, %1385 : vector<14x224xf32>
    %1387 = vector.extract_strided_slice %1365 {offsets = [1, 1, 0], sizes = [1, 1, 224], strides = [1, 1, 1]} : vector<3x3x224xf32> to vector<1x1x224xf32>
    %1388 = vector.shape_cast %1387 : vector<1x1x224xf32> to vector<1x224xf32>
    %1389 = vector.broadcast %1388 : vector<1x224xf32> to vector<14x224xf32>
    %1390 = arith.mulf %1342, %1389 : vector<14x224xf32>
    %1391 = arith.addf %1386, %1390 : vector<14x224xf32>
    %1392 = vector.extract_strided_slice %1365 {offsets = [1, 2, 0], sizes = [1, 1, 224], strides = [1, 1, 1]} : vector<3x3x224xf32> to vector<1x1x224xf32>
    %1393 = vector.shape_cast %1392 : vector<1x1x224xf32> to vector<1x224xf32>
    %1394 = vector.broadcast %1393 : vector<1x224xf32> to vector<14x224xf32>
    %1395 = arith.mulf %1344, %1394 : vector<14x224xf32>
    %1396 = arith.addf %1391, %1395 : vector<14x224xf32>
    %1397 = vector.extract_strided_slice %1365 {offsets = [2, 0, 0], sizes = [1, 1, 224], strides = [1, 1, 1]} : vector<3x3x224xf32> to vector<1x1x224xf32>
    %1398 = vector.shape_cast %1397 : vector<1x1x224xf32> to vector<1x224xf32>
    %1399 = vector.broadcast %1398 : vector<1x224xf32> to vector<14x224xf32>
    %1400 = arith.mulf %1354, %1399 : vector<14x224xf32>
    %1401 = arith.addf %1396, %1400 : vector<14x224xf32>
    %1402 = vector.extract_strided_slice %1365 {offsets = [2, 1, 0], sizes = [1, 1, 224], strides = [1, 1, 1]} : vector<3x3x224xf32> to vector<1x1x224xf32>
    %1403 = vector.shape_cast %1402 : vector<1x1x224xf32> to vector<1x224xf32>
    %1404 = vector.broadcast %1403 : vector<1x224xf32> to vector<14x224xf32>
    %1405 = arith.mulf %1346, %1404 : vector<14x224xf32>
    %1406 = arith.addf %1401, %1405 : vector<14x224xf32>
    %1407 = vector.extract_strided_slice %1365 {offsets = [2, 2, 0], sizes = [1, 1, 224], strides = [1, 1, 1]} : vector<3x3x224xf32> to vector<1x1x224xf32>
    %1408 = vector.shape_cast %1407 : vector<1x1x224xf32> to vector<1x224xf32>
    %1409 = vector.broadcast %1408 : vector<1x224xf32> to vector<14x224xf32>
    %1410 = arith.mulf %1348, %1409 : vector<14x224xf32>
    %1411 = arith.addf %1406, %1410 : vector<14x224xf32>
    %1412 = vector.extract_strided_slice %2 {offsets = [0, 0], sizes = [1, 224], strides = [1, 1]} : vector<2x224xf32> to vector<1x224xf32>
    %1413 = vector.broadcast %1412 : vector<1x224xf32> to vector<14x224xf32>
    %1414 = arith.mulf %1411, %1413 : vector<14x224xf32>
    %1415 = vector.extract_strided_slice %3 {offsets = [0, 0], sizes = [1, 224], strides = [1, 1]} : vector<2x224xf32> to vector<1x224xf32>
    %1416 = vector.broadcast %1415 : vector<1x224xf32> to vector<14x224xf32>
    %1417 = arith.addf %1414, %1416 : vector<14x224xf32>
    %cst_234 = arith.constant 0.000000e+00 : f32
    %1418 = vector.broadcast %cst_234 : f32 to vector<14x224xf32>
    %1419 = arith.maximumf %1417, %1418 : vector<14x224xf32>
    %cst_235 = arith.constant 0.000000e+00 : f32
    %1420 = vector.broadcast %cst_235 : f32 to vector<14x16xf32>
    %1421 = vector.extract_strided_slice %1419 {offsets = [0, 0], sizes = [14, 208], strides = [1, 1]} : vector<14x224xf32> to vector<14x208xf32>
    %1422 = tpu.concatenate %1420, %1421 in 1 : vector<14x16xf32>, vector<14x208xf32> -> vector<14x224xf32>
    %cst_236 = arith.constant 0.000000e+00 : f32
    %1423 = vector.broadcast %cst_236 : f32 to vector<14x16xf32>
    %1424 = vector.extract_strided_slice %1419 {offsets = [0, 16], sizes = [14, 208], strides = [1, 1]} : vector<14x224xf32> to vector<14x208xf32>
    %1425 = tpu.concatenate %1424, %1423 in 1 : vector<14x208xf32>, vector<14x16xf32> -> vector<14x224xf32>
    %1426 = vector.extract_strided_slice %1367 {offsets = [0, 0, 0], sizes = [1, 1, 224], strides = [1, 1, 1]} : vector<3x3x224xf32> to vector<1x1x224xf32>
    %1427 = vector.shape_cast %1426 : vector<1x1x224xf32> to vector<1x224xf32>
    %1428 = vector.broadcast %1427 : vector<1x224xf32> to vector<14x224xf32>
    %1429 = arith.mulf %1422, %1428 : vector<14x224xf32>
    %1430 = vector.extract_strided_slice %1367 {offsets = [0, 1, 0], sizes = [1, 1, 224], strides = [1, 1, 1]} : vector<3x3x224xf32> to vector<1x1x224xf32>
    %1431 = vector.shape_cast %1430 : vector<1x1x224xf32> to vector<1x224xf32>
    %1432 = vector.broadcast %1431 : vector<1x224xf32> to vector<14x224xf32>
    %1433 = arith.mulf %1419, %1432 : vector<14x224xf32>
    %1434 = arith.addf %1429, %1433 : vector<14x224xf32>
    %1435 = vector.extract_strided_slice %1367 {offsets = [0, 2, 0], sizes = [1, 1, 224], strides = [1, 1, 1]} : vector<3x3x224xf32> to vector<1x1x224xf32>
    %1436 = vector.shape_cast %1435 : vector<1x1x224xf32> to vector<1x224xf32>
    %1437 = vector.broadcast %1436 : vector<1x224xf32> to vector<14x224xf32>
    %1438 = arith.mulf %1425, %1437 : vector<14x224xf32>
    %1439 = arith.addf %1434, %1438 : vector<14x224xf32>
    %1440 = vector.extract_strided_slice %1367 {offsets = [1, 0, 0], sizes = [1, 1, 224], strides = [1, 1, 1]} : vector<3x3x224xf32> to vector<1x1x224xf32>
    %1441 = vector.shape_cast %1440 : vector<1x1x224xf32> to vector<1x224xf32>
    %1442 = vector.broadcast %1441 : vector<1x224xf32> to vector<14x224xf32>
    %1443 = arith.mulf %1422, %1442 : vector<14x224xf32>
    %1444 = vector.extract_strided_slice %1367 {offsets = [1, 1, 0], sizes = [1, 1, 224], strides = [1, 1, 1]} : vector<3x3x224xf32> to vector<1x1x224xf32>
    %1445 = vector.shape_cast %1444 : vector<1x1x224xf32> to vector<1x224xf32>
    %1446 = vector.broadcast %1445 : vector<1x224xf32> to vector<14x224xf32>
    %1447 = arith.mulf %1419, %1446 : vector<14x224xf32>
    %1448 = arith.addf %1443, %1447 : vector<14x224xf32>
    %1449 = vector.extract_strided_slice %1367 {offsets = [1, 2, 0], sizes = [1, 1, 224], strides = [1, 1, 1]} : vector<3x3x224xf32> to vector<1x1x224xf32>
    %1450 = vector.shape_cast %1449 : vector<1x1x224xf32> to vector<1x224xf32>
    %1451 = vector.broadcast %1450 : vector<1x224xf32> to vector<14x224xf32>
    %1452 = arith.mulf %1425, %1451 : vector<14x224xf32>
    %1453 = arith.addf %1448, %1452 : vector<14x224xf32>
    %1454 = vector.extract_strided_slice %1367 {offsets = [2, 0, 0], sizes = [1, 1, 224], strides = [1, 1, 1]} : vector<3x3x224xf32> to vector<1x1x224xf32>
    %1455 = vector.shape_cast %1454 : vector<1x1x224xf32> to vector<1x224xf32>
    %1456 = vector.broadcast %1455 : vector<1x224xf32> to vector<14x224xf32>
    %1457 = arith.mulf %1422, %1456 : vector<14x224xf32>
    %1458 = vector.extract_strided_slice %1367 {offsets = [2, 1, 0], sizes = [1, 1, 224], strides = [1, 1, 1]} : vector<3x3x224xf32> to vector<1x1x224xf32>
    %1459 = vector.shape_cast %1458 : vector<1x1x224xf32> to vector<1x224xf32>
    %1460 = vector.broadcast %1459 : vector<1x224xf32> to vector<14x224xf32>
    %1461 = arith.mulf %1419, %1460 : vector<14x224xf32>
    %1462 = arith.addf %1457, %1461 : vector<14x224xf32>
    %1463 = vector.extract_strided_slice %1367 {offsets = [2, 2, 0], sizes = [1, 1, 224], strides = [1, 1, 1]} : vector<3x3x224xf32> to vector<1x1x224xf32>
    %1464 = vector.shape_cast %1463 : vector<1x1x224xf32> to vector<1x224xf32>
    %1465 = vector.broadcast %1464 : vector<1x224xf32> to vector<14x224xf32>
    %1466 = arith.mulf %1425, %1465 : vector<14x224xf32>
    %1467 = arith.addf %1462, %1466 : vector<14x224xf32>
    %cst_237 = arith.constant 0.000000e+00 : f32
    %1468 = vector.broadcast %cst_237 : f32 to vector<1x224xf32>
    %1469 = vector.extract_strided_slice %1439 {offsets = [0, 0], sizes = [13, 224], strides = [1, 1]} : vector<14x224xf32> to vector<13x224xf32>
    %1470 = tpu.concatenate %1468, %1469 in 0 : vector<1x224xf32>, vector<13x224xf32> -> vector<14x224xf32>
    %1471 = arith.addf %1453, %1470 : vector<14x224xf32>
    %cst_238 = arith.constant 0.000000e+00 : f32
    %1472 = vector.broadcast %cst_238 : f32 to vector<1x224xf32>
    %1473 = vector.extract_strided_slice %1467 {offsets = [1, 0], sizes = [13, 224], strides = [1, 1]} : vector<14x224xf32> to vector<13x224xf32>
    %1474 = tpu.concatenate %1473, %1472 in 0 : vector<13x224xf32>, vector<1x224xf32> -> vector<14x224xf32>
    %1475 = arith.addf %1471, %1474 : vector<14x224xf32>
    %1476 = vector.extract_strided_slice %4 {offsets = [0, 0], sizes = [1, 224], strides = [1, 1]} : vector<2x224xf32> to vector<1x224xf32>
    %1477 = vector.broadcast %1476 : vector<1x224xf32> to vector<14x224xf32>
    %1478 = arith.mulf %1475, %1477 : vector<14x224xf32>
    %1479 = vector.extract_strided_slice %5 {offsets = [0, 0], sizes = [1, 224], strides = [1, 1]} : vector<2x224xf32> to vector<1x224xf32>
    %1480 = vector.broadcast %1479 : vector<1x224xf32> to vector<14x224xf32>
    %1481 = arith.addf %1478, %1480 : vector<14x224xf32>
    %cst_239 = arith.constant 0.000000e+00 : f32
    %1482 = vector.broadcast %cst_239 : f32 to vector<14x224xf32>
    %1483 = arith.maximumf %1481, %1482 : vector<14x224xf32>
    %1484 = vector.extract_strided_slice %0 {offsets = [1, 0, 0, 0], sizes = [1, 3, 3, 224], strides = [1, 1, 1, 1]} : vector<2x3x3x224xf32> to vector<1x3x3x224xf32>
    %1485 = vector.shape_cast %1484 : vector<1x3x3x224xf32> to vector<3x3x224xf32>
    %1486 = vector.extract_strided_slice %1 {offsets = [1, 0, 0, 0], sizes = [1, 3, 3, 224], strides = [1, 1, 1, 1]} : vector<2x3x3x224xf32> to vector<1x3x3x224xf32>
    %1487 = vector.shape_cast %1486 : vector<1x3x3x224xf32> to vector<3x3x224xf32>
    %1488 = vector.extract_strided_slice %1485 {offsets = [0, 0, 0], sizes = [1, 1, 224], strides = [1, 1, 1]} : vector<3x3x224xf32> to vector<1x1x224xf32>
    %1489 = vector.shape_cast %1488 : vector<1x1x224xf32> to vector<1x224xf32>
    %1490 = vector.broadcast %1489 : vector<1x224xf32> to vector<14x224xf32>
    %1491 = arith.mulf %1363, %1490 : vector<14x224xf32>
    %1492 = vector.extract_strided_slice %1485 {offsets = [0, 1, 0], sizes = [1, 1, 224], strides = [1, 1, 1]} : vector<3x3x224xf32> to vector<1x1x224xf32>
    %1493 = vector.shape_cast %1492 : vector<1x1x224xf32> to vector<1x224xf32>
    %1494 = vector.broadcast %1493 : vector<1x224xf32> to vector<14x224xf32>
    %1495 = arith.mulf %1357, %1494 : vector<14x224xf32>
    %1496 = arith.addf %1491, %1495 : vector<14x224xf32>
    %1497 = vector.extract_strided_slice %1485 {offsets = [0, 2, 0], sizes = [1, 1, 224], strides = [1, 1, 1]} : vector<3x3x224xf32> to vector<1x1x224xf32>
    %1498 = vector.shape_cast %1497 : vector<1x1x224xf32> to vector<1x224xf32>
    %1499 = vector.broadcast %1498 : vector<1x224xf32> to vector<14x224xf32>
    %1500 = arith.mulf %1360, %1499 : vector<14x224xf32>
    %1501 = arith.addf %1496, %1500 : vector<14x224xf32>
    %1502 = vector.extract_strided_slice %1485 {offsets = [1, 0, 0], sizes = [1, 1, 224], strides = [1, 1, 1]} : vector<3x3x224xf32> to vector<1x1x224xf32>
    %1503 = vector.shape_cast %1502 : vector<1x1x224xf32> to vector<1x224xf32>
    %1504 = vector.broadcast %1503 : vector<1x224xf32> to vector<14x224xf32>
    %1505 = arith.mulf %1351, %1504 : vector<14x224xf32>
    %1506 = arith.addf %1501, %1505 : vector<14x224xf32>
    %1507 = vector.extract_strided_slice %1485 {offsets = [1, 1, 0], sizes = [1, 1, 224], strides = [1, 1, 1]} : vector<3x3x224xf32> to vector<1x1x224xf32>
    %1508 = vector.shape_cast %1507 : vector<1x1x224xf32> to vector<1x224xf32>
    %1509 = vector.broadcast %1508 : vector<1x224xf32> to vector<14x224xf32>
    %1510 = arith.mulf %1342, %1509 : vector<14x224xf32>
    %1511 = arith.addf %1506, %1510 : vector<14x224xf32>
    %1512 = vector.extract_strided_slice %1485 {offsets = [1, 2, 0], sizes = [1, 1, 224], strides = [1, 1, 1]} : vector<3x3x224xf32> to vector<1x1x224xf32>
    %1513 = vector.shape_cast %1512 : vector<1x1x224xf32> to vector<1x224xf32>
    %1514 = vector.broadcast %1513 : vector<1x224xf32> to vector<14x224xf32>
    %1515 = arith.mulf %1344, %1514 : vector<14x224xf32>
    %1516 = arith.addf %1511, %1515 : vector<14x224xf32>
    %1517 = vector.extract_strided_slice %1485 {offsets = [2, 0, 0], sizes = [1, 1, 224], strides = [1, 1, 1]} : vector<3x3x224xf32> to vector<1x1x224xf32>
    %1518 = vector.shape_cast %1517 : vector<1x1x224xf32> to vector<1x224xf32>
    %1519 = vector.broadcast %1518 : vector<1x224xf32> to vector<14x224xf32>
    %1520 = arith.mulf %1354, %1519 : vector<14x224xf32>
    %1521 = arith.addf %1516, %1520 : vector<14x224xf32>
    %1522 = vector.extract_strided_slice %1485 {offsets = [2, 1, 0], sizes = [1, 1, 224], strides = [1, 1, 1]} : vector<3x3x224xf32> to vector<1x1x224xf32>
    %1523 = vector.shape_cast %1522 : vector<1x1x224xf32> to vector<1x224xf32>
    %1524 = vector.broadcast %1523 : vector<1x224xf32> to vector<14x224xf32>
    %1525 = arith.mulf %1346, %1524 : vector<14x224xf32>
    %1526 = arith.addf %1521, %1525 : vector<14x224xf32>
    %1527 = vector.extract_strided_slice %1485 {offsets = [2, 2, 0], sizes = [1, 1, 224], strides = [1, 1, 1]} : vector<3x3x224xf32> to vector<1x1x224xf32>
    %1528 = vector.shape_cast %1527 : vector<1x1x224xf32> to vector<1x224xf32>
    %1529 = vector.broadcast %1528 : vector<1x224xf32> to vector<14x224xf32>
    %1530 = arith.mulf %1348, %1529 : vector<14x224xf32>
    %1531 = arith.addf %1526, %1530 : vector<14x224xf32>
    %1532 = vector.extract_strided_slice %2 {offsets = [1, 0], sizes = [1, 224], strides = [1, 1]} : vector<2x224xf32> to vector<1x224xf32>
    %1533 = vector.broadcast %1532 : vector<1x224xf32> to vector<14x224xf32>
    %1534 = arith.mulf %1531, %1533 : vector<14x224xf32>
    %1535 = vector.extract_strided_slice %3 {offsets = [1, 0], sizes = [1, 224], strides = [1, 1]} : vector<2x224xf32> to vector<1x224xf32>
    %1536 = vector.broadcast %1535 : vector<1x224xf32> to vector<14x224xf32>
    %1537 = arith.addf %1534, %1536 : vector<14x224xf32>
    %cst_240 = arith.constant 0.000000e+00 : f32
    %1538 = vector.broadcast %cst_240 : f32 to vector<14x224xf32>
    %1539 = arith.maximumf %1537, %1538 : vector<14x224xf32>
    %cst_241 = arith.constant 0.000000e+00 : f32
    %1540 = vector.broadcast %cst_241 : f32 to vector<14x16xf32>
    %1541 = vector.extract_strided_slice %1539 {offsets = [0, 0], sizes = [14, 208], strides = [1, 1]} : vector<14x224xf32> to vector<14x208xf32>
    %1542 = tpu.concatenate %1540, %1541 in 1 : vector<14x16xf32>, vector<14x208xf32> -> vector<14x224xf32>
    %cst_242 = arith.constant 0.000000e+00 : f32
    %1543 = vector.broadcast %cst_242 : f32 to vector<14x16xf32>
    %1544 = vector.extract_strided_slice %1539 {offsets = [0, 16], sizes = [14, 208], strides = [1, 1]} : vector<14x224xf32> to vector<14x208xf32>
    %1545 = tpu.concatenate %1544, %1543 in 1 : vector<14x208xf32>, vector<14x16xf32> -> vector<14x224xf32>
    %1546 = vector.extract_strided_slice %1487 {offsets = [0, 0, 0], sizes = [1, 1, 224], strides = [1, 1, 1]} : vector<3x3x224xf32> to vector<1x1x224xf32>
    %1547 = vector.shape_cast %1546 : vector<1x1x224xf32> to vector<1x224xf32>
    %1548 = vector.broadcast %1547 : vector<1x224xf32> to vector<14x224xf32>
    %1549 = arith.mulf %1542, %1548 : vector<14x224xf32>
    %1550 = vector.extract_strided_slice %1487 {offsets = [0, 1, 0], sizes = [1, 1, 224], strides = [1, 1, 1]} : vector<3x3x224xf32> to vector<1x1x224xf32>
    %1551 = vector.shape_cast %1550 : vector<1x1x224xf32> to vector<1x224xf32>
    %1552 = vector.broadcast %1551 : vector<1x224xf32> to vector<14x224xf32>
    %1553 = arith.mulf %1539, %1552 : vector<14x224xf32>
    %1554 = arith.addf %1549, %1553 : vector<14x224xf32>
    %1555 = vector.extract_strided_slice %1487 {offsets = [0, 2, 0], sizes = [1, 1, 224], strides = [1, 1, 1]} : vector<3x3x224xf32> to vector<1x1x224xf32>
    %1556 = vector.shape_cast %1555 : vector<1x1x224xf32> to vector<1x224xf32>
    %1557 = vector.broadcast %1556 : vector<1x224xf32> to vector<14x224xf32>
    %1558 = arith.mulf %1545, %1557 : vector<14x224xf32>
    %1559 = arith.addf %1554, %1558 : vector<14x224xf32>
    %1560 = vector.extract_strided_slice %1487 {offsets = [1, 0, 0], sizes = [1, 1, 224], strides = [1, 1, 1]} : vector<3x3x224xf32> to vector<1x1x224xf32>
    %1561 = vector.shape_cast %1560 : vector<1x1x224xf32> to vector<1x224xf32>
    %1562 = vector.broadcast %1561 : vector<1x224xf32> to vector<14x224xf32>
    %1563 = arith.mulf %1542, %1562 : vector<14x224xf32>
    %1564 = vector.extract_strided_slice %1487 {offsets = [1, 1, 0], sizes = [1, 1, 224], strides = [1, 1, 1]} : vector<3x3x224xf32> to vector<1x1x224xf32>
    %1565 = vector.shape_cast %1564 : vector<1x1x224xf32> to vector<1x224xf32>
    %1566 = vector.broadcast %1565 : vector<1x224xf32> to vector<14x224xf32>
    %1567 = arith.mulf %1539, %1566 : vector<14x224xf32>
    %1568 = arith.addf %1563, %1567 : vector<14x224xf32>
    %1569 = vector.extract_strided_slice %1487 {offsets = [1, 2, 0], sizes = [1, 1, 224], strides = [1, 1, 1]} : vector<3x3x224xf32> to vector<1x1x224xf32>
    %1570 = vector.shape_cast %1569 : vector<1x1x224xf32> to vector<1x224xf32>
    %1571 = vector.broadcast %1570 : vector<1x224xf32> to vector<14x224xf32>
    %1572 = arith.mulf %1545, %1571 : vector<14x224xf32>
    %1573 = arith.addf %1568, %1572 : vector<14x224xf32>
    %1574 = vector.extract_strided_slice %1487 {offsets = [2, 0, 0], sizes = [1, 1, 224], strides = [1, 1, 1]} : vector<3x3x224xf32> to vector<1x1x224xf32>
    %1575 = vector.shape_cast %1574 : vector<1x1x224xf32> to vector<1x224xf32>
    %1576 = vector.broadcast %1575 : vector<1x224xf32> to vector<14x224xf32>
    %1577 = arith.mulf %1542, %1576 : vector<14x224xf32>
    %1578 = vector.extract_strided_slice %1487 {offsets = [2, 1, 0], sizes = [1, 1, 224], strides = [1, 1, 1]} : vector<3x3x224xf32> to vector<1x1x224xf32>
    %1579 = vector.shape_cast %1578 : vector<1x1x224xf32> to vector<1x224xf32>
    %1580 = vector.broadcast %1579 : vector<1x224xf32> to vector<14x224xf32>
    %1581 = arith.mulf %1539, %1580 : vector<14x224xf32>
    %1582 = arith.addf %1577, %1581 : vector<14x224xf32>
    %1583 = vector.extract_strided_slice %1487 {offsets = [2, 2, 0], sizes = [1, 1, 224], strides = [1, 1, 1]} : vector<3x3x224xf32> to vector<1x1x224xf32>
    %1584 = vector.shape_cast %1583 : vector<1x1x224xf32> to vector<1x224xf32>
    %1585 = vector.broadcast %1584 : vector<1x224xf32> to vector<14x224xf32>
    %1586 = arith.mulf %1545, %1585 : vector<14x224xf32>
    %1587 = arith.addf %1582, %1586 : vector<14x224xf32>
    %cst_243 = arith.constant 0.000000e+00 : f32
    %1588 = vector.broadcast %cst_243 : f32 to vector<1x224xf32>
    %1589 = vector.extract_strided_slice %1559 {offsets = [0, 0], sizes = [13, 224], strides = [1, 1]} : vector<14x224xf32> to vector<13x224xf32>
    %1590 = tpu.concatenate %1588, %1589 in 0 : vector<1x224xf32>, vector<13x224xf32> -> vector<14x224xf32>
    %1591 = arith.addf %1573, %1590 : vector<14x224xf32>
    %cst_244 = arith.constant 0.000000e+00 : f32
    %1592 = vector.broadcast %cst_244 : f32 to vector<1x224xf32>
    %1593 = vector.extract_strided_slice %1587 {offsets = [1, 0], sizes = [13, 224], strides = [1, 1]} : vector<14x224xf32> to vector<13x224xf32>
    %1594 = tpu.concatenate %1593, %1592 in 0 : vector<13x224xf32>, vector<1x224xf32> -> vector<14x224xf32>
    %1595 = arith.addf %1591, %1594 : vector<14x224xf32>
    %1596 = vector.extract_strided_slice %4 {offsets = [1, 0], sizes = [1, 224], strides = [1, 1]} : vector<2x224xf32> to vector<1x224xf32>
    %1597 = vector.broadcast %1596 : vector<1x224xf32> to vector<14x224xf32>
    %1598 = arith.mulf %1595, %1597 : vector<14x224xf32>
    %1599 = vector.extract_strided_slice %5 {offsets = [1, 0], sizes = [1, 224], strides = [1, 1]} : vector<2x224xf32> to vector<1x224xf32>
    %1600 = vector.broadcast %1599 : vector<1x224xf32> to vector<14x224xf32>
    %1601 = arith.addf %1598, %1600 : vector<14x224xf32>
    %cst_245 = arith.constant 0.000000e+00 : f32
    %1602 = vector.broadcast %cst_245 : f32 to vector<14x224xf32>
    %1603 = arith.maximumf %1601, %1602 : vector<14x224xf32>
    %1604 = tpu.concatenate %1483, %1603 in 1 : vector<14x224xf32>, vector<14x224xf32> -> vector<14x448xf32>
    %c5_246 = arith.constant 5 : index
    %c0_247 = arith.constant 0 : index
    %c0_248 = arith.constant 0 : index
    %1605 = vector.load %arg8[%c5_246, %c0_247, %c0_248] : memref<8x14x448xf32, #tpu.memory_space<vmem>>, vector<1x14x448xf32>
    %1606 = vector.shape_cast %1605 : vector<1x14x448xf32> to vector<14x448xf32>
    %1607 = vector.shape_cast %1604 : vector<14x448xf32> to vector<1x14x448xf32>
    tpu.vector_store %arg8[%c5_246, %c0_247, %c0_248], %1607 {strides = array<i32>} : memref<8x14x448xf32, #tpu.memory_space<vmem>>, vector<1x14x448xf32>,
    %c6 = arith.constant 6 : index
    %c0_249 = arith.constant 0 : index
    %c0_250 = arith.constant 0 : index
    %c0_251 = arith.constant 0 : index
    %c0_252 = arith.constant 0 : index
    %1608 = vector.load %arg1[%c6, %c0_249, %c0_250, %c0_251, %c0_252] : memref<8x2x2x14x224xf32, #tpu.memory_space<vmem>>, vector<1x1x1x14x224xf32>
    %1609 = vector.shape_cast %1608 : vector<1x1x1x14x224xf32> to vector<14x224xf32>
    %c6_253 = arith.constant 6 : index
    %c0_254 = arith.constant 0 : index
    %c1_255 = arith.constant 1 : index
    %c0_256 = arith.constant 0 : index
    %c0_257 = arith.constant 0 : index
    %1610 = vector.load %arg1[%c6_253, %c0_254, %c1_255, %c0_256, %c0_257] : memref<8x2x2x14x224xf32, #tpu.memory_space<vmem>>, vector<1x1x1x14x224xf32>
    %1611 = vector.shape_cast %1610 : vector<1x1x1x14x224xf32> to vector<14x224xf32>
    %c6_258 = arith.constant 6 : index
    %c1_259 = arith.constant 1 : index
    %c0_260 = arith.constant 0 : index
    %c0_261 = arith.constant 0 : index
    %c0_262 = arith.constant 0 : index
    %1612 = vector.load %arg1[%c6_258, %c1_259, %c0_260, %c0_261, %c0_262] : memref<8x2x2x14x224xf32, #tpu.memory_space<vmem>>, vector<1x1x1x14x224xf32>
    %1613 = vector.shape_cast %1612 : vector<1x1x1x14x224xf32> to vector<14x224xf32>
    %c6_263 = arith.constant 6 : index
    %c1_264 = arith.constant 1 : index
    %c1_265 = arith.constant 1 : index
    %c0_266 = arith.constant 0 : index
    %c0_267 = arith.constant 0 : index
    %1614 = vector.load %arg1[%c6_263, %c1_264, %c1_265, %c0_266, %c0_267] : memref<8x2x2x14x224xf32, #tpu.memory_space<vmem>>, vector<1x1x1x14x224xf32>
    %1615 = vector.shape_cast %1614 : vector<1x1x1x14x224xf32> to vector<14x224xf32>
    %cst_268 = arith.constant 0.000000e+00 : f32
    %1616 = vector.broadcast %cst_268 : f32 to vector<14x16xf32>
    %1617 = vector.extract_strided_slice %1611 {offsets = [0, 0], sizes = [14, 208], strides = [1, 1]} : vector<14x224xf32> to vector<14x208xf32>
    %1618 = tpu.concatenate %1616, %1617 in 1 : vector<14x16xf32>, vector<14x208xf32> -> vector<14x224xf32>
    %cst_269 = arith.constant 0.000000e+00 : f32
    %1619 = vector.broadcast %cst_269 : f32 to vector<14x16xf32>
    %1620 = vector.extract_strided_slice %1615 {offsets = [0, 0], sizes = [14, 208], strides = [1, 1]} : vector<14x224xf32> to vector<14x208xf32>
    %1621 = tpu.concatenate %1619, %1620 in 1 : vector<14x16xf32>, vector<14x208xf32> -> vector<14x224xf32>
    %cst_270 = arith.constant 0.000000e+00 : f32
    %1622 = vector.broadcast %cst_270 : f32 to vector<1x224xf32>
    %1623 = vector.extract_strided_slice %1613 {offsets = [0, 0], sizes = [13, 224], strides = [1, 1]} : vector<14x224xf32> to vector<13x224xf32>
    %1624 = tpu.concatenate %1622, %1623 in 0 : vector<1x224xf32>, vector<13x224xf32> -> vector<14x224xf32>
    %cst_271 = arith.constant 0.000000e+00 : f32
    %1625 = vector.broadcast %cst_271 : f32 to vector<1x224xf32>
    %1626 = vector.extract_strided_slice %1615 {offsets = [0, 0], sizes = [13, 224], strides = [1, 1]} : vector<14x224xf32> to vector<13x224xf32>
    %1627 = tpu.concatenate %1625, %1626 in 0 : vector<1x224xf32>, vector<13x224xf32> -> vector<14x224xf32>
    %cst_272 = arith.constant 0.000000e+00 : f32
    %1628 = vector.broadcast %cst_272 : f32 to vector<1x224xf32>
    %1629 = vector.extract_strided_slice %1621 {offsets = [0, 0], sizes = [13, 224], strides = [1, 1]} : vector<14x224xf32> to vector<13x224xf32>
    %1630 = tpu.concatenate %1628, %1629 in 0 : vector<1x224xf32>, vector<13x224xf32> -> vector<14x224xf32>
    %1631 = vector.extract_strided_slice %0 {offsets = [0, 0, 0, 0], sizes = [1, 3, 3, 224], strides = [1, 1, 1, 1]} : vector<2x3x3x224xf32> to vector<1x3x3x224xf32>
    %1632 = vector.shape_cast %1631 : vector<1x3x3x224xf32> to vector<3x3x224xf32>
    %1633 = vector.extract_strided_slice %1 {offsets = [0, 0, 0, 0], sizes = [1, 3, 3, 224], strides = [1, 1, 1, 1]} : vector<2x3x3x224xf32> to vector<1x3x3x224xf32>
    %1634 = vector.shape_cast %1633 : vector<1x3x3x224xf32> to vector<3x3x224xf32>
    %1635 = vector.extract_strided_slice %1632 {offsets = [0, 0, 0], sizes = [1, 1, 224], strides = [1, 1, 1]} : vector<3x3x224xf32> to vector<1x1x224xf32>
    %1636 = vector.shape_cast %1635 : vector<1x1x224xf32> to vector<1x224xf32>
    %1637 = vector.broadcast %1636 : vector<1x224xf32> to vector<14x224xf32>
    %1638 = arith.mulf %1630, %1637 : vector<14x224xf32>
    %1639 = vector.extract_strided_slice %1632 {offsets = [0, 1, 0], sizes = [1, 1, 224], strides = [1, 1, 1]} : vector<3x3x224xf32> to vector<1x1x224xf32>
    %1640 = vector.shape_cast %1639 : vector<1x1x224xf32> to vector<1x224xf32>
    %1641 = vector.broadcast %1640 : vector<1x224xf32> to vector<14x224xf32>
    %1642 = arith.mulf %1624, %1641 : vector<14x224xf32>
    %1643 = arith.addf %1638, %1642 : vector<14x224xf32>
    %1644 = vector.extract_strided_slice %1632 {offsets = [0, 2, 0], sizes = [1, 1, 224], strides = [1, 1, 1]} : vector<3x3x224xf32> to vector<1x1x224xf32>
    %1645 = vector.shape_cast %1644 : vector<1x1x224xf32> to vector<1x224xf32>
    %1646 = vector.broadcast %1645 : vector<1x224xf32> to vector<14x224xf32>
    %1647 = arith.mulf %1627, %1646 : vector<14x224xf32>
    %1648 = arith.addf %1643, %1647 : vector<14x224xf32>
    %1649 = vector.extract_strided_slice %1632 {offsets = [1, 0, 0], sizes = [1, 1, 224], strides = [1, 1, 1]} : vector<3x3x224xf32> to vector<1x1x224xf32>
    %1650 = vector.shape_cast %1649 : vector<1x1x224xf32> to vector<1x224xf32>
    %1651 = vector.broadcast %1650 : vector<1x224xf32> to vector<14x224xf32>
    %1652 = arith.mulf %1618, %1651 : vector<14x224xf32>
    %1653 = arith.addf %1648, %1652 : vector<14x224xf32>
    %1654 = vector.extract_strided_slice %1632 {offsets = [1, 1, 0], sizes = [1, 1, 224], strides = [1, 1, 1]} : vector<3x3x224xf32> to vector<1x1x224xf32>
    %1655 = vector.shape_cast %1654 : vector<1x1x224xf32> to vector<1x224xf32>
    %1656 = vector.broadcast %1655 : vector<1x224xf32> to vector<14x224xf32>
    %1657 = arith.mulf %1609, %1656 : vector<14x224xf32>
    %1658 = arith.addf %1653, %1657 : vector<14x224xf32>
    %1659 = vector.extract_strided_slice %1632 {offsets = [1, 2, 0], sizes = [1, 1, 224], strides = [1, 1, 1]} : vector<3x3x224xf32> to vector<1x1x224xf32>
    %1660 = vector.shape_cast %1659 : vector<1x1x224xf32> to vector<1x224xf32>
    %1661 = vector.broadcast %1660 : vector<1x224xf32> to vector<14x224xf32>
    %1662 = arith.mulf %1611, %1661 : vector<14x224xf32>
    %1663 = arith.addf %1658, %1662 : vector<14x224xf32>
    %1664 = vector.extract_strided_slice %1632 {offsets = [2, 0, 0], sizes = [1, 1, 224], strides = [1, 1, 1]} : vector<3x3x224xf32> to vector<1x1x224xf32>
    %1665 = vector.shape_cast %1664 : vector<1x1x224xf32> to vector<1x224xf32>
    %1666 = vector.broadcast %1665 : vector<1x224xf32> to vector<14x224xf32>
    %1667 = arith.mulf %1621, %1666 : vector<14x224xf32>
    %1668 = arith.addf %1663, %1667 : vector<14x224xf32>
    %1669 = vector.extract_strided_slice %1632 {offsets = [2, 1, 0], sizes = [1, 1, 224], strides = [1, 1, 1]} : vector<3x3x224xf32> to vector<1x1x224xf32>
    %1670 = vector.shape_cast %1669 : vector<1x1x224xf32> to vector<1x224xf32>
    %1671 = vector.broadcast %1670 : vector<1x224xf32> to vector<14x224xf32>
    %1672 = arith.mulf %1613, %1671 : vector<14x224xf32>
    %1673 = arith.addf %1668, %1672 : vector<14x224xf32>
    %1674 = vector.extract_strided_slice %1632 {offsets = [2, 2, 0], sizes = [1, 1, 224], strides = [1, 1, 1]} : vector<3x3x224xf32> to vector<1x1x224xf32>
    %1675 = vector.shape_cast %1674 : vector<1x1x224xf32> to vector<1x224xf32>
    %1676 = vector.broadcast %1675 : vector<1x224xf32> to vector<14x224xf32>
    %1677 = arith.mulf %1615, %1676 : vector<14x224xf32>
    %1678 = arith.addf %1673, %1677 : vector<14x224xf32>
    %1679 = vector.extract_strided_slice %2 {offsets = [0, 0], sizes = [1, 224], strides = [1, 1]} : vector<2x224xf32> to vector<1x224xf32>
    %1680 = vector.broadcast %1679 : vector<1x224xf32> to vector<14x224xf32>
    %1681 = arith.mulf %1678, %1680 : vector<14x224xf32>
    %1682 = vector.extract_strided_slice %3 {offsets = [0, 0], sizes = [1, 224], strides = [1, 1]} : vector<2x224xf32> to vector<1x224xf32>
    %1683 = vector.broadcast %1682 : vector<1x224xf32> to vector<14x224xf32>
    %1684 = arith.addf %1681, %1683 : vector<14x224xf32>
    %cst_273 = arith.constant 0.000000e+00 : f32
    %1685 = vector.broadcast %cst_273 : f32 to vector<14x224xf32>
    %1686 = arith.maximumf %1684, %1685 : vector<14x224xf32>
    %cst_274 = arith.constant 0.000000e+00 : f32
    %1687 = vector.broadcast %cst_274 : f32 to vector<14x16xf32>
    %1688 = vector.extract_strided_slice %1686 {offsets = [0, 0], sizes = [14, 208], strides = [1, 1]} : vector<14x224xf32> to vector<14x208xf32>
    %1689 = tpu.concatenate %1687, %1688 in 1 : vector<14x16xf32>, vector<14x208xf32> -> vector<14x224xf32>
    %cst_275 = arith.constant 0.000000e+00 : f32
    %1690 = vector.broadcast %cst_275 : f32 to vector<14x16xf32>
    %1691 = vector.extract_strided_slice %1686 {offsets = [0, 16], sizes = [14, 208], strides = [1, 1]} : vector<14x224xf32> to vector<14x208xf32>
    %1692 = tpu.concatenate %1691, %1690 in 1 : vector<14x208xf32>, vector<14x16xf32> -> vector<14x224xf32>
    %1693 = vector.extract_strided_slice %1634 {offsets = [0, 0, 0], sizes = [1, 1, 224], strides = [1, 1, 1]} : vector<3x3x224xf32> to vector<1x1x224xf32>
    %1694 = vector.shape_cast %1693 : vector<1x1x224xf32> to vector<1x224xf32>
    %1695 = vector.broadcast %1694 : vector<1x224xf32> to vector<14x224xf32>
    %1696 = arith.mulf %1689, %1695 : vector<14x224xf32>
    %1697 = vector.extract_strided_slice %1634 {offsets = [0, 1, 0], sizes = [1, 1, 224], strides = [1, 1, 1]} : vector<3x3x224xf32> to vector<1x1x224xf32>
    %1698 = vector.shape_cast %1697 : vector<1x1x224xf32> to vector<1x224xf32>
    %1699 = vector.broadcast %1698 : vector<1x224xf32> to vector<14x224xf32>
    %1700 = arith.mulf %1686, %1699 : vector<14x224xf32>
    %1701 = arith.addf %1696, %1700 : vector<14x224xf32>
    %1702 = vector.extract_strided_slice %1634 {offsets = [0, 2, 0], sizes = [1, 1, 224], strides = [1, 1, 1]} : vector<3x3x224xf32> to vector<1x1x224xf32>
    %1703 = vector.shape_cast %1702 : vector<1x1x224xf32> to vector<1x224xf32>
    %1704 = vector.broadcast %1703 : vector<1x224xf32> to vector<14x224xf32>
    %1705 = arith.mulf %1692, %1704 : vector<14x224xf32>
    %1706 = arith.addf %1701, %1705 : vector<14x224xf32>
    %1707 = vector.extract_strided_slice %1634 {offsets = [1, 0, 0], sizes = [1, 1, 224], strides = [1, 1, 1]} : vector<3x3x224xf32> to vector<1x1x224xf32>
    %1708 = vector.shape_cast %1707 : vector<1x1x224xf32> to vector<1x224xf32>
    %1709 = vector.broadcast %1708 : vector<1x224xf32> to vector<14x224xf32>
    %1710 = arith.mulf %1689, %1709 : vector<14x224xf32>
    %1711 = vector.extract_strided_slice %1634 {offsets = [1, 1, 0], sizes = [1, 1, 224], strides = [1, 1, 1]} : vector<3x3x224xf32> to vector<1x1x224xf32>
    %1712 = vector.shape_cast %1711 : vector<1x1x224xf32> to vector<1x224xf32>
    %1713 = vector.broadcast %1712 : vector<1x224xf32> to vector<14x224xf32>
    %1714 = arith.mulf %1686, %1713 : vector<14x224xf32>
    %1715 = arith.addf %1710, %1714 : vector<14x224xf32>
    %1716 = vector.extract_strided_slice %1634 {offsets = [1, 2, 0], sizes = [1, 1, 224], strides = [1, 1, 1]} : vector<3x3x224xf32> to vector<1x1x224xf32>
    %1717 = vector.shape_cast %1716 : vector<1x1x224xf32> to vector<1x224xf32>
    %1718 = vector.broadcast %1717 : vector<1x224xf32> to vector<14x224xf32>
    %1719 = arith.mulf %1692, %1718 : vector<14x224xf32>
    %1720 = arith.addf %1715, %1719 : vector<14x224xf32>
    %1721 = vector.extract_strided_slice %1634 {offsets = [2, 0, 0], sizes = [1, 1, 224], strides = [1, 1, 1]} : vector<3x3x224xf32> to vector<1x1x224xf32>
    %1722 = vector.shape_cast %1721 : vector<1x1x224xf32> to vector<1x224xf32>
    %1723 = vector.broadcast %1722 : vector<1x224xf32> to vector<14x224xf32>
    %1724 = arith.mulf %1689, %1723 : vector<14x224xf32>
    %1725 = vector.extract_strided_slice %1634 {offsets = [2, 1, 0], sizes = [1, 1, 224], strides = [1, 1, 1]} : vector<3x3x224xf32> to vector<1x1x224xf32>
    %1726 = vector.shape_cast %1725 : vector<1x1x224xf32> to vector<1x224xf32>
    %1727 = vector.broadcast %1726 : vector<1x224xf32> to vector<14x224xf32>
    %1728 = arith.mulf %1686, %1727 : vector<14x224xf32>
    %1729 = arith.addf %1724, %1728 : vector<14x224xf32>
    %1730 = vector.extract_strided_slice %1634 {offsets = [2, 2, 0], sizes = [1, 1, 224], strides = [1, 1, 1]} : vector<3x3x224xf32> to vector<1x1x224xf32>
    %1731 = vector.shape_cast %1730 : vector<1x1x224xf32> to vector<1x224xf32>
    %1732 = vector.broadcast %1731 : vector<1x224xf32> to vector<14x224xf32>
    %1733 = arith.mulf %1692, %1732 : vector<14x224xf32>
    %1734 = arith.addf %1729, %1733 : vector<14x224xf32>
    %cst_276 = arith.constant 0.000000e+00 : f32
    %1735 = vector.broadcast %cst_276 : f32 to vector<1x224xf32>
    %1736 = vector.extract_strided_slice %1706 {offsets = [0, 0], sizes = [13, 224], strides = [1, 1]} : vector<14x224xf32> to vector<13x224xf32>
    %1737 = tpu.concatenate %1735, %1736 in 0 : vector<1x224xf32>, vector<13x224xf32> -> vector<14x224xf32>
    %1738 = arith.addf %1720, %1737 : vector<14x224xf32>
    %cst_277 = arith.constant 0.000000e+00 : f32
    %1739 = vector.broadcast %cst_277 : f32 to vector<1x224xf32>
    %1740 = vector.extract_strided_slice %1734 {offsets = [1, 0], sizes = [13, 224], strides = [1, 1]} : vector<14x224xf32> to vector<13x224xf32>
    %1741 = tpu.concatenate %1740, %1739 in 0 : vector<13x224xf32>, vector<1x224xf32> -> vector<14x224xf32>
    %1742 = arith.addf %1738, %1741 : vector<14x224xf32>
    %1743 = vector.extract_strided_slice %4 {offsets = [0, 0], sizes = [1, 224], strides = [1, 1]} : vector<2x224xf32> to vector<1x224xf32>
    %1744 = vector.broadcast %1743 : vector<1x224xf32> to vector<14x224xf32>
    %1745 = arith.mulf %1742, %1744 : vector<14x224xf32>
    %1746 = vector.extract_strided_slice %5 {offsets = [0, 0], sizes = [1, 224], strides = [1, 1]} : vector<2x224xf32> to vector<1x224xf32>
    %1747 = vector.broadcast %1746 : vector<1x224xf32> to vector<14x224xf32>
    %1748 = arith.addf %1745, %1747 : vector<14x224xf32>
    %cst_278 = arith.constant 0.000000e+00 : f32
    %1749 = vector.broadcast %cst_278 : f32 to vector<14x224xf32>
    %1750 = arith.maximumf %1748, %1749 : vector<14x224xf32>
    %1751 = vector.extract_strided_slice %0 {offsets = [1, 0, 0, 0], sizes = [1, 3, 3, 224], strides = [1, 1, 1, 1]} : vector<2x3x3x224xf32> to vector<1x3x3x224xf32>
    %1752 = vector.shape_cast %1751 : vector<1x3x3x224xf32> to vector<3x3x224xf32>
    %1753 = vector.extract_strided_slice %1 {offsets = [1, 0, 0, 0], sizes = [1, 3, 3, 224], strides = [1, 1, 1, 1]} : vector<2x3x3x224xf32> to vector<1x3x3x224xf32>
    %1754 = vector.shape_cast %1753 : vector<1x3x3x224xf32> to vector<3x3x224xf32>
    %1755 = vector.extract_strided_slice %1752 {offsets = [0, 0, 0], sizes = [1, 1, 224], strides = [1, 1, 1]} : vector<3x3x224xf32> to vector<1x1x224xf32>
    %1756 = vector.shape_cast %1755 : vector<1x1x224xf32> to vector<1x224xf32>
    %1757 = vector.broadcast %1756 : vector<1x224xf32> to vector<14x224xf32>
    %1758 = arith.mulf %1630, %1757 : vector<14x224xf32>
    %1759 = vector.extract_strided_slice %1752 {offsets = [0, 1, 0], sizes = [1, 1, 224], strides = [1, 1, 1]} : vector<3x3x224xf32> to vector<1x1x224xf32>
    %1760 = vector.shape_cast %1759 : vector<1x1x224xf32> to vector<1x224xf32>
    %1761 = vector.broadcast %1760 : vector<1x224xf32> to vector<14x224xf32>
    %1762 = arith.mulf %1624, %1761 : vector<14x224xf32>
    %1763 = arith.addf %1758, %1762 : vector<14x224xf32>
    %1764 = vector.extract_strided_slice %1752 {offsets = [0, 2, 0], sizes = [1, 1, 224], strides = [1, 1, 1]} : vector<3x3x224xf32> to vector<1x1x224xf32>
    %1765 = vector.shape_cast %1764 : vector<1x1x224xf32> to vector<1x224xf32>
    %1766 = vector.broadcast %1765 : vector<1x224xf32> to vector<14x224xf32>
    %1767 = arith.mulf %1627, %1766 : vector<14x224xf32>
    %1768 = arith.addf %1763, %1767 : vector<14x224xf32>
    %1769 = vector.extract_strided_slice %1752 {offsets = [1, 0, 0], sizes = [1, 1, 224], strides = [1, 1, 1]} : vector<3x3x224xf32> to vector<1x1x224xf32>
    %1770 = vector.shape_cast %1769 : vector<1x1x224xf32> to vector<1x224xf32>
    %1771 = vector.broadcast %1770 : vector<1x224xf32> to vector<14x224xf32>
    %1772 = arith.mulf %1618, %1771 : vector<14x224xf32>
    %1773 = arith.addf %1768, %1772 : vector<14x224xf32>
    %1774 = vector.extract_strided_slice %1752 {offsets = [1, 1, 0], sizes = [1, 1, 224], strides = [1, 1, 1]} : vector<3x3x224xf32> to vector<1x1x224xf32>
    %1775 = vector.shape_cast %1774 : vector<1x1x224xf32> to vector<1x224xf32>
    %1776 = vector.broadcast %1775 : vector<1x224xf32> to vector<14x224xf32>
    %1777 = arith.mulf %1609, %1776 : vector<14x224xf32>
    %1778 = arith.addf %1773, %1777 : vector<14x224xf32>
    %1779 = vector.extract_strided_slice %1752 {offsets = [1, 2, 0], sizes = [1, 1, 224], strides = [1, 1, 1]} : vector<3x3x224xf32> to vector<1x1x224xf32>
    %1780 = vector.shape_cast %1779 : vector<1x1x224xf32> to vector<1x224xf32>
    %1781 = vector.broadcast %1780 : vector<1x224xf32> to vector<14x224xf32>
    %1782 = arith.mulf %1611, %1781 : vector<14x224xf32>
    %1783 = arith.addf %1778, %1782 : vector<14x224xf32>
    %1784 = vector.extract_strided_slice %1752 {offsets = [2, 0, 0], sizes = [1, 1, 224], strides = [1, 1, 1]} : vector<3x3x224xf32> to vector<1x1x224xf32>
    %1785 = vector.shape_cast %1784 : vector<1x1x224xf32> to vector<1x224xf32>
    %1786 = vector.broadcast %1785 : vector<1x224xf32> to vector<14x224xf32>
    %1787 = arith.mulf %1621, %1786 : vector<14x224xf32>
    %1788 = arith.addf %1783, %1787 : vector<14x224xf32>
    %1789 = vector.extract_strided_slice %1752 {offsets = [2, 1, 0], sizes = [1, 1, 224], strides = [1, 1, 1]} : vector<3x3x224xf32> to vector<1x1x224xf32>
    %1790 = vector.shape_cast %1789 : vector<1x1x224xf32> to vector<1x224xf32>
    %1791 = vector.broadcast %1790 : vector<1x224xf32> to vector<14x224xf32>
    %1792 = arith.mulf %1613, %1791 : vector<14x224xf32>
    %1793 = arith.addf %1788, %1792 : vector<14x224xf32>
    %1794 = vector.extract_strided_slice %1752 {offsets = [2, 2, 0], sizes = [1, 1, 224], strides = [1, 1, 1]} : vector<3x3x224xf32> to vector<1x1x224xf32>
    %1795 = vector.shape_cast %1794 : vector<1x1x224xf32> to vector<1x224xf32>
    %1796 = vector.broadcast %1795 : vector<1x224xf32> to vector<14x224xf32>
    %1797 = arith.mulf %1615, %1796 : vector<14x224xf32>
    %1798 = arith.addf %1793, %1797 : vector<14x224xf32>
    %1799 = vector.extract_strided_slice %2 {offsets = [1, 0], sizes = [1, 224], strides = [1, 1]} : vector<2x224xf32> to vector<1x224xf32>
    %1800 = vector.broadcast %1799 : vector<1x224xf32> to vector<14x224xf32>
    %1801 = arith.mulf %1798, %1800 : vector<14x224xf32>
    %1802 = vector.extract_strided_slice %3 {offsets = [1, 0], sizes = [1, 224], strides = [1, 1]} : vector<2x224xf32> to vector<1x224xf32>
    %1803 = vector.broadcast %1802 : vector<1x224xf32> to vector<14x224xf32>
    %1804 = arith.addf %1801, %1803 : vector<14x224xf32>
    %cst_279 = arith.constant 0.000000e+00 : f32
    %1805 = vector.broadcast %cst_279 : f32 to vector<14x224xf32>
    %1806 = arith.maximumf %1804, %1805 : vector<14x224xf32>
    %cst_280 = arith.constant 0.000000e+00 : f32
    %1807 = vector.broadcast %cst_280 : f32 to vector<14x16xf32>
    %1808 = vector.extract_strided_slice %1806 {offsets = [0, 0], sizes = [14, 208], strides = [1, 1]} : vector<14x224xf32> to vector<14x208xf32>
    %1809 = tpu.concatenate %1807, %1808 in 1 : vector<14x16xf32>, vector<14x208xf32> -> vector<14x224xf32>
    %cst_281 = arith.constant 0.000000e+00 : f32
    %1810 = vector.broadcast %cst_281 : f32 to vector<14x16xf32>
    %1811 = vector.extract_strided_slice %1806 {offsets = [0, 16], sizes = [14, 208], strides = [1, 1]} : vector<14x224xf32> to vector<14x208xf32>
    %1812 = tpu.concatenate %1811, %1810 in 1 : vector<14x208xf32>, vector<14x16xf32> -> vector<14x224xf32>
    %1813 = vector.extract_strided_slice %1754 {offsets = [0, 0, 0], sizes = [1, 1, 224], strides = [1, 1, 1]} : vector<3x3x224xf32> to vector<1x1x224xf32>
    %1814 = vector.shape_cast %1813 : vector<1x1x224xf32> to vector<1x224xf32>
    %1815 = vector.broadcast %1814 : vector<1x224xf32> to vector<14x224xf32>
    %1816 = arith.mulf %1809, %1815 : vector<14x224xf32>
    %1817 = vector.extract_strided_slice %1754 {offsets = [0, 1, 0], sizes = [1, 1, 224], strides = [1, 1, 1]} : vector<3x3x224xf32> to vector<1x1x224xf32>
    %1818 = vector.shape_cast %1817 : vector<1x1x224xf32> to vector<1x224xf32>
    %1819 = vector.broadcast %1818 : vector<1x224xf32> to vector<14x224xf32>
    %1820 = arith.mulf %1806, %1819 : vector<14x224xf32>
    %1821 = arith.addf %1816, %1820 : vector<14x224xf32>
    %1822 = vector.extract_strided_slice %1754 {offsets = [0, 2, 0], sizes = [1, 1, 224], strides = [1, 1, 1]} : vector<3x3x224xf32> to vector<1x1x224xf32>
    %1823 = vector.shape_cast %1822 : vector<1x1x224xf32> to vector<1x224xf32>
    %1824 = vector.broadcast %1823 : vector<1x224xf32> to vector<14x224xf32>
    %1825 = arith.mulf %1812, %1824 : vector<14x224xf32>
    %1826 = arith.addf %1821, %1825 : vector<14x224xf32>
    %1827 = vector.extract_strided_slice %1754 {offsets = [1, 0, 0], sizes = [1, 1, 224], strides = [1, 1, 1]} : vector<3x3x224xf32> to vector<1x1x224xf32>
    %1828 = vector.shape_cast %1827 : vector<1x1x224xf32> to vector<1x224xf32>
    %1829 = vector.broadcast %1828 : vector<1x224xf32> to vector<14x224xf32>
    %1830 = arith.mulf %1809, %1829 : vector<14x224xf32>
    %1831 = vector.extract_strided_slice %1754 {offsets = [1, 1, 0], sizes = [1, 1, 224], strides = [1, 1, 1]} : vector<3x3x224xf32> to vector<1x1x224xf32>
    %1832 = vector.shape_cast %1831 : vector<1x1x224xf32> to vector<1x224xf32>
    %1833 = vector.broadcast %1832 : vector<1x224xf32> to vector<14x224xf32>
    %1834 = arith.mulf %1806, %1833 : vector<14x224xf32>
    %1835 = arith.addf %1830, %1834 : vector<14x224xf32>
    %1836 = vector.extract_strided_slice %1754 {offsets = [1, 2, 0], sizes = [1, 1, 224], strides = [1, 1, 1]} : vector<3x3x224xf32> to vector<1x1x224xf32>
    %1837 = vector.shape_cast %1836 : vector<1x1x224xf32> to vector<1x224xf32>
    %1838 = vector.broadcast %1837 : vector<1x224xf32> to vector<14x224xf32>
    %1839 = arith.mulf %1812, %1838 : vector<14x224xf32>
    %1840 = arith.addf %1835, %1839 : vector<14x224xf32>
    %1841 = vector.extract_strided_slice %1754 {offsets = [2, 0, 0], sizes = [1, 1, 224], strides = [1, 1, 1]} : vector<3x3x224xf32> to vector<1x1x224xf32>
    %1842 = vector.shape_cast %1841 : vector<1x1x224xf32> to vector<1x224xf32>
    %1843 = vector.broadcast %1842 : vector<1x224xf32> to vector<14x224xf32>
    %1844 = arith.mulf %1809, %1843 : vector<14x224xf32>
    %1845 = vector.extract_strided_slice %1754 {offsets = [2, 1, 0], sizes = [1, 1, 224], strides = [1, 1, 1]} : vector<3x3x224xf32> to vector<1x1x224xf32>
    %1846 = vector.shape_cast %1845 : vector<1x1x224xf32> to vector<1x224xf32>
    %1847 = vector.broadcast %1846 : vector<1x224xf32> to vector<14x224xf32>
    %1848 = arith.mulf %1806, %1847 : vector<14x224xf32>
    %1849 = arith.addf %1844, %1848 : vector<14x224xf32>
    %1850 = vector.extract_strided_slice %1754 {offsets = [2, 2, 0], sizes = [1, 1, 224], strides = [1, 1, 1]} : vector<3x3x224xf32> to vector<1x1x224xf32>
    %1851 = vector.shape_cast %1850 : vector<1x1x224xf32> to vector<1x224xf32>
    %1852 = vector.broadcast %1851 : vector<1x224xf32> to vector<14x224xf32>
    %1853 = arith.mulf %1812, %1852 : vector<14x224xf32>
    %1854 = arith.addf %1849, %1853 : vector<14x224xf32>
    %cst_282 = arith.constant 0.000000e+00 : f32
    %1855 = vector.broadcast %cst_282 : f32 to vector<1x224xf32>
    %1856 = vector.extract_strided_slice %1826 {offsets = [0, 0], sizes = [13, 224], strides = [1, 1]} : vector<14x224xf32> to vector<13x224xf32>
    %1857 = tpu.concatenate %1855, %1856 in 0 : vector<1x224xf32>, vector<13x224xf32> -> vector<14x224xf32>
    %1858 = arith.addf %1840, %1857 : vector<14x224xf32>
    %cst_283 = arith.constant 0.000000e+00 : f32
    %1859 = vector.broadcast %cst_283 : f32 to vector<1x224xf32>
    %1860 = vector.extract_strided_slice %1854 {offsets = [1, 0], sizes = [13, 224], strides = [1, 1]} : vector<14x224xf32> to vector<13x224xf32>
    %1861 = tpu.concatenate %1860, %1859 in 0 : vector<13x224xf32>, vector<1x224xf32> -> vector<14x224xf32>
    %1862 = arith.addf %1858, %1861 : vector<14x224xf32>
    %1863 = vector.extract_strided_slice %4 {offsets = [1, 0], sizes = [1, 224], strides = [1, 1]} : vector<2x224xf32> to vector<1x224xf32>
    %1864 = vector.broadcast %1863 : vector<1x224xf32> to vector<14x224xf32>
    %1865 = arith.mulf %1862, %1864 : vector<14x224xf32>
    %1866 = vector.extract_strided_slice %5 {offsets = [1, 0], sizes = [1, 224], strides = [1, 1]} : vector<2x224xf32> to vector<1x224xf32>
    %1867 = vector.broadcast %1866 : vector<1x224xf32> to vector<14x224xf32>
    %1868 = arith.addf %1865, %1867 : vector<14x224xf32>
    %cst_284 = arith.constant 0.000000e+00 : f32
    %1869 = vector.broadcast %cst_284 : f32 to vector<14x224xf32>
    %1870 = arith.maximumf %1868, %1869 : vector<14x224xf32>
    %1871 = tpu.concatenate %1750, %1870 in 1 : vector<14x224xf32>, vector<14x224xf32> -> vector<14x448xf32>
    %c6_285 = arith.constant 6 : index
    %c0_286 = arith.constant 0 : index
    %c0_287 = arith.constant 0 : index
    %1872 = vector.load %arg8[%c6_285, %c0_286, %c0_287] : memref<8x14x448xf32, #tpu.memory_space<vmem>>, vector<1x14x448xf32>
    %1873 = vector.shape_cast %1872 : vector<1x14x448xf32> to vector<14x448xf32>
    %1874 = vector.shape_cast %1871 : vector<14x448xf32> to vector<1x14x448xf32>
    tpu.vector_store %arg8[%c6_285, %c0_286, %c0_287], %1874 {strides = array<i32>} : memref<8x14x448xf32, #tpu.memory_space<vmem>>, vector<1x14x448xf32>,
    %c7 = arith.constant 7 : index
    %c0_288 = arith.constant 0 : index
    %c0_289 = arith.constant 0 : index
    %c0_290 = arith.constant 0 : index
    %c0_291 = arith.constant 0 : index
    %1875 = vector.load %arg1[%c7, %c0_288, %c0_289, %c0_290, %c0_291] : memref<8x2x2x14x224xf32, #tpu.memory_space<vmem>>, vector<1x1x1x14x224xf32>
    %1876 = vector.shape_cast %1875 : vector<1x1x1x14x224xf32> to vector<14x224xf32>
    %c7_292 = arith.constant 7 : index
    %c0_293 = arith.constant 0 : index
    %c1_294 = arith.constant 1 : index
    %c0_295 = arith.constant 0 : index
    %c0_296 = arith.constant 0 : index
    %1877 = vector.load %arg1[%c7_292, %c0_293, %c1_294, %c0_295, %c0_296] : memref<8x2x2x14x224xf32, #tpu.memory_space<vmem>>, vector<1x1x1x14x224xf32>
    %1878 = vector.shape_cast %1877 : vector<1x1x1x14x224xf32> to vector<14x224xf32>
    %c7_297 = arith.constant 7 : index
    %c1_298 = arith.constant 1 : index
    %c0_299 = arith.constant 0 : index
    %c0_300 = arith.constant 0 : index
    %c0_301 = arith.constant 0 : index
    %1879 = vector.load %arg1[%c7_297, %c1_298, %c0_299, %c0_300, %c0_301] : memref<8x2x2x14x224xf32, #tpu.memory_space<vmem>>, vector<1x1x1x14x224xf32>
    %1880 = vector.shape_cast %1879 : vector<1x1x1x14x224xf32> to vector<14x224xf32>
    %c7_302 = arith.constant 7 : index
    %c1_303 = arith.constant 1 : index
    %c1_304 = arith.constant 1 : index
    %c0_305 = arith.constant 0 : index
    %c0_306 = arith.constant 0 : index
    %1881 = vector.load %arg1[%c7_302, %c1_303, %c1_304, %c0_305, %c0_306] : memref<8x2x2x14x224xf32, #tpu.memory_space<vmem>>, vector<1x1x1x14x224xf32>
    %1882 = vector.shape_cast %1881 : vector<1x1x1x14x224xf32> to vector<14x224xf32>
    %cst_307 = arith.constant 0.000000e+00 : f32
    %1883 = vector.broadcast %cst_307 : f32 to vector<14x16xf32>
    %1884 = vector.extract_strided_slice %1878 {offsets = [0, 0], sizes = [14, 208], strides = [1, 1]} : vector<14x224xf32> to vector<14x208xf32>
    %1885 = tpu.concatenate %1883, %1884 in 1 : vector<14x16xf32>, vector<14x208xf32> -> vector<14x224xf32>
    %cst_308 = arith.constant 0.000000e+00 : f32
    %1886 = vector.broadcast %cst_308 : f32 to vector<14x16xf32>
    %1887 = vector.extract_strided_slice %1882 {offsets = [0, 0], sizes = [14, 208], strides = [1, 1]} : vector<14x224xf32> to vector<14x208xf32>
    %1888 = tpu.concatenate %1886, %1887 in 1 : vector<14x16xf32>, vector<14x208xf32> -> vector<14x224xf32>
    %cst_309 = arith.constant 0.000000e+00 : f32
    %1889 = vector.broadcast %cst_309 : f32 to vector<1x224xf32>
    %1890 = vector.extract_strided_slice %1880 {offsets = [0, 0], sizes = [13, 224], strides = [1, 1]} : vector<14x224xf32> to vector<13x224xf32>
    %1891 = tpu.concatenate %1889, %1890 in 0 : vector<1x224xf32>, vector<13x224xf32> -> vector<14x224xf32>
    %cst_310 = arith.constant 0.000000e+00 : f32
    %1892 = vector.broadcast %cst_310 : f32 to vector<1x224xf32>
    %1893 = vector.extract_strided_slice %1882 {offsets = [0, 0], sizes = [13, 224], strides = [1, 1]} : vector<14x224xf32> to vector<13x224xf32>
    %1894 = tpu.concatenate %1892, %1893 in 0 : vector<1x224xf32>, vector<13x224xf32> -> vector<14x224xf32>
    %cst_311 = arith.constant 0.000000e+00 : f32
    %1895 = vector.broadcast %cst_311 : f32 to vector<1x224xf32>
    %1896 = vector.extract_strided_slice %1888 {offsets = [0, 0], sizes = [13, 224], strides = [1, 1]} : vector<14x224xf32> to vector<13x224xf32>
    %1897 = tpu.concatenate %1895, %1896 in 0 : vector<1x224xf32>, vector<13x224xf32> -> vector<14x224xf32>
    %1898 = vector.extract_strided_slice %0 {offsets = [0, 0, 0, 0], sizes = [1, 3, 3, 224], strides = [1, 1, 1, 1]} : vector<2x3x3x224xf32> to vector<1x3x3x224xf32>
    %1899 = vector.shape_cast %1898 : vector<1x3x3x224xf32> to vector<3x3x224xf32>
    %1900 = vector.extract_strided_slice %1 {offsets = [0, 0, 0, 0], sizes = [1, 3, 3, 224], strides = [1, 1, 1, 1]} : vector<2x3x3x224xf32> to vector<1x3x3x224xf32>
    %1901 = vector.shape_cast %1900 : vector<1x3x3x224xf32> to vector<3x3x224xf32>
    %1902 = vector.extract_strided_slice %1899 {offsets = [0, 0, 0], sizes = [1, 1, 224], strides = [1, 1, 1]} : vector<3x3x224xf32> to vector<1x1x224xf32>
    %1903 = vector.shape_cast %1902 : vector<1x1x224xf32> to vector<1x224xf32>
    %1904 = vector.broadcast %1903 : vector<1x224xf32> to vector<14x224xf32>
    %1905 = arith.mulf %1897, %1904 : vector<14x224xf32>
    %1906 = vector.extract_strided_slice %1899 {offsets = [0, 1, 0], sizes = [1, 1, 224], strides = [1, 1, 1]} : vector<3x3x224xf32> to vector<1x1x224xf32>
    %1907 = vector.shape_cast %1906 : vector<1x1x224xf32> to vector<1x224xf32>
    %1908 = vector.broadcast %1907 : vector<1x224xf32> to vector<14x224xf32>
    %1909 = arith.mulf %1891, %1908 : vector<14x224xf32>
    %1910 = arith.addf %1905, %1909 : vector<14x224xf32>
    %1911 = vector.extract_strided_slice %1899 {offsets = [0, 2, 0], sizes = [1, 1, 224], strides = [1, 1, 1]} : vector<3x3x224xf32> to vector<1x1x224xf32>
    %1912 = vector.shape_cast %1911 : vector<1x1x224xf32> to vector<1x224xf32>
    %1913 = vector.broadcast %1912 : vector<1x224xf32> to vector<14x224xf32>
    %1914 = arith.mulf %1894, %1913 : vector<14x224xf32>
    %1915 = arith.addf %1910, %1914 : vector<14x224xf32>
    %1916 = vector.extract_strided_slice %1899 {offsets = [1, 0, 0], sizes = [1, 1, 224], strides = [1, 1, 1]} : vector<3x3x224xf32> to vector<1x1x224xf32>
    %1917 = vector.shape_cast %1916 : vector<1x1x224xf32> to vector<1x224xf32>
    %1918 = vector.broadcast %1917 : vector<1x224xf32> to vector<14x224xf32>
    %1919 = arith.mulf %1885, %1918 : vector<14x224xf32>
    %1920 = arith.addf %1915, %1919 : vector<14x224xf32>
    %1921 = vector.extract_strided_slice %1899 {offsets = [1, 1, 0], sizes = [1, 1, 224], strides = [1, 1, 1]} : vector<3x3x224xf32> to vector<1x1x224xf32>
    %1922 = vector.shape_cast %1921 : vector<1x1x224xf32> to vector<1x224xf32>
    %1923 = vector.broadcast %1922 : vector<1x224xf32> to vector<14x224xf32>
    %1924 = arith.mulf %1876, %1923 : vector<14x224xf32>
    %1925 = arith.addf %1920, %1924 : vector<14x224xf32>
    %1926 = vector.extract_strided_slice %1899 {offsets = [1, 2, 0], sizes = [1, 1, 224], strides = [1, 1, 1]} : vector<3x3x224xf32> to vector<1x1x224xf32>
    %1927 = vector.shape_cast %1926 : vector<1x1x224xf32> to vector<1x224xf32>
    %1928 = vector.broadcast %1927 : vector<1x224xf32> to vector<14x224xf32>
    %1929 = arith.mulf %1878, %1928 : vector<14x224xf32>
    %1930 = arith.addf %1925, %1929 : vector<14x224xf32>
    %1931 = vector.extract_strided_slice %1899 {offsets = [2, 0, 0], sizes = [1, 1, 224], strides = [1, 1, 1]} : vector<3x3x224xf32> to vector<1x1x224xf32>
    %1932 = vector.shape_cast %1931 : vector<1x1x224xf32> to vector<1x224xf32>
    %1933 = vector.broadcast %1932 : vector<1x224xf32> to vector<14x224xf32>
    %1934 = arith.mulf %1888, %1933 : vector<14x224xf32>
    %1935 = arith.addf %1930, %1934 : vector<14x224xf32>
    %1936 = vector.extract_strided_slice %1899 {offsets = [2, 1, 0], sizes = [1, 1, 224], strides = [1, 1, 1]} : vector<3x3x224xf32> to vector<1x1x224xf32>
    %1937 = vector.shape_cast %1936 : vector<1x1x224xf32> to vector<1x224xf32>
    %1938 = vector.broadcast %1937 : vector<1x224xf32> to vector<14x224xf32>
    %1939 = arith.mulf %1880, %1938 : vector<14x224xf32>
    %1940 = arith.addf %1935, %1939 : vector<14x224xf32>
    %1941 = vector.extract_strided_slice %1899 {offsets = [2, 2, 0], sizes = [1, 1, 224], strides = [1, 1, 1]} : vector<3x3x224xf32> to vector<1x1x224xf32>
    %1942 = vector.shape_cast %1941 : vector<1x1x224xf32> to vector<1x224xf32>
    %1943 = vector.broadcast %1942 : vector<1x224xf32> to vector<14x224xf32>
    %1944 = arith.mulf %1882, %1943 : vector<14x224xf32>
    %1945 = arith.addf %1940, %1944 : vector<14x224xf32>
    %1946 = vector.extract_strided_slice %2 {offsets = [0, 0], sizes = [1, 224], strides = [1, 1]} : vector<2x224xf32> to vector<1x224xf32>
    %1947 = vector.broadcast %1946 : vector<1x224xf32> to vector<14x224xf32>
    %1948 = arith.mulf %1945, %1947 : vector<14x224xf32>
    %1949 = vector.extract_strided_slice %3 {offsets = [0, 0], sizes = [1, 224], strides = [1, 1]} : vector<2x224xf32> to vector<1x224xf32>
    %1950 = vector.broadcast %1949 : vector<1x224xf32> to vector<14x224xf32>
    %1951 = arith.addf %1948, %1950 : vector<14x224xf32>
    %cst_312 = arith.constant 0.000000e+00 : f32
    %1952 = vector.broadcast %cst_312 : f32 to vector<14x224xf32>
    %1953 = arith.maximumf %1951, %1952 : vector<14x224xf32>
    %cst_313 = arith.constant 0.000000e+00 : f32
    %1954 = vector.broadcast %cst_313 : f32 to vector<14x16xf32>
    %1955 = vector.extract_strided_slice %1953 {offsets = [0, 0], sizes = [14, 208], strides = [1, 1]} : vector<14x224xf32> to vector<14x208xf32>
    %1956 = tpu.concatenate %1954, %1955 in 1 : vector<14x16xf32>, vector<14x208xf32> -> vector<14x224xf32>
    %cst_314 = arith.constant 0.000000e+00 : f32
    %1957 = vector.broadcast %cst_314 : f32 to vector<14x16xf32>
    %1958 = vector.extract_strided_slice %1953 {offsets = [0, 16], sizes = [14, 208], strides = [1, 1]} : vector<14x224xf32> to vector<14x208xf32>
    %1959 = tpu.concatenate %1958, %1957 in 1 : vector<14x208xf32>, vector<14x16xf32> -> vector<14x224xf32>
    %1960 = vector.extract_strided_slice %1901 {offsets = [0, 0, 0], sizes = [1, 1, 224], strides = [1, 1, 1]} : vector<3x3x224xf32> to vector<1x1x224xf32>
    %1961 = vector.shape_cast %1960 : vector<1x1x224xf32> to vector<1x224xf32>
    %1962 = vector.broadcast %1961 : vector<1x224xf32> to vector<14x224xf32>
    %1963 = arith.mulf %1956, %1962 : vector<14x224xf32>
    %1964 = vector.extract_strided_slice %1901 {offsets = [0, 1, 0], sizes = [1, 1, 224], strides = [1, 1, 1]} : vector<3x3x224xf32> to vector<1x1x224xf32>
    %1965 = vector.shape_cast %1964 : vector<1x1x224xf32> to vector<1x224xf32>
    %1966 = vector.broadcast %1965 : vector<1x224xf32> to vector<14x224xf32>
    %1967 = arith.mulf %1953, %1966 : vector<14x224xf32>
    %1968 = arith.addf %1963, %1967 : vector<14x224xf32>
    %1969 = vector.extract_strided_slice %1901 {offsets = [0, 2, 0], sizes = [1, 1, 224], strides = [1, 1, 1]} : vector<3x3x224xf32> to vector<1x1x224xf32>
    %1970 = vector.shape_cast %1969 : vector<1x1x224xf32> to vector<1x224xf32>
    %1971 = vector.broadcast %1970 : vector<1x224xf32> to vector<14x224xf32>
    %1972 = arith.mulf %1959, %1971 : vector<14x224xf32>
    %1973 = arith.addf %1968, %1972 : vector<14x224xf32>
    %1974 = vector.extract_strided_slice %1901 {offsets = [1, 0, 0], sizes = [1, 1, 224], strides = [1, 1, 1]} : vector<3x3x224xf32> to vector<1x1x224xf32>
    %1975 = vector.shape_cast %1974 : vector<1x1x224xf32> to vector<1x224xf32>
    %1976 = vector.broadcast %1975 : vector<1x224xf32> to vector<14x224xf32>
    %1977 = arith.mulf %1956, %1976 : vector<14x224xf32>
    %1978 = vector.extract_strided_slice %1901 {offsets = [1, 1, 0], sizes = [1, 1, 224], strides = [1, 1, 1]} : vector<3x3x224xf32> to vector<1x1x224xf32>
    %1979 = vector.shape_cast %1978 : vector<1x1x224xf32> to vector<1x224xf32>
    %1980 = vector.broadcast %1979 : vector<1x224xf32> to vector<14x224xf32>
    %1981 = arith.mulf %1953, %1980 : vector<14x224xf32>
    %1982 = arith.addf %1977, %1981 : vector<14x224xf32>
    %1983 = vector.extract_strided_slice %1901 {offsets = [1, 2, 0], sizes = [1, 1, 224], strides = [1, 1, 1]} : vector<3x3x224xf32> to vector<1x1x224xf32>
    %1984 = vector.shape_cast %1983 : vector<1x1x224xf32> to vector<1x224xf32>
    %1985 = vector.broadcast %1984 : vector<1x224xf32> to vector<14x224xf32>
    %1986 = arith.mulf %1959, %1985 : vector<14x224xf32>
    %1987 = arith.addf %1982, %1986 : vector<14x224xf32>
    %1988 = vector.extract_strided_slice %1901 {offsets = [2, 0, 0], sizes = [1, 1, 224], strides = [1, 1, 1]} : vector<3x3x224xf32> to vector<1x1x224xf32>
    %1989 = vector.shape_cast %1988 : vector<1x1x224xf32> to vector<1x224xf32>
    %1990 = vector.broadcast %1989 : vector<1x224xf32> to vector<14x224xf32>
    %1991 = arith.mulf %1956, %1990 : vector<14x224xf32>
    %1992 = vector.extract_strided_slice %1901 {offsets = [2, 1, 0], sizes = [1, 1, 224], strides = [1, 1, 1]} : vector<3x3x224xf32> to vector<1x1x224xf32>
    %1993 = vector.shape_cast %1992 : vector<1x1x224xf32> to vector<1x224xf32>
    %1994 = vector.broadcast %1993 : vector<1x224xf32> to vector<14x224xf32>
    %1995 = arith.mulf %1953, %1994 : vector<14x224xf32>
    %1996 = arith.addf %1991, %1995 : vector<14x224xf32>
    %1997 = vector.extract_strided_slice %1901 {offsets = [2, 2, 0], sizes = [1, 1, 224], strides = [1, 1, 1]} : vector<3x3x224xf32> to vector<1x1x224xf32>
    %1998 = vector.shape_cast %1997 : vector<1x1x224xf32> to vector<1x224xf32>
    %1999 = vector.broadcast %1998 : vector<1x224xf32> to vector<14x224xf32>
    %2000 = arith.mulf %1959, %1999 : vector<14x224xf32>
    %2001 = arith.addf %1996, %2000 : vector<14x224xf32>
    %cst_315 = arith.constant 0.000000e+00 : f32
    %2002 = vector.broadcast %cst_315 : f32 to vector<1x224xf32>
    %2003 = vector.extract_strided_slice %1973 {offsets = [0, 0], sizes = [13, 224], strides = [1, 1]} : vector<14x224xf32> to vector<13x224xf32>
    %2004 = tpu.concatenate %2002, %2003 in 0 : vector<1x224xf32>, vector<13x224xf32> -> vector<14x224xf32>
    %2005 = arith.addf %1987, %2004 : vector<14x224xf32>
    %cst_316 = arith.constant 0.000000e+00 : f32
    %2006 = vector.broadcast %cst_316 : f32 to vector<1x224xf32>
    %2007 = vector.extract_strided_slice %2001 {offsets = [1, 0], sizes = [13, 224], strides = [1, 1]} : vector<14x224xf32> to vector<13x224xf32>
    %2008 = tpu.concatenate %2007, %2006 in 0 : vector<13x224xf32>, vector<1x224xf32> -> vector<14x224xf32>
    %2009 = arith.addf %2005, %2008 : vector<14x224xf32>
    %2010 = vector.extract_strided_slice %4 {offsets = [0, 0], sizes = [1, 224], strides = [1, 1]} : vector<2x224xf32> to vector<1x224xf32>
    %2011 = vector.broadcast %2010 : vector<1x224xf32> to vector<14x224xf32>
    %2012 = arith.mulf %2009, %2011 : vector<14x224xf32>
    %2013 = vector.extract_strided_slice %5 {offsets = [0, 0], sizes = [1, 224], strides = [1, 1]} : vector<2x224xf32> to vector<1x224xf32>
    %2014 = vector.broadcast %2013 : vector<1x224xf32> to vector<14x224xf32>
    %2015 = arith.addf %2012, %2014 : vector<14x224xf32>
    %cst_317 = arith.constant 0.000000e+00 : f32
    %2016 = vector.broadcast %cst_317 : f32 to vector<14x224xf32>
    %2017 = arith.maximumf %2015, %2016 : vector<14x224xf32>
    %2018 = vector.extract_strided_slice %0 {offsets = [1, 0, 0, 0], sizes = [1, 3, 3, 224], strides = [1, 1, 1, 1]} : vector<2x3x3x224xf32> to vector<1x3x3x224xf32>
    %2019 = vector.shape_cast %2018 : vector<1x3x3x224xf32> to vector<3x3x224xf32>
    %2020 = vector.extract_strided_slice %1 {offsets = [1, 0, 0, 0], sizes = [1, 3, 3, 224], strides = [1, 1, 1, 1]} : vector<2x3x3x224xf32> to vector<1x3x3x224xf32>
    %2021 = vector.shape_cast %2020 : vector<1x3x3x224xf32> to vector<3x3x224xf32>
    %2022 = vector.extract_strided_slice %2019 {offsets = [0, 0, 0], sizes = [1, 1, 224], strides = [1, 1, 1]} : vector<3x3x224xf32> to vector<1x1x224xf32>
    %2023 = vector.shape_cast %2022 : vector<1x1x224xf32> to vector<1x224xf32>
    %2024 = vector.broadcast %2023 : vector<1x224xf32> to vector<14x224xf32>
    %2025 = arith.mulf %1897, %2024 : vector<14x224xf32>
    %2026 = vector.extract_strided_slice %2019 {offsets = [0, 1, 0], sizes = [1, 1, 224], strides = [1, 1, 1]} : vector<3x3x224xf32> to vector<1x1x224xf32>
    %2027 = vector.shape_cast %2026 : vector<1x1x224xf32> to vector<1x224xf32>
    %2028 = vector.broadcast %2027 : vector<1x224xf32> to vector<14x224xf32>
    %2029 = arith.mulf %1891, %2028 : vector<14x224xf32>
    %2030 = arith.addf %2025, %2029 : vector<14x224xf32>
    %2031 = vector.extract_strided_slice %2019 {offsets = [0, 2, 0], sizes = [1, 1, 224], strides = [1, 1, 1]} : vector<3x3x224xf32> to vector<1x1x224xf32>
    %2032 = vector.shape_cast %2031 : vector<1x1x224xf32> to vector<1x224xf32>
    %2033 = vector.broadcast %2032 : vector<1x224xf32> to vector<14x224xf32>
    %2034 = arith.mulf %1894, %2033 : vector<14x224xf32>
    %2035 = arith.addf %2030, %2034 : vector<14x224xf32>
    %2036 = vector.extract_strided_slice %2019 {offsets = [1, 0, 0], sizes = [1, 1, 224], strides = [1, 1, 1]} : vector<3x3x224xf32> to vector<1x1x224xf32>
    %2037 = vector.shape_cast %2036 : vector<1x1x224xf32> to vector<1x224xf32>
    %2038 = vector.broadcast %2037 : vector<1x224xf32> to vector<14x224xf32>
    %2039 = arith.mulf %1885, %2038 : vector<14x224xf32>
    %2040 = arith.addf %2035, %2039 : vector<14x224xf32>
    %2041 = vector.extract_strided_slice %2019 {offsets = [1, 1, 0], sizes = [1, 1, 224], strides = [1, 1, 1]} : vector<3x3x224xf32> to vector<1x1x224xf32>
    %2042 = vector.shape_cast %2041 : vector<1x1x224xf32> to vector<1x224xf32>
    %2043 = vector.broadcast %2042 : vector<1x224xf32> to vector<14x224xf32>
    %2044 = arith.mulf %1876, %2043 : vector<14x224xf32>
    %2045 = arith.addf %2040, %2044 : vector<14x224xf32>
    %2046 = vector.extract_strided_slice %2019 {offsets = [1, 2, 0], sizes = [1, 1, 224], strides = [1, 1, 1]} : vector<3x3x224xf32> to vector<1x1x224xf32>
    %2047 = vector.shape_cast %2046 : vector<1x1x224xf32> to vector<1x224xf32>
    %2048 = vector.broadcast %2047 : vector<1x224xf32> to vector<14x224xf32>
    %2049 = arith.mulf %1878, %2048 : vector<14x224xf32>
    %2050 = arith.addf %2045, %2049 : vector<14x224xf32>
    %2051 = vector.extract_strided_slice %2019 {offsets = [2, 0, 0], sizes = [1, 1, 224], strides = [1, 1, 1]} : vector<3x3x224xf32> to vector<1x1x224xf32>
    %2052 = vector.shape_cast %2051 : vector<1x1x224xf32> to vector<1x224xf32>
    %2053 = vector.broadcast %2052 : vector<1x224xf32> to vector<14x224xf32>
    %2054 = arith.mulf %1888, %2053 : vector<14x224xf32>
    %2055 = arith.addf %2050, %2054 : vector<14x224xf32>
    %2056 = vector.extract_strided_slice %2019 {offsets = [2, 1, 0], sizes = [1, 1, 224], strides = [1, 1, 1]} : vector<3x3x224xf32> to vector<1x1x224xf32>
    %2057 = vector.shape_cast %2056 : vector<1x1x224xf32> to vector<1x224xf32>
    %2058 = vector.broadcast %2057 : vector<1x224xf32> to vector<14x224xf32>
    %2059 = arith.mulf %1880, %2058 : vector<14x224xf32>
    %2060 = arith.addf %2055, %2059 : vector<14x224xf32>
    %2061 = vector.extract_strided_slice %2019 {offsets = [2, 2, 0], sizes = [1, 1, 224], strides = [1, 1, 1]} : vector<3x3x224xf32> to vector<1x1x224xf32>
    %2062 = vector.shape_cast %2061 : vector<1x1x224xf32> to vector<1x224xf32>
    %2063 = vector.broadcast %2062 : vector<1x224xf32> to vector<14x224xf32>
    %2064 = arith.mulf %1882, %2063 : vector<14x224xf32>
    %2065 = arith.addf %2060, %2064 : vector<14x224xf32>
    %2066 = vector.extract_strided_slice %2 {offsets = [1, 0], sizes = [1, 224], strides = [1, 1]} : vector<2x224xf32> to vector<1x224xf32>
    %2067 = vector.broadcast %2066 : vector<1x224xf32> to vector<14x224xf32>
    %2068 = arith.mulf %2065, %2067 : vector<14x224xf32>
    %2069 = vector.extract_strided_slice %3 {offsets = [1, 0], sizes = [1, 224], strides = [1, 1]} : vector<2x224xf32> to vector<1x224xf32>
    %2070 = vector.broadcast %2069 : vector<1x224xf32> to vector<14x224xf32>
    %2071 = arith.addf %2068, %2070 : vector<14x224xf32>
    %cst_318 = arith.constant 0.000000e+00 : f32
    %2072 = vector.broadcast %cst_318 : f32 to vector<14x224xf32>
    %2073 = arith.maximumf %2071, %2072 : vector<14x224xf32>
    %cst_319 = arith.constant 0.000000e+00 : f32
    %2074 = vector.broadcast %cst_319 : f32 to vector<14x16xf32>
    %2075 = vector.extract_strided_slice %2073 {offsets = [0, 0], sizes = [14, 208], strides = [1, 1]} : vector<14x224xf32> to vector<14x208xf32>
    %2076 = tpu.concatenate %2074, %2075 in 1 : vector<14x16xf32>, vector<14x208xf32> -> vector<14x224xf32>
    %cst_320 = arith.constant 0.000000e+00 : f32
    %2077 = vector.broadcast %cst_320 : f32 to vector<14x16xf32>
    %2078 = vector.extract_strided_slice %2073 {offsets = [0, 16], sizes = [14, 208], strides = [1, 1]} : vector<14x224xf32> to vector<14x208xf32>
    %2079 = tpu.concatenate %2078, %2077 in 1 : vector<14x208xf32>, vector<14x16xf32> -> vector<14x224xf32>
    %2080 = vector.extract_strided_slice %2021 {offsets = [0, 0, 0], sizes = [1, 1, 224], strides = [1, 1, 1]} : vector<3x3x224xf32> to vector<1x1x224xf32>
    %2081 = vector.shape_cast %2080 : vector<1x1x224xf32> to vector<1x224xf32>
    %2082 = vector.broadcast %2081 : vector<1x224xf32> to vector<14x224xf32>
    %2083 = arith.mulf %2076, %2082 : vector<14x224xf32>
    %2084 = vector.extract_strided_slice %2021 {offsets = [0, 1, 0], sizes = [1, 1, 224], strides = [1, 1, 1]} : vector<3x3x224xf32> to vector<1x1x224xf32>
    %2085 = vector.shape_cast %2084 : vector<1x1x224xf32> to vector<1x224xf32>
    %2086 = vector.broadcast %2085 : vector<1x224xf32> to vector<14x224xf32>
    %2087 = arith.mulf %2073, %2086 : vector<14x224xf32>
    %2088 = arith.addf %2083, %2087 : vector<14x224xf32>
    %2089 = vector.extract_strided_slice %2021 {offsets = [0, 2, 0], sizes = [1, 1, 224], strides = [1, 1, 1]} : vector<3x3x224xf32> to vector<1x1x224xf32>
    %2090 = vector.shape_cast %2089 : vector<1x1x224xf32> to vector<1x224xf32>
    %2091 = vector.broadcast %2090 : vector<1x224xf32> to vector<14x224xf32>
    %2092 = arith.mulf %2079, %2091 : vector<14x224xf32>
    %2093 = arith.addf %2088, %2092 : vector<14x224xf32>
    %2094 = vector.extract_strided_slice %2021 {offsets = [1, 0, 0], sizes = [1, 1, 224], strides = [1, 1, 1]} : vector<3x3x224xf32> to vector<1x1x224xf32>
    %2095 = vector.shape_cast %2094 : vector<1x1x224xf32> to vector<1x224xf32>
    %2096 = vector.broadcast %2095 : vector<1x224xf32> to vector<14x224xf32>
    %2097 = arith.mulf %2076, %2096 : vector<14x224xf32>
    %2098 = vector.extract_strided_slice %2021 {offsets = [1, 1, 0], sizes = [1, 1, 224], strides = [1, 1, 1]} : vector<3x3x224xf32> to vector<1x1x224xf32>
    %2099 = vector.shape_cast %2098 : vector<1x1x224xf32> to vector<1x224xf32>
    %2100 = vector.broadcast %2099 : vector<1x224xf32> to vector<14x224xf32>
    %2101 = arith.mulf %2073, %2100 : vector<14x224xf32>
    %2102 = arith.addf %2097, %2101 : vector<14x224xf32>
    %2103 = vector.extract_strided_slice %2021 {offsets = [1, 2, 0], sizes = [1, 1, 224], strides = [1, 1, 1]} : vector<3x3x224xf32> to vector<1x1x224xf32>
    %2104 = vector.shape_cast %2103 : vector<1x1x224xf32> to vector<1x224xf32>
    %2105 = vector.broadcast %2104 : vector<1x224xf32> to vector<14x224xf32>
    %2106 = arith.mulf %2079, %2105 : vector<14x224xf32>
    %2107 = arith.addf %2102, %2106 : vector<14x224xf32>
    %2108 = vector.extract_strided_slice %2021 {offsets = [2, 0, 0], sizes = [1, 1, 224], strides = [1, 1, 1]} : vector<3x3x224xf32> to vector<1x1x224xf32>
    %2109 = vector.shape_cast %2108 : vector<1x1x224xf32> to vector<1x224xf32>
    %2110 = vector.broadcast %2109 : vector<1x224xf32> to vector<14x224xf32>
    %2111 = arith.mulf %2076, %2110 : vector<14x224xf32>
    %2112 = vector.extract_strided_slice %2021 {offsets = [2, 1, 0], sizes = [1, 1, 224], strides = [1, 1, 1]} : vector<3x3x224xf32> to vector<1x1x224xf32>
    %2113 = vector.shape_cast %2112 : vector<1x1x224xf32> to vector<1x224xf32>
    %2114 = vector.broadcast %2113 : vector<1x224xf32> to vector<14x224xf32>
    %2115 = arith.mulf %2073, %2114 : vector<14x224xf32>
    %2116 = arith.addf %2111, %2115 : vector<14x224xf32>
    %2117 = vector.extract_strided_slice %2021 {offsets = [2, 2, 0], sizes = [1, 1, 224], strides = [1, 1, 1]} : vector<3x3x224xf32> to vector<1x1x224xf32>
    %2118 = vector.shape_cast %2117 : vector<1x1x224xf32> to vector<1x224xf32>
    %2119 = vector.broadcast %2118 : vector<1x224xf32> to vector<14x224xf32>
    %2120 = arith.mulf %2079, %2119 : vector<14x224xf32>
    %2121 = arith.addf %2116, %2120 : vector<14x224xf32>
    %cst_321 = arith.constant 0.000000e+00 : f32
    %2122 = vector.broadcast %cst_321 : f32 to vector<1x224xf32>
    %2123 = vector.extract_strided_slice %2093 {offsets = [0, 0], sizes = [13, 224], strides = [1, 1]} : vector<14x224xf32> to vector<13x224xf32>
    %2124 = tpu.concatenate %2122, %2123 in 0 : vector<1x224xf32>, vector<13x224xf32> -> vector<14x224xf32>
    %2125 = arith.addf %2107, %2124 : vector<14x224xf32>
    %cst_322 = arith.constant 0.000000e+00 : f32
    %2126 = vector.broadcast %cst_322 : f32 to vector<1x224xf32>
    %2127 = vector.extract_strided_slice %2121 {offsets = [1, 0], sizes = [13, 224], strides = [1, 1]} : vector<14x224xf32> to vector<13x224xf32>
    %2128 = tpu.concatenate %2127, %2126 in 0 : vector<13x224xf32>, vector<1x224xf32> -> vector<14x224xf32>
    %2129 = arith.addf %2125, %2128 : vector<14x224xf32>
    %2130 = vector.extract_strided_slice %4 {offsets = [1, 0], sizes = [1, 224], strides = [1, 1]} : vector<2x224xf32> to vector<1x224xf32>
    %2131 = vector.broadcast %2130 : vector<1x224xf32> to vector<14x224xf32>
    %2132 = arith.mulf %2129, %2131 : vector<14x224xf32>
    %2133 = vector.extract_strided_slice %5 {offsets = [1, 0], sizes = [1, 224], strides = [1, 1]} : vector<2x224xf32> to vector<1x224xf32>
    %2134 = vector.broadcast %2133 : vector<1x224xf32> to vector<14x224xf32>
    %2135 = arith.addf %2132, %2134 : vector<14x224xf32>
    %cst_323 = arith.constant 0.000000e+00 : f32
    %2136 = vector.broadcast %cst_323 : f32 to vector<14x224xf32>
    %2137 = arith.maximumf %2135, %2136 : vector<14x224xf32>
    %2138 = tpu.concatenate %2017, %2137 in 1 : vector<14x224xf32>, vector<14x224xf32> -> vector<14x448xf32>
    %c7_324 = arith.constant 7 : index
    %c0_325 = arith.constant 0 : index
    %c0_326 = arith.constant 0 : index
    %2139 = vector.load %arg8[%c7_324, %c0_325, %c0_326] : memref<8x14x448xf32, #tpu.memory_space<vmem>>, vector<1x14x448xf32>
    %2140 = vector.shape_cast %2139 : vector<1x14x448xf32> to vector<14x448xf32>
    %2141 = vector.shape_cast %2138 : vector<14x448xf32> to vector<1x14x448xf32>
    tpu.vector_store %arg8[%c7_324, %c0_325, %c0_326], %2141 {strides = array<i32>} : memref<8x14x448xf32, #tpu.memory_space<vmem>>, vector<1x14x448xf32>,
    return
  }
  func.func @transform_0(%arg0: i32) -> (i32, i32, i32, i32, i32) {
    %c0_i32 = arith.constant 0 : i32
    %c0_i32_0 = arith.constant 0 : i32
    %c0_i32_1 = arith.constant 0 : i32
    %c0_i32_2 = arith.constant 0 : i32
    %c0_i32_3 = arith.constant 0 : i32
    return %arg0, %c0_i32, %c0_i32_0, %c0_i32_1, %c0_i32_2 : i32, i32, i32, i32, i32
  }
  func.func @transform_1(%arg0: i32) -> (i32, i32, i32, i32) {
    %c0_i32 = arith.constant 0 : i32
    %c0_i32_0 = arith.constant 0 : i32
    %c0_i32_1 = arith.constant 0 : i32
    %c0_i32_2 = arith.constant 0 : i32
    %c0_i32_3 = arith.constant 0 : i32
    return %c0_i32, %c0_i32_0, %c0_i32_1, %c0_i32_2 : i32, i32, i32, i32
  }
  func.func @transform_2(%arg0: i32) -> (i32, i32, i32, i32) {
    %c0_i32 = arith.constant 0 : i32
    %c0_i32_0 = arith.constant 0 : i32
    %c0_i32_1 = arith.constant 0 : i32
    %c0_i32_2 = arith.constant 0 : i32
    %c0_i32_3 = arith.constant 0 : i32
    return %c0_i32, %c0_i32_0, %c0_i32_1, %c0_i32_2 : i32, i32, i32, i32
  }
  func.func @transform_3(%arg0: i32) -> (i32, i32) {
    %c0_i32 = arith.constant 0 : i32
    %c0_i32_0 = arith.constant 0 : i32
    %c0_i32_1 = arith.constant 0 : i32
    return %c0_i32, %c0_i32_0 : i32, i32
  }
  func.func @transform_4(%arg0: i32) -> (i32, i32) {
    %c0_i32 = arith.constant 0 : i32
    %c0_i32_0 = arith.constant 0 : i32
    %c0_i32_1 = arith.constant 0 : i32
    return %c0_i32, %c0_i32_0 : i32, i32
  }
  func.func @transform_5(%arg0: i32) -> (i32, i32) {
    %c0_i32 = arith.constant 0 : i32
    %c0_i32_0 = arith.constant 0 : i32
    %c0_i32_1 = arith.constant 0 : i32
    return %c0_i32, %c0_i32_0 : i32, i32
  }
  func.func @transform_6(%arg0: i32) -> (i32, i32) {
    %c0_i32 = arith.constant 0 : i32
    %c0_i32_0 = arith.constant 0 : i32
    %c0_i32_1 = arith.constant 0 : i32
    return %c0_i32, %c0_i32_0 : i32, i32
  }
  func.func @transform_7(%arg0: i32) -> (i32, i32, i32) {
    %c0_i32 = arith.constant 0 : i32
    %c0_i32_0 = arith.constant 0 : i32
    %c0_i32_1 = arith.constant 0 : i32
    return %arg0, %c0_i32, %c0_i32_0 : i32, i32, i32
  }
}

</mosaic_0001>

<llo_original>
// kernel: local_feature_extractor.1
$region0: #{local_feature_extractor.1}
  #allocation0 [shape = 'u32[]', space=smem, size = 0x4, offset = 0x4, fixed_abs, tag = 'smem constant byte address 0x4 - core index']
  #allocation1 [shape = 'u32[144,128]{1,0:T(1,128)}', space=vmem, size = 0x12000, scoped, tag = 'internal scratch']
  %s0 = inlined_call_operand.vmem [shape: f32[8,2,2,14,224], index: 0, kind: input, shape index: {}]
  %s1 = inlined_call_operand.vmem [shape: f32[2,3,3,224], index: 1, kind: input, shape index: {}]
  %s2 = inlined_call_operand.vmem [shape: f32[2,3,3,224], index: 2, kind: input, shape index: {}]
  %s3 = inlined_call_operand.vmem [shape: f32[2,224], index: 3, kind: input, shape index: {}]
  %s4 = inlined_call_operand.vmem [shape: f32[2,224], index: 4, kind: input, shape index: {}]
  %s5 = inlined_call_operand.vmem [shape: f32[2,224], index: 5, kind: input, shape index: {}]
  %s6 = inlined_call_operand.vmem [shape: f32[2,224], index: 6, kind: input, shape index: {}]
  %s7 = inlined_call_operand.vmem [shape: f32[8,14,448], index: 7, kind: output, shape index: {}]
  %s8 = sld [smem:[#allocation0]]
  $region38: #{local_feature_extractor.1} parent=0
    _
  %s10 = ssub.s32 1, %s8
  %s11 = scalar_select 0, %s10, %s8
  // Predicated region
  $region2: #{local_feature_extractor.1} parent=0 // pred_check
    _
  $region3: #{local_feature_extractor.1} parent=0 // pred_check_branch
    %13 = sbr.rel (0) target = $region5
  $region4: #{local_feature_extractor.1} parent=0 // pred_region
    _
  $region5: #{local_feature_extractor.1} parent=0 // pred_fallthru
    _
  // Predicated region
  $region6: #{local_feature_extractor.1} parent=0 // pred_check
    _
  $region7: #{local_feature_extractor.1} parent=0 // pred_check_branch
    %15 = sbr.rel (0) target = $region9
  $region8: #{local_feature_extractor.1} parent=0 // pred_region
    _
  $region9: #{local_feature_extractor.1} parent=0 // pred_fallthru
    _
  // Predicated region
  $region10: #{local_feature_extractor.1} parent=0 // pred_check
    _
  $region11: #{local_feature_extractor.1} parent=0 // pred_check_branch
    %17 = sbr.rel (0) target = $region13
  $region12: #{local_feature_extractor.1} parent=0 // pred_region
    _
  $region13: #{local_feature_extractor.1} parent=0 // pred_fallthru
    _
  // Predicated region
  $region14: #{local_feature_extractor.1} parent=0 // pred_check
    _
  $region15: #{local_feature_extractor.1} parent=0 // pred_check_branch
    %19 = sbr.rel (0) target = $region17
  $region16: #{local_feature_extractor.1} parent=0 // pred_region
    _
  $region17: #{local_feature_extractor.1} parent=0 // pred_fallthru
    _
  // Predicated region
  $region18: #{local_feature_extractor.1} parent=0 // pred_check
    _
  $region19: #{local_feature_extractor.1} parent=0 // pred_check_branch
    %21 = sbr.rel (0) target = $region21
  $region20: #{local_feature_extractor.1} parent=0 // pred_region
    _
  $region21: #{local_feature_extractor.1} parent=0 // pred_fallthru
    _
  // Predicated region
  $region22: #{local_feature_extractor.1} parent=0 // pred_check
    _
  $region23: #{local_feature_extractor.1} parent=0 // pred_check_branch
    %23 = sbr.rel (0) target = $region25
  $region24: #{local_feature_extractor.1} parent=0 // pred_region
    _
  $region25: #{local_feature_extractor.1} parent=0 // pred_fallthru
    _
  // Predicated region
  $region26: #{local_feature_extractor.1} parent=0 // pred_check
    _
  $region27: #{local_feature_extractor.1} parent=0 // pred_check_branch
    %25 = sbr.rel (0) target = $region29
  $region28: #{local_feature_extractor.1} parent=0 // pred_region
    _
  $region29: #{local_feature_extractor.1} parent=0 // pred_fallthru
    _
  %v26 = vld [vmem:[%s1] sm:$0x77]
  %v27 = vld [vmem:[%s1 + $0x8] sm:$0x77]
  %v28 = vld [vmem:[%s1 + $0x10] sm:$0x77]
  %v29 = vld [vmem:[%s1 + $0x18] sm:$0x77]
  %v30 = vld [vmem:[%s1 + $0x20] sm:$0x77]
  %v31 = vld [vmem:[%s1 + $0x28] sm:$0x77]
  %v32 = vld [vmem:[%s2] sm:$0x77]
  %v33 = vld [vmem:[%s2 + $0x8] sm:$0x77]
  %v34 = vld [vmem:[%s2 + $0x10] sm:$0x77]
  %v35 = vld [vmem:[%s2 + $0x18] sm:$0x77]
  %v36 = vld [vmem:[%s2 + $0x20] sm:$0x77]
  %v37 = vld [vmem:[%s2 + $0x28] sm:$0x77]
  %v38 = vld [vmem:[%s3] sm:$0xf]
  %v39 = vld [vmem:[%s4] sm:$0xf]
  %v40 = vld [vmem:[%s5] sm:$0xf]
  %v41 = vld [vmem:[%s6] sm:$0xf]
  %v42 = vld [vmem:[%s0] sm:$0xff]
  %v43 = vld [vmem:[%s0 + $0x8] sm:$0xff]
  %v44 = vld [vmem:[%s0 + $0x10] sm:$0x3f]
  %v45 = vld [vmem:[%s0 + $0x18] sm:$0x3f]
  %s46 = scalar_lea.vmem %s0, 32
  %v47 = vld [vmem:[%s46] sm:$0xff]
  %v48 = vld [vmem:[%s46 + $0x8] sm:$0xff]
  %v49 = vld [vmem:[%s46 + $0x10] sm:$0x3f]
  %v50 = vld [vmem:[%s46 + $0x18] sm:$0x3f]
  %s51 = scalar_lea.vmem %s0, 64
  %v52 = vld [vmem:[%s51] sm:$0xff]
  %v53 = vld [vmem:[%s51 + $0x8] sm:$0xff]
  %v54 = vld [vmem:[%s51 + $0x10] sm:$0x3f]
  %v55 = vld [vmem:[%s51 + $0x18] sm:$0x3f]
  %s56 = scalar_lea.vmem %s0, 96
  %v57 = vld [vmem:[%s56] sm:$0xff]
  %v58 = vld [vmem:[%s56 + $0x8] sm:$0xff]
  %v59 = vld [vmem:[%s56 + $0x10] sm:$0x3f]
  %v60 = vld [vmem:[%s56 + $0x18] sm:$0x3f]
  %65 = vrot.lane.b32.xlu0 %v47, 16
  %v66 = vpop.permute.xlu0 %65
  %67 = vrot.lane.b32.xlu0 %v48, 16
  %v68 = vpop.permute.xlu0 %67
  %69 = vrot.lane.b32.xlu0 %v49, 16
  %v70 = vpop.permute.xlu0 %69
  %71 = vrot.lane.b32.xlu0 %v50, 16
  %v72 = vpop.permute.xlu0 %71
  %vm73 = vcmask 130048
  %v74 = vsel %vm73, %v66, %v68
  %v75 = vsel %vm73, %v70, %v72
  %v80 = vsel %vm73, 0.0, %v66
  %v81 = vsel %vm73, 0.0, %v70
  %86 = vrot.lane.b32.xlu0 %v57, 16
  %v87 = vpop.permute.xlu0 %86
  %88 = vrot.lane.b32.xlu0 %v58, 16
  %v89 = vpop.permute.xlu0 %88
  %90 = vrot.lane.b32.xlu0 %v59, 16
  %v91 = vpop.permute.xlu0 %90
  %92 = vrot.lane.b32.xlu0 %v60, 16
  %v93 = vpop.permute.xlu0 %92
  %v94 = vsel %vm73, %v87, %v89
  %v95 = vsel %vm73, %v91, %v93
  %v100 = vsel %vm73, 0.0, %v87
  %v101 = vsel %vm73, 0.0, %v91
  %vm106 = vcmask 1040384
  %v107 = vrot.slane %v52, 7
  %v108 = vrot.slane %v53, 7
  %v109 = vrot.slane %v54, 7
  %v110 = vsel %vm106, %v107, %v109
  %v111 = vrot.slane %v55, 7
  %v112 = vsel %vm106, %v108, %v111
  %v117 = vsel %vm106, 0.0, %v107
  %v118 = vsel %vm106, 0.0, %v108
  %v119 = vrot.slane %v57, 7
  %v120 = vrot.slane %v58, 7
  %v121 = vrot.slane %v59, 7
  %v122 = vsel %vm106, %v119, %v121
  %v123 = vrot.slane %v60, 7
  %v124 = vsel %vm106, %v120, %v123
  %v129 = vsel %vm106, 0.0, %v119
  %v130 = vsel %vm106, 0.0, %v120
  %v133 = vrot.slane %v100, 7
  %v134 = vrot.slane %v94, 7
  %v135 = vrot.slane %v101, 7
  %v136 = vsel %vm106, %v133, %v135
  %v137 = vrot.slane %v95, 7
  %v138 = vsel %vm106, %v134, %v137
  %v143 = vsel %vm106, 0.0, %v133
  %v144 = vsel %vm106, 0.0, %v134
  %v146 = vlaneseq
  %v147 = vshrl.u32 %v146, 7
  %v148 = vsub.s32 0, %v147
  %v149 = vrot.slane %v26, %v148
  %v150 = vlaneseq
  %v151 = vshrl.u32 %v150, 7
  %v152 = vsub.s32 4, %v151
  %v153 = vrot.slane %v26, %v152
  %v156 = vlaneseq
  %v157 = vshrl.u32 %v156, 7
  %v158 = vsub.s32 0, %v157
  %v159 = vrot.slane %v149, %v158
  %v160 = vlaneseq
  %v161 = vshrl.u32 %v160, 7
  %v162 = vsub.s32 0, %v161
  %v163 = vrot.slane %v153, %v162
  %v164 = vmul.f32 %v143, %v159
  %v165 = vmul.f32 %v144, %v163
  %v166 = vmul.f32 %v136, %v159
  %v167 = vmul.f32 %v138, %v163
  %v168 = vlaneseq
  %v169 = vshrl.u32 %v168, 7
  %v170 = vsub.s32 1, %v169
  %v171 = vrot.slane %v26, %v170
  %v172 = vlaneseq
  %v173 = vshrl.u32 %v172, 7
  %v174 = vsub.s32 5, %v173
  %v175 = vrot.slane %v26, %v174
  %v178 = vlaneseq
  %v179 = vshrl.u32 %v178, 7
  %v180 = vsub.s32 1, %v179
  %v181 = vrot.slane %v171, %v180
  %v182 = vlaneseq
  %v183 = vshrl.u32 %v182, 7
  %v184 = vsub.s32 1, %v183
  %v185 = vrot.slane %v175, %v184
  %v186 = vmul.f32 %v117, %v181
  %v187 = vmul.f32 %v118, %v185
  %v188 = vmul.f32 %v110, %v181
  %v189 = vmul.f32 %v112, %v185
  %v190 = vadd.f32 %v164, %v186
  %v191 = vadd.f32 %v165, %v187
  %v192 = vadd.f32 %v166, %v188
  %v193 = vadd.f32 %v167, %v189
  %v194 = vlaneseq
  %v195 = vshrl.u32 %v194, 7
  %v196 = vsub.s32 2, %v195
  %v197 = vrot.slane %v26, %v196
  %v198 = vlaneseq
  %v199 = vshrl.u32 %v198, 7
  %v200 = vsub.s32 6, %v199
  %v201 = vrot.slane %v26, %v200
  %v204 = vlaneseq
  %v205 = vshrl.u32 %v204, 7
  %v206 = vsub.s32 2, %v205
  %v207 = vrot.slane %v197, %v206
  %v208 = vlaneseq
  %v209 = vshrl.u32 %v208, 7
  %v210 = vsub.s32 2, %v209
  %v211 = vrot.slane %v201, %v210
  %v212 = vmul.f32 %v129, %v207
  %v213 = vmul.f32 %v130, %v211
  %v214 = vmul.f32 %v122, %v207
  %v215 = vmul.f32 %v124, %v211
  %v216 = vadd.f32 %v190, %v212
  %v217 = vadd.f32 %v191, %v213
  %v218 = vadd.f32 %v192, %v214
  %v219 = vadd.f32 %v193, %v215
  %v221 = vlaneseq
  %v222 = vshrl.u32 %v221, 7
  %v223 = vsub.s32 0, %v222
  %v224 = vrot.slane %v27, %v223
  %v225 = vlaneseq
  %v226 = vshrl.u32 %v225, 7
  %v227 = vsub.s32 4, %v226
  %v228 = vrot.slane %v27, %v227
  %v231 = vlaneseq
  %v232 = vshrl.u32 %v231, 7
  %v233 = vsub.s32 0, %v232
  %v234 = vrot.slane %v224, %v233
  %v235 = vlaneseq
  %v236 = vshrl.u32 %v235, 7
  %v237 = vsub.s32 0, %v236
  %v238 = vrot.slane %v228, %v237
  %v239 = vmul.f32 %v80, %v234
  %v240 = vmul.f32 %v74, %v238
  %v241 = vmul.f32 %v81, %v234
  %v242 = vmul.f32 %v75, %v238
  %v243 = vadd.f32 %v216, %v239
  %v244 = vadd.f32 %v217, %v240
  %v245 = vadd.f32 %v218, %v241
  %v246 = vadd.f32 %v219, %v242
  %v247 = vlaneseq
  %v248 = vshrl.u32 %v247, 7
  %v249 = vsub.s32 1, %v248
  %v250 = vrot.slane %v27, %v249
  %v251 = vlaneseq
  %v252 = vshrl.u32 %v251, 7
  %v253 = vsub.s32 5, %v252
  %v254 = vrot.slane %v27, %v253
  %v257 = vlaneseq
  %v258 = vshrl.u32 %v257, 7
  %v259 = vsub.s32 1, %v258
  %v260 = vrot.slane %v250, %v259
  %v261 = vlaneseq
  %v262 = vshrl.u32 %v261, 7
  %v263 = vsub.s32 1, %v262
  %v264 = vrot.slane %v254, %v263
  %v265 = vmul.f32 %v42, %v260
  %v266 = vmul.f32 %v43, %v264
  %v267 = vmul.f32 %v44, %v260
  %v268 = vmul.f32 %v45, %v264
  %v269 = vadd.f32 %v243, %v265
  %v270 = vadd.f32 %v244, %v266
  %v271 = vadd.f32 %v245, %v267
  %v272 = vadd.f32 %v246, %v268
  %v273 = vlaneseq
  %v274 = vshrl.u32 %v273, 7
  %v275 = vsub.s32 2, %v274
  %v276 = vrot.slane %v27, %v275
  %v277 = vlaneseq
  %v278 = vshrl.u32 %v277, 7
  %v279 = vsub.s32 6, %v278
  %v280 = vrot.slane %v27, %v279
  %v283 = vlaneseq
  %v284 = vshrl.u32 %v283, 7
  %v285 = vsub.s32 2, %v284
  %v286 = vrot.slane %v276, %v285
  %v287 = vlaneseq
  %v288 = vshrl.u32 %v287, 7
  %v289 = vsub.s32 2, %v288
  %v290 = vrot.slane %v280, %v289
  %v291 = vmul.f32 %v47, %v286
  %v292 = vmul.f32 %v48, %v290
  %v293 = vmul.f32 %v49, %v286
  %v294 = vmul.f32 %v50, %v290
  %v295 = vadd.f32 %v269, %v291
  %v296 = vadd.f32 %v270, %v292
  %v297 = vadd.f32 %v271, %v293
  %v298 = vadd.f32 %v272, %v294
  %v300 = vlaneseq
  %v301 = vshrl.u32 %v300, 7
  %v302 = vsub.s32 0, %v301
  %v303 = vrot.slane %v28, %v302
  %v304 = vlaneseq
  %v305 = vshrl.u32 %v304, 7
  %v306 = vsub.s32 4, %v305
  %v307 = vrot.slane %v28, %v306
  %v310 = vlaneseq
  %v311 = vshrl.u32 %v310, 7
  %v312 = vsub.s32 0, %v311
  %v313 = vrot.slane %v303, %v312
  %v314 = vlaneseq
  %v315 = vshrl.u32 %v314, 7
  %v316 = vsub.s32 0, %v315
  %v317 = vrot.slane %v307, %v316
  %v318 = vmul.f32 %v100, %v313
  %v319 = vmul.f32 %v94, %v317
  %v320 = vmul.f32 %v101, %v313
  %v321 = vmul.f32 %v95, %v317
  %v322 = vadd.f32 %v295, %v318
  %v323 = vadd.f32 %v296, %v319
  %v324 = vadd.f32 %v297, %v320
  %v325 = vadd.f32 %v298, %v321
  %v326 = vlaneseq
  %v327 = vshrl.u32 %v326, 7
  %v328 = vsub.s32 1, %v327
  %v329 = vrot.slane %v28, %v328
  %v330 = vlaneseq
  %v331 = vshrl.u32 %v330, 7
  %v332 = vsub.s32 5, %v331
  %v333 = vrot.slane %v28, %v332
  %v336 = vlaneseq
  %v337 = vshrl.u32 %v336, 7
  %v338 = vsub.s32 1, %v337
  %v339 = vrot.slane %v329, %v338
  %v340 = vlaneseq
  %v341 = vshrl.u32 %v340, 7
  %v342 = vsub.s32 1, %v341
  %v343 = vrot.slane %v333, %v342
  %v344 = vmul.f32 %v52, %v339
  %v345 = vmul.f32 %v53, %v343
  %v346 = vmul.f32 %v54, %v339
  %v347 = vmul.f32 %v55, %v343
  %v348 = vadd.f32 %v322, %v344
  %v349 = vadd.f32 %v323, %v345
  %v350 = vadd.f32 %v324, %v346
  %v351 = vadd.f32 %v325, %v347
  %v352 = vlaneseq
  %v353 = vshrl.u32 %v352, 7
  %v354 = vsub.s32 2, %v353
  %v355 = vrot.slane %v28, %v354
  %v356 = vlaneseq
  %v357 = vshrl.u32 %v356, 7
  %v358 = vsub.s32 6, %v357
  %v359 = vrot.slane %v28, %v358
  %v362 = vlaneseq
  %v363 = vshrl.u32 %v362, 7
  %v364 = vsub.s32 2, %v363
  %v365 = vrot.slane %v355, %v364
  %v366 = vlaneseq
  %v367 = vshrl.u32 %v366, 7
  %v368 = vsub.s32 2, %v367
  %v369 = vrot.slane %v359, %v368
  %v370 = vmul.f32 %v57, %v365
  %v371 = vmul.f32 %v58, %v369
  %v372 = vmul.f32 %v59, %v365
  %v373 = vmul.f32 %v60, %v369
  %v374 = vadd.f32 %v348, %v370
  %v375 = vadd.f32 %v349, %v371
  %v376 = vadd.f32 %v350, %v372
  %v377 = vadd.f32 %v351, %v373
  %v379 = vlaneseq
  %v380 = vshrl.u32 %v379, 7
  %v381 = vsub.s32 0, %v380
  %v382 = vrot.slane %v38, %v381
  %v383 = vlaneseq
  %v384 = vshrl.u32 %v383, 7
  %v385 = vsub.s32 2, %v384
  %v386 = vrot.slane %v38, %v385
  %v389 = vlaneseq
  %v390 = vshrl.u32 %v389, 7
  %v391 = vsub.s32 0, %v390
  %v392 = vrot.slane %v382, %v391
  %v393 = vlaneseq
  %v394 = vshrl.u32 %v393, 7
  %v395 = vsub.s32 0, %v394
  %v396 = vrot.slane %v386, %v395
  %v397 = vmul.f32 %v374, %v392
  %v398 = vmul.f32 %v375, %v396
  %v399 = vmul.f32 %v376, %v392
  %v400 = vmul.f32 %v377, %v396
  %v402 = vlaneseq
  %v403 = vshrl.u32 %v402, 7
  %v404 = vsub.s32 0, %v403
  %v405 = vrot.slane %v39, %v404
  %v406 = vlaneseq
  %v407 = vshrl.u32 %v406, 7
  %v408 = vsub.s32 2, %v407
  %v409 = vrot.slane %v39, %v408
  %v412 = vlaneseq
  %v413 = vshrl.u32 %v412, 7
  %v414 = vsub.s32 0, %v413
  %v415 = vrot.slane %v405, %v414
  %v416 = vlaneseq
  %v417 = vshrl.u32 %v416, 7
  %v418 = vsub.s32 0, %v417
  %v419 = vrot.slane %v409, %v418
  %v420 = vadd.f32 %v397, %v415
  %v421 = vadd.f32 %v398, %v419
  %v422 = vadd.f32 %v399, %v415
  %v423 = vadd.f32 %v400, %v419
  %v424 = vmax.f32 %v420, 0.0
  %v425 = vmax.f32 %v421, 0.0
  %v426 = vmax.f32 %v422, 0.0
  %v427 = vmax.f32 %v423, 0.0
  %432 = vrot.lane.b32.xlu0 %v424, 16
  %v433 = vpop.permute.xlu0 %432
  %434 = vrot.lane.b32.xlu0 %v425, 16
  %v435 = vpop.permute.xlu0 %434
  %436 = vrot.lane.b32.xlu0 %v426, 16
  %v437 = vpop.permute.xlu0 %436
  %438 = vrot.lane.b32.xlu0 %v427, 16
  %v439 = vpop.permute.xlu0 %438
  %v440 = vsel %vm73, %v433, %v435
  %v441 = vsel %vm73, %v437, %v439
  %v446 = vsel %vm73, 0.0, %v433
  %v447 = vsel %vm73, 0.0, %v437
  %448 = vrot.lane.b32.xlu0 %v424, 112
  %v449 = vpop.permute.xlu0 %448
  %450 = vrot.lane.b32.xlu0 %v425, 112
  %v451 = vpop.permute.xlu0 %450
  %452 = vrot.lane.b32.xlu0 %v426, 112
  %v453 = vpop.permute.xlu0 %452
  %454 = vrot.lane.b32.xlu0 %v427, 112
  %v455 = vpop.permute.xlu0 %454
  %vm456 = vcmask 916480
  %v457 = vsel %vm456, %v449, %v451
  %v458 = vsel %vm456, %v453, %v455
  %vm463 = vcmask 654336
  %v464 = vsel %vm463, %v451, 0.0
  %v465 = vsel %vm463, %v455, 0.0
  %v467 = vlaneseq
  %v468 = vshrl.u32 %v467, 7
  %v469 = vsub.s32 0, %v468
  %v470 = vrot.slane %v32, %v469
  %v471 = vlaneseq
  %v472 = vshrl.u32 %v471, 7
  %v473 = vsub.s32 4, %v472
  %v474 = vrot.slane %v32, %v473
  %v477 = vlaneseq
  %v478 = vshrl.u32 %v477, 7
  %v479 = vsub.s32 0, %v478
  %v480 = vrot.slane %v470, %v479
  %v481 = vlaneseq
  %v482 = vshrl.u32 %v481, 7
  %v483 = vsub.s32 0, %v482
  %v484 = vrot.slane %v474, %v483
  %v485 = vmul.f32 %v446, %v480
  %v486 = vmul.f32 %v440, %v484
  %v487 = vmul.f32 %v447, %v480
  %v488 = vmul.f32 %v441, %v484
  %v489 = vlaneseq
  %v490 = vshrl.u32 %v489, 7
  %v491 = vsub.s32 1, %v490
  %v492 = vrot.slane %v32, %v491
  %v493 = vlaneseq
  %v494 = vshrl.u32 %v493, 7
  %v495 = vsub.s32 5, %v494
  %v496 = vrot.slane %v32, %v495
  %v499 = vlaneseq
  %v500 = vshrl.u32 %v499, 7
  %v501 = vsub.s32 1, %v500
  %v502 = vrot.slane %v492, %v501
  %v503 = vlaneseq
  %v504 = vshrl.u32 %v503, 7
  %v505 = vsub.s32 1, %v504
  %v506 = vrot.slane %v496, %v505
  %v507 = vmul.f32 %v424, %v502
  %v508 = vmul.f32 %v425, %v506
  %v509 = vmul.f32 %v426, %v502
  %v510 = vmul.f32 %v427, %v506
  %v511 = vadd.f32 %v485, %v507
  %v512 = vadd.f32 %v486, %v508
  %v513 = vadd.f32 %v487, %v509
  %v514 = vadd.f32 %v488, %v510
  %v515 = vlaneseq
  %v516 = vshrl.u32 %v515, 7
  %v517 = vsub.s32 2, %v516
  %v518 = vrot.slane %v32, %v517
  %v519 = vlaneseq
  %v520 = vshrl.u32 %v519, 7
  %v521 = vsub.s32 6, %v520
  %v522 = vrot.slane %v32, %v521
  %v525 = vlaneseq
  %v526 = vshrl.u32 %v525, 7
  %v527 = vsub.s32 2, %v526
  %v528 = vrot.slane %v518, %v527
  %v529 = vlaneseq
  %v530 = vshrl.u32 %v529, 7
  %v531 = vsub.s32 2, %v530
  %v532 = vrot.slane %v522, %v531
  %v533 = vmul.f32 %v457, %v528
  %v534 = vmul.f32 %v464, %v532
  %v535 = vmul.f32 %v458, %v528
  %v536 = vmul.f32 %v465, %v532
  %v537 = vadd.f32 %v511, %v533
  %v538 = vadd.f32 %v512, %v534
  %v539 = vadd.f32 %v513, %v535
  %v540 = vadd.f32 %v514, %v536
  %v542 = vlaneseq
  %v543 = vshrl.u32 %v542, 7
  %v544 = vsub.s32 0, %v543
  %v545 = vrot.slane %v33, %v544
  %v546 = vlaneseq
  %v547 = vshrl.u32 %v546, 7
  %v548 = vsub.s32 4, %v547
  %v549 = vrot.slane %v33, %v548
  %v552 = vlaneseq
  %v553 = vshrl.u32 %v552, 7
  %v554 = vsub.s32 0, %v553
  %v555 = vrot.slane %v545, %v554
  %v556 = vlaneseq
  %v557 = vshrl.u32 %v556, 7
  %v558 = vsub.s32 0, %v557
  %v559 = vrot.slane %v549, %v558
  %v560 = vmul.f32 %v446, %v555
  %v561 = vmul.f32 %v440, %v559
  %v562 = vmul.f32 %v447, %v555
  %v563 = vmul.f32 %v441, %v559
  %v564 = vlaneseq
  %v565 = vshrl.u32 %v564, 7
  %v566 = vsub.s32 1, %v565
  %v567 = vrot.slane %v33, %v566
  %v568 = vlaneseq
  %v569 = vshrl.u32 %v568, 7
  %v570 = vsub.s32 5, %v569
  %v571 = vrot.slane %v33, %v570
  %v574 = vlaneseq
  %v575 = vshrl.u32 %v574, 7
  %v576 = vsub.s32 1, %v575
  %v577 = vrot.slane %v567, %v576
  %v578 = vlaneseq
  %v579 = vshrl.u32 %v578, 7
  %v580 = vsub.s32 1, %v579
  %v581 = vrot.slane %v571, %v580
  %v582 = vmul.f32 %v424, %v577
  %v583 = vmul.f32 %v425, %v581
  %v584 = vmul.f32 %v426, %v577
  %v585 = vmul.f32 %v427, %v581
  %v586 = vadd.f32 %v560, %v582
  %v587 = vadd.f32 %v561, %v583
  %v588 = vadd.f32 %v562, %v584
  %v589 = vadd.f32 %v563, %v585
  %v590 = vlaneseq
  %v591 = vshrl.u32 %v590, 7
  %v592 = vsub.s32 2, %v591
  %v593 = vrot.slane %v33, %v592
  %v594 = vlaneseq
  %v595 = vshrl.u32 %v594, 7
  %v596 = vsub.s32 6, %v595
  %v597 = vrot.slane %v33, %v596
  %v600 = vlaneseq
  %v601 = vshrl.u32 %v600, 7
  %v602 = vsub.s32 2, %v601
  %v603 = vrot.slane %v593, %v602
  %v604 = vlaneseq
  %v605 = vshrl.u32 %v604, 7
  %v606 = vsub.s32 2, %v605
  %v607 = vrot.slane %v597, %v606
  %v608 = vmul.f32 %v457, %v603
  %v609 = vmul.f32 %v464, %v607
  %v610 = vmul.f32 %v458, %v603
  %v611 = vmul.f32 %v465, %v607
  %v612 = vadd.f32 %v586, %v608
  %v613 = vadd.f32 %v587, %v609
  %v614 = vadd.f32 %v588, %v610
  %v615 = vadd.f32 %v589, %v611
  %v617 = vlaneseq
  %v618 = vshrl.u32 %v617, 7
  %v619 = vsub.s32 0, %v618
  %v620 = vrot.slane %v34, %v619
  %v621 = vlaneseq
  %v622 = vshrl.u32 %v621, 7
  %v623 = vsub.s32 4, %v622
  %v624 = vrot.slane %v34, %v623
  %v627 = vlaneseq
  %v628 = vshrl.u32 %v627, 7
  %v629 = vsub.s32 0, %v628
  %v630 = vrot.slane %v620, %v629
  %v631 = vlaneseq
  %v632 = vshrl.u32 %v631, 7
  %v633 = vsub.s32 0, %v632
  %v634 = vrot.slane %v624, %v633
  %v635 = vmul.f32 %v446, %v630
  %v636 = vmul.f32 %v440, %v634
  %v637 = vmul.f32 %v447, %v630
  %v638 = vmul.f32 %v441, %v634
  %v639 = vlaneseq
  %v640 = vshrl.u32 %v639, 7
  %v641 = vsub.s32 1, %v640
  %v642 = vrot.slane %v34, %v641
  %v643 = vlaneseq
  %v644 = vshrl.u32 %v643, 7
  %v645 = vsub.s32 5, %v644
  %v646 = vrot.slane %v34, %v645
  %v649 = vlaneseq
  %v650 = vshrl.u32 %v649, 7
  %v651 = vsub.s32 1, %v650
  %v652 = vrot.slane %v642, %v651
  %v653 = vlaneseq
  %v654 = vshrl.u32 %v653, 7
  %v655 = vsub.s32 1, %v654
  %v656 = vrot.slane %v646, %v655
  %v657 = vmul.f32 %v424, %v652
  %v658 = vmul.f32 %v425, %v656
  %v659 = vmul.f32 %v426, %v652
  %v660 = vmul.f32 %v427, %v656
  %v661 = vadd.f32 %v635, %v657
  %v662 = vadd.f32 %v636, %v658
  %v663 = vadd.f32 %v637, %v659
  %v664 = vadd.f32 %v638, %v660
  %v665 = vlaneseq
  %v666 = vshrl.u32 %v665, 7
  %v667 = vsub.s32 2, %v666
  %v668 = vrot.slane %v34, %v667
  %v669 = vlaneseq
  %v670 = vshrl.u32 %v669, 7
  %v671 = vsub.s32 6, %v670
  %v672 = vrot.slane %v34, %v671
  %v675 = vlaneseq
  %v676 = vshrl.u32 %v675, 7
  %v677 = vsub.s32 2, %v676
  %v678 = vrot.slane %v668, %v677
  %v679 = vlaneseq
  %v680 = vshrl.u32 %v679, 7
  %v681 = vsub.s32 2, %v680
  %v682 = vrot.slane %v672, %v681
  %v683 = vmul.f32 %v457, %v678
  %v684 = vmul.f32 %v464, %v682
  %v685 = vmul.f32 %v458, %v678
  %v686 = vmul.f32 %v465, %v682
  %v687 = vadd.f32 %v661, %v683
  %v688 = vadd.f32 %v662, %v684
  %v689 = vadd.f32 %v663, %v685
  %v690 = vadd.f32 %v664, %v686
  %v695 = vrot.slane %v537, 7
  %v696 = vrot.slane %v538, 7
  %v697 = vrot.slane %v539, 7
  %v698 = vsel %vm106, %v695, %v697
  %v699 = vrot.slane %v540, 7
  %v700 = vsel %vm106, %v696, %v699
  %v705 = vsel %vm106, 0.0, %v695
  %v706 = vsel %vm106, 0.0, %v696
  %v707 = vadd.f32 %v612, %v705
  %v708 = vadd.f32 %v613, %v706
  %v709 = vadd.f32 %v614, %v698
  %v710 = vadd.f32 %v615, %v700
  %vm715 = vcmask 1046528
  %v716 = vrot.slane %v687, 1
  %v717 = vrot.slane %v689, 1
  %v718 = vsel %vm715, %v716, %v717
  %v719 = vrot.slane %v688, 1
  %v720 = vrot.slane %v690, 1
  %v721 = vsel %vm715, %v719, %v720
  %vm726 = vcmask 1044480
  %v727 = vsel %vm726, %v717, 0.0
  %v728 = vsel %vm726, %v720, 0.0
  %v729 = vadd.f32 %v707, %v718
  %v730 = vadd.f32 %v708, %v721
  %v731 = vadd.f32 %v709, %v727
  %v732 = vadd.f32 %v710, %v728
  %v734 = vlaneseq
  %v735 = vshrl.u32 %v734, 7
  %v736 = vsub.s32 0, %v735
  %v737 = vrot.slane %v40, %v736
  %v738 = vlaneseq
  %v739 = vshrl.u32 %v738, 7
  %v740 = vsub.s32 2, %v739
  %v741 = vrot.slane %v40, %v740
  %v744 = vlaneseq
  %v745 = vshrl.u32 %v744, 7
  %v746 = vsub.s32 0, %v745
  %v747 = vrot.slane %v737, %v746
  %v748 = vlaneseq
  %v749 = vshrl.u32 %v748, 7
  %v750 = vsub.s32 0, %v749
  %v751 = vrot.slane %v741, %v750
  %v752 = vmul.f32 %v729, %v747
  %v753 = vmul.f32 %v730, %v751
  %v754 = vmul.f32 %v731, %v747
  %v755 = vmul.f32 %v732, %v751
  %v757 = vlaneseq
  %v758 = vshrl.u32 %v757, 7
  %v759 = vsub.s32 0, %v758
  %v760 = vrot.slane %v41, %v759
  %v761 = vlaneseq
  %v762 = vshrl.u32 %v761, 7
  %v763 = vsub.s32 2, %v762
  %v764 = vrot.slane %v41, %v763
  %v767 = vlaneseq
  %v768 = vshrl.u32 %v767, 7
  %v769 = vsub.s32 0, %v768
  %v770 = vrot.slane %v760, %v769
  %v771 = vlaneseq
  %v772 = vshrl.u32 %v771, 7
  %v773 = vsub.s32 0, %v772
  %v774 = vrot.slane %v764, %v773
  %v775 = vadd.f32 %v752, %v770
  %v776 = vadd.f32 %v753, %v774
  %v777 = vadd.f32 %v754, %v770
  %v778 = vadd.f32 %v755, %v774
  %v779 = vmax.f32 %v775, 0.0
  %v780 = vmax.f32 %v776, 0.0
  %v781 = vmax.f32 %v777, 0.0
  %v782 = vmax.f32 %v778, 0.0
  %v784 = vlaneseq
  %v785 = vshrl.u32 %v784, 7
  %v786 = vsub.s32 0, %v785
  %v787 = vrot.slane %v29, %v786
  %v788 = vlaneseq
  %v789 = vshrl.u32 %v788, 7
  %v790 = vsub.s32 4, %v789
  %v791 = vrot.slane %v29, %v790
  %v794 = vlaneseq
  %v795 = vshrl.u32 %v794, 7
  %v796 = vsub.s32 0, %v795
  %v797 = vrot.slane %v787, %v796
  %v798 = vlaneseq
  %v799 = vshrl.u32 %v798, 7
  %v800 = vsub.s32 0, %v799
  %v801 = vrot.slane %v791, %v800
  %v802 = vmul.f32 %v143, %v797
  %v803 = vmul.f32 %v144, %v801
  %v804 = vmul.f32 %v136, %v797
  %v805 = vmul.f32 %v138, %v801
  %v806 = vlaneseq
  %v807 = vshrl.u32 %v806, 7
  %v808 = vsub.s32 1, %v807
  %v809 = vrot.slane %v29, %v808
  %v810 = vlaneseq
  %v811 = vshrl.u32 %v810, 7
  %v812 = vsub.s32 5, %v811
  %v813 = vrot.slane %v29, %v812
  %v816 = vlaneseq
  %v817 = vshrl.u32 %v816, 7
  %v818 = vsub.s32 1, %v817
  %v819 = vrot.slane %v809, %v818
  %v820 = vlaneseq
  %v821 = vshrl.u32 %v820, 7
  %v822 = vsub.s32 1, %v821
  %v823 = vrot.slane %v813, %v822
  %v824 = vmul.f32 %v117, %v819
  %v825 = vmul.f32 %v118, %v823
  %v826 = vmul.f32 %v110, %v819
  %v827 = vmul.f32 %v112, %v823
  %v828 = vadd.f32 %v802, %v824
  %v829 = vadd.f32 %v803, %v825
  %v830 = vadd.f32 %v804, %v826
  %v831 = vadd.f32 %v805, %v827
  %v832 = vlaneseq
  %v833 = vshrl.u32 %v832, 7
  %v834 = vsub.s32 2, %v833
  %v835 = vrot.slane %v29, %v834
  %v836 = vlaneseq
  %v837 = vshrl.u32 %v836, 7
  %v838 = vsub.s32 6, %v837
  %v839 = vrot.slane %v29, %v838
  %v842 = vlaneseq
  %v843 = vshrl.u32 %v842, 7
  %v844 = vsub.s32 2, %v843
  %v845 = vrot.slane %v835, %v844
  %v846 = vlaneseq
  %v847 = vshrl.u32 %v846, 7
  %v848 = vsub.s32 2, %v847
  %v849 = vrot.slane %v839, %v848
  %v850 = vmul.f32 %v129, %v845
  %v851 = vmul.f32 %v130, %v849
  %v852 = vmul.f32 %v122, %v845
  %v853 = vmul.f32 %v124, %v849
  %v854 = vadd.f32 %v828, %v850
  %v855 = vadd.f32 %v829, %v851
  %v856 = vadd.f32 %v830, %v852
  %v857 = vadd.f32 %v831, %v853
  %v859 = vlaneseq
  %v860 = vshrl.u32 %v859, 7
  %v861 = vsub.s32 0, %v860
  %v862 = vrot.slane %v30, %v861
  %v863 = vlaneseq
  %v864 = vshrl.u32 %v863, 7
  %v865 = vsub.s32 4, %v864
  %v866 = vrot.slane %v30, %v865
  %v869 = vlaneseq
  %v870 = vshrl.u32 %v869, 7
  %v871 = vsub.s32 0, %v870
  %v872 = vrot.slane %v862, %v871
  %v873 = vlaneseq
  %v874 = vshrl.u32 %v873, 7
  %v875 = vsub.s32 0, %v874
  %v876 = vrot.slane %v866, %v875
  %v877 = vmul.f32 %v80, %v872
  %v878 = vmul.f32 %v74, %v876
  %v879 = vmul.f32 %v81, %v872
  %v880 = vmul.f32 %v75, %v876
  %v881 = vadd.f32 %v854, %v877
  %v882 = vadd.f32 %v855, %v878
  %v883 = vadd.f32 %v856, %v879
  %v884 = vadd.f32 %v857, %v880
  %v885 = vlaneseq
  %v886 = vshrl.u32 %v885, 7
  %v887 = vsub.s32 1, %v886
  %v888 = vrot.slane %v30, %v887
  %v889 = vlaneseq
  %v890 = vshrl.u32 %v889, 7
  %v891 = vsub.s32 5, %v890
  %v892 = vrot.slane %v30, %v891
  %v895 = vlaneseq
  %v896 = vshrl.u32 %v895, 7
  %v897 = vsub.s32 1, %v896
  %v898 = vrot.slane %v888, %v897
  %v899 = vlaneseq
  %v900 = vshrl.u32 %v899, 7
  %v901 = vsub.s32 1, %v900
  %v902 = vrot.slane %v892, %v901
  %v903 = vmul.f32 %v42, %v898
  %v904 = vmul.f32 %v43, %v902
  %v905 = vmul.f32 %v44, %v898
  %v906 = vmul.f32 %v45, %v902
  %v907 = vadd.f32 %v881, %v903
  %v908 = vadd.f32 %v882, %v904
  %v909 = vadd.f32 %v883, %v905
  %v910 = vadd.f32 %v884, %v906
  %v911 = vlaneseq
  %v912 = vshrl.u32 %v911, 7
  %v913 = vsub.s32 2, %v912
  %v914 = vrot.slane %v30, %v913
  %v915 = vlaneseq
  %v916 = vshrl.u32 %v915, 7
  %v917 = vsub.s32 6, %v916
  %v918 = vrot.slane %v30, %v917
  %v921 = vlaneseq
  %v922 = vshrl.u32 %v921, 7
  %v923 = vsub.s32 2, %v922
  %v924 = vrot.slane %v914, %v923
  %v925 = vlaneseq
  %v926 = vshrl.u32 %v925, 7
  %v927 = vsub.s32 2, %v926
  %v928 = vrot.slane %v918, %v927
  %v929 = vmul.f32 %v47, %v924
  %v930 = vmul.f32 %v48, %v928
  %v931 = vmul.f32 %v49, %v924
  %v932 = vmul.f32 %v50, %v928
  %v933 = vadd.f32 %v907, %v929
  %v934 = vadd.f32 %v908, %v930
  %v935 = vadd.f32 %v909, %v931
  %v936 = vadd.f32 %v910, %v932
  %v938 = vlaneseq
  %v939 = vshrl.u32 %v938, 7
  %v940 = vsub.s32 0, %v939
  %v941 = vrot.slane %v31, %v940
  %v942 = vlaneseq
  %v943 = vshrl.u32 %v942, 7
  %v944 = vsub.s32 4, %v943
  %v945 = vrot.slane %v31, %v944
  %v948 = vlaneseq
  %v949 = vshrl.u32 %v948, 7
  %v950 = vsub.s32 0, %v949
  %v951 = vrot.slane %v941, %v950
  %v952 = vlaneseq
  %v953 = vshrl.u32 %v952, 7
  %v954 = vsub.s32 0, %v953
  %v955 = vrot.slane %v945, %v954
  %v956 = vmul.f32 %v100, %v951
  %v957 = vmul.f32 %v94, %v955
  %v958 = vmul.f32 %v101, %v951
  %v959 = vmul.f32 %v95, %v955
  %v960 = vadd.f32 %v933, %v956
  %v961 = vadd.f32 %v934, %v957
  %v962 = vadd.f32 %v935, %v958
  %v963 = vadd.f32 %v936, %v959
  %v964 = vlaneseq
  %v965 = vshrl.u32 %v964, 7
  %v966 = vsub.s32 1, %v965
  %v967 = vrot.slane %v31, %v966
  %v968 = vlaneseq
  %v969 = vshrl.u32 %v968, 7
  %v970 = vsub.s32 5, %v969
  %v971 = vrot.slane %v31, %v970
  %v974 = vlaneseq
  %v975 = vshrl.u32 %v974, 7
  %v976 = vsub.s32 1, %v975
  %v977 = vrot.slane %v967, %v976
  %v978 = vlaneseq
  %v979 = vshrl.u32 %v978, 7
  %v980 = vsub.s32 1, %v979
  %v981 = vrot.slane %v971, %v980
  %v982 = vmul.f32 %v52, %v977
  %v983 = vmul.f32 %v53, %v981
  %v984 = vmul.f32 %v54, %v977
  %v985 = vmul.f32 %v55, %v981
  %v986 = vadd.f32 %v960, %v982
  %v987 = vadd.f32 %v961, %v983
  %v988 = vadd.f32 %v962, %v984
  %v989 = vadd.f32 %v963, %v985
  %v990 = vlaneseq
  %v991 = vshrl.u32 %v990, 7
  %v992 = vsub.s32 2, %v991
  %v993 = vrot.slane %v31, %v992
  %v994 = vlaneseq
  %v995 = vshrl.u32 %v994, 7
  %v996 = vsub.s32 6, %v995
  %v997 = vrot.slane %v31, %v996
  %v1000 = vlaneseq
  %v1001 = vshrl.u32 %v1000, 7
  %v1002 = vsub.s32 2, %v1001
  %v1003 = vrot.slane %v993, %v1002
  %v1004 = vlaneseq
  %v1005 = vshrl.u32 %v1004, 7
  %v1006 = vsub.s32 2, %v1005
  %v1007 = vrot.slane %v997, %v1006
  %v1008 = vmul.f32 %v57, %v1003
  %v1009 = vmul.f32 %v58, %v1007
  %v1010 = vmul.f32 %v59, %v1003
  %v1011 = vmul.f32 %v60, %v1007
  %v1012 = vadd.f32 %v986, %v1008
  %v1013 = vadd.f32 %v987, %v1009
  %v1014 = vadd.f32 %v988, %v1010
  %v1015 = vadd.f32 %v989, %v1011
  %v1016 = vlaneseq
  %v1017 = vshrl.u32 %v1016, 7
  %v1018 = vsub.s32 1, %v1017
  %v1019 = vrot.slane %v38, %v1018
  %v1020 = vlaneseq
  %v1021 = vshrl.u32 %v1020, 7
  %v1022 = vsub.s32 3, %v1021
  %v1023 = vrot.slane %v38, %v1022
  %v1026 = vlaneseq
  %v1027 = vshrl.u32 %v1026, 7
  %v1028 = vsub.s32 1, %v1027
  %v1029 = vrot.slane %v1019, %v1028
  %v1030 = vlaneseq
  %v1031 = vshrl.u32 %v1030, 7
  %v1032 = vsub.s32 1, %v1031
  %v1033 = vrot.slane %v1023, %v1032
  %v1034 = vmul.f32 %v1012, %v1029
  %v1035 = vmul.f32 %v1013, %v1033
  %v1036 = vmul.f32 %v1014, %v1029
  %v1037 = vmul.f32 %v1015, %v1033
  %v1038 = vlaneseq
  %v1039 = vshrl.u32 %v1038, 7
  %v1040 = vsub.s32 1, %v1039
  %v1041 = vrot.slane %v39, %v1040
  %v1042 = vlaneseq
  %v1043 = vshrl.u32 %v1042, 7
  %v1044 = vsub.s32 3, %v1043
  %v1045 = vrot.slane %v39, %v1044
  %v1048 = vlaneseq
  %v1049 = vshrl.u32 %v1048, 7
  %v1050 = vsub.s32 1, %v1049
  %v1051 = vrot.slane %v1041, %v1050
  %v1052 = vlaneseq
  %v1053 = vshrl.u32 %v1052, 7
  %v1054 = vsub.s32 1, %v1053
  %v1055 = vrot.slane %v1045, %v1054
  %v1056 = vadd.f32 %v1034, %v1051
  %v1057 = vadd.f32 %v1035, %v1055
  %v1058 = vadd.f32 %v1036, %v1051
  %v1059 = vadd.f32 %v1037, %v1055
  %v1060 = vmax.f32 %v1056, 0.0
  %v1061 = vmax.f32 %v1057, 0.0
  %v1062 = vmax.f32 %v1058, 0.0
  %v1063 = vmax.f32 %v1059, 0.0
  %1068 = vrot.lane.b32.xlu0 %v1060, 16
  %v1069 = vpop.permute.xlu0 %1068
  %1070 = vrot.lane.b32.xlu0 %v1061, 16
  %v1071 = vpop.permute.xlu0 %1070
  %1072 = vrot.lane.b32.xlu0 %v1062, 16
  %v1073 = vpop.permute.xlu0 %1072
  %1074 = vrot.lane.b32.xlu0 %v1063, 16
  %v1075 = vpop.permute.xlu0 %1074
  %v1076 = vsel %vm73, %v1069, %v1071
  %v1077 = vsel %vm73, %v1073, %v1075
  %v1082 = vsel %vm73, 0.0, %v1069
  %v1083 = vsel %vm73, 0.0, %v1073
  %1084 = vrot.lane.b32.xlu0 %v1060, 112
  %v1085 = vpop.permute.xlu0 %1084
  %1086 = vrot.lane.b32.xlu0 %v1061, 112
  %v1087 = vpop.permute.xlu0 %1086
  %1088 = vrot.lane.b32.xlu0 %v1062, 112
  %v1089 = vpop.permute.xlu0 %1088
  %1090 = vrot.lane.b32.xlu0 %v1063, 112
  %v1091 = vpop.permute.xlu0 %1090
  %v1092 = vsel %vm456, %v1085, %v1087
  %v1093 = vsel %vm456, %v1089, %v1091
  %v1098 = vsel %vm463, %v1087, 0.0
  %v1099 = vsel %vm463, %v1091, 0.0
  %v1101 = vlaneseq
  %v1102 = vshrl.u32 %v1101, 7
  %v1103 = vsub.s32 0, %v1102
  %v1104 = vrot.slane %v35, %v1103
  %v1105 = vlaneseq
  %v1106 = vshrl.u32 %v1105, 7
  %v1107 = vsub.s32 4, %v1106
  %v1108 = vrot.slane %v35, %v1107
  %v1111 = vlaneseq
  %v1112 = vshrl.u32 %v1111, 7
  %v1113 = vsub.s32 0, %v1112
  %v1114 = vrot.slane %v1104, %v1113
  %v1115 = vlaneseq
  %v1116 = vshrl.u32 %v1115, 7
  %v1117 = vsub.s32 0, %v1116
  %v1118 = vrot.slane %v1108, %v1117
  %v1119 = vmul.f32 %v1082, %v1114
  %v1120 = vmul.f32 %v1076, %v1118
  %v1121 = vmul.f32 %v1083, %v1114
  %v1122 = vmul.f32 %v1077, %v1118
  %v1123 = vlaneseq
  %v1124 = vshrl.u32 %v1123, 7
  %v1125 = vsub.s32 1, %v1124
  %v1126 = vrot.slane %v35, %v1125
  %v1127 = vlaneseq
  %v1128 = vshrl.u32 %v1127, 7
  %v1129 = vsub.s32 5, %v1128
  %v1130 = vrot.slane %v35, %v1129
  %v1133 = vlaneseq
  %v1134 = vshrl.u32 %v1133, 7
  %v1135 = vsub.s32 1, %v1134
  %v1136 = vrot.slane %v1126, %v1135
  %v1137 = vlaneseq
  %v1138 = vshrl.u32 %v1137, 7
  %v1139 = vsub.s32 1, %v1138
  %v1140 = vrot.slane %v1130, %v1139
  %v1141 = vmul.f32 %v1060, %v1136
  %v1142 = vmul.f32 %v1061, %v1140
  %v1143 = vmul.f32 %v1062, %v1136
  %v1144 = vmul.f32 %v1063, %v1140
  %v1145 = vadd.f32 %v1119, %v1141
  %v1146 = vadd.f32 %v1120, %v1142
  %v1147 = vadd.f32 %v1121, %v1143
  %v1148 = vadd.f32 %v1122, %v1144
  %v1149 = vlaneseq
  %v1150 = vshrl.u32 %v1149, 7
  %v1151 = vsub.s32 2, %v1150
  %v1152 = vrot.slane %v35, %v1151
  %v1153 = vlaneseq
  %v1154 = vshrl.u32 %v1153, 7
  %v1155 = vsub.s32 6, %v1154
  %v1156 = vrot.slane %v35, %v1155
  %v1159 = vlaneseq
  %v1160 = vshrl.u32 %v1159, 7
  %v1161 = vsub.s32 2, %v1160
  %v1162 = vrot.slane %v1152, %v1161
  %v1163 = vlaneseq
  %v1164 = vshrl.u32 %v1163, 7
  %v1165 = vsub.s32 2, %v1164
  %v1166 = vrot.slane %v1156, %v1165
  %v1167 = vmul.f32 %v1092, %v1162
  %v1168 = vmul.f32 %v1098, %v1166
  %v1169 = vmul.f32 %v1093, %v1162
  %v1170 = vmul.f32 %v1099, %v1166
  %v1171 = vadd.f32 %v1145, %v1167
  %v1172 = vadd.f32 %v1146, %v1168
  %v1173 = vadd.f32 %v1147, %v1169
  %v1174 = vadd.f32 %v1148, %v1170
  %v1176 = vlaneseq
  %v1177 = vshrl.u32 %v1176, 7
  %v1178 = vsub.s32 0, %v1177
  %v1179 = vrot.slane %v36, %v1178
  %v1180 = vlaneseq
  %v1181 = vshrl.u32 %v1180, 7
  %v1182 = vsub.s32 4, %v1181
  %v1183 = vrot.slane %v36, %v1182
  %v1186 = vlaneseq
  %v1187 = vshrl.u32 %v1186, 7
  %v1188 = vsub.s32 0, %v1187
  %v1189 = vrot.slane %v1179, %v1188
  %v1190 = vlaneseq
  %v1191 = vshrl.u32 %v1190, 7
  %v1192 = vsub.s32 0, %v1191
  %v1193 = vrot.slane %v1183, %v1192
  %v1194 = vmul.f32 %v1082, %v1189
  %v1195 = vmul.f32 %v1076, %v1193
  %v1196 = vmul.f32 %v1083, %v1189
  %v1197 = vmul.f32 %v1077, %v1193
  %v1198 = vlaneseq
  %v1199 = vshrl.u32 %v1198, 7
  %v1200 = vsub.s32 1, %v1199
  %v1201 = vrot.slane %v36, %v1200
  %v1202 = vlaneseq
  %v1203 = vshrl.u32 %v1202, 7
  %v1204 = vsub.s32 5, %v1203
  %v1205 = vrot.slane %v36, %v1204
  %v1208 = vlaneseq
  %v1209 = vshrl.u32 %v1208, 7
  %v1210 = vsub.s32 1, %v1209
  %v1211 = vrot.slane %v1201, %v1210
  %v1212 = vlaneseq
  %v1213 = vshrl.u32 %v1212, 7
  %v1214 = vsub.s32 1, %v1213
  %v1215 = vrot.slane %v1205, %v1214
  %v1216 = vmul.f32 %v1060, %v1211
  %v1217 = vmul.f32 %v1061, %v1215
  %v1218 = vmul.f32 %v1062, %v1211
  %v1219 = vmul.f32 %v1063, %v1215
  %v1220 = vadd.f32 %v1194, %v1216
  %v1221 = vadd.f32 %v1195, %v1217
  %v1222 = vadd.f32 %v1196, %v1218
  %v1223 = vadd.f32 %v1197, %v1219
  %v1224 = vlaneseq
  %v1225 = vshrl.u32 %v1224, 7
  %v1226 = vsub.s32 2, %v1225
  %v1227 = vrot.slane %v36, %v1226
  %v1228 = vlaneseq
  %v1229 = vshrl.u32 %v1228, 7
  %v1230 = vsub.s32 6, %v1229
  %v1231 = vrot.slane %v36, %v1230
  %v1234 = vlaneseq
  %v1235 = vshrl.u32 %v1234, 7
  %v1236 = vsub.s32 2, %v1235
  %v1237 = vrot.slane %v1227, %v1236
  %v1238 = vlaneseq
  %v1239 = vshrl.u32 %v1238, 7
  %v1240 = vsub.s32 2, %v1239
  %v1241 = vrot.slane %v1231, %v1240
  %v1242 = vmul.f32 %v1092, %v1237
  %v1243 = vmul.f32 %v1098, %v1241
  %v1244 = vmul.f32 %v1093, %v1237
  %v1245 = vmul.f32 %v1099, %v1241
  %v1246 = vadd.f32 %v1220, %v1242
  %v1247 = vadd.f32 %v1221, %v1243
  %v1248 = vadd.f32 %v1222, %v1244
  %v1249 = vadd.f32 %v1223, %v1245
  %v1251 = vlaneseq
  %v1252 = vshrl.u32 %v1251, 7
  %v1253 = vsub.s32 0, %v1252
  %v1254 = vrot.slane %v37, %v1253
  %v1255 = vlaneseq
  %v1256 = vshrl.u32 %v1255, 7
  %v1257 = vsub.s32 4, %v1256
  %v1258 = vrot.slane %v37, %v1257
  %v1261 = vlaneseq
  %v1262 = vshrl.u32 %v1261, 7
  %v1263 = vsub.s32 0, %v1262
  %v1264 = vrot.slane %v1254, %v1263
  %v1265 = vlaneseq
  %v1266 = vshrl.u32 %v1265, 7
  %v1267 = vsub.s32 0, %v1266
  %v1268 = vrot.slane %v1258, %v1267
  %v1269 = vmul.f32 %v1082, %v1264
  %v1270 = vmul.f32 %v1076, %v1268
  %v1271 = vmul.f32 %v1083, %v1264
  %v1272 = vmul.f32 %v1077, %v1268
  %v1273 = vlaneseq
  %v1274 = vshrl.u32 %v1273, 7
  %v1275 = vsub.s32 1, %v1274
  %v1276 = vrot.slane %v37, %v1275
  %v1277 = vlaneseq
  %v1278 = vshrl.u32 %v1277, 7
  %v1279 = vsub.s32 5, %v1278
  %v1280 = vrot.slane %v37, %v1279
  %v1283 = vlaneseq
  %v1284 = vshrl.u32 %v1283, 7
  %v1285 = vsub.s32 1, %v1284
  %v1286 = vrot.slane %v1276, %v1285
  %v1287 = vlaneseq
  %v1288 = vshrl.u32 %v1287, 7
  %v1289 = vsub.s32 1, %v1288
  %v1290 = vrot.slane %v1280, %v1289
  %v1291 = vmul.f32 %v1060, %v1286
  %v1292 = vmul.f32 %v1061, %v1290
  %v1293 = vmul.f32 %v1062, %v1286
  %v1294 = vmul.f32 %v1063, %v1290
  %v1295 = vadd.f32 %v1269, %v1291
  %v1296 = vadd.f32 %v1270, %v1292
  %v1297 = vadd.f32 %v1271, %v1293
  %v1298 = vadd.f32 %v1272, %v1294
  %v1299 = vlaneseq
  %v1300 = vshrl.u32 %v1299, 7
  %v1301 = vsub.s32 2, %v1300
  %v1302 = vrot.slane %v37, %v1301
  %v1303 = vlaneseq
  %v1304 = vshrl.u32 %v1303, 7
  %v1305 = vsub.s32 6, %v1304
  %v1306 = vrot.slane %v37, %v1305
  %v1309 = vlaneseq
  %v1310 = vshrl.u32 %v1309, 7
  %v1311 = vsub.s32 2, %v1310
  %v1312 = vrot.slane %v1302, %v1311
  %v1313 = vlaneseq
  %v1314 = vshrl.u32 %v1313, 7
  %v1315 = vsub.s32 2, %v1314
  %v1316 = vrot.slane %v1306, %v1315
  %v1317 = vmul.f32 %v1092, %v1312
  %v1318 = vmul.f32 %v1098, %v1316
  %v1319 = vmul.f32 %v1093, %v1312
  %v1320 = vmul.f32 %v1099, %v1316
  %v1321 = vadd.f32 %v1295, %v1317
  %v1322 = vadd.f32 %v1296, %v1318
  %v1323 = vadd.f32 %v1297, %v1319
  %v1324 = vadd.f32 %v1298, %v1320
  %v1329 = vrot.slane %v1171, 7
  %v1330 = vrot.slane %v1172, 7
  %v1331 = vrot.slane %v1173, 7
  %v1332 = vsel %vm106, %v1329, %v1331
  %v1333 = vrot.slane %v1174, 7
  %v1334 = vsel %vm106, %v1330, %v1333
  %v1339 = vsel %vm106, 0.0, %v1329
  %v1340 = vsel %vm106, 0.0, %v1330
  %v1341 = vadd.f32 %v1246, %v1339
  %v1342 = vadd.f32 %v1247, %v1340
  %v1343 = vadd.f32 %v1248, %v1332
  %v1344 = vadd.f32 %v1249, %v1334
  %v1349 = vrot.slane %v1321, 1
  %v1350 = vrot.slane %v1323, 1
  %v1351 = vsel %vm715, %v1349, %v1350
  %v1352 = vrot.slane %v1322, 1
  %v1353 = vrot.slane %v1324, 1
  %v1354 = vsel %vm715, %v1352, %v1353
  %v1359 = vsel %vm726, %v1350, 0.0
  %v1360 = vsel %vm726, %v1353, 0.0
  %v1361 = vadd.f32 %v1341, %v1351
  %v1362 = vadd.f32 %v1342, %v1354
  %v1363 = vadd.f32 %v1343, %v1359
  %v1364 = vadd.f32 %v1344, %v1360
  %v1365 = vlaneseq
  %v1366 = vshrl.u32 %v1365, 7
  %v1367 = vsub.s32 1, %v1366
  %v1368 = vrot.slane %v40, %v1367
  %v1369 = vlaneseq
  %v1370 = vshrl.u32 %v1369, 7
  %v1371 = vsub.s32 3, %v1370
  %v1372 = vrot.slane %v40, %v1371
  %v1375 = vlaneseq
  %v1376 = vshrl.u32 %v1375, 7
  %v1377 = vsub.s32 1, %v1376
  %v1378 = vrot.slane %v1368, %v1377
  %v1379 = vlaneseq
  %v1380 = vshrl.u32 %v1379, 7
  %v1381 = vsub.s32 1, %v1380
  %v1382 = vrot.slane %v1372, %v1381
  %v1383 = vmul.f32 %v1361, %v1378
  %v1384 = vmul.f32 %v1362, %v1382
  %v1385 = vmul.f32 %v1363, %v1378
  %v1386 = vmul.f32 %v1364, %v1382
  %v1387 = vlaneseq
  %v1388 = vshrl.u32 %v1387, 7
  %v1389 = vsub.s32 1, %v1388
  %v1390 = vrot.slane %v41, %v1389
  %v1391 = vlaneseq
  %v1392 = vshrl.u32 %v1391, 7
  %v1393 = vsub.s32 3, %v1392
  %v1394 = vrot.slane %v41, %v1393
  %v1397 = vlaneseq
  %v1398 = vshrl.u32 %v1397, 7
  %v1399 = vsub.s32 1, %v1398
  %v1400 = vrot.slane %v1390, %v1399
  %v1401 = vlaneseq
  %v1402 = vshrl.u32 %v1401, 7
  %v1403 = vsub.s32 1, %v1402
  %v1404 = vrot.slane %v1394, %v1403
  %v1405 = vadd.f32 %v1383, %v1400
  %v1406 = vadd.f32 %v1384, %v1404
  %v1407 = vadd.f32 %v1385, %v1400
  %v1408 = vadd.f32 %v1386, %v1404
  %v1409 = vmax.f32 %v1405, 0.0
  %v1410 = vmax.f32 %v1406, 0.0
  %v1411 = vmax.f32 %v1407, 0.0
  %v1412 = vmax.f32 %v1408, 0.0
  %1417 = vrot.lane.b32.xlu0 %v1409, 96
  %v1418 = vpop.permute.xlu0 %1417
  %1419 = vrot.lane.b32.xlu0 %v1410, 96
  %v1420 = vpop.permute.xlu0 %1419
  %1421 = vrot.lane.b32.xlu0 %v1411, 96
  %v1422 = vpop.permute.xlu0 %1421
  %1423 = vrot.lane.b32.xlu0 %v1412, 96
  %v1424 = vpop.permute.xlu0 %1423
  %vm1425 = vcmask 785408
  %v1426 = vsel %vm1425, %v1418, %v1420
  %v1427 = vsel %vm1425, %v1422, %v1424
  %v1434 = vsel %vm1425, %v780, %v1418
  %v1435 = vsel %vm1425, %v782, %v1422
  %1436 = vst [vmem:[%s7] sm:$0xff] %v779
  %1437 = vst [vmem:[%s7 + $0x8] sm:$0xff] %v1434
  %1438 = vst [vmem:[%s7 + $0x10] sm:$0xff] %v1426
  %vm1439 = vcmask 523264
  %1440 = vst.msk [vmem:[%s7 + $0x18] sm:$0xff] %vm1439, %v1420
  %1441 = vst [vmem:[%s7 + $0x20] sm:$0x3f] %v781
  %1442 = vst [vmem:[%s7 + $0x28] sm:$0x3f] %v1435
  %1443 = vst [vmem:[%s7 + $0x30] sm:$0x3f] %v1427
  %vm1444 = vcmask 521216
  %1445 = vst.msk [vmem:[%s7 + $0x38] sm:$0x3f] %vm1444, %v1424
  %s1446 = scalar_lea.vmem %s0, 128
  %v1447 = vld [vmem:[%s1446] sm:$0xff]
  %v1448 = vld [vmem:[%s1446 + $0x8] sm:$0xff]
  %v1449 = vld [vmem:[%s1446 + $0x10] sm:$0x3f]
  %v1450 = vld [vmem:[%s1446 + $0x18] sm:$0x3f]
  %s1451 = scalar_lea.vmem %s0, 160
  %v1452 = vld [vmem:[%s1451] sm:$0xff]
  %v1453 = vld [vmem:[%s1451 + $0x8] sm:$0xff]
  %v1454 = vld [vmem:[%s1451 + $0x10] sm:$0x3f]
  %v1455 = vld [vmem:[%s1451 + $0x18] sm:$0x3f]
  %s1456 = scalar_lea.vmem %s0, 192
  %v1457 = vld [vmem:[%s1456] sm:$0xff]
  %v1458 = vld [vmem:[%s1456 + $0x8] sm:$0xff]
  %v1459 = vld [vmem:[%s1456 + $0x10] sm:$0x3f]
  %v1460 = vld [vmem:[%s1456 + $0x18] sm:$0x3f]
  %s1461 = scalar_lea.vmem %s0, 224
  %v1462 = vld [vmem:[%s1461] sm:$0xff]
  %v1463 = vld [vmem:[%s1461 + $0x8] sm:$0xff]
  %v1464 = vld [vmem:[%s1461 + $0x10] sm:$0x3f]
  %v1465 = vld [vmem:[%s1461 + $0x18] sm:$0x3f]
  %1470 = vrot.lane.b32.xlu0 %v1452, 16
  %v1471 = vpop.permute.xlu0 %1470
  %1472 = vrot.lane.b32.xlu0 %v1453, 16
  %v1473 = vpop.permute.xlu0 %1472
  %1474 = vrot.lane.b32.xlu0 %v1454, 16
  %v1475 = vpop.permute.xlu0 %1474
  %1476 = vrot.lane.b32.xlu0 %v1455, 16
  %v1477 = vpop.permute.xlu0 %1476
  %v1478 = vsel %vm73, %v1471, %v1473
  %v1479 = vsel %vm73, %v1475, %v1477
  %v1484 = vsel %vm73, 0.0, %v1471
  %v1485 = vsel %vm73, 0.0, %v1475
  %1490 = vrot.lane.b32.xlu0 %v1462, 16
  %v1491 = vpop.permute.xlu0 %1490
  %1492 = vrot.lane.b32.xlu0 %v1463, 16
  %v1493 = vpop.permute.xlu0 %1492
  %1494 = vrot.lane.b32.xlu0 %v1464, 16
  %v1495 = vpop.permute.xlu0 %1494
  %1496 = vrot.lane.b32.xlu0 %v1465, 16
  %v1497 = vpop.permute.xlu0 %1496
  %v1498 = vsel %vm73, %v1491, %v1493
  %v1499 = vsel %vm73, %v1495, %v1497
  %v1504 = vsel %vm73, 0.0, %v1491
  %v1505 = vsel %vm73, 0.0, %v1495
  %v1510 = vrot.slane %v1457, 7
  %v1511 = vrot.slane %v1458, 7
  %v1512 = vrot.slane %v1459, 7
  %v1513 = vsel %vm106, %v1510, %v1512
  %v1514 = vrot.slane %v1460, 7
  %v1515 = vsel %vm106, %v1511, %v1514
  %v1520 = vsel %vm106, 0.0, %v1510
  %v1521 = vsel %vm106, 0.0, %v1511
  %v1522 = vrot.slane %v1462, 7
  %v1523 = vrot.slane %v1463, 7
  %v1524 = vrot.slane %v1464, 7
  %v1525 = vsel %vm106, %v1522, %v1524
  %v1526 = vrot.slane %v1465, 7
  %v1527 = vsel %vm106, %v1523, %v1526
  %v1532 = vsel %vm106, 0.0, %v1522
  %v1533 = vsel %vm106, 0.0, %v1523
  %v1536 = vrot.slane %v1504, 7
  %v1537 = vrot.slane %v1498, 7
  %v1538 = vrot.slane %v1505, 7
  %v1539 = vsel %vm106, %v1536, %v1538
  %v1540 = vrot.slane %v1499, 7
  %v1541 = vsel %vm106, %v1537, %v1540
  %v1546 = vsel %vm106, 0.0, %v1536
  %v1547 = vsel %vm106, 0.0, %v1537
  %v1548 = vmul.f32 %v1546, %v159
  %v1549 = vmul.f32 %v1547, %v163
  %v1550 = vmul.f32 %v1539, %v159
  %v1551 = vmul.f32 %v1541, %v163
  %v1552 = vmul.f32 %v1520, %v181
  %v1553 = vmul.f32 %v1521, %v185
  %v1554 = vmul.f32 %v1513, %v181
  %v1555 = vmul.f32 %v1515, %v185
  %v1556 = vadd.f32 %v1548, %v1552
  %v1557 = vadd.f32 %v1549, %v1553
  %v1558 = vadd.f32 %v1550, %v1554
  %v1559 = vadd.f32 %v1551, %v1555
  %v1560 = vmul.f32 %v1532, %v207
  %v1561 = vmul.f32 %v1533, %v211
  %v1562 = vmul.f32 %v1525, %v207
  %v1563 = vmul.f32 %v1527, %v211
  %v1564 = vadd.f32 %v1556, %v1560
  %v1565 = vadd.f32 %v1557, %v1561
  %v1566 = vadd.f32 %v1558, %v1562
  %v1567 = vadd.f32 %v1559, %v1563
  %v1568 = vmul.f32 %v1484, %v234
  %v1569 = vmul.f32 %v1478, %v238
  %v1570 = vmul.f32 %v1485, %v234
  %v1571 = vmul.f32 %v1479, %v238
  %v1572 = vadd.f32 %v1564, %v1568
  %v1573 = vadd.f32 %v1565, %v1569
  %v1574 = vadd.f32 %v1566, %v1570
  %v1575 = vadd.f32 %v1567, %v1571
  %v1576 = vmul.f32 %v1447, %v260
  %v1577 = vmul.f32 %v1448, %v264
  %v1578 = vmul.f32 %v1449, %v260
  %v1579 = vmul.f32 %v1450, %v264
  %v1580 = vadd.f32 %v1572, %v1576
  %v1581 = vadd.f32 %v1573, %v1577
  %v1582 = vadd.f32 %v1574, %v1578
  %v1583 = vadd.f32 %v1575, %v1579
  %v1584 = vmul.f32 %v1452, %v286
  %v1585 = vmul.f32 %v1453, %v290
  %v1586 = vmul.f32 %v1454, %v286
  %v1587 = vmul.f32 %v1455, %v290
  %v1588 = vadd.f32 %v1580, %v1584
  %v1589 = vadd.f32 %v1581, %v1585
  %v1590 = vadd.f32 %v1582, %v1586
  %v1591 = vadd.f32 %v1583, %v1587
  %v1592 = vmul.f32 %v1504, %v313
  %v1593 = vmul.f32 %v1498, %v317
  %v1594 = vmul.f32 %v1505, %v313
  %v1595 = vmul.f32 %v1499, %v317
  %v1596 = vadd.f32 %v1588, %v1592
  %v1597 = vadd.f32 %v1589, %v1593
  %v1598 = vadd.f32 %v1590, %v1594
  %v1599 = vadd.f32 %v1591, %v1595
  %v1600 = vmul.f32 %v1457, %v339
  %v1601 = vmul.f32 %v1458, %v343
  %v1602 = vmul.f32 %v1459, %v339
  %v1603 = vmul.f32 %v1460, %v343
  %v1604 = vadd.f32 %v1596, %v1600
  %v1605 = vadd.f32 %v1597, %v1601
  %v1606 = vadd.f32 %v1598, %v1602
  %v1607 = vadd.f32 %v1599, %v1603
  %v1608 = vmul.f32 %v1462, %v365
  %v1609 = vmul.f32 %v1463, %v369
  %v1610 = vmul.f32 %v1464, %v365
  %v1611 = vmul.f32 %v1465, %v369
  %v1612 = vadd.f32 %v1604, %v1608
  %v1613 = vadd.f32 %v1605, %v1609
  %v1614 = vadd.f32 %v1606, %v1610
  %v1615 = vadd.f32 %v1607, %v1611
  %v1616 = vmul.f32 %v1612, %v392
  %v1617 = vmul.f32 %v1613, %v396
  %v1618 = vmul.f32 %v1614, %v392
  %v1619 = vmul.f32 %v1615, %v396
  %v1620 = vadd.f32 %v1616, %v415
  %v1621 = vadd.f32 %v1617, %v419
  %v1622 = vadd.f32 %v1618, %v415
  %v1623 = vadd.f32 %v1619, %v419
  %v1624 = vmax.f32 %v1620, 0.0
  %v1625 = vmax.f32 %v1621, 0.0
  %v1626 = vmax.f32 %v1622, 0.0
  %v1627 = vmax.f32 %v1623, 0.0
  %1632 = vrot.lane.b32.xlu0 %v1624, 16
  %v1633 = vpop.permute.xlu0 %1632
  %1634 = vrot.lane.b32.xlu0 %v1625, 16
  %v1635 = vpop.permute.xlu0 %1634
  %1636 = vrot.lane.b32.xlu0 %v1626, 16
  %v1637 = vpop.permute.xlu0 %1636
  %1638 = vrot.lane.b32.xlu0 %v1627, 16
  %v1639 = vpop.permute.xlu0 %1638
  %v1640 = vsel %vm73, %v1633, %v1635
  %v1641 = vsel %vm73, %v1637, %v1639
  %v1646 = vsel %vm73, 0.0, %v1633
  %v1647 = vsel %vm73, 0.0, %v1637
  %1648 = vrot.lane.b32.xlu0 %v1624, 112
  %v1649 = vpop.permute.xlu0 %1648
  %1650 = vrot.lane.b32.xlu0 %v1625, 112
  %v1651 = vpop.permute.xlu0 %1650
  %1652 = vrot.lane.b32.xlu0 %v1626, 112
  %v1653 = vpop.permute.xlu0 %1652
  %1654 = vrot.lane.b32.xlu0 %v1627, 112
  %v1655 = vpop.permute.xlu0 %1654
  %v1656 = vsel %vm456, %v1649, %v1651
  %v1657 = vsel %vm456, %v1653, %v1655
  %v1662 = vsel %vm463, %v1651, 0.0
  %v1663 = vsel %vm463, %v1655, 0.0
  %v1664 = vmul.f32 %v1646, %v480
  %v1665 = vmul.f32 %v1640, %v484
  %v1666 = vmul.f32 %v1647, %v480
  %v1667 = vmul.f32 %v1641, %v484
  %v1668 = vmul.f32 %v1624, %v502
  %v1669 = vmul.f32 %v1625, %v506
  %v1670 = vmul.f32 %v1626, %v502
  %v1671 = vmul.f32 %v1627, %v506
  %v1672 = vadd.f32 %v1664, %v1668
  %v1673 = vadd.f32 %v1665, %v1669
  %v1674 = vadd.f32 %v1666, %v1670
  %v1675 = vadd.f32 %v1667, %v1671
  %v1676 = vmul.f32 %v1656, %v528
  %v1677 = vmul.f32 %v1662, %v532
  %v1678 = vmul.f32 %v1657, %v528
  %v1679 = vmul.f32 %v1663, %v532
  %v1680 = vadd.f32 %v1672, %v1676
  %v1681 = vadd.f32 %v1673, %v1677
  %v1682 = vadd.f32 %v1674, %v1678
  %v1683 = vadd.f32 %v1675, %v1679
  %v1684 = vmul.f32 %v1646, %v555
  %v1685 = vmul.f32 %v1640, %v559
  %v1686 = vmul.f32 %v1647, %v555
  %v1687 = vmul.f32 %v1641, %v559
  %v1688 = vmul.f32 %v1624, %v577
  %v1689 = vmul.f32 %v1625, %v581
  %v1690 = vmul.f32 %v1626, %v577
  %v1691 = vmul.f32 %v1627, %v581
  %v1692 = vadd.f32 %v1684, %v1688
  %v1693 = vadd.f32 %v1685, %v1689
  %v1694 = vadd.f32 %v1686, %v1690
  %v1695 = vadd.f32 %v1687, %v1691
  %v1696 = vmul.f32 %v1656, %v603
  %v1697 = vmul.f32 %v1662, %v607
  %v1698 = vmul.f32 %v1657, %v603
  %v1699 = vmul.f32 %v1663, %v607
  %v1700 = vadd.f32 %v1692, %v1696
  %v1701 = vadd.f32 %v1693, %v1697
  %v1702 = vadd.f32 %v1694, %v1698
  %v1703 = vadd.f32 %v1695, %v1699
  %v1704 = vmul.f32 %v1646, %v630
  %v1705 = vmul.f32 %v1640, %v634
  %v1706 = vmul.f32 %v1647, %v630
  %v1707 = vmul.f32 %v1641, %v634
  %v1708 = vmul.f32 %v1624, %v652
  %v1709 = vmul.f32 %v1625, %v656
  %v1710 = vmul.f32 %v1626, %v652
  %v1711 = vmul.f32 %v1627, %v656
  %v1712 = vadd.f32 %v1704, %v1708
  %v1713 = vadd.f32 %v1705, %v1709
  %v1714 = vadd.f32 %v1706, %v1710
  %v1715 = vadd.f32 %v1707, %v1711
  %v1716 = vmul.f32 %v1656, %v678
  %v1717 = vmul.f32 %v1662, %v682
  %v1718 = vmul.f32 %v1657, %v678
  %v1719 = vmul.f32 %v1663, %v682
  %v1720 = vadd.f32 %v1712, %v1716
  %v1721 = vadd.f32 %v1713, %v1717
  %v1722 = vadd.f32 %v1714, %v1718
  %v1723 = vadd.f32 %v1715, %v1719
  %v1728 = vrot.slane %v1680, 7
  %v1729 = vrot.slane %v1681, 7
  %v1730 = vrot.slane %v1682, 7
  %v1731 = vsel %vm106, %v1728, %v1730
  %v1732 = vrot.slane %v1683, 7
  %v1733 = vsel %vm106, %v1729, %v1732
  %v1738 = vsel %vm106, 0.0, %v1728
  %v1739 = vsel %vm106, 0.0, %v1729
  %v1740 = vadd.f32 %v1700, %v1738
  %v1741 = vadd.f32 %v1701, %v1739
  %v1742 = vadd.f32 %v1702, %v1731
  %v1743 = vadd.f32 %v1703, %v1733
  %v1748 = vrot.slane %v1720, 1
  %v1749 = vrot.slane %v1722, 1
  %v1750 = vsel %vm715, %v1748, %v1749
  %v1751 = vrot.slane %v1721, 1
  %v1752 = vrot.slane %v1723, 1
  %v1753 = vsel %vm715, %v1751, %v1752
  %v1758 = vsel %vm726, %v1749, 0.0
  %v1759 = vsel %vm726, %v1752, 0.0
  %v1760 = vadd.f32 %v1740, %v1750
  %v1761 = vadd.f32 %v1741, %v1753
  %v1762 = vadd.f32 %v1742, %v1758
  %v1763 = vadd.f32 %v1743, %v1759
  %v1764 = vmul.f32 %v1760, %v747
  %v1765 = vmul.f32 %v1761, %v751
  %v1766 = vmul.f32 %v1762, %v747
  %v1767 = vmul.f32 %v1763, %v751
  %v1768 = vadd.f32 %v1764, %v770
  %v1769 = vadd.f32 %v1765, %v774
  %v1770 = vadd.f32 %v1766, %v770
  %v1771 = vadd.f32 %v1767, %v774
  %v1772 = vmax.f32 %v1768, 0.0
  %v1773 = vmax.f32 %v1769, 0.0
  %v1774 = vmax.f32 %v1770, 0.0
  %v1775 = vmax.f32 %v1771, 0.0
  %v1776 = vmul.f32 %v1546, %v797
  %v1777 = vmul.f32 %v1547, %v801
  %v1778 = vmul.f32 %v1539, %v797
  %v1779 = vmul.f32 %v1541, %v801
  %v1780 = vmul.f32 %v1520, %v819
  %v1781 = vmul.f32 %v1521, %v823
  %v1782 = vmul.f32 %v1513, %v819
  %v1783 = vmul.f32 %v1515, %v823
  %v1784 = vadd.f32 %v1776, %v1780
  %v1785 = vadd.f32 %v1777, %v1781
  %v1786 = vadd.f32 %v1778, %v1782
  %v1787 = vadd.f32 %v1779, %v1783
  %v1788 = vmul.f32 %v1532, %v845
  %v1789 = vmul.f32 %v1533, %v849
  %v1790 = vmul.f32 %v1525, %v845
  %v1791 = vmul.f32 %v1527, %v849
  %v1792 = vadd.f32 %v1784, %v1788
  %v1793 = vadd.f32 %v1785, %v1789
  %v1794 = vadd.f32 %v1786, %v1790
  %v1795 = vadd.f32 %v1787, %v1791
  %v1796 = vmul.f32 %v1484, %v872
  %v1797 = vmul.f32 %v1478, %v876
  %v1798 = vmul.f32 %v1485, %v872
  %v1799 = vmul.f32 %v1479, %v876
  %v1800 = vadd.f32 %v1792, %v1796
  %v1801 = vadd.f32 %v1793, %v1797
  %v1802 = vadd.f32 %v1794, %v1798
  %v1803 = vadd.f32 %v1795, %v1799
  %v1804 = vmul.f32 %v1447, %v898
  %v1805 = vmul.f32 %v1448, %v902
  %v1806 = vmul.f32 %v1449, %v898
  %v1807 = vmul.f32 %v1450, %v902
  %v1808 = vadd.f32 %v1800, %v1804
  %v1809 = vadd.f32 %v1801, %v1805
  %v1810 = vadd.f32 %v1802, %v1806
  %v1811 = vadd.f32 %v1803, %v1807
  %v1812 = vmul.f32 %v1452, %v924
  %v1813 = vmul.f32 %v1453, %v928
  %v1814 = vmul.f32 %v1454, %v924
  %v1815 = vmul.f32 %v1455, %v928
  %v1816 = vadd.f32 %v1808, %v1812
  %v1817 = vadd.f32 %v1809, %v1813
  %v1818 = vadd.f32 %v1810, %v1814
  %v1819 = vadd.f32 %v1811, %v1815
  %v1820 = vmul.f32 %v1504, %v951
  %v1821 = vmul.f32 %v1498, %v955
  %v1822 = vmul.f32 %v1505, %v951
  %v1823 = vmul.f32 %v1499, %v955
  %v1824 = vadd.f32 %v1816, %v1820
  %v1825 = vadd.f32 %v1817, %v1821
  %v1826 = vadd.f32 %v1818, %v1822
  %v1827 = vadd.f32 %v1819, %v1823
  %v1828 = vmul.f32 %v1457, %v977
  %v1829 = vmul.f32 %v1458, %v981
  %v1830 = vmul.f32 %v1459, %v977
  %v1831 = vmul.f32 %v1460, %v981
  %v1832 = vadd.f32 %v1824, %v1828
  %v1833 = vadd.f32 %v1825, %v1829
  %v1834 = vadd.f32 %v1826, %v1830
  %v1835 = vadd.f32 %v1827, %v1831
  %v1836 = vmul.f32 %v1462, %v1003
  %v1837 = vmul.f32 %v1463, %v1007
  %v1838 = vmul.f32 %v1464, %v1003
  %v1839 = vmul.f32 %v1465, %v1007
  %v1840 = vadd.f32 %v1832, %v1836
  %v1841 = vadd.f32 %v1833, %v1837
  %v1842 = vadd.f32 %v1834, %v1838
  %v1843 = vadd.f32 %v1835, %v1839
  %v1844 = vmul.f32 %v1840, %v1029
  %v1845 = vmul.f32 %v1841, %v1033
  %v1846 = vmul.f32 %v1842, %v1029
  %v1847 = vmul.f32 %v1843, %v1033
  %v1848 = vadd.f32 %v1844, %v1051
  %v1849 = vadd.f32 %v1845, %v1055
  %v1850 = vadd.f32 %v1846, %v1051
  %v1851 = vadd.f32 %v1847, %v1055
  %v1852 = vmax.f32 %v1848, 0.0
  %v1853 = vmax.f32 %v1849, 0.0
  %v1854 = vmax.f32 %v1850, 0.0
  %v1855 = vmax.f32 %v1851, 0.0
  %1860 = vrot.lane.b32.xlu0 %v1852, 16
  %v1861 = vpop.permute.xlu0 %1860
  %1862 = vrot.lane.b32.xlu0 %v1853, 16
  %v1863 = vpop.permute.xlu0 %1862
  %1864 = vrot.lane.b32.xlu0 %v1854, 16
  %v1865 = vpop.permute.xlu0 %1864
  %1866 = vrot.lane.b32.xlu0 %v1855, 16
  %v1867 = vpop.permute.xlu0 %1866
  %v1868 = vsel %vm73, %v1861, %v1863
  %v1869 = vsel %vm73, %v1865, %v1867
  %v1874 = vsel %vm73, 0.0, %v1861
  %v1875 = vsel %vm73, 0.0, %v1865
  %1876 = vrot.lane.b32.xlu0 %v1852, 112
  %v1877 = vpop.permute.xlu0 %1876
  %1878 = vrot.lane.b32.xlu0 %v1853, 112
  %v1879 = vpop.permute.xlu0 %1878
  %1880 = vrot.lane.b32.xlu0 %v1854, 112
  %v1881 = vpop.permute.xlu0 %1880
  %1882 = vrot.lane.b32.xlu0 %v1855, 112
  %v1883 = vpop.permute.xlu0 %1882
  %v1884 = vsel %vm456, %v1877, %v1879
  %v1885 = vsel %vm456, %v1881, %v1883
  %v1890 = vsel %vm463, %v1879, 0.0
  %v1891 = vsel %vm463, %v1883, 0.0
  %v1892 = vmul.f32 %v1874, %v1114
  %v1893 = vmul.f32 %v1868, %v1118
  %v1894 = vmul.f32 %v1875, %v1114
  %v1895 = vmul.f32 %v1869, %v1118
  %v1896 = vmul.f32 %v1852, %v1136
  %v1897 = vmul.f32 %v1853, %v1140
  %v1898 = vmul.f32 %v1854, %v1136
  %v1899 = vmul.f32 %v1855, %v1140
  %v1900 = vadd.f32 %v1892, %v1896
  %v1901 = vadd.f32 %v1893, %v1897
  %v1902 = vadd.f32 %v1894, %v1898
  %v1903 = vadd.f32 %v1895, %v1899
  %v1904 = vmul.f32 %v1884, %v1162
  %v1905 = vmul.f32 %v1890, %v1166
  %v1906 = vmul.f32 %v1885, %v1162
  %v1907 = vmul.f32 %v1891, %v1166
  %v1908 = vadd.f32 %v1900, %v1904
  %v1909 = vadd.f32 %v1901, %v1905
  %v1910 = vadd.f32 %v1902, %v1906
  %v1911 = vadd.f32 %v1903, %v1907
  %v1912 = vmul.f32 %v1874, %v1189
  %v1913 = vmul.f32 %v1868, %v1193
  %v1914 = vmul.f32 %v1875, %v1189
  %v1915 = vmul.f32 %v1869, %v1193
  %v1916 = vmul.f32 %v1852, %v1211
  %v1917 = vmul.f32 %v1853, %v1215
  %v1918 = vmul.f32 %v1854, %v1211
  %v1919 = vmul.f32 %v1855, %v1215
  %v1920 = vadd.f32 %v1912, %v1916
  %v1921 = vadd.f32 %v1913, %v1917
  %v1922 = vadd.f32 %v1914, %v1918
  %v1923 = vadd.f32 %v1915, %v1919
  %v1924 = vmul.f32 %v1884, %v1237
  %v1925 = vmul.f32 %v1890, %v1241
  %v1926 = vmul.f32 %v1885, %v1237
  %v1927 = vmul.f32 %v1891, %v1241
  %v1928 = vadd.f32 %v1920, %v1924
  %v1929 = vadd.f32 %v1921, %v1925
  %v1930 = vadd.f32 %v1922, %v1926
  %v1931 = vadd.f32 %v1923, %v1927
  %v1932 = vmul.f32 %v1874, %v1264
  %v1933 = vmul.f32 %v1868, %v1268
  %v1934 = vmul.f32 %v1875, %v1264
  %v1935 = vmul.f32 %v1869, %v1268
  %v1936 = vmul.f32 %v1852, %v1286
  %v1937 = vmul.f32 %v1853, %v1290
  %v1938 = vmul.f32 %v1854, %v1286
  %v1939 = vmul.f32 %v1855, %v1290
  %v1940 = vadd.f32 %v1932, %v1936
  %v1941 = vadd.f32 %v1933, %v1937
  %v1942 = vadd.f32 %v1934, %v1938
  %v1943 = vadd.f32 %v1935, %v1939
  %v1944 = vmul.f32 %v1884, %v1312
  %v1945 = vmul.f32 %v1890, %v1316
  %v1946 = vmul.f32 %v1885, %v1312
  %v1947 = vmul.f32 %v1891, %v1316
  %v1948 = vadd.f32 %v1940, %v1944
  %v1949 = vadd.f32 %v1941, %v1945
  %v1950 = vadd.f32 %v1942, %v1946
  %v1951 = vadd.f32 %v1943, %v1947
  %v1956 = vrot.slane %v1908, 7
  %v1957 = vrot.slane %v1909, 7
  %v1958 = vrot.slane %v1910, 7
  %v1959 = vsel %vm106, %v1956, %v1958
  %v1960 = vrot.slane %v1911, 7
  %v1961 = vsel %vm106, %v1957, %v1960
  %v1966 = vsel %vm106, 0.0, %v1956
  %v1967 = vsel %vm106, 0.0, %v1957
  %v1968 = vadd.f32 %v1928, %v1966
  %v1969 = vadd.f32 %v1929, %v1967
  %v1970 = vadd.f32 %v1930, %v1959
  %v1971 = vadd.f32 %v1931, %v1961
  %v1976 = vrot.slane %v1948, 1
  %v1977 = vrot.slane %v1950, 1
  %v1978 = vsel %vm715, %v1976, %v1977
  %v1979 = vrot.slane %v1949, 1
  %v1980 = vrot.slane %v1951, 1
  %v1981 = vsel %vm715, %v1979, %v1980
  %v1986 = vsel %vm726, %v1977, 0.0
  %v1987 = vsel %vm726, %v1980, 0.0
  %v1988 = vadd.f32 %v1968, %v1978
  %v1989 = vadd.f32 %v1969, %v1981
  %v1990 = vadd.f32 %v1970, %v1986
  %v1991 = vadd.f32 %v1971, %v1987
  %v1992 = vmul.f32 %v1988, %v1378
  %v1993 = vmul.f32 %v1989, %v1382
  %v1994 = vmul.f32 %v1990, %v1378
  %v1995 = vmul.f32 %v1991, %v1382
  %v1996 = vadd.f32 %v1992, %v1400
  %v1997 = vadd.f32 %v1993, %v1404
  %v1998 = vadd.f32 %v1994, %v1400
  %v1999 = vadd.f32 %v1995, %v1404
  %v2000 = vmax.f32 %v1996, 0.0
  %v2001 = vmax.f32 %v1997, 0.0
  %v2002 = vmax.f32 %v1998, 0.0
  %v2003 = vmax.f32 %v1999, 0.0
  %2008 = vrot.lane.b32.xlu0 %v2000, 96
  %v2009 = vpop.permute.xlu0 %2008
  %2010 = vrot.lane.b32.xlu0 %v2001, 96
  %v2011 = vpop.permute.xlu0 %2010
  %2012 = vrot.lane.b32.xlu0 %v2002, 96
  %v2013 = vpop.permute.xlu0 %2012
  %2014 = vrot.lane.b32.xlu0 %v2003, 96
  %v2015 = vpop.permute.xlu0 %2014
  %v2016 = vsel %vm1425, %v2009, %v2011
  %v2017 = vsel %vm1425, %v2013, %v2015
  %v2024 = vsel %vm1425, %v1773, %v2009
  %v2025 = vsel %vm1425, %v1775, %v2013
  %s2026 = scalar_lea.vmem %s7, 64
  %2027 = vst [vmem:[%s2026] sm:$0xff] %v1772
  %2028 = vst [vmem:[%s2026 + $0x8] sm:$0xff] %v2024
  %2029 = vst [vmem:[%s2026 + $0x10] sm:$0xff] %v2016
  %2030 = vst.msk [vmem:[%s2026 + $0x18] sm:$0xff] %vm1439, %v2011
  %2031 = vst [vmem:[%s2026 + $0x20] sm:$0x3f] %v1774
  %2032 = vst [vmem:[%s2026 + $0x28] sm:$0x3f] %v2025
  %2033 = vst [vmem:[%s2026 + $0x30] sm:$0x3f] %v2017
  %2034 = vst.msk [vmem:[%s2026 + $0x38] sm:$0x3f] %vm1444, %v2015
  %s2035 = scalar_lea.vmem %s0, 256
  %v2036 = vld [vmem:[%s2035] sm:$0xff]
  %v2037 = vld [vmem:[%s2035 + $0x8] sm:$0xff]
  %v2038 = vld [vmem:[%s2035 + $0x10] sm:$0x3f]
  %v2039 = vld [vmem:[%s2035 + $0x18] sm:$0x3f]
  %s2040 = scalar_lea.vmem %s0, 288
  %v2041 = vld [vmem:[%s2040] sm:$0xff]
  %v2042 = vld [vmem:[%s2040 + $0x8] sm:$0xff]
  %v2043 = vld [vmem:[%s2040 + $0x10] sm:$0x3f]
  %v2044 = vld [vmem:[%s2040 + $0x18] sm:$0x3f]
  %s2045 = scalar_lea.vmem %s0, 320
  %v2046 = vld [vmem:[%s2045] sm:$0xff]
  %v2047 = vld [vmem:[%s2045 + $0x8] sm:$0xff]
  %v2048 = vld [vmem:[%s2045 + $0x10] sm:$0x3f]
  %v2049 = vld [vmem:[%s2045 + $0x18] sm:$0x3f]
  %s2050 = scalar_lea.vmem %s0, 352
  %v2051 = vld [vmem:[%s2050] sm:$0xff]
  %v2052 = vld [vmem:[%s2050 + $0x8] sm:$0xff]
  %v2053 = vld [vmem:[%s2050 + $0x10] sm:$0x3f]
  %v2054 = vld [vmem:[%s2050 + $0x18] sm:$0x3f]
  %2059 = vrot.lane.b32.xlu0 %v2041, 16
  %v2060 = vpop.permute.xlu0 %2059
  %2061 = vrot.lane.b32.xlu0 %v2042, 16
  %v2062 = vpop.permute.xlu0 %2061
  %2063 = vrot.lane.b32.xlu0 %v2043, 16
  %v2064 = vpop.permute.xlu0 %2063
  %2065 = vrot.lane.b32.xlu0 %v2044, 16
  %v2066 = vpop.permute.xlu0 %2065
  %v2067 = vsel %vm73, %v2060, %v2062
  %v2068 = vsel %vm73, %v2064, %v2066
  %v2073 = vsel %vm73, 0.0, %v2060
  %v2074 = vsel %vm73, 0.0, %v2064
  %2079 = vrot.lane.b32.xlu0 %v2051, 16
  %v2080 = vpop.permute.xlu0 %2079
  %2081 = vrot.lane.b32.xlu0 %v2052, 16
  %v2082 = vpop.permute.xlu0 %2081
  %2083 = vrot.lane.b32.xlu0 %v2053, 16
  %v2084 = vpop.permute.xlu0 %2083
  %2085 = vrot.lane.b32.xlu0 %v2054, 16
  %v2086 = vpop.permute.xlu0 %2085
  %v2087 = vsel %vm73, %v2080, %v2082
  %v2088 = vsel %vm73, %v2084, %v2086
  %v2093 = vsel %vm73, 0.0, %v2080
  %v2094 = vsel %vm73, 0.0, %v2084
  %v2099 = vrot.slane %v2046, 7
  %v2100 = vrot.slane %v2047, 7
  %v2101 = vrot.slane %v2048, 7
  %v2102 = vsel %vm106, %v2099, %v2101
  %v2103 = vrot.slane %v2049, 7
  %v2104 = vsel %vm106, %v2100, %v2103
  %v2109 = vsel %vm106, 0.0, %v2099
  %v2110 = vsel %vm106, 0.0, %v2100
  %v2111 = vrot.slane %v2051, 7
  %v2112 = vrot.slane %v2052, 7
  %v2113 = vrot.slane %v2053, 7
  %v2114 = vsel %vm106, %v2111, %v2113
  %v2115 = vrot.slane %v2054, 7
  %v2116 = vsel %vm106, %v2112, %v2115
  %v2121 = vsel %vm106, 0.0, %v2111
  %v2122 = vsel %vm106, 0.0, %v2112
  %v2125 = vrot.slane %v2093, 7
  %v2126 = vrot.slane %v2087, 7
  %v2127 = vrot.slane %v2094, 7
  %v2128 = vsel %vm106, %v2125, %v2127
  %v2129 = vrot.slane %v2088, 7
  %v2130 = vsel %vm106, %v2126, %v2129
  %v2135 = vsel %vm106, 0.0, %v2125
  %v2136 = vsel %vm106, 0.0, %v2126
  %v2137 = vmul.f32 %v2135, %v159
  %v2138 = vmul.f32 %v2136, %v163
  %v2139 = vmul.f32 %v2128, %v159
  %v2140 = vmul.f32 %v2130, %v163
  %v2141 = vmul.f32 %v2109, %v181
  %v2142 = vmul.f32 %v2110, %v185
  %v2143 = vmul.f32 %v2102, %v181
  %v2144 = vmul.f32 %v2104, %v185
  %v2145 = vadd.f32 %v2137, %v2141
  %v2146 = vadd.f32 %v2138, %v2142
  %v2147 = vadd.f32 %v2139, %v2143
  %v2148 = vadd.f32 %v2140, %v2144
  %v2149 = vmul.f32 %v2121, %v207
  %v2150 = vmul.f32 %v2122, %v211
  %v2151 = vmul.f32 %v2114, %v207
  %v2152 = vmul.f32 %v2116, %v211
  %v2153 = vadd.f32 %v2145, %v2149
  %v2154 = vadd.f32 %v2146, %v2150
  %v2155 = vadd.f32 %v2147, %v2151
  %v2156 = vadd.f32 %v2148, %v2152
  %v2157 = vmul.f32 %v2073, %v234
  %v2158 = vmul.f32 %v2067, %v238
  %v2159 = vmul.f32 %v2074, %v234
  %v2160 = vmul.f32 %v2068, %v238
  %v2161 = vadd.f32 %v2153, %v2157
  %v2162 = vadd.f32 %v2154, %v2158
  %v2163 = vadd.f32 %v2155, %v2159
  %v2164 = vadd.f32 %v2156, %v2160
  %v2165 = vmul.f32 %v2036, %v260
  %v2166 = vmul.f32 %v2037, %v264
  %v2167 = vmul.f32 %v2038, %v260
  %v2168 = vmul.f32 %v2039, %v264
  %v2169 = vadd.f32 %v2161, %v2165
  %v2170 = vadd.f32 %v2162, %v2166
  %v2171 = vadd.f32 %v2163, %v2167
  %v2172 = vadd.f32 %v2164, %v2168
  %v2173 = vmul.f32 %v2041, %v286
  %v2174 = vmul.f32 %v2042, %v290
  %v2175 = vmul.f32 %v2043, %v286
  %v2176 = vmul.f32 %v2044, %v290
  %v2177 = vadd.f32 %v2169, %v2173
  %v2178 = vadd.f32 %v2170, %v2174
  %v2179 = vadd.f32 %v2171, %v2175
  %v2180 = vadd.f32 %v2172, %v2176
  %v2181 = vmul.f32 %v2093, %v313
  %v2182 = vmul.f32 %v2087, %v317
  %v2183 = vmul.f32 %v2094, %v313
  %v2184 = vmul.f32 %v2088, %v317
  %v2185 = vadd.f32 %v2177, %v2181
  %v2186 = vadd.f32 %v2178, %v2182
  %v2187 = vadd.f32 %v2179, %v2183
  %v2188 = vadd.f32 %v2180, %v2184
  %v2189 = vmul.f32 %v2046, %v339
  %v2190 = vmul.f32 %v2047, %v343
  %v2191 = vmul.f32 %v2048, %v339
  %v2192 = vmul.f32 %v2049, %v343
  %v2193 = vadd.f32 %v2185, %v2189
  %v2194 = vadd.f32 %v2186, %v2190
  %v2195 = vadd.f32 %v2187, %v2191
  %v2196 = vadd.f32 %v2188, %v2192
  %v2197 = vmul.f32 %v2051, %v365
  %v2198 = vmul.f32 %v2052, %v369
  %v2199 = vmul.f32 %v2053, %v365
  %v2200 = vmul.f32 %v2054, %v369
  %v2201 = vadd.f32 %v2193, %v2197
  %v2202 = vadd.f32 %v2194, %v2198
  %v2203 = vadd.f32 %v2195, %v2199
  %v2204 = vadd.f32 %v2196, %v2200
  %v2205 = vmul.f32 %v2201, %v392
  %v2206 = vmul.f32 %v2202, %v396
  %v2207 = vmul.f32 %v2203, %v392
  %v2208 = vmul.f32 %v2204, %v396
  %v2209 = vadd.f32 %v2205, %v415
  %v2210 = vadd.f32 %v2206, %v419
  %v2211 = vadd.f32 %v2207, %v415
  %v2212 = vadd.f32 %v2208, %v419
  %v2213 = vmax.f32 %v2209, 0.0
  %v2214 = vmax.f32 %v2210, 0.0
  %v2215 = vmax.f32 %v2211, 0.0
  %v2216 = vmax.f32 %v2212, 0.0
  %2221 = vrot.lane.b32.xlu0 %v2213, 16
  %v2222 = vpop.permute.xlu0 %2221
  %2223 = vrot.lane.b32.xlu0 %v2214, 16
  %v2224 = vpop.permute.xlu0 %2223
  %2225 = vrot.lane.b32.xlu0 %v2215, 16
  %v2226 = vpop.permute.xlu0 %2225
  %2227 = vrot.lane.b32.xlu0 %v2216, 16
  %v2228 = vpop.permute.xlu0 %2227
  %v2229 = vsel %vm73, %v2222, %v2224
  %v2230 = vsel %vm73, %v2226, %v2228
  %v2235 = vsel %vm73, 0.0, %v2222
  %v2236 = vsel %vm73, 0.0, %v2226
  %2237 = vrot.lane.b32.xlu0 %v2213, 112
  %v2238 = vpop.permute.xlu0 %2237
  %2239 = vrot.lane.b32.xlu0 %v2214, 112
  %v2240 = vpop.permute.xlu0 %2239
  %2241 = vrot.lane.b32.xlu0 %v2215, 112
  %v2242 = vpop.permute.xlu0 %2241
  %2243 = vrot.lane.b32.xlu0 %v2216, 112
  %v2244 = vpop.permute.xlu0 %2243
  %v2245 = vsel %vm456, %v2238, %v2240
  %v2246 = vsel %vm456, %v2242, %v2244
  %v2251 = vsel %vm463, %v2240, 0.0
  %v2252 = vsel %vm463, %v2244, 0.0
  %v2253 = vmul.f32 %v2235, %v480
  %v2254 = vmul.f32 %v2229, %v484
  %v2255 = vmul.f32 %v2236, %v480
  %v2256 = vmul.f32 %v2230, %v484
  %v2257 = vmul.f32 %v2213, %v502
  %v2258 = vmul.f32 %v2214, %v506
  %v2259 = vmul.f32 %v2215, %v502
  %v2260 = vmul.f32 %v2216, %v506
  %v2261 = vadd.f32 %v2253, %v2257
  %v2262 = vadd.f32 %v2254, %v2258
  %v2263 = vadd.f32 %v2255, %v2259
  %v2264 = vadd.f32 %v2256, %v2260
  %v2265 = vmul.f32 %v2245, %v528
  %v2266 = vmul.f32 %v2251, %v532
  %v2267 = vmul.f32 %v2246, %v528
  %v2268 = vmul.f32 %v2252, %v532
  %v2269 = vadd.f32 %v2261, %v2265
  %v2270 = vadd.f32 %v2262, %v2266
  %v2271 = vadd.f32 %v2263, %v2267
  %v2272 = vadd.f32 %v2264, %v2268
  %v2273 = vmul.f32 %v2235, %v555
  %v2274 = vmul.f32 %v2229, %v559
  %v2275 = vmul.f32 %v2236, %v555
  %v2276 = vmul.f32 %v2230, %v559
  %v2277 = vmul.f32 %v2213, %v577
  %v2278 = vmul.f32 %v2214, %v581
  %v2279 = vmul.f32 %v2215, %v577
  %v2280 = vmul.f32 %v2216, %v581
  %v2281 = vadd.f32 %v2273, %v2277
  %v2282 = vadd.f32 %v2274, %v2278
  %v2283 = vadd.f32 %v2275, %v2279
  %v2284 = vadd.f32 %v2276, %v2280
  %v2285 = vmul.f32 %v2245, %v603
  %v2286 = vmul.f32 %v2251, %v607
  %v2287 = vmul.f32 %v2246, %v603
  %v2288 = vmul.f32 %v2252, %v607
  %v2289 = vadd.f32 %v2281, %v2285
  %v2290 = vadd.f32 %v2282, %v2286
  %v2291 = vadd.f32 %v2283, %v2287
  %v2292 = vadd.f32 %v2284, %v2288
  %v2293 = vmul.f32 %v2235, %v630
  %v2294 = vmul.f32 %v2229, %v634
  %v2295 = vmul.f32 %v2236, %v630
  %v2296 = vmul.f32 %v2230, %v634
  %v2297 = vmul.f32 %v2213, %v652
  %v2298 = vmul.f32 %v2214, %v656
  %v2299 = vmul.f32 %v2215, %v652
  %v2300 = vmul.f32 %v2216, %v656
  %v2301 = vadd.f32 %v2293, %v2297
  %v2302 = vadd.f32 %v2294, %v2298
  %v2303 = vadd.f32 %v2295, %v2299
  %v2304 = vadd.f32 %v2296, %v2300
  %v2305 = vmul.f32 %v2245, %v678
  %v2306 = vmul.f32 %v2251, %v682
  %v2307 = vmul.f32 %v2246, %v678
  %v2308 = vmul.f32 %v2252, %v682
  %v2309 = vadd.f32 %v2301, %v2305
  %v2310 = vadd.f32 %v2302, %v2306
  %v2311 = vadd.f32 %v2303, %v2307
  %v2312 = vadd.f32 %v2304, %v2308
  %v2317 = vrot.slane %v2269, 7
  %v2318 = vrot.slane %v2270, 7
  %v2319 = vrot.slane %v2271, 7
  %v2320 = vsel %vm106, %v2317, %v2319
  %v2321 = vrot.slane %v2272, 7
  %v2322 = vsel %vm106, %v2318, %v2321
  %v2327 = vsel %vm106, 0.0, %v2317
  %v2328 = vsel %vm106, 0.0, %v2318
  %v2329 = vadd.f32 %v2289, %v2327
  %v2330 = vadd.f32 %v2290, %v2328
  %v2331 = vadd.f32 %v2291, %v2320
  %v2332 = vadd.f32 %v2292, %v2322
  %v2337 = vrot.slane %v2309, 1
  %v2338 = vrot.slane %v2311, 1
  %v2339 = vsel %vm715, %v2337, %v2338
  %v2340 = vrot.slane %v2310, 1
  %v2341 = vrot.slane %v2312, 1
  %v2342 = vsel %vm715, %v2340, %v2341
  %v2347 = vsel %vm726, %v2338, 0.0
  %v2348 = vsel %vm726, %v2341, 0.0
  %v2349 = vadd.f32 %v2329, %v2339
  %v2350 = vadd.f32 %v2330, %v2342
  %v2351 = vadd.f32 %v2331, %v2347
  %v2352 = vadd.f32 %v2332, %v2348
  %v2353 = vmul.f32 %v2349, %v747
  %v2354 = vmul.f32 %v2350, %v751
  %v2355 = vmul.f32 %v2351, %v747
  %v2356 = vmul.f32 %v2352, %v751
  %v2357 = vadd.f32 %v2353, %v770
  %v2358 = vadd.f32 %v2354, %v774
  %v2359 = vadd.f32 %v2355, %v770
  %v2360 = vadd.f32 %v2356, %v774
  %v2361 = vmax.f32 %v2357, 0.0
  %v2362 = vmax.f32 %v2358, 0.0
  %v2363 = vmax.f32 %v2359, 0.0
  %v2364 = vmax.f32 %v2360, 0.0
  %v2365 = vmul.f32 %v2135, %v797
  %v2366 = vmul.f32 %v2136, %v801
  %v2367 = vmul.f32 %v2128, %v797
  %v2368 = vmul.f32 %v2130, %v801
  %v2369 = vmul.f32 %v2109, %v819
  %v2370 = vmul.f32 %v2110, %v823
  %v2371 = vmul.f32 %v2102, %v819
  %v2372 = vmul.f32 %v2104, %v823
  %v2373 = vadd.f32 %v2365, %v2369
  %v2374 = vadd.f32 %v2366, %v2370
  %v2375 = vadd.f32 %v2367, %v2371
  %v2376 = vadd.f32 %v2368, %v2372
  %v2377 = vmul.f32 %v2121, %v845
  %v2378 = vmul.f32 %v2122, %v849
  %v2379 = vmul.f32 %v2114, %v845
  %v2380 = vmul.f32 %v2116, %v849
  %v2381 = vadd.f32 %v2373, %v2377
  %v2382 = vadd.f32 %v2374, %v2378
  %v2383 = vadd.f32 %v2375, %v2379
  %v2384 = vadd.f32 %v2376, %v2380
  %v2385 = vmul.f32 %v2073, %v872
  %v2386 = vmul.f32 %v2067, %v876
  %v2387 = vmul.f32 %v2074, %v872
  %v2388 = vmul.f32 %v2068, %v876
  %v2389 = vadd.f32 %v2381, %v2385
  %v2390 = vadd.f32 %v2382, %v2386
  %v2391 = vadd.f32 %v2383, %v2387
  %v2392 = vadd.f32 %v2384, %v2388
  %v2393 = vmul.f32 %v2036, %v898
  %v2394 = vmul.f32 %v2037, %v902
  %v2395 = vmul.f32 %v2038, %v898
  %v2396 = vmul.f32 %v2039, %v902
  %v2397 = vadd.f32 %v2389, %v2393
  %v2398 = vadd.f32 %v2390, %v2394
  %v2399 = vadd.f32 %v2391, %v2395
  %v2400 = vadd.f32 %v2392, %v2396
  %v2401 = vmul.f32 %v2041, %v924
  %v2402 = vmul.f32 %v2042, %v928
  %v2403 = vmul.f32 %v2043, %v924
  %v2404 = vmul.f32 %v2044, %v928
  %v2405 = vadd.f32 %v2397, %v2401
  %v2406 = vadd.f32 %v2398, %v2402
  %v2407 = vadd.f32 %v2399, %v2403
  %v2408 = vadd.f32 %v2400, %v2404
  %v2409 = vmul.f32 %v2093, %v951
  %v2410 = vmul.f32 %v2087, %v955
  %v2411 = vmul.f32 %v2094, %v951
  %v2412 = vmul.f32 %v2088, %v955
  %v2413 = vadd.f32 %v2405, %v2409
  %v2414 = vadd.f32 %v2406, %v2410
  %v2415 = vadd.f32 %v2407, %v2411
  %v2416 = vadd.f32 %v2408, %v2412
  %v2417 = vmul.f32 %v2046, %v977
  %v2418 = vmul.f32 %v2047, %v981
  %v2419 = vmul.f32 %v2048, %v977
  %v2420 = vmul.f32 %v2049, %v981
  %v2421 = vadd.f32 %v2413, %v2417
  %v2422 = vadd.f32 %v2414, %v2418
  %v2423 = vadd.f32 %v2415, %v2419
  %v2424 = vadd.f32 %v2416, %v2420
  %v2425 = vmul.f32 %v2051, %v1003
  %v2426 = vmul.f32 %v2052, %v1007
  %v2427 = vmul.f32 %v2053, %v1003
  %v2428 = vmul.f32 %v2054, %v1007
  %v2429 = vadd.f32 %v2421, %v2425
  %v2430 = vadd.f32 %v2422, %v2426
  %v2431 = vadd.f32 %v2423, %v2427
  %v2432 = vadd.f32 %v2424, %v2428
  %v2433 = vmul.f32 %v2429, %v1029
  %v2434 = vmul.f32 %v2430, %v1033
  %v2435 = vmul.f32 %v2431, %v1029
  %v2436 = vmul.f32 %v2432, %v1033
  %v2437 = vadd.f32 %v2433, %v1051
  %v2438 = vadd.f32 %v2434, %v1055
  %v2439 = vadd.f32 %v2435, %v1051
  %v2440 = vadd.f32 %v2436, %v1055
  %v2441 = vmax.f32 %v2437, 0.0
  %v2442 = vmax.f32 %v2438, 0.0
  %v2443 = vmax.f32 %v2439, 0.0
  %v2444 = vmax.f32 %v2440, 0.0
  %2449 = vrot.lane.b32.xlu0 %v2441, 16
  %v2450 = vpop.permute.xlu0 %2449
  %2451 = vrot.lane.b32.xlu0 %v2442, 16
  %v2452 = vpop.permute.xlu0 %2451
  %2453 = vrot.lane.b32.xlu0 %v2443, 16
  %v2454 = vpop.permute.xlu0 %2453
  %2455 = vrot.lane.b32.xlu0 %v2444, 16
  %v2456 = vpop.permute.xlu0 %2455
  %v2457 = vsel %vm73, %v2450, %v2452
  %v2458 = vsel %vm73, %v2454, %v2456
  %v2463 = vsel %vm73, 0.0, %v2450
  %v2464 = vsel %vm73, 0.0, %v2454
  %2465 = vrot.lane.b32.xlu0 %v2441, 112
  %v2466 = vpop.permute.xlu0 %2465
  %2467 = vrot.lane.b32.xlu0 %v2442, 112
  %v2468 = vpop.permute.xlu0 %2467
  %2469 = vrot.lane.b32.xlu0 %v2443, 112
  %v2470 = vpop.permute.xlu0 %2469
  %2471 = vrot.lane.b32.xlu0 %v2444, 112
  %v2472 = vpop.permute.xlu0 %2471
  %v2473 = vsel %vm456, %v2466, %v2468
  %v2474 = vsel %vm456, %v2470, %v2472
  %v2479 = vsel %vm463, %v2468, 0.0
  %v2480 = vsel %vm463, %v2472, 0.0
  %v2481 = vmul.f32 %v2463, %v1114
  %v2482 = vmul.f32 %v2457, %v1118
  %v2483 = vmul.f32 %v2464, %v1114
  %v2484 = vmul.f32 %v2458, %v1118
  %v2485 = vmul.f32 %v2441, %v1136
  %v2486 = vmul.f32 %v2442, %v1140
  %v2487 = vmul.f32 %v2443, %v1136
  %v2488 = vmul.f32 %v2444, %v1140
  %v2489 = vadd.f32 %v2481, %v2485
  %v2490 = vadd.f32 %v2482, %v2486
  %v2491 = vadd.f32 %v2483, %v2487
  %v2492 = vadd.f32 %v2484, %v2488
  %v2493 = vmul.f32 %v2473, %v1162
  %v2494 = vmul.f32 %v2479, %v1166
  %v2495 = vmul.f32 %v2474, %v1162
  %v2496 = vmul.f32 %v2480, %v1166
  %v2497 = vadd.f32 %v2489, %v2493
  %v2498 = vadd.f32 %v2490, %v2494
  %v2499 = vadd.f32 %v2491, %v2495
  %v2500 = vadd.f32 %v2492, %v2496
  %v2501 = vmul.f32 %v2463, %v1189
  %v2502 = vmul.f32 %v2457, %v1193
  %v2503 = vmul.f32 %v2464, %v1189
  %v2504 = vmul.f32 %v2458, %v1193
  %v2505 = vmul.f32 %v2441, %v1211
  %v2506 = vmul.f32 %v2442, %v1215
  %v2507 = vmul.f32 %v2443, %v1211
  %v2508 = vmul.f32 %v2444, %v1215
  %v2509 = vadd.f32 %v2501, %v2505
  %v2510 = vadd.f32 %v2502, %v2506
  %v2511 = vadd.f32 %v2503, %v2507
  %v2512 = vadd.f32 %v2504, %v2508
  %v2513 = vmul.f32 %v2473, %v1237
  %v2514 = vmul.f32 %v2479, %v1241
  %v2515 = vmul.f32 %v2474, %v1237
  %v2516 = vmul.f32 %v2480, %v1241
  %v2517 = vadd.f32 %v2509, %v2513
  %v2518 = vadd.f32 %v2510, %v2514
  %v2519 = vadd.f32 %v2511, %v2515
  %v2520 = vadd.f32 %v2512, %v2516
  %v2521 = vmul.f32 %v2463, %v1264
  %v2522 = vmul.f32 %v2457, %v1268
  %v2523 = vmul.f32 %v2464, %v1264
  %v2524 = vmul.f32 %v2458, %v1268
  %v2525 = vmul.f32 %v2441, %v1286
  %v2526 = vmul.f32 %v2442, %v1290
  %v2527 = vmul.f32 %v2443, %v1286
  %v2528 = vmul.f32 %v2444, %v1290
  %v2529 = vadd.f32 %v2521, %v2525
  %v2530 = vadd.f32 %v2522, %v2526
  %v2531 = vadd.f32 %v2523, %v2527
  %v2532 = vadd.f32 %v2524, %v2528
  %v2533 = vmul.f32 %v2473, %v1312
  %v2534 = vmul.f32 %v2479, %v1316
  %v2535 = vmul.f32 %v2474, %v1312
  %v2536 = vmul.f32 %v2480, %v1316
  %v2537 = vadd.f32 %v2529, %v2533
  %v2538 = vadd.f32 %v2530, %v2534
  %v2539 = vadd.f32 %v2531, %v2535
  %v2540 = vadd.f32 %v2532, %v2536
  %v2545 = vrot.slane %v2497, 7
  %v2546 = vrot.slane %v2498, 7
  %v2547 = vrot.slane %v2499, 7
  %v2548 = vsel %vm106, %v2545, %v2547
  %v2549 = vrot.slane %v2500, 7
  %v2550 = vsel %vm106, %v2546, %v2549
  %v2555 = vsel %vm106, 0.0, %v2545
  %v2556 = vsel %vm106, 0.0, %v2546
  %v2557 = vadd.f32 %v2517, %v2555
  %v2558 = vadd.f32 %v2518, %v2556
  %v2559 = vadd.f32 %v2519, %v2548
  %v2560 = vadd.f32 %v2520, %v2550
  %v2565 = vrot.slane %v2537, 1
  %v2566 = vrot.slane %v2539, 1
  %v2567 = vsel %vm715, %v2565, %v2566
  %v2568 = vrot.slane %v2538, 1
  %v2569 = vrot.slane %v2540, 1
  %v2570 = vsel %vm715, %v2568, %v2569
  %v2575 = vsel %vm726, %v2566, 0.0
  %v2576 = vsel %vm726, %v2569, 0.0
  %v2577 = vadd.f32 %v2557, %v2567
  %v2578 = vadd.f32 %v2558, %v2570
  %v2579 = vadd.f32 %v2559, %v2575
  %v2580 = vadd.f32 %v2560, %v2576
  %v2581 = vmul.f32 %v2577, %v1378
  %v2582 = vmul.f32 %v2578, %v1382
  %v2583 = vmul.f32 %v2579, %v1378
  %v2584 = vmul.f32 %v2580, %v1382
  %v2585 = vadd.f32 %v2581, %v1400
  %v2586 = vadd.f32 %v2582, %v1404
  %v2587 = vadd.f32 %v2583, %v1400
  %v2588 = vadd.f32 %v2584, %v1404
  %v2589 = vmax.f32 %v2585, 0.0
  %v2590 = vmax.f32 %v2586, 0.0
  %v2591 = vmax.f32 %v2587, 0.0
  %v2592 = vmax.f32 %v2588, 0.0
  %2597 = vrot.lane.b32.xlu0 %v2589, 96
  %v2598 = vpop.permute.xlu0 %2597
  %2599 = vrot.lane.b32.xlu0 %v2590, 96
  %v2600 = vpop.permute.xlu0 %2599
  %2601 = vrot.lane.b32.xlu0 %v2591, 96
  %v2602 = vpop.permute.xlu0 %2601
  %2603 = vrot.lane.b32.xlu0 %v2592, 96
  %v2604 = vpop.permute.xlu0 %2603
  %v2605 = vsel %vm1425, %v2598, %v2600
  %v2606 = vsel %vm1425, %v2602, %v2604
  %v2613 = vsel %vm1425, %v2362, %v2598
  %v2614 = vsel %vm1425, %v2364, %v2602
  %s2615 = scalar_lea.vmem %s7, 128
  %2616 = vst [vmem:[%s2615] sm:$0xff] %v2361
  %2617 = vst [vmem:[%s2615 + $0x8] sm:$0xff] %v2613
  %2618 = vst [vmem:[%s2615 + $0x10] sm:$0xff] %v2605
  %2619 = vst.msk [vmem:[%s2615 + $0x18] sm:$0xff] %vm1439, %v2600
  %2620 = vst [vmem:[%s2615 + $0x20] sm:$0x3f] %v2363
  %2621 = vst [vmem:[%s2615 + $0x28] sm:$0x3f] %v2614
  %2622 = vst [vmem:[%s2615 + $0x30] sm:$0x3f] %v2606
  %2623 = vst.msk [vmem:[%s2615 + $0x38] sm:$0x3f] %vm1444, %v2604
  %s2624 = scalar_lea.vmem %s0, 384
  %v2625 = vld [vmem:[%s2624] sm:$0xff]
  %v2626 = vld [vmem:[%s2624 + $0x8] sm:$0xff]
  %v2627 = vld [vmem:[%s2624 + $0x10] sm:$0x3f]
  %v2628 = vld [vmem:[%s2624 + $0x18] sm:$0x3f]
  %s2629 = scalar_lea.vmem %s0, 416
  %v2630 = vld [vmem:[%s2629] sm:$0xff]
  %v2631 = vld [vmem:[%s2629 + $0x8] sm:$0xff]
  %v2632 = vld [vmem:[%s2629 + $0x10] sm:$0x3f]
  %v2633 = vld [vmem:[%s2629 + $0x18] sm:$0x3f]
  %s2634 = scalar_lea.vmem %s0, 448
  %v2635 = vld [vmem:[%s2634] sm:$0xff]
  %v2636 = vld [vmem:[%s2634 + $0x8] sm:$0xff]
  %v2637 = vld [vmem:[%s2634 + $0x10] sm:$0x3f]
  %v2638 = vld [vmem:[%s2634 + $0x18] sm:$0x3f]
  %s2639 = scalar_lea.vmem %s0, 480
  %v2640 = vld [vmem:[%s2639] sm:$0xff]
  %v2641 = vld [vmem:[%s2639 + $0x8] sm:$0xff]
  %v2642 = vld [vmem:[%s2639 + $0x10] sm:$0x3f]
  %v2643 = vld [vmem:[%s2639 + $0x18] sm:$0x3f]
  %2648 = vrot.lane.b32.xlu0 %v2630, 16
  %v2649 = vpop.permute.xlu0 %2648
  %2650 = vrot.lane.b32.xlu0 %v2631, 16
  %v2651 = vpop.permute.xlu0 %2650
  %2652 = vrot.lane.b32.xlu0 %v2632, 16
  %v2653 = vpop.permute.xlu0 %2652
  %2654 = vrot.lane.b32.xlu0 %v2633, 16
  %v2655 = vpop.permute.xlu0 %2654
  %v2656 = vsel %vm73, %v2649, %v2651
  %v2657 = vsel %vm73, %v2653, %v2655
  %v2662 = vsel %vm73, 0.0, %v2649
  %v2663 = vsel %vm73, 0.0, %v2653
  %2668 = vrot.lane.b32.xlu0 %v2640, 16
  %v2669 = vpop.permute.xlu0 %2668
  %2670 = vrot.lane.b32.xlu0 %v2641, 16
  %v2671 = vpop.permute.xlu0 %2670
  %2672 = vrot.lane.b32.xlu0 %v2642, 16
  %v2673 = vpop.permute.xlu0 %2672
  %2674 = vrot.lane.b32.xlu0 %v2643, 16
  %v2675 = vpop.permute.xlu0 %2674
  %v2676 = vsel %vm73, %v2669, %v2671
  %v2677 = vsel %vm73, %v2673, %v2675
  %v2682 = vsel %vm73, 0.0, %v2669
  %v2683 = vsel %vm73, 0.0, %v2673
  %v2688 = vrot.slane %v2635, 7
  %v2689 = vrot.slane %v2636, 7
  %v2690 = vrot.slane %v2637, 7
  %v2691 = vsel %vm106, %v2688, %v2690
  %v2692 = vrot.slane %v2638, 7
  %v2693 = vsel %vm106, %v2689, %v2692
  %v2698 = vsel %vm106, 0.0, %v2688
  %v2699 = vsel %vm106, 0.0, %v2689
  %v2700 = vrot.slane %v2640, 7
  %v2701 = vrot.slane %v2641, 7
  %v2702 = vrot.slane %v2642, 7
  %v2703 = vsel %vm106, %v2700, %v2702
  %v2704 = vrot.slane %v2643, 7
  %v2705 = vsel %vm106, %v2701, %v2704
  %v2710 = vsel %vm106, 0.0, %v2700
  %v2711 = vsel %vm106, 0.0, %v2701
  %v2714 = vrot.slane %v2682, 7
  %v2715 = vrot.slane %v2676, 7
  %v2716 = vrot.slane %v2683, 7
  %v2717 = vsel %vm106, %v2714, %v2716
  %v2718 = vrot.slane %v2677, 7
  %v2719 = vsel %vm106, %v2715, %v2718
  %v2724 = vsel %vm106, 0.0, %v2714
  %v2725 = vsel %vm106, 0.0, %v2715
  %v2726 = vmul.f32 %v2724, %v159
  %v2727 = vmul.f32 %v2725, %v163
  %v2728 = vmul.f32 %v2717, %v159
  %v2729 = vmul.f32 %v2719, %v163
  %v2730 = vmul.f32 %v2698, %v181
  %v2731 = vmul.f32 %v2699, %v185
  %v2732 = vmul.f32 %v2691, %v181
  %v2733 = vmul.f32 %v2693, %v185
  %v2734 = vadd.f32 %v2726, %v2730
  %v2735 = vadd.f32 %v2727, %v2731
  %v2736 = vadd.f32 %v2728, %v2732
  %v2737 = vadd.f32 %v2729, %v2733
  %v2738 = vmul.f32 %v2710, %v207
  %v2739 = vmul.f32 %v2711, %v211
  %v2740 = vmul.f32 %v2703, %v207
  %v2741 = vmul.f32 %v2705, %v211
  %v2742 = vadd.f32 %v2734, %v2738
  %v2743 = vadd.f32 %v2735, %v2739
  %v2744 = vadd.f32 %v2736, %v2740
  %v2745 = vadd.f32 %v2737, %v2741
  %v2746 = vmul.f32 %v2662, %v234
  %v2747 = vmul.f32 %v2656, %v238
  %v2748 = vmul.f32 %v2663, %v234
  %v2749 = vmul.f32 %v2657, %v238
  %v2750 = vadd.f32 %v2742, %v2746
  %v2751 = vadd.f32 %v2743, %v2747
  %v2752 = vadd.f32 %v2744, %v2748
  %v2753 = vadd.f32 %v2745, %v2749
  %v2754 = vmul.f32 %v2625, %v260
  %v2755 = vmul.f32 %v2626, %v264
  %v2756 = vmul.f32 %v2627, %v260
  %v2757 = vmul.f32 %v2628, %v264
  %v2758 = vadd.f32 %v2750, %v2754
  %v2759 = vadd.f32 %v2751, %v2755
  %v2760 = vadd.f32 %v2752, %v2756
  %v2761 = vadd.f32 %v2753, %v2757
  %v2762 = vmul.f32 %v2630, %v286
  %v2763 = vmul.f32 %v2631, %v290
  %v2764 = vmul.f32 %v2632, %v286
  %v2765 = vmul.f32 %v2633, %v290
  %v2766 = vadd.f32 %v2758, %v2762
  %v2767 = vadd.f32 %v2759, %v2763
  %v2768 = vadd.f32 %v2760, %v2764
  %v2769 = vadd.f32 %v2761, %v2765
  %v2770 = vmul.f32 %v2682, %v313
  %v2771 = vmul.f32 %v2676, %v317
  %v2772 = vmul.f32 %v2683, %v313
  %v2773 = vmul.f32 %v2677, %v317
  %v2774 = vadd.f32 %v2766, %v2770
  %v2775 = vadd.f32 %v2767, %v2771
  %v2776 = vadd.f32 %v2768, %v2772
  %v2777 = vadd.f32 %v2769, %v2773
  %v2778 = vmul.f32 %v2635, %v339
  %v2779 = vmul.f32 %v2636, %v343
  %v2780 = vmul.f32 %v2637, %v339
  %v2781 = vmul.f32 %v2638, %v343
  %v2782 = vadd.f32 %v2774, %v2778
  %v2783 = vadd.f32 %v2775, %v2779
  %v2784 = vadd.f32 %v2776, %v2780
  %v2785 = vadd.f32 %v2777, %v2781
  %v2786 = vmul.f32 %v2640, %v365
  %v2787 = vmul.f32 %v2641, %v369
  %v2788 = vmul.f32 %v2642, %v365
  %v2789 = vmul.f32 %v2643, %v369
  %v2790 = vadd.f32 %v2782, %v2786
  %v2791 = vadd.f32 %v2783, %v2787
  %v2792 = vadd.f32 %v2784, %v2788
  %v2793 = vadd.f32 %v2785, %v2789
  %v2794 = vmul.f32 %v2790, %v392
  %v2795 = vmul.f32 %v2791, %v396
  %v2796 = vmul.f32 %v2792, %v392
  %v2797 = vmul.f32 %v2793, %v396
  %v2798 = vadd.f32 %v2794, %v415
  %v2799 = vadd.f32 %v2795, %v419
  %v2800 = vadd.f32 %v2796, %v415
  %v2801 = vadd.f32 %v2797, %v419
  %v2802 = vmax.f32 %v2798, 0.0
  %v2803 = vmax.f32 %v2799, 0.0
  %v2804 = vmax.f32 %v2800, 0.0
  %v2805 = vmax.f32 %v2801, 0.0
  %2810 = vrot.lane.b32.xlu0 %v2802, 16
  %v2811 = vpop.permute.xlu0 %2810
  %2812 = vrot.lane.b32.xlu0 %v2803, 16
  %v2813 = vpop.permute.xlu0 %2812
  %2814 = vrot.lane.b32.xlu0 %v2804, 16
  %v2815 = vpop.permute.xlu0 %2814
  %2816 = vrot.lane.b32.xlu0 %v2805, 16
  %v2817 = vpop.permute.xlu0 %2816
  %v2818 = vsel %vm73, %v2811, %v2813
  %v2819 = vsel %vm73, %v2815, %v2817
  %v2824 = vsel %vm73, 0.0, %v2811
  %v2825 = vsel %vm73, 0.0, %v2815
  %2826 = vrot.lane.b32.xlu0 %v2802, 112
  %v2827 = vpop.permute.xlu0 %2826
  %2828 = vrot.lane.b32.xlu0 %v2803, 112
  %v2829 = vpop.permute.xlu0 %2828
  %2830 = vrot.lane.b32.xlu0 %v2804, 112
  %v2831 = vpop.permute.xlu0 %2830
  %2832 = vrot.lane.b32.xlu0 %v2805, 112
  %v2833 = vpop.permute.xlu0 %2832
  %v2834 = vsel %vm456, %v2827, %v2829
  %v2835 = vsel %vm456, %v2831, %v2833
  %v2840 = vsel %vm463, %v2829, 0.0
  %v2841 = vsel %vm463, %v2833, 0.0
  %v2842 = vmul.f32 %v2824, %v480
  %v2843 = vmul.f32 %v2818, %v484
  %v2844 = vmul.f32 %v2825, %v480
  %v2845 = vmul.f32 %v2819, %v484
  %v2846 = vmul.f32 %v2802, %v502
  %v2847 = vmul.f32 %v2803, %v506
  %v2848 = vmul.f32 %v2804, %v502
  %v2849 = vmul.f32 %v2805, %v506
  %v2850 = vadd.f32 %v2842, %v2846
  %v2851 = vadd.f32 %v2843, %v2847
  %v2852 = vadd.f32 %v2844, %v2848
  %v2853 = vadd.f32 %v2845, %v2849
  %v2854 = vmul.f32 %v2834, %v528
  %v2855 = vmul.f32 %v2840, %v532
  %v2856 = vmul.f32 %v2835, %v528
  %v2857 = vmul.f32 %v2841, %v532
  %v2858 = vadd.f32 %v2850, %v2854
  %v2859 = vadd.f32 %v2851, %v2855
  %v2860 = vadd.f32 %v2852, %v2856
  %v2861 = vadd.f32 %v2853, %v2857
  %v2862 = vmul.f32 %v2824, %v555
  %v2863 = vmul.f32 %v2818, %v559
  %v2864 = vmul.f32 %v2825, %v555
  %v2865 = vmul.f32 %v2819, %v559
  %v2866 = vmul.f32 %v2802, %v577
  %v2867 = vmul.f32 %v2803, %v581
  %v2868 = vmul.f32 %v2804, %v577
  %v2869 = vmul.f32 %v2805, %v581
  %v2870 = vadd.f32 %v2862, %v2866
  %v2871 = vadd.f32 %v2863, %v2867
  %v2872 = vadd.f32 %v2864, %v2868
  %v2873 = vadd.f32 %v2865, %v2869
  %v2874 = vmul.f32 %v2834, %v603
  %v2875 = vmul.f32 %v2840, %v607
  %v2876 = vmul.f32 %v2835, %v603
  %v2877 = vmul.f32 %v2841, %v607
  %v2878 = vadd.f32 %v2870, %v2874
  %v2879 = vadd.f32 %v2871, %v2875
  %v2880 = vadd.f32 %v2872, %v2876
  %v2881 = vadd.f32 %v2873, %v2877
  %v2882 = vmul.f32 %v2824, %v630
  %v2883 = vmul.f32 %v2818, %v634
  %v2884 = vmul.f32 %v2825, %v630
  %v2885 = vmul.f32 %v2819, %v634
  %v2886 = vmul.f32 %v2802, %v652
  %v2887 = vmul.f32 %v2803, %v656
  %v2888 = vmul.f32 %v2804, %v652
  %v2889 = vmul.f32 %v2805, %v656
  %v2890 = vadd.f32 %v2882, %v2886
  %v2891 = vadd.f32 %v2883, %v2887
  %v2892 = vadd.f32 %v2884, %v2888
  %v2893 = vadd.f32 %v2885, %v2889
  %v2894 = vmul.f32 %v2834, %v678
  %v2895 = vmul.f32 %v2840, %v682
  %v2896 = vmul.f32 %v2835, %v678
  %v2897 = vmul.f32 %v2841, %v682
  %v2898 = vadd.f32 %v2890, %v2894
  %v2899 = vadd.f32 %v2891, %v2895
  %v2900 = vadd.f32 %v2892, %v2896
  %v2901 = vadd.f32 %v2893, %v2897
  %v2906 = vrot.slane %v2858, 7
  %v2907 = vrot.slane %v2859, 7
  %v2908 = vrot.slane %v2860, 7
  %v2909 = vsel %vm106, %v2906, %v2908
  %v2910 = vrot.slane %v2861, 7
  %v2911 = vsel %vm106, %v2907, %v2910
  %v2916 = vsel %vm106, 0.0, %v2906
  %v2917 = vsel %vm106, 0.0, %v2907
  %v2918 = vadd.f32 %v2878, %v2916
  %v2919 = vadd.f32 %v2879, %v2917
  %v2920 = vadd.f32 %v2880, %v2909
  %v2921 = vadd.f32 %v2881, %v2911
  %v2926 = vrot.slane %v2898, 1
  %v2927 = vrot.slane %v2900, 1
  %v2928 = vsel %vm715, %v2926, %v2927
  %v2929 = vrot.slane %v2899, 1
  %v2930 = vrot.slane %v2901, 1
  %v2931 = vsel %vm715, %v2929, %v2930
  %v2936 = vsel %vm726, %v2927, 0.0
  %v2937 = vsel %vm726, %v2930, 0.0
  %v2938 = vadd.f32 %v2918, %v2928
  %v2939 = vadd.f32 %v2919, %v2931
  %v2940 = vadd.f32 %v2920, %v2936
  %v2941 = vadd.f32 %v2921, %v2937
  %v2942 = vmul.f32 %v2938, %v747
  %v2943 = vmul.f32 %v2939, %v751
  %v2944 = vmul.f32 %v2940, %v747
  %v2945 = vmul.f32 %v2941, %v751
  %v2946 = vadd.f32 %v2942, %v770
  %v2947 = vadd.f32 %v2943, %v774
  %v2948 = vadd.f32 %v2944, %v770
  %v2949 = vadd.f32 %v2945, %v774
  %v2950 = vmax.f32 %v2946, 0.0
  %v2951 = vmax.f32 %v2947, 0.0
  %v2952 = vmax.f32 %v2948, 0.0
  %v2953 = vmax.f32 %v2949, 0.0
  %v2954 = vmul.f32 %v2724, %v797
  %v2955 = vmul.f32 %v2725, %v801
  %v2956 = vmul.f32 %v2717, %v797
  %v2957 = vmul.f32 %v2719, %v801
  %v2958 = vmul.f32 %v2698, %v819
  %v2959 = vmul.f32 %v2699, %v823
  %v2960 = vmul.f32 %v2691, %v819
  %v2961 = vmul.f32 %v2693, %v823
  %v2962 = vadd.f32 %v2954, %v2958
  %v2963 = vadd.f32 %v2955, %v2959
  %v2964 = vadd.f32 %v2956, %v2960
  %v2965 = vadd.f32 %v2957, %v2961
  %v2966 = vmul.f32 %v2710, %v845
  %v2967 = vmul.f32 %v2711, %v849
  %v2968 = vmul.f32 %v2703, %v845
  %v2969 = vmul.f32 %v2705, %v849
  %v2970 = vadd.f32 %v2962, %v2966
  %v2971 = vadd.f32 %v2963, %v2967
  %v2972 = vadd.f32 %v2964, %v2968
  %v2973 = vadd.f32 %v2965, %v2969
  %v2974 = vmul.f32 %v2662, %v872
  %v2975 = vmul.f32 %v2656, %v876
  %v2976 = vmul.f32 %v2663, %v872
  %v2977 = vmul.f32 %v2657, %v876
  %v2978 = vadd.f32 %v2970, %v2974
  %v2979 = vadd.f32 %v2971, %v2975
  %v2980 = vadd.f32 %v2972, %v2976
  %v2981 = vadd.f32 %v2973, %v2977
  %v2982 = vmul.f32 %v2625, %v898
  %v2983 = vmul.f32 %v2626, %v902
  %v2984 = vmul.f32 %v2627, %v898
  %v2985 = vmul.f32 %v2628, %v902
  %v2986 = vadd.f32 %v2978, %v2982
  %v2987 = vadd.f32 %v2979, %v2983
  %v2988 = vadd.f32 %v2980, %v2984
  %v2989 = vadd.f32 %v2981, %v2985
  %v2990 = vmul.f32 %v2630, %v924
  %v2991 = vmul.f32 %v2631, %v928
  %v2992 = vmul.f32 %v2632, %v924
  %v2993 = vmul.f32 %v2633, %v928
  %v2994 = vadd.f32 %v2986, %v2990
  %v2995 = vadd.f32 %v2987, %v2991
  %v2996 = vadd.f32 %v2988, %v2992
  %v2997 = vadd.f32 %v2989, %v2993
  %v2998 = vmul.f32 %v2682, %v951
  %v2999 = vmul.f32 %v2676, %v955
  %v3000 = vmul.f32 %v2683, %v951
  %v3001 = vmul.f32 %v2677, %v955
  %v3002 = vadd.f32 %v2994, %v2998
  %v3003 = vadd.f32 %v2995, %v2999
  %v3004 = vadd.f32 %v2996, %v3000
  %v3005 = vadd.f32 %v2997, %v3001
  %v3006 = vmul.f32 %v2635, %v977
  %v3007 = vmul.f32 %v2636, %v981
  %v3008 = vmul.f32 %v2637, %v977
  %v3009 = vmul.f32 %v2638, %v981
  %v3010 = vadd.f32 %v3002, %v3006
  %v3011 = vadd.f32 %v3003, %v3007
  %v3012 = vadd.f32 %v3004, %v3008
  %v3013 = vadd.f32 %v3005, %v3009
  %v3014 = vmul.f32 %v2640, %v1003
  %v3015 = vmul.f32 %v2641, %v1007
  %v3016 = vmul.f32 %v2642, %v1003
  %v3017 = vmul.f32 %v2643, %v1007
  %v3018 = vadd.f32 %v3010, %v3014
  %v3019 = vadd.f32 %v3011, %v3015
  %v3020 = vadd.f32 %v3012, %v3016
  %v3021 = vadd.f32 %v3013, %v3017
  %v3022 = vmul.f32 %v3018, %v1029
  %v3023 = vmul.f32 %v3019, %v1033
  %v3024 = vmul.f32 %v3020, %v1029
  %v3025 = vmul.f32 %v3021, %v1033
  %v3026 = vadd.f32 %v3022, %v1051
  %v3027 = vadd.f32 %v3023, %v1055
  %v3028 = vadd.f32 %v3024, %v1051
  %v3029 = vadd.f32 %v3025, %v1055
  %v3030 = vmax.f32 %v3026, 0.0
  %v3031 = vmax.f32 %v3027, 0.0
  %v3032 = vmax.f32 %v3028, 0.0
  %v3033 = vmax.f32 %v3029, 0.0
  %3038 = vrot.lane.b32.xlu0 %v3030, 16
  %v3039 = vpop.permute.xlu0 %3038
  %3040 = vrot.lane.b32.xlu0 %v3031, 16
  %v3041 = vpop.permute.xlu0 %3040
  %3042 = vrot.lane.b32.xlu0 %v3032, 16
  %v3043 = vpop.permute.xlu0 %3042
  %3044 = vrot.lane.b32.xlu0 %v3033, 16
  %v3045 = vpop.permute.xlu0 %3044
  %v3046 = vsel %vm73, %v3039, %v3041
  %v3047 = vsel %vm73, %v3043, %v3045
  %v3052 = vsel %vm73, 0.0, %v3039
  %v3053 = vsel %vm73, 0.0, %v3043
  %3054 = vrot.lane.b32.xlu0 %v3030, 112
  %v3055 = vpop.permute.xlu0 %3054
  %3056 = vrot.lane.b32.xlu0 %v3031, 112
  %v3057 = vpop.permute.xlu0 %3056
  %3058 = vrot.lane.b32.xlu0 %v3032, 112
  %v3059 = vpop.permute.xlu0 %3058
  %3060 = vrot.lane.b32.xlu0 %v3033, 112
  %v3061 = vpop.permute.xlu0 %3060
  %v3062 = vsel %vm456, %v3055, %v3057
  %v3063 = vsel %vm456, %v3059, %v3061
  %v3068 = vsel %vm463, %v3057, 0.0
  %v3069 = vsel %vm463, %v3061, 0.0
  %v3070 = vmul.f32 %v3052, %v1114
  %v3071 = vmul.f32 %v3046, %v1118
  %v3072 = vmul.f32 %v3053, %v1114
  %v3073 = vmul.f32 %v3047, %v1118
  %v3074 = vmul.f32 %v3030, %v1136
  %v3075 = vmul.f32 %v3031, %v1140
  %v3076 = vmul.f32 %v3032, %v1136
  %v3077 = vmul.f32 %v3033, %v1140
  %v3078 = vadd.f32 %v3070, %v3074
  %v3079 = vadd.f32 %v3071, %v3075
  %v3080 = vadd.f32 %v3072, %v3076
  %v3081 = vadd.f32 %v3073, %v3077
  %v3082 = vmul.f32 %v3062, %v1162
  %v3083 = vmul.f32 %v3068, %v1166
  %v3084 = vmul.f32 %v3063, %v1162
  %v3085 = vmul.f32 %v3069, %v1166
  %v3086 = vadd.f32 %v3078, %v3082
  %v3087 = vadd.f32 %v3079, %v3083
  %v3088 = vadd.f32 %v3080, %v3084
  %v3089 = vadd.f32 %v3081, %v3085
  %v3090 = vmul.f32 %v3052, %v1189
  %v3091 = vmul.f32 %v3046, %v1193
  %v3092 = vmul.f32 %v3053, %v1189
  %v3093 = vmul.f32 %v3047, %v1193
  %v3094 = vmul.f32 %v3030, %v1211
  %v3095 = vmul.f32 %v3031, %v1215
  %v3096 = vmul.f32 %v3032, %v1211
  %v3097 = vmul.f32 %v3033, %v1215
  %v3098 = vadd.f32 %v3090, %v3094
  %v3099 = vadd.f32 %v3091, %v3095
  %v3100 = vadd.f32 %v3092, %v3096
  %v3101 = vadd.f32 %v3093, %v3097
  %v3102 = vmul.f32 %v3062, %v1237
  %v3103 = vmul.f32 %v3068, %v1241
  %v3104 = vmul.f32 %v3063, %v1237
  %v3105 = vmul.f32 %v3069, %v1241
  %v3106 = vadd.f32 %v3098, %v3102
  %v3107 = vadd.f32 %v3099, %v3103
  %v3108 = vadd.f32 %v3100, %v3104
  %v3109 = vadd.f32 %v3101, %v3105
  %v3110 = vmul.f32 %v3052, %v1264
  %v3111 = vmul.f32 %v3046, %v1268
  %v3112 = vmul.f32 %v3053, %v1264
  %v3113 = vmul.f32 %v3047, %v1268
  %v3114 = vmul.f32 %v3030, %v1286
  %v3115 = vmul.f32 %v3031, %v1290
  %v3116 = vmul.f32 %v3032, %v1286
  %v3117 = vmul.f32 %v3033, %v1290
  %v3118 = vadd.f32 %v3110, %v3114
  %v3119 = vadd.f32 %v3111, %v3115
  %v3120 = vadd.f32 %v3112, %v3116
  %v3121 = vadd.f32 %v3113, %v3117
  %v3122 = vmul.f32 %v3062, %v1312
  %v3123 = vmul.f32 %v3068, %v1316
  %v3124 = vmul.f32 %v3063, %v1312
  %v3125 = vmul.f32 %v3069, %v1316
  %v3126 = vadd.f32 %v3118, %v3122
  %v3127 = vadd.f32 %v3119, %v3123
  %v3128 = vadd.f32 %v3120, %v3124
  %v3129 = vadd.f32 %v3121, %v3125
  %v3134 = vrot.slane %v3086, 7
  %v3135 = vrot.slane %v3087, 7
  %v3136 = vrot.slane %v3088, 7
  %v3137 = vsel %vm106, %v3134, %v3136
  %v3138 = vrot.slane %v3089, 7
  %v3139 = vsel %vm106, %v3135, %v3138
  %v3144 = vsel %vm106, 0.0, %v3134
  %v3145 = vsel %vm106, 0.0, %v3135
  %v3146 = vadd.f32 %v3106, %v3144
  %v3147 = vadd.f32 %v3107, %v3145
  %v3148 = vadd.f32 %v3108, %v3137
  %v3149 = vadd.f32 %v3109, %v3139
  %v3154 = vrot.slane %v3126, 1
  %v3155 = vrot.slane %v3128, 1
  %v3156 = vsel %vm715, %v3154, %v3155
  %v3157 = vrot.slane %v3127, 1
  %v3158 = vrot.slane %v3129, 1
  %v3159 = vsel %vm715, %v3157, %v3158
  %v3164 = vsel %vm726, %v3155, 0.0
  %v3165 = vsel %vm726, %v3158, 0.0
  %v3166 = vadd.f32 %v3146, %v3156
  %v3167 = vadd.f32 %v3147, %v3159
  %v3168 = vadd.f32 %v3148, %v3164
  %v3169 = vadd.f32 %v3149, %v3165
  %v3170 = vmul.f32 %v3166, %v1378
  %v3171 = vmul.f32 %v3167, %v1382
  %v3172 = vmul.f32 %v3168, %v1378
  %v3173 = vmul.f32 %v3169, %v1382
  %v3174 = vadd.f32 %v3170, %v1400
  %v3175 = vadd.f32 %v3171, %v1404
  %v3176 = vadd.f32 %v3172, %v1400
  %v3177 = vadd.f32 %v3173, %v1404
  %v3178 = vmax.f32 %v3174, 0.0
  %v3179 = vmax.f32 %v3175, 0.0
  %v3180 = vmax.f32 %v3176, 0.0
  %v3181 = vmax.f32 %v3177, 0.0
  %3186 = vrot.lane.b32.xlu0 %v3178, 96
  %v3187 = vpop.permute.xlu0 %3186
  %3188 = vrot.lane.b32.xlu0 %v3179, 96
  %v3189 = vpop.permute.xlu0 %3188
  %3190 = vrot.lane.b32.xlu0 %v3180, 96
  %v3191 = vpop.permute.xlu0 %3190
  %3192 = vrot.lane.b32.xlu0 %v3181, 96
  %v3193 = vpop.permute.xlu0 %3192
  %v3194 = vsel %vm1425, %v3187, %v3189
  %v3195 = vsel %vm1425, %v3191, %v3193
  %v3202 = vsel %vm1425, %v2951, %v3187
  %v3203 = vsel %vm1425, %v2953, %v3191
  %s3204 = scalar_lea.vmem %s7, 192
  %3205 = vst [vmem:[%s3204] sm:$0xff] %v2950
  %3206 = vst [vmem:[%s3204 + $0x8] sm:$0xff] %v3202
  %3207 = vst [vmem:[%s3204 + $0x10] sm:$0xff] %v3194
  %3208 = vst.msk [vmem:[%s3204 + $0x18] sm:$0xff] %vm1439, %v3189
  %3209 = vst [vmem:[%s3204 + $0x20] sm:$0x3f] %v2952
  %3210 = vst [vmem:[%s3204 + $0x28] sm:$0x3f] %v3203
  %3211 = vst [vmem:[%s3204 + $0x30] sm:$0x3f] %v3195
  %3212 = vst.msk [vmem:[%s3204 + $0x38] sm:$0x3f] %vm1444, %v3193
  %s3213 = scalar_lea.vmem %s0, 512
  %v3214 = vld [vmem:[%s3213] sm:$0xff]
  %v3215 = vld [vmem:[%s3213 + $0x8] sm:$0xff]
  %v3216 = vld [vmem:[%s3213 + $0x10] sm:$0x3f]
  %v3217 = vld [vmem:[%s3213 + $0x18] sm:$0x3f]
  %s3218 = scalar_lea.vmem %s0, 544
  %v3219 = vld [vmem:[%s3218] sm:$0xff]
  %v3220 = vld [vmem:[%s3218 + $0x8] sm:$0xff]
  %v3221 = vld [vmem:[%s3218 + $0x10] sm:$0x3f]
  %v3222 = vld [vmem:[%s3218 + $0x18] sm:$0x3f]
  %s3223 = scalar_lea.vmem %s0, 576
  %v3224 = vld [vmem:[%s3223] sm:$0xff]
  %v3225 = vld [vmem:[%s3223 + $0x8] sm:$0xff]
  %v3226 = vld [vmem:[%s3223 + $0x10] sm:$0x3f]
  %v3227 = vld [vmem:[%s3223 + $0x18] sm:$0x3f]
  %s3228 = scalar_lea.vmem %s0, 608
  %v3229 = vld [vmem:[%s3228] sm:$0xff]
  %v3230 = vld [vmem:[%s3228 + $0x8] sm:$0xff]
  %v3231 = vld [vmem:[%s3228 + $0x10] sm:$0x3f]
  %v3232 = vld [vmem:[%s3228 + $0x18] sm:$0x3f]
  %3237 = vrot.lane.b32.xlu0 %v3219, 16
  %v3238 = vpop.permute.xlu0 %3237
  %3239 = vrot.lane.b32.xlu0 %v3220, 16
  %v3240 = vpop.permute.xlu0 %3239
  %3241 = vrot.lane.b32.xlu0 %v3221, 16
  %v3242 = vpop.permute.xlu0 %3241
  %3243 = vrot.lane.b32.xlu0 %v3222, 16
  %v3244 = vpop.permute.xlu0 %3243
  %v3245 = vsel %vm73, %v3238, %v3240
  %v3246 = vsel %vm73, %v3242, %v3244
  %v3251 = vsel %vm73, 0.0, %v3238
  %v3252 = vsel %vm73, 0.0, %v3242
  %3257 = vrot.lane.b32.xlu0 %v3229, 16
  %v3258 = vpop.permute.xlu0 %3257
  %3259 = vrot.lane.b32.xlu0 %v3230, 16
  %v3260 = vpop.permute.xlu0 %3259
  %3261 = vrot.lane.b32.xlu0 %v3231, 16
  %v3262 = vpop.permute.xlu0 %3261
  %3263 = vrot.lane.b32.xlu0 %v3232, 16
  %v3264 = vpop.permute.xlu0 %3263
  %v3265 = vsel %vm73, %v3258, %v3260
  %v3266 = vsel %vm73, %v3262, %v3264
  %v3271 = vsel %vm73, 0.0, %v3258
  %v3272 = vsel %vm73, 0.0, %v3262
  %v3277 = vrot.slane %v3224, 7
  %v3278 = vrot.slane %v3225, 7
  %v3279 = vrot.slane %v3226, 7
  %v3280 = vsel %vm106, %v3277, %v3279
  %v3281 = vrot.slane %v3227, 7
  %v3282 = vsel %vm106, %v3278, %v3281
  %v3287 = vsel %vm106, 0.0, %v3277
  %v3288 = vsel %vm106, 0.0, %v3278
  %v3289 = vrot.slane %v3229, 7
  %v3290 = vrot.slane %v3230, 7
  %v3291 = vrot.slane %v3231, 7
  %v3292 = vsel %vm106, %v3289, %v3291
  %v3293 = vrot.slane %v3232, 7
  %v3294 = vsel %vm106, %v3290, %v3293
  %v3299 = vsel %vm106, 0.0, %v3289
  %v3300 = vsel %vm106, 0.0, %v3290
  %v3303 = vrot.slane %v3271, 7
  %v3304 = vrot.slane %v3265, 7
  %v3305 = vrot.slane %v3272, 7
  %v3306 = vsel %vm106, %v3303, %v3305
  %v3307 = vrot.slane %v3266, 7
  %v3308 = vsel %vm106, %v3304, %v3307
  %v3313 = vsel %vm106, 0.0, %v3303
  %v3314 = vsel %vm106, 0.0, %v3304
  %v3315 = vmul.f32 %v3313, %v159
  %v3316 = vmul.f32 %v3314, %v163
  %v3317 = vmul.f32 %v3306, %v159
  %v3318 = vmul.f32 %v3308, %v163
  %v3319 = vmul.f32 %v3287, %v181
  %v3320 = vmul.f32 %v3288, %v185
  %v3321 = vmul.f32 %v3280, %v181
  %v3322 = vmul.f32 %v3282, %v185
  %v3323 = vadd.f32 %v3315, %v3319
  %v3324 = vadd.f32 %v3316, %v3320
  %v3325 = vadd.f32 %v3317, %v3321
  %v3326 = vadd.f32 %v3318, %v3322
  %v3327 = vmul.f32 %v3299, %v207
  %v3328 = vmul.f32 %v3300, %v211
  %v3329 = vmul.f32 %v3292, %v207
  %v3330 = vmul.f32 %v3294, %v211
  %v3331 = vadd.f32 %v3323, %v3327
  %v3332 = vadd.f32 %v3324, %v3328
  %v3333 = vadd.f32 %v3325, %v3329
  %v3334 = vadd.f32 %v3326, %v3330
  %v3335 = vmul.f32 %v3251, %v234
  %v3336 = vmul.f32 %v3245, %v238
  %v3337 = vmul.f32 %v3252, %v234
  %v3338 = vmul.f32 %v3246, %v238
  %v3339 = vadd.f32 %v3331, %v3335
  %v3340 = vadd.f32 %v3332, %v3336
  %v3341 = vadd.f32 %v3333, %v3337
  %v3342 = vadd.f32 %v3334, %v3338
  %v3343 = vmul.f32 %v3214, %v260
  %v3344 = vmul.f32 %v3215, %v264
  %v3345 = vmul.f32 %v3216, %v260
  %v3346 = vmul.f32 %v3217, %v264
  %v3347 = vadd.f32 %v3339, %v3343
  %v3348 = vadd.f32 %v3340, %v3344
  %v3349 = vadd.f32 %v3341, %v3345
  %v3350 = vadd.f32 %v3342, %v3346
  %v3351 = vmul.f32 %v3219, %v286
  %v3352 = vmul.f32 %v3220, %v290
  %v3353 = vmul.f32 %v3221, %v286
  %v3354 = vmul.f32 %v3222, %v290
  %v3355 = vadd.f32 %v3347, %v3351
  %v3356 = vadd.f32 %v3348, %v3352
  %v3357 = vadd.f32 %v3349, %v3353
  %v3358 = vadd.f32 %v3350, %v3354
  %v3359 = vmul.f32 %v3271, %v313
  %v3360 = vmul.f32 %v3265, %v317
  %v3361 = vmul.f32 %v3272, %v313
  %v3362 = vmul.f32 %v3266, %v317
  %v3363 = vadd.f32 %v3355, %v3359
  %v3364 = vadd.f32 %v3356, %v3360
  %v3365 = vadd.f32 %v3357, %v3361
  %v3366 = vadd.f32 %v3358, %v3362
  %v3367 = vmul.f32 %v3224, %v339
  %v3368 = vmul.f32 %v3225, %v343
  %v3369 = vmul.f32 %v3226, %v339
  %v3370 = vmul.f32 %v3227, %v343
  %v3371 = vadd.f32 %v3363, %v3367
  %v3372 = vadd.f32 %v3364, %v3368
  %v3373 = vadd.f32 %v3365, %v3369
  %v3374 = vadd.f32 %v3366, %v3370
  %v3375 = vmul.f32 %v3229, %v365
  %v3376 = vmul.f32 %v3230, %v369
  %v3377 = vmul.f32 %v3231, %v365
  %v3378 = vmul.f32 %v3232, %v369
  %v3379 = vadd.f32 %v3371, %v3375
  %v3380 = vadd.f32 %v3372, %v3376
  %v3381 = vadd.f32 %v3373, %v3377
  %v3382 = vadd.f32 %v3374, %v3378
  %v3383 = vmul.f32 %v3379, %v392
  %v3384 = vmul.f32 %v3380, %v396
  %v3385 = vmul.f32 %v3381, %v392
  %v3386 = vmul.f32 %v3382, %v396
  %v3387 = vadd.f32 %v3383, %v415
  %v3388 = vadd.f32 %v3384, %v419
  %v3389 = vadd.f32 %v3385, %v415
  %v3390 = vadd.f32 %v3386, %v419
  %v3391 = vmax.f32 %v3387, 0.0
  %v3392 = vmax.f32 %v3388, 0.0
  %v3393 = vmax.f32 %v3389, 0.0
  %v3394 = vmax.f32 %v3390, 0.0
  %3399 = vrot.lane.b32.xlu0 %v3391, 16
  %v3400 = vpop.permute.xlu0 %3399
  %3401 = vrot.lane.b32.xlu0 %v3392, 16
  %v3402 = vpop.permute.xlu0 %3401
  %3403 = vrot.lane.b32.xlu0 %v3393, 16
  %v3404 = vpop.permute.xlu0 %3403
  %3405 = vrot.lane.b32.xlu0 %v3394, 16
  %v3406 = vpop.permute.xlu0 %3405
  %v3407 = vsel %vm73, %v3400, %v3402
  %v3408 = vsel %vm73, %v3404, %v3406
  %v3413 = vsel %vm73, 0.0, %v3400
  %v3414 = vsel %vm73, 0.0, %v3404
  %3415 = vrot.lane.b32.xlu0 %v3391, 112
  %v3416 = vpop.permute.xlu0 %3415
  %3417 = vrot.lane.b32.xlu0 %v3392, 112
  %v3418 = vpop.permute.xlu0 %3417
  %3419 = vrot.lane.b32.xlu0 %v3393, 112
  %v3420 = vpop.permute.xlu0 %3419
  %3421 = vrot.lane.b32.xlu0 %v3394, 112
  %v3422 = vpop.permute.xlu0 %3421
  %v3423 = vsel %vm456, %v3416, %v3418
  %v3424 = vsel %vm456, %v3420, %v3422
  %v3429 = vsel %vm463, %v3418, 0.0
  %v3430 = vsel %vm463, %v3422, 0.0
  %v3431 = vmul.f32 %v3413, %v480
  %v3432 = vmul.f32 %v3407, %v484
  %v3433 = vmul.f32 %v3414, %v480
  %v3434 = vmul.f32 %v3408, %v484
  %v3435 = vmul.f32 %v3391, %v502
  %v3436 = vmul.f32 %v3392, %v506
  %v3437 = vmul.f32 %v3393, %v502
  %v3438 = vmul.f32 %v3394, %v506
  %v3439 = vadd.f32 %v3431, %v3435
  %v3440 = vadd.f32 %v3432, %v3436
  %v3441 = vadd.f32 %v3433, %v3437
  %v3442 = vadd.f32 %v3434, %v3438
  %v3443 = vmul.f32 %v3423, %v528
  %v3444 = vmul.f32 %v3429, %v532
  %v3445 = vmul.f32 %v3424, %v528
  %v3446 = vmul.f32 %v3430, %v532
  %v3447 = vadd.f32 %v3439, %v3443
  %v3448 = vadd.f32 %v3440, %v3444
  %v3449 = vadd.f32 %v3441, %v3445
  %v3450 = vadd.f32 %v3442, %v3446
  %v3451 = vmul.f32 %v3413, %v555
  %v3452 = vmul.f32 %v3407, %v559
  %v3453 = vmul.f32 %v3414, %v555
  %v3454 = vmul.f32 %v3408, %v559
  %v3455 = vmul.f32 %v3391, %v577
  %v3456 = vmul.f32 %v3392, %v581
  %v3457 = vmul.f32 %v3393, %v577
  %v3458 = vmul.f32 %v3394, %v581
  %v3459 = vadd.f32 %v3451, %v3455
  %v3460 = vadd.f32 %v3452, %v3456
  %v3461 = vadd.f32 %v3453, %v3457
  %v3462 = vadd.f32 %v3454, %v3458
  %v3463 = vmul.f32 %v3423, %v603
  %v3464 = vmul.f32 %v3429, %v607
  %v3465 = vmul.f32 %v3424, %v603
  %v3466 = vmul.f32 %v3430, %v607
  %v3467 = vadd.f32 %v3459, %v3463
  %v3468 = vadd.f32 %v3460, %v3464
  %v3469 = vadd.f32 %v3461, %v3465
  %v3470 = vadd.f32 %v3462, %v3466
  %v3471 = vmul.f32 %v3413, %v630
  %v3472 = vmul.f32 %v3407, %v634
  %v3473 = vmul.f32 %v3414, %v630
  %v3474 = vmul.f32 %v3408, %v634
  %v3475 = vmul.f32 %v3391, %v652
  %v3476 = vmul.f32 %v3392, %v656
  %v3477 = vmul.f32 %v3393, %v652
  %v3478 = vmul.f32 %v3394, %v656
  %v3479 = vadd.f32 %v3471, %v3475
  %v3480 = vadd.f32 %v3472, %v3476
  %v3481 = vadd.f32 %v3473, %v3477
  %v3482 = vadd.f32 %v3474, %v3478
  %v3483 = vmul.f32 %v3423, %v678
  %v3484 = vmul.f32 %v3429, %v682
  %v3485 = vmul.f32 %v3424, %v678
  %v3486 = vmul.f32 %v3430, %v682
  %v3487 = vadd.f32 %v3479, %v3483
  %v3488 = vadd.f32 %v3480, %v3484
  %v3489 = vadd.f32 %v3481, %v3485
  %v3490 = vadd.f32 %v3482, %v3486
  %v3495 = vrot.slane %v3447, 7
  %v3496 = vrot.slane %v3448, 7
  %v3497 = vrot.slane %v3449, 7
  %v3498 = vsel %vm106, %v3495, %v3497
  %v3499 = vrot.slane %v3450, 7
  %v3500 = vsel %vm106, %v3496, %v3499
  %v3505 = vsel %vm106, 0.0, %v3495
  %v3506 = vsel %vm106, 0.0, %v3496
  %v3507 = vadd.f32 %v3467, %v3505
  %v3508 = vadd.f32 %v3468, %v3506
  %v3509 = vadd.f32 %v3469, %v3498
  %v3510 = vadd.f32 %v3470, %v3500
  %v3515 = vrot.slane %v3487, 1
  %v3516 = vrot.slane %v3489, 1
  %v3517 = vsel %vm715, %v3515, %v3516
  %v3518 = vrot.slane %v3488, 1
  %v3519 = vrot.slane %v3490, 1
  %v3520 = vsel %vm715, %v3518, %v3519
  %v3525 = vsel %vm726, %v3516, 0.0
  %v3526 = vsel %vm726, %v3519, 0.0
  %v3527 = vadd.f32 %v3507, %v3517
  %v3528 = vadd.f32 %v3508, %v3520
  %v3529 = vadd.f32 %v3509, %v3525
  %v3530 = vadd.f32 %v3510, %v3526
  %v3531 = vmul.f32 %v3527, %v747
  %v3532 = vmul.f32 %v3528, %v751
  %v3533 = vmul.f32 %v3529, %v747
  %v3534 = vmul.f32 %v3530, %v751
  %v3535 = vadd.f32 %v3531, %v770
  %v3536 = vadd.f32 %v3532, %v774
  %v3537 = vadd.f32 %v3533, %v770
  %v3538 = vadd.f32 %v3534, %v774
  %v3539 = vmax.f32 %v3535, 0.0
  %v3540 = vmax.f32 %v3536, 0.0
  %v3541 = vmax.f32 %v3537, 0.0
  %v3542 = vmax.f32 %v3538, 0.0
  %v3543 = vmul.f32 %v3313, %v797
  %v3544 = vmul.f32 %v3314, %v801
  %v3545 = vmul.f32 %v3306, %v797
  %v3546 = vmul.f32 %v3308, %v801
  %v3547 = vmul.f32 %v3287, %v819
  %v3548 = vmul.f32 %v3288, %v823
  %v3549 = vmul.f32 %v3280, %v819
  %v3550 = vmul.f32 %v3282, %v823
  %v3551 = vadd.f32 %v3543, %v3547
  %v3552 = vadd.f32 %v3544, %v3548
  %v3553 = vadd.f32 %v3545, %v3549
  %v3554 = vadd.f32 %v3546, %v3550
  %v3555 = vmul.f32 %v3299, %v845
  %v3556 = vmul.f32 %v3300, %v849
  %v3557 = vmul.f32 %v3292, %v845
  %v3558 = vmul.f32 %v3294, %v849
  %v3559 = vadd.f32 %v3551, %v3555
  %v3560 = vadd.f32 %v3552, %v3556
  %v3561 = vadd.f32 %v3553, %v3557
  %v3562 = vadd.f32 %v3554, %v3558
  %v3563 = vmul.f32 %v3251, %v872
  %v3564 = vmul.f32 %v3245, %v876
  %v3565 = vmul.f32 %v3252, %v872
  %v3566 = vmul.f32 %v3246, %v876
  %v3567 = vadd.f32 %v3559, %v3563
  %v3568 = vadd.f32 %v3560, %v3564
  %v3569 = vadd.f32 %v3561, %v3565
  %v3570 = vadd.f32 %v3562, %v3566
  %v3571 = vmul.f32 %v3214, %v898
  %v3572 = vmul.f32 %v3215, %v902
  %v3573 = vmul.f32 %v3216, %v898
  %v3574 = vmul.f32 %v3217, %v902
  %v3575 = vadd.f32 %v3567, %v3571
  %v3576 = vadd.f32 %v3568, %v3572
  %v3577 = vadd.f32 %v3569, %v3573
  %v3578 = vadd.f32 %v3570, %v3574
  %v3579 = vmul.f32 %v3219, %v924
  %v3580 = vmul.f32 %v3220, %v928
  %v3581 = vmul.f32 %v3221, %v924
  %v3582 = vmul.f32 %v3222, %v928
  %v3583 = vadd.f32 %v3575, %v3579
  %v3584 = vadd.f32 %v3576, %v3580
  %v3585 = vadd.f32 %v3577, %v3581
  %v3586 = vadd.f32 %v3578, %v3582
  %v3587 = vmul.f32 %v3271, %v951
  %v3588 = vmul.f32 %v3265, %v955
  %v3589 = vmul.f32 %v3272, %v951
  %v3590 = vmul.f32 %v3266, %v955
  %v3591 = vadd.f32 %v3583, %v3587
  %v3592 = vadd.f32 %v3584, %v3588
  %v3593 = vadd.f32 %v3585, %v3589
  %v3594 = vadd.f32 %v3586, %v3590
  %v3595 = vmul.f32 %v3224, %v977
  %v3596 = vmul.f32 %v3225, %v981
  %v3597 = vmul.f32 %v3226, %v977
  %v3598 = vmul.f32 %v3227, %v981
  %v3599 = vadd.f32 %v3591, %v3595
  %v3600 = vadd.f32 %v3592, %v3596
  %v3601 = vadd.f32 %v3593, %v3597
  %v3602 = vadd.f32 %v3594, %v3598
  %v3603 = vmul.f32 %v3229, %v1003
  %v3604 = vmul.f32 %v3230, %v1007
  %v3605 = vmul.f32 %v3231, %v1003
  %v3606 = vmul.f32 %v3232, %v1007
  %v3607 = vadd.f32 %v3599, %v3603
  %v3608 = vadd.f32 %v3600, %v3604
  %v3609 = vadd.f32 %v3601, %v3605
  %v3610 = vadd.f32 %v3602, %v3606
  %v3611 = vmul.f32 %v3607, %v1029
  %v3612 = vmul.f32 %v3608, %v1033
  %v3613 = vmul.f32 %v3609, %v1029
  %v3614 = vmul.f32 %v3610, %v1033
  %v3615 = vadd.f32 %v3611, %v1051
  %v3616 = vadd.f32 %v3612, %v1055
  %v3617 = vadd.f32 %v3613, %v1051
  %v3618 = vadd.f32 %v3614, %v1055
  %v3619 = vmax.f32 %v3615, 0.0
  %v3620 = vmax.f32 %v3616, 0.0
  %v3621 = vmax.f32 %v3617, 0.0
  %v3622 = vmax.f32 %v3618, 0.0
  %3627 = vrot.lane.b32.xlu0 %v3619, 16
  %v3628 = vpop.permute.xlu0 %3627
  %3629 = vrot.lane.b32.xlu0 %v3620, 16
  %v3630 = vpop.permute.xlu0 %3629
  %3631 = vrot.lane.b32.xlu0 %v3621, 16
  %v3632 = vpop.permute.xlu0 %3631
  %3633 = vrot.lane.b32.xlu0 %v3622, 16
  %v3634 = vpop.permute.xlu0 %3633
  %v3635 = vsel %vm73, %v3628, %v3630
  %v3636 = vsel %vm73, %v3632, %v3634
  %v3641 = vsel %vm73, 0.0, %v3628
  %v3642 = vsel %vm73, 0.0, %v3632
  %3643 = vrot.lane.b32.xlu0 %v3619, 112
  %v3644 = vpop.permute.xlu0 %3643
  %3645 = vrot.lane.b32.xlu0 %v3620, 112
  %v3646 = vpop.permute.xlu0 %3645
  %3647 = vrot.lane.b32.xlu0 %v3621, 112
  %v3648 = vpop.permute.xlu0 %3647
  %3649 = vrot.lane.b32.xlu0 %v3622, 112
  %v3650 = vpop.permute.xlu0 %3649
  %v3651 = vsel %vm456, %v3644, %v3646
  %v3652 = vsel %vm456, %v3648, %v3650
  %v3657 = vsel %vm463, %v3646, 0.0
  %v3658 = vsel %vm463, %v3650, 0.0
  %v3659 = vmul.f32 %v3641, %v1114
  %v3660 = vmul.f32 %v3635, %v1118
  %v3661 = vmul.f32 %v3642, %v1114
  %v3662 = vmul.f32 %v3636, %v1118
  %v3663 = vmul.f32 %v3619, %v1136
  %v3664 = vmul.f32 %v3620, %v1140
  %v3665 = vmul.f32 %v3621, %v1136
  %v3666 = vmul.f32 %v3622, %v1140
  %v3667 = vadd.f32 %v3659, %v3663
  %v3668 = vadd.f32 %v3660, %v3664
  %v3669 = vadd.f32 %v3661, %v3665
  %v3670 = vadd.f32 %v3662, %v3666
  %v3671 = vmul.f32 %v3651, %v1162
  %v3672 = vmul.f32 %v3657, %v1166
  %v3673 = vmul.f32 %v3652, %v1162
  %v3674 = vmul.f32 %v3658, %v1166
  %v3675 = vadd.f32 %v3667, %v3671
  %v3676 = vadd.f32 %v3668, %v3672
  %v3677 = vadd.f32 %v3669, %v3673
  %v3678 = vadd.f32 %v3670, %v3674
  %v3679 = vmul.f32 %v3641, %v1189
  %v3680 = vmul.f32 %v3635, %v1193
  %v3681 = vmul.f32 %v3642, %v1189
  %v3682 = vmul.f32 %v3636, %v1193
  %v3683 = vmul.f32 %v3619, %v1211
  %v3684 = vmul.f32 %v3620, %v1215
  %v3685 = vmul.f32 %v3621, %v1211
  %v3686 = vmul.f32 %v3622, %v1215
  %v3687 = vadd.f32 %v3679, %v3683
  %v3688 = vadd.f32 %v3680, %v3684
  %v3689 = vadd.f32 %v3681, %v3685
  %v3690 = vadd.f32 %v3682, %v3686
  %v3691 = vmul.f32 %v3651, %v1237
  %v3692 = vmul.f32 %v3657, %v1241
  %v3693 = vmul.f32 %v3652, %v1237
  %v3694 = vmul.f32 %v3658, %v1241
  %v3695 = vadd.f32 %v3687, %v3691
  %v3696 = vadd.f32 %v3688, %v3692
  %v3697 = vadd.f32 %v3689, %v3693
  %v3698 = vadd.f32 %v3690, %v3694
  %v3699 = vmul.f32 %v3641, %v1264
  %v3700 = vmul.f32 %v3635, %v1268
  %v3701 = vmul.f32 %v3642, %v1264
  %v3702 = vmul.f32 %v3636, %v1268
  %v3703 = vmul.f32 %v3619, %v1286
  %v3704 = vmul.f32 %v3620, %v1290
  %v3705 = vmul.f32 %v3621, %v1286
  %v3706 = vmul.f32 %v3622, %v1290
  %v3707 = vadd.f32 %v3699, %v3703
  %v3708 = vadd.f32 %v3700, %v3704
  %v3709 = vadd.f32 %v3701, %v3705
  %v3710 = vadd.f32 %v3702, %v3706
  %v3711 = vmul.f32 %v3651, %v1312
  %v3712 = vmul.f32 %v3657, %v1316
  %v3713 = vmul.f32 %v3652, %v1312
  %v3714 = vmul.f32 %v3658, %v1316
  %v3715 = vadd.f32 %v3707, %v3711
  %v3716 = vadd.f32 %v3708, %v3712
  %v3717 = vadd.f32 %v3709, %v3713
  %v3718 = vadd.f32 %v3710, %v3714
  %v3723 = vrot.slane %v3675, 7
  %v3724 = vrot.slane %v3676, 7
  %v3725 = vrot.slane %v3677, 7
  %v3726 = vsel %vm106, %v3723, %v3725
  %v3727 = vrot.slane %v3678, 7
  %v3728 = vsel %vm106, %v3724, %v3727
  %v3733 = vsel %vm106, 0.0, %v3723
  %v3734 = vsel %vm106, 0.0, %v3724
  %v3735 = vadd.f32 %v3695, %v3733
  %v3736 = vadd.f32 %v3696, %v3734
  %v3737 = vadd.f32 %v3697, %v3726
  %v3738 = vadd.f32 %v3698, %v3728
  %v3743 = vrot.slane %v3715, 1
  %v3744 = vrot.slane %v3717, 1
  %v3745 = vsel %vm715, %v3743, %v3744
  %v3746 = vrot.slane %v3716, 1
  %v3747 = vrot.slane %v3718, 1
  %v3748 = vsel %vm715, %v3746, %v3747
  %v3753 = vsel %vm726, %v3744, 0.0
  %v3754 = vsel %vm726, %v3747, 0.0
  %v3755 = vadd.f32 %v3735, %v3745
  %v3756 = vadd.f32 %v3736, %v3748
  %v3757 = vadd.f32 %v3737, %v3753
  %v3758 = vadd.f32 %v3738, %v3754
  %v3759 = vmul.f32 %v3755, %v1378
  %v3760 = vmul.f32 %v3756, %v1382
  %v3761 = vmul.f32 %v3757, %v1378
  %v3762 = vmul.f32 %v3758, %v1382
  %v3763 = vadd.f32 %v3759, %v1400
  %v3764 = vadd.f32 %v3760, %v1404
  %v3765 = vadd.f32 %v3761, %v1400
  %v3766 = vadd.f32 %v3762, %v1404
  %v3767 = vmax.f32 %v3763, 0.0
  %v3768 = vmax.f32 %v3764, 0.0
  %v3769 = vmax.f32 %v3765, 0.0
  %v3770 = vmax.f32 %v3766, 0.0
  %3775 = vrot.lane.b32.xlu0 %v3767, 96
  %v3776 = vpop.permute.xlu0 %3775
  %3777 = vrot.lane.b32.xlu0 %v3768, 96
  %v3778 = vpop.permute.xlu0 %3777
  %3779 = vrot.lane.b32.xlu0 %v3769, 96
  %v3780 = vpop.permute.xlu0 %3779
  %3781 = vrot.lane.b32.xlu0 %v3770, 96
  %v3782 = vpop.permute.xlu0 %3781
  %v3783 = vsel %vm1425, %v3776, %v3778
  %v3784 = vsel %vm1425, %v3780, %v3782
  %v3791 = vsel %vm1425, %v3540, %v3776
  %v3792 = vsel %vm1425, %v3542, %v3780
  %s3793 = scalar_lea.vmem %s7, 256
  %3794 = vst [vmem:[%s3793] sm:$0xff] %v3539
  %3795 = vst [vmem:[%s3793 + $0x8] sm:$0xff] %v3791
  %3796 = vst [vmem:[%s3793 + $0x10] sm:$0xff] %v3783
  %3797 = vst.msk [vmem:[%s3793 + $0x18] sm:$0xff] %vm1439, %v3778
  %3798 = vst [vmem:[%s3793 + $0x20] sm:$0x3f] %v3541
  %3799 = vst [vmem:[%s3793 + $0x28] sm:$0x3f] %v3792
  %3800 = vst [vmem:[%s3793 + $0x30] sm:$0x3f] %v3784
  %3801 = vst.msk [vmem:[%s3793 + $0x38] sm:$0x3f] %vm1444, %v3782
  %s3802 = scalar_lea.vmem %s0, 640
  %v3803 = vld [vmem:[%s3802] sm:$0xff]
  %v3804 = vld [vmem:[%s3802 + $0x8] sm:$0xff]
  %v3805 = vld [vmem:[%s3802 + $0x10] sm:$0x3f]
  %v3806 = vld [vmem:[%s3802 + $0x18] sm:$0x3f]
  %s3807 = scalar_lea.vmem %s0, 672
  %v3808 = vld [vmem:[%s3807] sm:$0xff]
  %v3809 = vld [vmem:[%s3807 + $0x8] sm:$0xff]
  %v3810 = vld [vmem:[%s3807 + $0x10] sm:$0x3f]
  %v3811 = vld [vmem:[%s3807 + $0x18] sm:$0x3f]
  %s3812 = scalar_lea.vmem %s0, 704
  %v3813 = vld [vmem:[%s3812] sm:$0xff]
  %v3814 = vld [vmem:[%s3812 + $0x8] sm:$0xff]
  %v3815 = vld [vmem:[%s3812 + $0x10] sm:$0x3f]
  %v3816 = vld [vmem:[%s3812 + $0x18] sm:$0x3f]
  %s3817 = scalar_lea.vmem %s0, 736
  %v3818 = vld [vmem:[%s3817] sm:$0xff]
  %v3819 = vld [vmem:[%s3817 + $0x8] sm:$0xff]
  %v3820 = vld [vmem:[%s3817 + $0x10] sm:$0x3f]
  %v3821 = vld [vmem:[%s3817 + $0x18] sm:$0x3f]
  %3826 = vrot.lane.b32.xlu0 %v3808, 16
  %v3827 = vpop.permute.xlu0 %3826
  %3828 = vrot.lane.b32.xlu0 %v3809, 16
  %v3829 = vpop.permute.xlu0 %3828
  %3830 = vrot.lane.b32.xlu0 %v3810, 16
  %v3831 = vpop.permute.xlu0 %3830
  %3832 = vrot.lane.b32.xlu0 %v3811, 16
  %v3833 = vpop.permute.xlu0 %3832
  %v3834 = vsel %vm73, %v3827, %v3829
  %v3835 = vsel %vm73, %v3831, %v3833
  %v3840 = vsel %vm73, 0.0, %v3827
  %v3841 = vsel %vm73, 0.0, %v3831
  %3846 = vrot.lane.b32.xlu0 %v3818, 16
  %v3847 = vpop.permute.xlu0 %3846
  %3848 = vrot.lane.b32.xlu0 %v3819, 16
  %v3849 = vpop.permute.xlu0 %3848
  %3850 = vrot.lane.b32.xlu0 %v3820, 16
  %v3851 = vpop.permute.xlu0 %3850
  %3852 = vrot.lane.b32.xlu0 %v3821, 16
  %v3853 = vpop.permute.xlu0 %3852
  %v3854 = vsel %vm73, %v3847, %v3849
  %v3855 = vsel %vm73, %v3851, %v3853
  %v3860 = vsel %vm73, 0.0, %v3847
  %v3861 = vsel %vm73, 0.0, %v3851
  %v3866 = vrot.slane %v3813, 7
  %v3867 = vrot.slane %v3814, 7
  %v3868 = vrot.slane %v3815, 7
  %v3869 = vsel %vm106, %v3866, %v3868
  %v3870 = vrot.slane %v3816, 7
  %v3871 = vsel %vm106, %v3867, %v3870
  %v3876 = vsel %vm106, 0.0, %v3866
  %v3877 = vsel %vm106, 0.0, %v3867
  %v3878 = vrot.slane %v3818, 7
  %v3879 = vrot.slane %v3819, 7
  %v3880 = vrot.slane %v3820, 7
  %v3881 = vsel %vm106, %v3878, %v3880
  %v3882 = vrot.slane %v3821, 7
  %v3883 = vsel %vm106, %v3879, %v3882
  %v3888 = vsel %vm106, 0.0, %v3878
  %v3889 = vsel %vm106, 0.0, %v3879
  %v3892 = vrot.slane %v3860, 7
  %v3893 = vrot.slane %v3854, 7
  %v3894 = vrot.slane %v3861, 7
  %v3895 = vsel %vm106, %v3892, %v3894
  %v3896 = vrot.slane %v3855, 7
  %v3897 = vsel %vm106, %v3893, %v3896
  %v3902 = vsel %vm106, 0.0, %v3892
  %v3903 = vsel %vm106, 0.0, %v3893
  %v3904 = vmul.f32 %v3902, %v159
  %v3905 = vmul.f32 %v3903, %v163
  %v3906 = vmul.f32 %v3895, %v159
  %v3907 = vmul.f32 %v3897, %v163
  %v3908 = vmul.f32 %v3876, %v181
  %v3909 = vmul.f32 %v3877, %v185
  %v3910 = vmul.f32 %v3869, %v181
  %v3911 = vmul.f32 %v3871, %v185
  %v3912 = vadd.f32 %v3904, %v3908
  %v3913 = vadd.f32 %v3905, %v3909
  %v3914 = vadd.f32 %v3906, %v3910
  %v3915 = vadd.f32 %v3907, %v3911
  %v3916 = vmul.f32 %v3888, %v207
  %v3917 = vmul.f32 %v3889, %v211
  %v3918 = vmul.f32 %v3881, %v207
  %v3919 = vmul.f32 %v3883, %v211
  %v3920 = vadd.f32 %v3912, %v3916
  %v3921 = vadd.f32 %v3913, %v3917
  %v3922 = vadd.f32 %v3914, %v3918
  %v3923 = vadd.f32 %v3915, %v3919
  %v3924 = vmul.f32 %v3840, %v234
  %v3925 = vmul.f32 %v3834, %v238
  %v3926 = vmul.f32 %v3841, %v234
  %v3927 = vmul.f32 %v3835, %v238
  %v3928 = vadd.f32 %v3920, %v3924
  %v3929 = vadd.f32 %v3921, %v3925
  %v3930 = vadd.f32 %v3922, %v3926
  %v3931 = vadd.f32 %v3923, %v3927
  %v3932 = vmul.f32 %v3803, %v260
  %v3933 = vmul.f32 %v3804, %v264
  %v3934 = vmul.f32 %v3805, %v260
  %v3935 = vmul.f32 %v3806, %v264
  %v3936 = vadd.f32 %v3928, %v3932
  %v3937 = vadd.f32 %v3929, %v3933
  %v3938 = vadd.f32 %v3930, %v3934
  %v3939 = vadd.f32 %v3931, %v3935
  %v3940 = vmul.f32 %v3808, %v286
  %v3941 = vmul.f32 %v3809, %v290
  %v3942 = vmul.f32 %v3810, %v286
  %v3943 = vmul.f32 %v3811, %v290
  %v3944 = vadd.f32 %v3936, %v3940
  %v3945 = vadd.f32 %v3937, %v3941
  %v3946 = vadd.f32 %v3938, %v3942
  %v3947 = vadd.f32 %v3939, %v3943
  %v3948 = vmul.f32 %v3860, %v313
  %v3949 = vmul.f32 %v3854, %v317
  %v3950 = vmul.f32 %v3861, %v313
  %v3951 = vmul.f32 %v3855, %v317
  %v3952 = vadd.f32 %v3944, %v3948
  %v3953 = vadd.f32 %v3945, %v3949
  %v3954 = vadd.f32 %v3946, %v3950
  %v3955 = vadd.f32 %v3947, %v3951
  %v3956 = vmul.f32 %v3813, %v339
  %v3957 = vmul.f32 %v3814, %v343
  %v3958 = vmul.f32 %v3815, %v339
  %v3959 = vmul.f32 %v3816, %v343
  %v3960 = vadd.f32 %v3952, %v3956
  %v3961 = vadd.f32 %v3953, %v3957
  %v3962 = vadd.f32 %v3954, %v3958
  %v3963 = vadd.f32 %v3955, %v3959
  %v3964 = vmul.f32 %v3818, %v365
  %v3965 = vmul.f32 %v3819, %v369
  %v3966 = vmul.f32 %v3820, %v365
  %v3967 = vmul.f32 %v3821, %v369
  %v3968 = vadd.f32 %v3960, %v3964
  %v3969 = vadd.f32 %v3961, %v3965
  %v3970 = vadd.f32 %v3962, %v3966
  %v3971 = vadd.f32 %v3963, %v3967
  %v3972 = vmul.f32 %v3968, %v392
  %v3973 = vmul.f32 %v3969, %v396
  %v3974 = vmul.f32 %v3970, %v392
  %v3975 = vmul.f32 %v3971, %v396
  %v3976 = vadd.f32 %v3972, %v415
  %v3977 = vadd.f32 %v3973, %v419
  %v3978 = vadd.f32 %v3974, %v415
  %v3979 = vadd.f32 %v3975, %v419
  %v3980 = vmax.f32 %v3976, 0.0
  %v3981 = vmax.f32 %v3977, 0.0
  %v3982 = vmax.f32 %v3978, 0.0
  %v3983 = vmax.f32 %v3979, 0.0
  %3988 = vrot.lane.b32.xlu0 %v3980, 16
  %v3989 = vpop.permute.xlu0 %3988
  %3990 = vrot.lane.b32.xlu0 %v3981, 16
  %v3991 = vpop.permute.xlu0 %3990
  %3992 = vrot.lane.b32.xlu0 %v3982, 16
  %v3993 = vpop.permute.xlu0 %3992
  %3994 = vrot.lane.b32.xlu0 %v3983, 16
  %v3995 = vpop.permute.xlu0 %3994
  %v3996 = vsel %vm73, %v3989, %v3991
  %v3997 = vsel %vm73, %v3993, %v3995
  %v4002 = vsel %vm73, 0.0, %v3989
  %v4003 = vsel %vm73, 0.0, %v3993
  %4004 = vrot.lane.b32.xlu0 %v3980, 112
  %v4005 = vpop.permute.xlu0 %4004
  %4006 = vrot.lane.b32.xlu0 %v3981, 112
  %v4007 = vpop.permute.xlu0 %4006
  %4008 = vrot.lane.b32.xlu0 %v3982, 112
  %v4009 = vpop.permute.xlu0 %4008
  %4010 = vrot.lane.b32.xlu0 %v3983, 112
  %v4011 = vpop.permute.xlu0 %4010
  %v4012 = vsel %vm456, %v4005, %v4007
  %v4013 = vsel %vm456, %v4009, %v4011
  %v4018 = vsel %vm463, %v4007, 0.0
  %v4019 = vsel %vm463, %v4011, 0.0
  %v4020 = vmul.f32 %v4002, %v480
  %v4021 = vmul.f32 %v3996, %v484
  %v4022 = vmul.f32 %v4003, %v480
  %v4023 = vmul.f32 %v3997, %v484
  %v4024 = vmul.f32 %v3980, %v502
  %v4025 = vmul.f32 %v3981, %v506
  %v4026 = vmul.f32 %v3982, %v502
  %v4027 = vmul.f32 %v3983, %v506
  %v4028 = vadd.f32 %v4020, %v4024
  %v4029 = vadd.f32 %v4021, %v4025
  %v4030 = vadd.f32 %v4022, %v4026
  %v4031 = vadd.f32 %v4023, %v4027
  %v4032 = vmul.f32 %v4012, %v528
  %v4033 = vmul.f32 %v4018, %v532
  %v4034 = vmul.f32 %v4013, %v528
  %v4035 = vmul.f32 %v4019, %v532
  %v4036 = vadd.f32 %v4028, %v4032
  %v4037 = vadd.f32 %v4029, %v4033
  %v4038 = vadd.f32 %v4030, %v4034
  %v4039 = vadd.f32 %v4031, %v4035
  %v4040 = vmul.f32 %v4002, %v555
  %v4041 = vmul.f32 %v3996, %v559
  %v4042 = vmul.f32 %v4003, %v555
  %v4043 = vmul.f32 %v3997, %v559
  %v4044 = vmul.f32 %v3980, %v577
  %v4045 = vmul.f32 %v3981, %v581
  %v4046 = vmul.f32 %v3982, %v577
  %v4047 = vmul.f32 %v3983, %v581
  %v4048 = vadd.f32 %v4040, %v4044
  %v4049 = vadd.f32 %v4041, %v4045
  %v4050 = vadd.f32 %v4042, %v4046
  %v4051 = vadd.f32 %v4043, %v4047
  %v4052 = vmul.f32 %v4012, %v603
  %v4053 = vmul.f32 %v4018, %v607
  %v4054 = vmul.f32 %v4013, %v603
  %v4055 = vmul.f32 %v4019, %v607
  %v4056 = vadd.f32 %v4048, %v4052
  %v4057 = vadd.f32 %v4049, %v4053
  %v4058 = vadd.f32 %v4050, %v4054
  %v4059 = vadd.f32 %v4051, %v4055
  %v4060 = vmul.f32 %v4002, %v630
  %v4061 = vmul.f32 %v3996, %v634
  %v4062 = vmul.f32 %v4003, %v630
  %v4063 = vmul.f32 %v3997, %v634
  %v4064 = vmul.f32 %v3980, %v652
  %v4065 = vmul.f32 %v3981, %v656
  %v4066 = vmul.f32 %v3982, %v652
  %v4067 = vmul.f32 %v3983, %v656
  %v4068 = vadd.f32 %v4060, %v4064
  %v4069 = vadd.f32 %v4061, %v4065
  %v4070 = vadd.f32 %v4062, %v4066
  %v4071 = vadd.f32 %v4063, %v4067
  %v4072 = vmul.f32 %v4012, %v678
  %v4073 = vmul.f32 %v4018, %v682
  %v4074 = vmul.f32 %v4013, %v678
  %v4075 = vmul.f32 %v4019, %v682
  %v4076 = vadd.f32 %v4068, %v4072
  %v4077 = vadd.f32 %v4069, %v4073
  %v4078 = vadd.f32 %v4070, %v4074
  %v4079 = vadd.f32 %v4071, %v4075
  %v4084 = vrot.slane %v4036, 7
  %v4085 = vrot.slane %v4037, 7
  %v4086 = vrot.slane %v4038, 7
  %v4087 = vsel %vm106, %v4084, %v4086
  %v4088 = vrot.slane %v4039, 7
  %v4089 = vsel %vm106, %v4085, %v4088
  %v4094 = vsel %vm106, 0.0, %v4084
  %v4095 = vsel %vm106, 0.0, %v4085
  %v4096 = vadd.f32 %v4056, %v4094
  %v4097 = vadd.f32 %v4057, %v4095
  %v4098 = vadd.f32 %v4058, %v4087
  %v4099 = vadd.f32 %v4059, %v4089
  %v4104 = vrot.slane %v4076, 1
  %v4105 = vrot.slane %v4078, 1
  %v4106 = vsel %vm715, %v4104, %v4105
  %v4107 = vrot.slane %v4077, 1
  %v4108 = vrot.slane %v4079, 1
  %v4109 = vsel %vm715, %v4107, %v4108
  %v4114 = vsel %vm726, %v4105, 0.0
  %v4115 = vsel %vm726, %v4108, 0.0
  %v4116 = vadd.f32 %v4096, %v4106
  %v4117 = vadd.f32 %v4097, %v4109
  %v4118 = vadd.f32 %v4098, %v4114
  %v4119 = vadd.f32 %v4099, %v4115
  %v4120 = vmul.f32 %v4116, %v747
  %v4121 = vmul.f32 %v4117, %v751
  %v4122 = vmul.f32 %v4118, %v747
  %v4123 = vmul.f32 %v4119, %v751
  %v4124 = vadd.f32 %v4120, %v770
  %v4125 = vadd.f32 %v4121, %v774
  %v4126 = vadd.f32 %v4122, %v770
  %v4127 = vadd.f32 %v4123, %v774
  %v4128 = vmax.f32 %v4124, 0.0
  %v4129 = vmax.f32 %v4125, 0.0
  %v4130 = vmax.f32 %v4126, 0.0
  %v4131 = vmax.f32 %v4127, 0.0
  %v4132 = vmul.f32 %v3902, %v797
  %v4133 = vmul.f32 %v3903, %v801
  %v4134 = vmul.f32 %v3895, %v797
  %v4135 = vmul.f32 %v3897, %v801
  %v4136 = vmul.f32 %v3876, %v819
  %v4137 = vmul.f32 %v3877, %v823
  %v4138 = vmul.f32 %v3869, %v819
  %v4139 = vmul.f32 %v3871, %v823
  %v4140 = vadd.f32 %v4132, %v4136
  %v4141 = vadd.f32 %v4133, %v4137
  %v4142 = vadd.f32 %v4134, %v4138
  %v4143 = vadd.f32 %v4135, %v4139
  %v4144 = vmul.f32 %v3888, %v845
  %v4145 = vmul.f32 %v3889, %v849
  %v4146 = vmul.f32 %v3881, %v845
  %v4147 = vmul.f32 %v3883, %v849
  %v4148 = vadd.f32 %v4140, %v4144
  %v4149 = vadd.f32 %v4141, %v4145
  %v4150 = vadd.f32 %v4142, %v4146
  %v4151 = vadd.f32 %v4143, %v4147
  %v4152 = vmul.f32 %v3840, %v872
  %v4153 = vmul.f32 %v3834, %v876
  %v4154 = vmul.f32 %v3841, %v872
  %v4155 = vmul.f32 %v3835, %v876
  %v4156 = vadd.f32 %v4148, %v4152
  %v4157 = vadd.f32 %v4149, %v4153
  %v4158 = vadd.f32 %v4150, %v4154
  %v4159 = vadd.f32 %v4151, %v4155
  %v4160 = vmul.f32 %v3803, %v898
  %v4161 = vmul.f32 %v3804, %v902
  %v4162 = vmul.f32 %v3805, %v898
  %v4163 = vmul.f32 %v3806, %v902
  %v4164 = vadd.f32 %v4156, %v4160
  %v4165 = vadd.f32 %v4157, %v4161
  %v4166 = vadd.f32 %v4158, %v4162
  %v4167 = vadd.f32 %v4159, %v4163
  %v4168 = vmul.f32 %v3808, %v924
  %v4169 = vmul.f32 %v3809, %v928
  %v4170 = vmul.f32 %v3810, %v924
  %v4171 = vmul.f32 %v3811, %v928
  %v4172 = vadd.f32 %v4164, %v4168
  %v4173 = vadd.f32 %v4165, %v4169
  %v4174 = vadd.f32 %v4166, %v4170
  %v4175 = vadd.f32 %v4167, %v4171
  %v4176 = vmul.f32 %v3860, %v951
  %v4177 = vmul.f32 %v3854, %v955
  %v4178 = vmul.f32 %v3861, %v951
  %v4179 = vmul.f32 %v3855, %v955
  %v4180 = vadd.f32 %v4172, %v4176
  %v4181 = vadd.f32 %v4173, %v4177
  %v4182 = vadd.f32 %v4174, %v4178
  %v4183 = vadd.f32 %v4175, %v4179
  %v4184 = vmul.f32 %v3813, %v977
  %v4185 = vmul.f32 %v3814, %v981
  %v4186 = vmul.f32 %v3815, %v977
  %v4187 = vmul.f32 %v3816, %v981
  %v4188 = vadd.f32 %v4180, %v4184
  %v4189 = vadd.f32 %v4181, %v4185
  %v4190 = vadd.f32 %v4182, %v4186
  %v4191 = vadd.f32 %v4183, %v4187
  %v4192 = vmul.f32 %v3818, %v1003
  %v4193 = vmul.f32 %v3819, %v1007
  %v4194 = vmul.f32 %v3820, %v1003
  %v4195 = vmul.f32 %v3821, %v1007
  %v4196 = vadd.f32 %v4188, %v4192
  %v4197 = vadd.f32 %v4189, %v4193
  %v4198 = vadd.f32 %v4190, %v4194
  %v4199 = vadd.f32 %v4191, %v4195
  %v4200 = vmul.f32 %v4196, %v1029
  %v4201 = vmul.f32 %v4197, %v1033
  %v4202 = vmul.f32 %v4198, %v1029
  %v4203 = vmul.f32 %v4199, %v1033
  %v4204 = vadd.f32 %v4200, %v1051
  %v4205 = vadd.f32 %v4201, %v1055
  %v4206 = vadd.f32 %v4202, %v1051
  %v4207 = vadd.f32 %v4203, %v1055
  %v4208 = vmax.f32 %v4204, 0.0
  %v4209 = vmax.f32 %v4205, 0.0
  %v4210 = vmax.f32 %v4206, 0.0
  %v4211 = vmax.f32 %v4207, 0.0
  %4216 = vrot.lane.b32.xlu0 %v4208, 16
  %v4217 = vpop.permute.xlu0 %4216
  %4218 = vrot.lane.b32.xlu0 %v4209, 16
  %v4219 = vpop.permute.xlu0 %4218
  %4220 = vrot.lane.b32.xlu0 %v4210, 16
  %v4221 = vpop.permute.xlu0 %4220
  %4222 = vrot.lane.b32.xlu0 %v4211, 16
  %v4223 = vpop.permute.xlu0 %4222
  %v4224 = vsel %vm73, %v4217, %v4219
  %v4225 = vsel %vm73, %v4221, %v4223
  %v4230 = vsel %vm73, 0.0, %v4217
  %v4231 = vsel %vm73, 0.0, %v4221
  %4232 = vrot.lane.b32.xlu0 %v4208, 112
  %v4233 = vpop.permute.xlu0 %4232
  %4234 = vrot.lane.b32.xlu0 %v4209, 112
  %v4235 = vpop.permute.xlu0 %4234
  %4236 = vrot.lane.b32.xlu0 %v4210, 112
  %v4237 = vpop.permute.xlu0 %4236
  %4238 = vrot.lane.b32.xlu0 %v4211, 112
  %v4239 = vpop.permute.xlu0 %4238
  %v4240 = vsel %vm456, %v4233, %v4235
  %v4241 = vsel %vm456, %v4237, %v4239
  %v4246 = vsel %vm463, %v4235, 0.0
  %v4247 = vsel %vm463, %v4239, 0.0
  %v4248 = vmul.f32 %v4230, %v1114
  %v4249 = vmul.f32 %v4224, %v1118
  %v4250 = vmul.f32 %v4231, %v1114
  %v4251 = vmul.f32 %v4225, %v1118
  %v4252 = vmul.f32 %v4208, %v1136
  %v4253 = vmul.f32 %v4209, %v1140
  %v4254 = vmul.f32 %v4210, %v1136
  %v4255 = vmul.f32 %v4211, %v1140
  %v4256 = vadd.f32 %v4248, %v4252
  %v4257 = vadd.f32 %v4249, %v4253
  %v4258 = vadd.f32 %v4250, %v4254
  %v4259 = vadd.f32 %v4251, %v4255
  %v4260 = vmul.f32 %v4240, %v1162
  %v4261 = vmul.f32 %v4246, %v1166
  %v4262 = vmul.f32 %v4241, %v1162
  %v4263 = vmul.f32 %v4247, %v1166
  %v4264 = vadd.f32 %v4256, %v4260
  %v4265 = vadd.f32 %v4257, %v4261
  %v4266 = vadd.f32 %v4258, %v4262
  %v4267 = vadd.f32 %v4259, %v4263
  %v4268 = vmul.f32 %v4230, %v1189
  %v4269 = vmul.f32 %v4224, %v1193
  %v4270 = vmul.f32 %v4231, %v1189
  %v4271 = vmul.f32 %v4225, %v1193
  %v4272 = vmul.f32 %v4208, %v1211
  %v4273 = vmul.f32 %v4209, %v1215
  %v4274 = vmul.f32 %v4210, %v1211
  %v4275 = vmul.f32 %v4211, %v1215
  %v4276 = vadd.f32 %v4268, %v4272
  %v4277 = vadd.f32 %v4269, %v4273
  %v4278 = vadd.f32 %v4270, %v4274
  %v4279 = vadd.f32 %v4271, %v4275
  %v4280 = vmul.f32 %v4240, %v1237
  %v4281 = vmul.f32 %v4246, %v1241
  %v4282 = vmul.f32 %v4241, %v1237
  %v4283 = vmul.f32 %v4247, %v1241
  %v4284 = vadd.f32 %v4276, %v4280
  %v4285 = vadd.f32 %v4277, %v4281
  %v4286 = vadd.f32 %v4278, %v4282
  %v4287 = vadd.f32 %v4279, %v4283
  %v4288 = vmul.f32 %v4230, %v1264
  %v4289 = vmul.f32 %v4224, %v1268
  %v4290 = vmul.f32 %v4231, %v1264
  %v4291 = vmul.f32 %v4225, %v1268
  %v4292 = vmul.f32 %v4208, %v1286
  %v4293 = vmul.f32 %v4209, %v1290
  %v4294 = vmul.f32 %v4210, %v1286
  %v4295 = vmul.f32 %v4211, %v1290
  %v4296 = vadd.f32 %v4288, %v4292
  %v4297 = vadd.f32 %v4289, %v4293
  %v4298 = vadd.f32 %v4290, %v4294
  %v4299 = vadd.f32 %v4291, %v4295
  %v4300 = vmul.f32 %v4240, %v1312
  %v4301 = vmul.f32 %v4246, %v1316
  %v4302 = vmul.f32 %v4241, %v1312
  %v4303 = vmul.f32 %v4247, %v1316
  %v4304 = vadd.f32 %v4296, %v4300
  %v4305 = vadd.f32 %v4297, %v4301
  %v4306 = vadd.f32 %v4298, %v4302
  %v4307 = vadd.f32 %v4299, %v4303
  %v4312 = vrot.slane %v4264, 7
  %v4313 = vrot.slane %v4265, 7
  %v4314 = vrot.slane %v4266, 7
  %v4315 = vsel %vm106, %v4312, %v4314
  %v4316 = vrot.slane %v4267, 7
  %v4317 = vsel %vm106, %v4313, %v4316
  %v4322 = vsel %vm106, 0.0, %v4312
  %v4323 = vsel %vm106, 0.0, %v4313
  %v4324 = vadd.f32 %v4284, %v4322
  %v4325 = vadd.f32 %v4285, %v4323
  %v4326 = vadd.f32 %v4286, %v4315
  %v4327 = vadd.f32 %v4287, %v4317
  %v4332 = vrot.slane %v4304, 1
  %v4333 = vrot.slane %v4306, 1
  %v4334 = vsel %vm715, %v4332, %v4333
  %v4335 = vrot.slane %v4305, 1
  %v4336 = vrot.slane %v4307, 1
  %v4337 = vsel %vm715, %v4335, %v4336
  %v4342 = vsel %vm726, %v4333, 0.0
  %v4343 = vsel %vm726, %v4336, 0.0
  %v4344 = vadd.f32 %v4324, %v4334
  %v4345 = vadd.f32 %v4325, %v4337
  %v4346 = vadd.f32 %v4326, %v4342
  %v4347 = vadd.f32 %v4327, %v4343
  %v4348 = vmul.f32 %v4344, %v1378
  %v4349 = vmul.f32 %v4345, %v1382
  %v4350 = vmul.f32 %v4346, %v1378
  %v4351 = vmul.f32 %v4347, %v1382
  %v4352 = vadd.f32 %v4348, %v1400
  %v4353 = vadd.f32 %v4349, %v1404
  %v4354 = vadd.f32 %v4350, %v1400
  %v4355 = vadd.f32 %v4351, %v1404
  %v4356 = vmax.f32 %v4352, 0.0
  %v4357 = vmax.f32 %v4353, 0.0
  %v4358 = vmax.f32 %v4354, 0.0
  %v4359 = vmax.f32 %v4355, 0.0
  %4364 = vrot.lane.b32.xlu0 %v4356, 96
  %v4365 = vpop.permute.xlu0 %4364
  %4366 = vrot.lane.b32.xlu0 %v4357, 96
  %v4367 = vpop.permute.xlu0 %4366
  %4368 = vrot.lane.b32.xlu0 %v4358, 96
  %v4369 = vpop.permute.xlu0 %4368
  %4370 = vrot.lane.b32.xlu0 %v4359, 96
  %v4371 = vpop.permute.xlu0 %4370
  %v4372 = vsel %vm1425, %v4365, %v4367
  %v4373 = vsel %vm1425, %v4369, %v4371
  %v4380 = vsel %vm1425, %v4129, %v4365
  %v4381 = vsel %vm1425, %v4131, %v4369
  %s4382 = scalar_lea.vmem %s7, 320
  %4383 = vst [vmem:[%s4382] sm:$0xff] %v4128
  %4384 = vst [vmem:[%s4382 + $0x8] sm:$0xff] %v4380
  %4385 = vst [vmem:[%s4382 + $0x10] sm:$0xff] %v4372
  %4386 = vst.msk [vmem:[%s4382 + $0x18] sm:$0xff] %vm1439, %v4367
  %4387 = vst [vmem:[%s4382 + $0x20] sm:$0x3f] %v4130
  %4388 = vst [vmem:[%s4382 + $0x28] sm:$0x3f] %v4381
  %4389 = vst [vmem:[%s4382 + $0x30] sm:$0x3f] %v4373
  %4390 = vst.msk [vmem:[%s4382 + $0x38] sm:$0x3f] %vm1444, %v4371
  %s4391 = scalar_lea.vmem %s0, 768
  %v4392 = vld [vmem:[%s4391] sm:$0xff]
  %v4393 = vld [vmem:[%s4391 + $0x8] sm:$0xff]
  %v4394 = vld [vmem:[%s4391 + $0x10] sm:$0x3f]
  %v4395 = vld [vmem:[%s4391 + $0x18] sm:$0x3f]
  %s4396 = scalar_lea.vmem %s0, 800
  %v4397 = vld [vmem:[%s4396] sm:$0xff]
  %v4398 = vld [vmem:[%s4396 + $0x8] sm:$0xff]
  %v4399 = vld [vmem:[%s4396 + $0x10] sm:$0x3f]
  %v4400 = vld [vmem:[%s4396 + $0x18] sm:$0x3f]
  %s4401 = scalar_lea.vmem %s0, 832
  %v4402 = vld [vmem:[%s4401] sm:$0xff]
  %v4403 = vld [vmem:[%s4401 + $0x8] sm:$0xff]
  %v4404 = vld [vmem:[%s4401 + $0x10] sm:$0x3f]
  %v4405 = vld [vmem:[%s4401 + $0x18] sm:$0x3f]
  %s4406 = scalar_lea.vmem %s0, 864
  %v4407 = vld [vmem:[%s4406] sm:$0xff]
  %v4408 = vld [vmem:[%s4406 + $0x8] sm:$0xff]
  %v4409 = vld [vmem:[%s4406 + $0x10] sm:$0x3f]
  %v4410 = vld [vmem:[%s4406 + $0x18] sm:$0x3f]
  %4415 = vrot.lane.b32.xlu0 %v4397, 16
  %v4416 = vpop.permute.xlu0 %4415
  %4417 = vrot.lane.b32.xlu0 %v4398, 16
  %v4418 = vpop.permute.xlu0 %4417
  %4419 = vrot.lane.b32.xlu0 %v4399, 16
  %v4420 = vpop.permute.xlu0 %4419
  %4421 = vrot.lane.b32.xlu0 %v4400, 16
  %v4422 = vpop.permute.xlu0 %4421
  %v4423 = vsel %vm73, %v4416, %v4418
  %v4424 = vsel %vm73, %v4420, %v4422
  %v4429 = vsel %vm73, 0.0, %v4416
  %v4430 = vsel %vm73, 0.0, %v4420
  %4435 = vrot.lane.b32.xlu0 %v4407, 16
  %v4436 = vpop.permute.xlu0 %4435
  %4437 = vrot.lane.b32.xlu0 %v4408, 16
  %v4438 = vpop.permute.xlu0 %4437
  %4439 = vrot.lane.b32.xlu0 %v4409, 16
  %v4440 = vpop.permute.xlu0 %4439
  %4441 = vrot.lane.b32.xlu0 %v4410, 16
  %v4442 = vpop.permute.xlu0 %4441
  %v4443 = vsel %vm73, %v4436, %v4438
  %v4444 = vsel %vm73, %v4440, %v4442
  %v4449 = vsel %vm73, 0.0, %v4436
  %v4450 = vsel %vm73, 0.0, %v4440
  %v4455 = vrot.slane %v4402, 7
  %v4456 = vrot.slane %v4403, 7
  %v4457 = vrot.slane %v4404, 7
  %v4458 = vsel %vm106, %v4455, %v4457
  %v4459 = vrot.slane %v4405, 7
  %v4460 = vsel %vm106, %v4456, %v4459
  %v4465 = vsel %vm106, 0.0, %v4455
  %v4466 = vsel %vm106, 0.0, %v4456
  %v4467 = vrot.slane %v4407, 7
  %v4468 = vrot.slane %v4408, 7
  %v4469 = vrot.slane %v4409, 7
  %v4470 = vsel %vm106, %v4467, %v4469
  %v4471 = vrot.slane %v4410, 7
  %v4472 = vsel %vm106, %v4468, %v4471
  %v4477 = vsel %vm106, 0.0, %v4467
  %v4478 = vsel %vm106, 0.0, %v4468
  %v4481 = vrot.slane %v4449, 7
  %v4482 = vrot.slane %v4443, 7
  %v4483 = vrot.slane %v4450, 7
  %v4484 = vsel %vm106, %v4481, %v4483
  %v4485 = vrot.slane %v4444, 7
  %v4486 = vsel %vm106, %v4482, %v4485
  %v4491 = vsel %vm106, 0.0, %v4481
  %v4492 = vsel %vm106, 0.0, %v4482
  %v4493 = vmul.f32 %v4491, %v159
  %v4494 = vmul.f32 %v4492, %v163
  %v4495 = vmul.f32 %v4484, %v159
  %v4496 = vmul.f32 %v4486, %v163
  %v4497 = vmul.f32 %v4465, %v181
  %v4498 = vmul.f32 %v4466, %v185
  %v4499 = vmul.f32 %v4458, %v181
  %v4500 = vmul.f32 %v4460, %v185
  %v4501 = vadd.f32 %v4493, %v4497
  %v4502 = vadd.f32 %v4494, %v4498
  %v4503 = vadd.f32 %v4495, %v4499
  %v4504 = vadd.f32 %v4496, %v4500
  %v4505 = vmul.f32 %v4477, %v207
  %v4506 = vmul.f32 %v4478, %v211
  %v4507 = vmul.f32 %v4470, %v207
  %v4508 = vmul.f32 %v4472, %v211
  %v4509 = vadd.f32 %v4501, %v4505
  %v4510 = vadd.f32 %v4502, %v4506
  %v4511 = vadd.f32 %v4503, %v4507
  %v4512 = vadd.f32 %v4504, %v4508
  %v4513 = vmul.f32 %v4429, %v234
  %v4514 = vmul.f32 %v4423, %v238
  %v4515 = vmul.f32 %v4430, %v234
  %v4516 = vmul.f32 %v4424, %v238
  %v4517 = vadd.f32 %v4509, %v4513
  %v4518 = vadd.f32 %v4510, %v4514
  %v4519 = vadd.f32 %v4511, %v4515
  %v4520 = vadd.f32 %v4512, %v4516
  %v4521 = vmul.f32 %v4392, %v260
  %v4522 = vmul.f32 %v4393, %v264
  %v4523 = vmul.f32 %v4394, %v260
  %v4524 = vmul.f32 %v4395, %v264
  %v4525 = vadd.f32 %v4517, %v4521
  %v4526 = vadd.f32 %v4518, %v4522
  %v4527 = vadd.f32 %v4519, %v4523
  %v4528 = vadd.f32 %v4520, %v4524
  %v4529 = vmul.f32 %v4397, %v286
  %v4530 = vmul.f32 %v4398, %v290
  %v4531 = vmul.f32 %v4399, %v286
  %v4532 = vmul.f32 %v4400, %v290
  %v4533 = vadd.f32 %v4525, %v4529
  %v4534 = vadd.f32 %v4526, %v4530
  %v4535 = vadd.f32 %v4527, %v4531
  %v4536 = vadd.f32 %v4528, %v4532
  %v4537 = vmul.f32 %v4449, %v313
  %v4538 = vmul.f32 %v4443, %v317
  %v4539 = vmul.f32 %v4450, %v313
  %v4540 = vmul.f32 %v4444, %v317
  %v4541 = vadd.f32 %v4533, %v4537
  %v4542 = vadd.f32 %v4534, %v4538
  %v4543 = vadd.f32 %v4535, %v4539
  %v4544 = vadd.f32 %v4536, %v4540
  %v4545 = vmul.f32 %v4402, %v339
  %v4546 = vmul.f32 %v4403, %v343
  %v4547 = vmul.f32 %v4404, %v339
  %v4548 = vmul.f32 %v4405, %v343
  %v4549 = vadd.f32 %v4541, %v4545
  %v4550 = vadd.f32 %v4542, %v4546
  %v4551 = vadd.f32 %v4543, %v4547
  %v4552 = vadd.f32 %v4544, %v4548
  %v4553 = vmul.f32 %v4407, %v365
  %v4554 = vmul.f32 %v4408, %v369
  %v4555 = vmul.f32 %v4409, %v365
  %v4556 = vmul.f32 %v4410, %v369
  %v4557 = vadd.f32 %v4549, %v4553
  %v4558 = vadd.f32 %v4550, %v4554
  %v4559 = vadd.f32 %v4551, %v4555
  %v4560 = vadd.f32 %v4552, %v4556
  %v4561 = vmul.f32 %v4557, %v392
  %v4562 = vmul.f32 %v4558, %v396
  %v4563 = vmul.f32 %v4559, %v392
  %v4564 = vmul.f32 %v4560, %v396
  %v4565 = vadd.f32 %v4561, %v415
  %v4566 = vadd.f32 %v4562, %v419
  %v4567 = vadd.f32 %v4563, %v415
  %v4568 = vadd.f32 %v4564, %v419
  %v4569 = vmax.f32 %v4565, 0.0
  %v4570 = vmax.f32 %v4566, 0.0
  %v4571 = vmax.f32 %v4567, 0.0
  %v4572 = vmax.f32 %v4568, 0.0
  %4577 = vrot.lane.b32.xlu0 %v4569, 16
  %v4578 = vpop.permute.xlu0 %4577
  %4579 = vrot.lane.b32.xlu0 %v4570, 16
  %v4580 = vpop.permute.xlu0 %4579
  %4581 = vrot.lane.b32.xlu0 %v4571, 16
  %v4582 = vpop.permute.xlu0 %4581
  %4583 = vrot.lane.b32.xlu0 %v4572, 16
  %v4584 = vpop.permute.xlu0 %4583
  %v4585 = vsel %vm73, %v4578, %v4580
  %v4586 = vsel %vm73, %v4582, %v4584
  %v4591 = vsel %vm73, 0.0, %v4578
  %v4592 = vsel %vm73, 0.0, %v4582
  %4593 = vrot.lane.b32.xlu0 %v4569, 112
  %v4594 = vpop.permute.xlu0 %4593
  %4595 = vrot.lane.b32.xlu0 %v4570, 112
  %v4596 = vpop.permute.xlu0 %4595
  %4597 = vrot.lane.b32.xlu0 %v4571, 112
  %v4598 = vpop.permute.xlu0 %4597
  %4599 = vrot.lane.b32.xlu0 %v4572, 112
  %v4600 = vpop.permute.xlu0 %4599
  %v4601 = vsel %vm456, %v4594, %v4596
  %v4602 = vsel %vm456, %v4598, %v4600
  %v4607 = vsel %vm463, %v4596, 0.0
  %v4608 = vsel %vm463, %v4600, 0.0
  %v4609 = vmul.f32 %v4591, %v480
  %v4610 = vmul.f32 %v4585, %v484
  %v4611 = vmul.f32 %v4592, %v480
  %v4612 = vmul.f32 %v4586, %v484
  %v4613 = vmul.f32 %v4569, %v502
  %v4614 = vmul.f32 %v4570, %v506
  %v4615 = vmul.f32 %v4571, %v502
  %v4616 = vmul.f32 %v4572, %v506
  %v4617 = vadd.f32 %v4609, %v4613
  %v4618 = vadd.f32 %v4610, %v4614
  %v4619 = vadd.f32 %v4611, %v4615
  %v4620 = vadd.f32 %v4612, %v4616
  %v4621 = vmul.f32 %v4601, %v528
  %v4622 = vmul.f32 %v4607, %v532
  %v4623 = vmul.f32 %v4602, %v528
  %v4624 = vmul.f32 %v4608, %v532
  %v4625 = vadd.f32 %v4617, %v4621
  %v4626 = vadd.f32 %v4618, %v4622
  %v4627 = vadd.f32 %v4619, %v4623
  %v4628 = vadd.f32 %v4620, %v4624
  %v4629 = vmul.f32 %v4591, %v555
  %v4630 = vmul.f32 %v4585, %v559
  %v4631 = vmul.f32 %v4592, %v555
  %v4632 = vmul.f32 %v4586, %v559
  %v4633 = vmul.f32 %v4569, %v577
  %v4634 = vmul.f32 %v4570, %v581
  %v4635 = vmul.f32 %v4571, %v577
  %v4636 = vmul.f32 %v4572, %v581
  %v4637 = vadd.f32 %v4629, %v4633
  %v4638 = vadd.f32 %v4630, %v4634
  %v4639 = vadd.f32 %v4631, %v4635
  %v4640 = vadd.f32 %v4632, %v4636
  %v4641 = vmul.f32 %v4601, %v603
  %v4642 = vmul.f32 %v4607, %v607
  %v4643 = vmul.f32 %v4602, %v603
  %v4644 = vmul.f32 %v4608, %v607
  %v4645 = vadd.f32 %v4637, %v4641
  %v4646 = vadd.f32 %v4638, %v4642
  %v4647 = vadd.f32 %v4639, %v4643
  %v4648 = vadd.f32 %v4640, %v4644
  %v4649 = vmul.f32 %v4591, %v630
  %v4650 = vmul.f32 %v4585, %v634
  %v4651 = vmul.f32 %v4592, %v630
  %v4652 = vmul.f32 %v4586, %v634
  %v4653 = vmul.f32 %v4569, %v652
  %v4654 = vmul.f32 %v4570, %v656
  %v4655 = vmul.f32 %v4571, %v652
  %v4656 = vmul.f32 %v4572, %v656
  %v4657 = vadd.f32 %v4649, %v4653
  %v4658 = vadd.f32 %v4650, %v4654
  %v4659 = vadd.f32 %v4651, %v4655
  %v4660 = vadd.f32 %v4652, %v4656
  %v4661 = vmul.f32 %v4601, %v678
  %v4662 = vmul.f32 %v4607, %v682
  %v4663 = vmul.f32 %v4602, %v678
  %v4664 = vmul.f32 %v4608, %v682
  %v4665 = vadd.f32 %v4657, %v4661
  %v4666 = vadd.f32 %v4658, %v4662
  %v4667 = vadd.f32 %v4659, %v4663
  %v4668 = vadd.f32 %v4660, %v4664
  %v4673 = vrot.slane %v4625, 7
  %v4674 = vrot.slane %v4626, 7
  %v4675 = vrot.slane %v4627, 7
  %v4676 = vsel %vm106, %v4673, %v4675
  %v4677 = vrot.slane %v4628, 7
  %v4678 = vsel %vm106, %v4674, %v4677
  %v4683 = vsel %vm106, 0.0, %v4673
  %v4684 = vsel %vm106, 0.0, %v4674
  %v4685 = vadd.f32 %v4645, %v4683
  %v4686 = vadd.f32 %v4646, %v4684
  %v4687 = vadd.f32 %v4647, %v4676
  %v4688 = vadd.f32 %v4648, %v4678
  %v4693 = vrot.slane %v4665, 1
  %v4694 = vrot.slane %v4667, 1
  %v4695 = vsel %vm715, %v4693, %v4694
  %v4696 = vrot.slane %v4666, 1
  %v4697 = vrot.slane %v4668, 1
  %v4698 = vsel %vm715, %v4696, %v4697
  %v4703 = vsel %vm726, %v4694, 0.0
  %v4704 = vsel %vm726, %v4697, 0.0
  %v4705 = vadd.f32 %v4685, %v4695
  %v4706 = vadd.f32 %v4686, %v4698
  %v4707 = vadd.f32 %v4687, %v4703
  %v4708 = vadd.f32 %v4688, %v4704
  %v4709 = vmul.f32 %v4705, %v747
  %v4710 = vmul.f32 %v4706, %v751
  %v4711 = vmul.f32 %v4707, %v747
  %v4712 = vmul.f32 %v4708, %v751
  %v4713 = vadd.f32 %v4709, %v770
  %v4714 = vadd.f32 %v4710, %v774
  %v4715 = vadd.f32 %v4711, %v770
  %v4716 = vadd.f32 %v4712, %v774
  %v4717 = vmax.f32 %v4713, 0.0
  %v4718 = vmax.f32 %v4714, 0.0
  %v4719 = vmax.f32 %v4715, 0.0
  %v4720 = vmax.f32 %v4716, 0.0
  %v4721 = vmul.f32 %v4491, %v797
  %v4722 = vmul.f32 %v4492, %v801
  %v4723 = vmul.f32 %v4484, %v797
  %v4724 = vmul.f32 %v4486, %v801
  %v4725 = vmul.f32 %v4465, %v819
  %v4726 = vmul.f32 %v4466, %v823
  %v4727 = vmul.f32 %v4458, %v819
  %v4728 = vmul.f32 %v4460, %v823
  %v4729 = vadd.f32 %v4721, %v4725
  %v4730 = vadd.f32 %v4722, %v4726
  %v4731 = vadd.f32 %v4723, %v4727
  %v4732 = vadd.f32 %v4724, %v4728
  %v4733 = vmul.f32 %v4477, %v845
  %v4734 = vmul.f32 %v4478, %v849
  %v4735 = vmul.f32 %v4470, %v845
  %v4736 = vmul.f32 %v4472, %v849
  %v4737 = vadd.f32 %v4729, %v4733
  %v4738 = vadd.f32 %v4730, %v4734
  %v4739 = vadd.f32 %v4731, %v4735
  %v4740 = vadd.f32 %v4732, %v4736
  %v4741 = vmul.f32 %v4429, %v872
  %v4742 = vmul.f32 %v4423, %v876
  %v4743 = vmul.f32 %v4430, %v872
  %v4744 = vmul.f32 %v4424, %v876
  %v4745 = vadd.f32 %v4737, %v4741
  %v4746 = vadd.f32 %v4738, %v4742
  %v4747 = vadd.f32 %v4739, %v4743
  %v4748 = vadd.f32 %v4740, %v4744
  %v4749 = vmul.f32 %v4392, %v898
  %v4750 = vmul.f32 %v4393, %v902
  %v4751 = vmul.f32 %v4394, %v898
  %v4752 = vmul.f32 %v4395, %v902
  %v4753 = vadd.f32 %v4745, %v4749
  %v4754 = vadd.f32 %v4746, %v4750
  %v4755 = vadd.f32 %v4747, %v4751
  %v4756 = vadd.f32 %v4748, %v4752
  %v4757 = vmul.f32 %v4397, %v924
  %v4758 = vmul.f32 %v4398, %v928
  %v4759 = vmul.f32 %v4399, %v924
  %v4760 = vmul.f32 %v4400, %v928
  %v4761 = vadd.f32 %v4753, %v4757
  %v4762 = vadd.f32 %v4754, %v4758
  %v4763 = vadd.f32 %v4755, %v4759
  %v4764 = vadd.f32 %v4756, %v4760
  %v4765 = vmul.f32 %v4449, %v951
  %v4766 = vmul.f32 %v4443, %v955
  %v4767 = vmul.f32 %v4450, %v951
  %v4768 = vmul.f32 %v4444, %v955
  %v4769 = vadd.f32 %v4761, %v4765
  %v4770 = vadd.f32 %v4762, %v4766
  %v4771 = vadd.f32 %v4763, %v4767
  %v4772 = vadd.f32 %v4764, %v4768
  %v4773 = vmul.f32 %v4402, %v977
  %v4774 = vmul.f32 %v4403, %v981
  %v4775 = vmul.f32 %v4404, %v977
  %v4776 = vmul.f32 %v4405, %v981
  %v4777 = vadd.f32 %v4769, %v4773
  %v4778 = vadd.f32 %v4770, %v4774
  %v4779 = vadd.f32 %v4771, %v4775
  %v4780 = vadd.f32 %v4772, %v4776
  %v4781 = vmul.f32 %v4407, %v1003
  %v4782 = vmul.f32 %v4408, %v1007
  %v4783 = vmul.f32 %v4409, %v1003
  %v4784 = vmul.f32 %v4410, %v1007
  %v4785 = vadd.f32 %v4777, %v4781
  %v4786 = vadd.f32 %v4778, %v4782
  %v4787 = vadd.f32 %v4779, %v4783
  %v4788 = vadd.f32 %v4780, %v4784
  %v4789 = vmul.f32 %v4785, %v1029
  %v4790 = vmul.f32 %v4786, %v1033
  %v4791 = vmul.f32 %v4787, %v1029
  %v4792 = vmul.f32 %v4788, %v1033
  %v4793 = vadd.f32 %v4789, %v1051
  %v4794 = vadd.f32 %v4790, %v1055
  %v4795 = vadd.f32 %v4791, %v1051
  %v4796 = vadd.f32 %v4792, %v1055
  %v4797 = vmax.f32 %v4793, 0.0
  %v4798 = vmax.f32 %v4794, 0.0
  %v4799 = vmax.f32 %v4795, 0.0
  %v4800 = vmax.f32 %v4796, 0.0
  %4805 = vrot.lane.b32.xlu0 %v4797, 16
  %v4806 = vpop.permute.xlu0 %4805
  %4807 = vrot.lane.b32.xlu0 %v4798, 16
  %v4808 = vpop.permute.xlu0 %4807
  %4809 = vrot.lane.b32.xlu0 %v4799, 16
  %v4810 = vpop.permute.xlu0 %4809
  %4811 = vrot.lane.b32.xlu0 %v4800, 16
  %v4812 = vpop.permute.xlu0 %4811
  %v4813 = vsel %vm73, %v4806, %v4808
  %v4814 = vsel %vm73, %v4810, %v4812
  %v4819 = vsel %vm73, 0.0, %v4806
  %v4820 = vsel %vm73, 0.0, %v4810
  %4821 = vrot.lane.b32.xlu0 %v4797, 112
  %v4822 = vpop.permute.xlu0 %4821
  %4823 = vrot.lane.b32.xlu0 %v4798, 112
  %v4824 = vpop.permute.xlu0 %4823
  %4825 = vrot.lane.b32.xlu0 %v4799, 112
  %v4826 = vpop.permute.xlu0 %4825
  %4827 = vrot.lane.b32.xlu0 %v4800, 112
  %v4828 = vpop.permute.xlu0 %4827
  %v4829 = vsel %vm456, %v4822, %v4824
  %v4830 = vsel %vm456, %v4826, %v4828
  %v4835 = vsel %vm463, %v4824, 0.0
  %v4836 = vsel %vm463, %v4828, 0.0
  %v4837 = vmul.f32 %v4819, %v1114
  %v4838 = vmul.f32 %v4813, %v1118
  %v4839 = vmul.f32 %v4820, %v1114
  %v4840 = vmul.f32 %v4814, %v1118
  %v4841 = vmul.f32 %v4797, %v1136
  %v4842 = vmul.f32 %v4798, %v1140
  %v4843 = vmul.f32 %v4799, %v1136
  %v4844 = vmul.f32 %v4800, %v1140
  %v4845 = vadd.f32 %v4837, %v4841
  %v4846 = vadd.f32 %v4838, %v4842
  %v4847 = vadd.f32 %v4839, %v4843
  %v4848 = vadd.f32 %v4840, %v4844
  %v4849 = vmul.f32 %v4829, %v1162
  %v4850 = vmul.f32 %v4835, %v1166
  %v4851 = vmul.f32 %v4830, %v1162
  %v4852 = vmul.f32 %v4836, %v1166
  %v4853 = vadd.f32 %v4845, %v4849
  %v4854 = vadd.f32 %v4846, %v4850
  %v4855 = vadd.f32 %v4847, %v4851
  %v4856 = vadd.f32 %v4848, %v4852
  %v4857 = vmul.f32 %v4819, %v1189
  %v4858 = vmul.f32 %v4813, %v1193
  %v4859 = vmul.f32 %v4820, %v1189
  %v4860 = vmul.f32 %v4814, %v1193
  %v4861 = vmul.f32 %v4797, %v1211
  %v4862 = vmul.f32 %v4798, %v1215
  %v4863 = vmul.f32 %v4799, %v1211
  %v4864 = vmul.f32 %v4800, %v1215
  %v4865 = vadd.f32 %v4857, %v4861
  %v4866 = vadd.f32 %v4858, %v4862
  %v4867 = vadd.f32 %v4859, %v4863
  %v4868 = vadd.f32 %v4860, %v4864
  %v4869 = vmul.f32 %v4829, %v1237
  %v4870 = vmul.f32 %v4835, %v1241
  %v4871 = vmul.f32 %v4830, %v1237
  %v4872 = vmul.f32 %v4836, %v1241
  %v4873 = vadd.f32 %v4865, %v4869
  %v4874 = vadd.f32 %v4866, %v4870
  %v4875 = vadd.f32 %v4867, %v4871
  %v4876 = vadd.f32 %v4868, %v4872
  %v4877 = vmul.f32 %v4819, %v1264
  %v4878 = vmul.f32 %v4813, %v1268
  %v4879 = vmul.f32 %v4820, %v1264
  %v4880 = vmul.f32 %v4814, %v1268
  %v4881 = vmul.f32 %v4797, %v1286
  %v4882 = vmul.f32 %v4798, %v1290
  %v4883 = vmul.f32 %v4799, %v1286
  %v4884 = vmul.f32 %v4800, %v1290
  %v4885 = vadd.f32 %v4877, %v4881
  %v4886 = vadd.f32 %v4878, %v4882
  %v4887 = vadd.f32 %v4879, %v4883
  %v4888 = vadd.f32 %v4880, %v4884
  %v4889 = vmul.f32 %v4829, %v1312
  %v4890 = vmul.f32 %v4835, %v1316
  %v4891 = vmul.f32 %v4830, %v1312
  %v4892 = vmul.f32 %v4836, %v1316
  %v4893 = vadd.f32 %v4885, %v4889
  %v4894 = vadd.f32 %v4886, %v4890
  %v4895 = vadd.f32 %v4887, %v4891
  %v4896 = vadd.f32 %v4888, %v4892
  %v4901 = vrot.slane %v4853, 7
  %v4902 = vrot.slane %v4854, 7
  %v4903 = vrot.slane %v4855, 7
  %v4904 = vsel %vm106, %v4901, %v4903
  %v4905 = vrot.slane %v4856, 7
  %v4906 = vsel %vm106, %v4902, %v4905
  %v4911 = vsel %vm106, 0.0, %v4901
  %v4912 = vsel %vm106, 0.0, %v4902
  %v4913 = vadd.f32 %v4873, %v4911
  %v4914 = vadd.f32 %v4874, %v4912
  %v4915 = vadd.f32 %v4875, %v4904
  %v4916 = vadd.f32 %v4876, %v4906
  %v4921 = vrot.slane %v4893, 1
  %v4922 = vrot.slane %v4895, 1
  %v4923 = vsel %vm715, %v4921, %v4922
  %v4924 = vrot.slane %v4894, 1
  %v4925 = vrot.slane %v4896, 1
  %v4926 = vsel %vm715, %v4924, %v4925
  %v4931 = vsel %vm726, %v4922, 0.0
  %v4932 = vsel %vm726, %v4925, 0.0
  %v4933 = vadd.f32 %v4913, %v4923
  %v4934 = vadd.f32 %v4914, %v4926
  %v4935 = vadd.f32 %v4915, %v4931
  %v4936 = vadd.f32 %v4916, %v4932
  %v4937 = vmul.f32 %v4933, %v1378
  %v4938 = vmul.f32 %v4934, %v1382
  %v4939 = vmul.f32 %v4935, %v1378
  %v4940 = vmul.f32 %v4936, %v1382
  %v4941 = vadd.f32 %v4937, %v1400
  %v4942 = vadd.f32 %v4938, %v1404
  %v4943 = vadd.f32 %v4939, %v1400
  %v4944 = vadd.f32 %v4940, %v1404
  %v4945 = vmax.f32 %v4941, 0.0
  %v4946 = vmax.f32 %v4942, 0.0
  %v4947 = vmax.f32 %v4943, 0.0
  %v4948 = vmax.f32 %v4944, 0.0
  %4953 = vrot.lane.b32.xlu0 %v4945, 96
  %v4954 = vpop.permute.xlu0 %4953
  %4955 = vrot.lane.b32.xlu0 %v4946, 96
  %v4956 = vpop.permute.xlu0 %4955
  %4957 = vrot.lane.b32.xlu0 %v4947, 96
  %v4958 = vpop.permute.xlu0 %4957
  %4959 = vrot.lane.b32.xlu0 %v4948, 96
  %v4960 = vpop.permute.xlu0 %4959
  %v4961 = vsel %vm1425, %v4954, %v4956
  %v4962 = vsel %vm1425, %v4958, %v4960
  %v4969 = vsel %vm1425, %v4718, %v4954
  %v4970 = vsel %vm1425, %v4720, %v4958
  %s4971 = scalar_lea.vmem %s7, 384
  %4972 = vst [vmem:[%s4971] sm:$0xff] %v4717
  %4973 = vst [vmem:[%s4971 + $0x8] sm:$0xff] %v4969
  %4974 = vst [vmem:[%s4971 + $0x10] sm:$0xff] %v4961
  %4975 = vst.msk [vmem:[%s4971 + $0x18] sm:$0xff] %vm1439, %v4956
  %4976 = vst [vmem:[%s4971 + $0x20] sm:$0x3f] %v4719
  %4977 = vst [vmem:[%s4971 + $0x28] sm:$0x3f] %v4970
  %4978 = vst [vmem:[%s4971 + $0x30] sm:$0x3f] %v4962
  %4979 = vst.msk [vmem:[%s4971 + $0x38] sm:$0x3f] %vm1444, %v4960
  %s4980 = scalar_lea.vmem %s0, 896
  %v4981 = vld [vmem:[%s4980] sm:$0xff]
  %v4982 = vld [vmem:[%s4980 + $0x8] sm:$0xff]
  %v4983 = vld [vmem:[%s4980 + $0x10] sm:$0x3f]
  %v4984 = vld [vmem:[%s4980 + $0x18] sm:$0x3f]
  %s4985 = scalar_lea.vmem %s0, 928
  %v4986 = vld [vmem:[%s4985] sm:$0xff]
  %v4987 = vld [vmem:[%s4985 + $0x8] sm:$0xff]
  %v4988 = vld [vmem:[%s4985 + $0x10] sm:$0x3f]
  %v4989 = vld [vmem:[%s4985 + $0x18] sm:$0x3f]
  %s4990 = scalar_lea.vmem %s0, 960
  %v4991 = vld [vmem:[%s4990] sm:$0xff]
  %v4992 = vld [vmem:[%s4990 + $0x8] sm:$0xff]
  %v4993 = vld [vmem:[%s4990 + $0x10] sm:$0x3f]
  %v4994 = vld [vmem:[%s4990 + $0x18] sm:$0x3f]
  %s4995 = scalar_lea.vmem %s0, 992
  %v4996 = vld [vmem:[%s4995] sm:$0xff]
  %v4997 = vld [vmem:[%s4995 + $0x8] sm:$0xff]
  %v4998 = vld [vmem:[%s4995 + $0x10] sm:$0x3f]
  %v4999 = vld [vmem:[%s4995 + $0x18] sm:$0x3f]
  %5004 = vrot.lane.b32.xlu0 %v4986, 16
  %v5005 = vpop.permute.xlu0 %5004
  %5006 = vrot.lane.b32.xlu0 %v4987, 16
  %v5007 = vpop.permute.xlu0 %5006
  %5008 = vrot.lane.b32.xlu0 %v4988, 16
  %v5009 = vpop.permute.xlu0 %5008
  %5010 = vrot.lane.b32.xlu0 %v4989, 16
  %v5011 = vpop.permute.xlu0 %5010
  %v5012 = vsel %vm73, %v5005, %v5007
  %v5013 = vsel %vm73, %v5009, %v5011
  %v5018 = vsel %vm73, 0.0, %v5005
  %v5019 = vsel %vm73, 0.0, %v5009
  %5024 = vrot.lane.b32.xlu0 %v4996, 16
  %v5025 = vpop.permute.xlu0 %5024
  %5026 = vrot.lane.b32.xlu0 %v4997, 16
  %v5027 = vpop.permute.xlu0 %5026
  %5028 = vrot.lane.b32.xlu0 %v4998, 16
  %v5029 = vpop.permute.xlu0 %5028
  %5030 = vrot.lane.b32.xlu0 %v4999, 16
  %v5031 = vpop.permute.xlu0 %5030
  %v5032 = vsel %vm73, %v5025, %v5027
  %v5033 = vsel %vm73, %v5029, %v5031
  %v5038 = vsel %vm73, 0.0, %v5025
  %v5039 = vsel %vm73, 0.0, %v5029
  %v5044 = vrot.slane %v4991, 7
  %v5045 = vrot.slane %v4992, 7
  %v5046 = vrot.slane %v4993, 7
  %v5047 = vsel %vm106, %v5044, %v5046
  %v5048 = vrot.slane %v4994, 7
  %v5049 = vsel %vm106, %v5045, %v5048
  %v5054 = vsel %vm106, 0.0, %v5044
  %v5055 = vsel %vm106, 0.0, %v5045
  %v5056 = vrot.slane %v4996, 7
  %v5057 = vrot.slane %v4997, 7
  %v5058 = vrot.slane %v4998, 7
  %v5059 = vsel %vm106, %v5056, %v5058
  %v5060 = vrot.slane %v4999, 7
  %v5061 = vsel %vm106, %v5057, %v5060
  %v5066 = vsel %vm106, 0.0, %v5056
  %v5067 = vsel %vm106, 0.0, %v5057
  %v5070 = vrot.slane %v5038, 7
  %v5071 = vrot.slane %v5032, 7
  %v5072 = vrot.slane %v5039, 7
  %v5073 = vsel %vm106, %v5070, %v5072
  %v5074 = vrot.slane %v5033, 7
  %v5075 = vsel %vm106, %v5071, %v5074
  %v5080 = vsel %vm106, 0.0, %v5070
  %v5081 = vsel %vm106, 0.0, %v5071
  %v5082 = vmul.f32 %v5080, %v159
  %v5083 = vmul.f32 %v5081, %v163
  %v5084 = vmul.f32 %v5073, %v159
  %v5085 = vmul.f32 %v5075, %v163
  %v5086 = vmul.f32 %v5054, %v181
  %v5087 = vmul.f32 %v5055, %v185
  %v5088 = vmul.f32 %v5047, %v181
  %v5089 = vmul.f32 %v5049, %v185
  %v5090 = vadd.f32 %v5082, %v5086
  %v5091 = vadd.f32 %v5083, %v5087
  %v5092 = vadd.f32 %v5084, %v5088
  %v5093 = vadd.f32 %v5085, %v5089
  %v5094 = vmul.f32 %v5066, %v207
  %v5095 = vmul.f32 %v5067, %v211
  %v5096 = vmul.f32 %v5059, %v207
  %v5097 = vmul.f32 %v5061, %v211
  %v5098 = vadd.f32 %v5090, %v5094
  %v5099 = vadd.f32 %v5091, %v5095
  %v5100 = vadd.f32 %v5092, %v5096
  %v5101 = vadd.f32 %v5093, %v5097
  %v5102 = vmul.f32 %v5018, %v234
  %v5103 = vmul.f32 %v5012, %v238
  %v5104 = vmul.f32 %v5019, %v234
  %v5105 = vmul.f32 %v5013, %v238
  %v5106 = vadd.f32 %v5098, %v5102
  %v5107 = vadd.f32 %v5099, %v5103
  %v5108 = vadd.f32 %v5100, %v5104
  %v5109 = vadd.f32 %v5101, %v5105
  %v5110 = vmul.f32 %v4981, %v260
  %v5111 = vmul.f32 %v4982, %v264
  %v5112 = vmul.f32 %v4983, %v260
  %v5113 = vmul.f32 %v4984, %v264
  %v5114 = vadd.f32 %v5106, %v5110
  %v5115 = vadd.f32 %v5107, %v5111
  %v5116 = vadd.f32 %v5108, %v5112
  %v5117 = vadd.f32 %v5109, %v5113
  %v5118 = vmul.f32 %v4986, %v286
  %v5119 = vmul.f32 %v4987, %v290
  %v5120 = vmul.f32 %v4988, %v286
  %v5121 = vmul.f32 %v4989, %v290
  %v5122 = vadd.f32 %v5114, %v5118
  %v5123 = vadd.f32 %v5115, %v5119
  %v5124 = vadd.f32 %v5116, %v5120
  %v5125 = vadd.f32 %v5117, %v5121
  %v5126 = vmul.f32 %v5038, %v313
  %v5127 = vmul.f32 %v5032, %v317
  %v5128 = vmul.f32 %v5039, %v313
  %v5129 = vmul.f32 %v5033, %v317
  %v5130 = vadd.f32 %v5122, %v5126
  %v5131 = vadd.f32 %v5123, %v5127
  %v5132 = vadd.f32 %v5124, %v5128
  %v5133 = vadd.f32 %v5125, %v5129
  %v5134 = vmul.f32 %v4991, %v339
  %v5135 = vmul.f32 %v4992, %v343
  %v5136 = vmul.f32 %v4993, %v339
  %v5137 = vmul.f32 %v4994, %v343
  %v5138 = vadd.f32 %v5130, %v5134
  %v5139 = vadd.f32 %v5131, %v5135
  %v5140 = vadd.f32 %v5132, %v5136
  %v5141 = vadd.f32 %v5133, %v5137
  %v5142 = vmul.f32 %v4996, %v365
  %v5143 = vmul.f32 %v4997, %v369
  %v5144 = vmul.f32 %v4998, %v365
  %v5145 = vmul.f32 %v4999, %v369
  %v5146 = vadd.f32 %v5138, %v5142
  %v5147 = vadd.f32 %v5139, %v5143
  %v5148 = vadd.f32 %v5140, %v5144
  %v5149 = vadd.f32 %v5141, %v5145
  %v5150 = vmul.f32 %v5146, %v392
  %v5151 = vmul.f32 %v5147, %v396
  %v5152 = vmul.f32 %v5148, %v392
  %v5153 = vmul.f32 %v5149, %v396
  %v5154 = vadd.f32 %v5150, %v415
  %v5155 = vadd.f32 %v5151, %v419
  %v5156 = vadd.f32 %v5152, %v415
  %v5157 = vadd.f32 %v5153, %v419
  %v5158 = vmax.f32 %v5154, 0.0
  %v5159 = vmax.f32 %v5155, 0.0
  %v5160 = vmax.f32 %v5156, 0.0
  %v5161 = vmax.f32 %v5157, 0.0
  %5166 = vrot.lane.b32.xlu0 %v5158, 16
  %v5167 = vpop.permute.xlu0 %5166
  %5168 = vrot.lane.b32.xlu0 %v5159, 16
  %v5169 = vpop.permute.xlu0 %5168
  %5170 = vrot.lane.b32.xlu0 %v5160, 16
  %v5171 = vpop.permute.xlu0 %5170
  %5172 = vrot.lane.b32.xlu0 %v5161, 16
  %v5173 = vpop.permute.xlu0 %5172
  %v5174 = vsel %vm73, %v5167, %v5169
  %v5175 = vsel %vm73, %v5171, %v5173
  %v5180 = vsel %vm73, 0.0, %v5167
  %v5181 = vsel %vm73, 0.0, %v5171
  %5182 = vrot.lane.b32.xlu0 %v5158, 112
  %v5183 = vpop.permute.xlu0 %5182
  %5184 = vrot.lane.b32.xlu0 %v5159, 112
  %v5185 = vpop.permute.xlu0 %5184
  %5186 = vrot.lane.b32.xlu0 %v5160, 112
  %v5187 = vpop.permute.xlu0 %5186
  %5188 = vrot.lane.b32.xlu0 %v5161, 112
  %v5189 = vpop.permute.xlu0 %5188
  %v5190 = vsel %vm456, %v5183, %v5185
  %v5191 = vsel %vm456, %v5187, %v5189
  %v5196 = vsel %vm463, %v5185, 0.0
  %v5197 = vsel %vm463, %v5189, 0.0
  %v5198 = vmul.f32 %v5180, %v480
  %v5199 = vmul.f32 %v5174, %v484
  %v5200 = vmul.f32 %v5181, %v480
  %v5201 = vmul.f32 %v5175, %v484
  %v5202 = vmul.f32 %v5158, %v502
  %v5203 = vmul.f32 %v5159, %v506
  %v5204 = vmul.f32 %v5160, %v502
  %v5205 = vmul.f32 %v5161, %v506
  %v5206 = vadd.f32 %v5198, %v5202
  %v5207 = vadd.f32 %v5199, %v5203
  %v5208 = vadd.f32 %v5200, %v5204
  %v5209 = vadd.f32 %v5201, %v5205
  %v5210 = vmul.f32 %v5190, %v528
  %v5211 = vmul.f32 %v5196, %v532
  %v5212 = vmul.f32 %v5191, %v528
  %v5213 = vmul.f32 %v5197, %v532
  %v5214 = vadd.f32 %v5206, %v5210
  %v5215 = vadd.f32 %v5207, %v5211
  %v5216 = vadd.f32 %v5208, %v5212
  %v5217 = vadd.f32 %v5209, %v5213
  %v5218 = vmul.f32 %v5180, %v555
  %v5219 = vmul.f32 %v5174, %v559
  %v5220 = vmul.f32 %v5181, %v555
  %v5221 = vmul.f32 %v5175, %v559
  %v5222 = vmul.f32 %v5158, %v577
  %v5223 = vmul.f32 %v5159, %v581
  %v5224 = vmul.f32 %v5160, %v577
  %v5225 = vmul.f32 %v5161, %v581
  %v5226 = vadd.f32 %v5218, %v5222
  %v5227 = vadd.f32 %v5219, %v5223
  %v5228 = vadd.f32 %v5220, %v5224
  %v5229 = vadd.f32 %v5221, %v5225
  %v5230 = vmul.f32 %v5190, %v603
  %v5231 = vmul.f32 %v5196, %v607
  %v5232 = vmul.f32 %v5191, %v603
  %v5233 = vmul.f32 %v5197, %v607
  %v5234 = vadd.f32 %v5226, %v5230
  %v5235 = vadd.f32 %v5227, %v5231
  %v5236 = vadd.f32 %v5228, %v5232
  %v5237 = vadd.f32 %v5229, %v5233
  %v5238 = vmul.f32 %v5180, %v630
  %v5239 = vmul.f32 %v5174, %v634
  %v5240 = vmul.f32 %v5181, %v630
  %v5241 = vmul.f32 %v5175, %v634
  %v5242 = vmul.f32 %v5158, %v652
  %v5243 = vmul.f32 %v5159, %v656
  %v5244 = vmul.f32 %v5160, %v652
  %v5245 = vmul.f32 %v5161, %v656
  %v5246 = vadd.f32 %v5238, %v5242
  %v5247 = vadd.f32 %v5239, %v5243
  %v5248 = vadd.f32 %v5240, %v5244
  %v5249 = vadd.f32 %v5241, %v5245
  %v5250 = vmul.f32 %v5190, %v678
  %v5251 = vmul.f32 %v5196, %v682
  %v5252 = vmul.f32 %v5191, %v678
  %v5253 = vmul.f32 %v5197, %v682
  %v5254 = vadd.f32 %v5246, %v5250
  %v5255 = vadd.f32 %v5247, %v5251
  %v5256 = vadd.f32 %v5248, %v5252
  %v5257 = vadd.f32 %v5249, %v5253
  %v5262 = vrot.slane %v5214, 7
  %v5263 = vrot.slane %v5215, 7
  %v5264 = vrot.slane %v5216, 7
  %v5265 = vsel %vm106, %v5262, %v5264
  %v5266 = vrot.slane %v5217, 7
  %v5267 = vsel %vm106, %v5263, %v5266
  %v5272 = vsel %vm106, 0.0, %v5262
  %v5273 = vsel %vm106, 0.0, %v5263
  %v5274 = vadd.f32 %v5234, %v5272
  %v5275 = vadd.f32 %v5235, %v5273
  %v5276 = vadd.f32 %v5236, %v5265
  %v5277 = vadd.f32 %v5237, %v5267
  %v5282 = vrot.slane %v5254, 1
  %v5283 = vrot.slane %v5256, 1
  %v5284 = vsel %vm715, %v5282, %v5283
  %v5285 = vrot.slane %v5255, 1
  %v5286 = vrot.slane %v5257, 1
  %v5287 = vsel %vm715, %v5285, %v5286
  %v5292 = vsel %vm726, %v5283, 0.0
  %v5293 = vsel %vm726, %v5286, 0.0
  %v5294 = vadd.f32 %v5274, %v5284
  %v5295 = vadd.f32 %v5275, %v5287
  %v5296 = vadd.f32 %v5276, %v5292
  %v5297 = vadd.f32 %v5277, %v5293
  %v5298 = vmul.f32 %v5294, %v747
  %v5299 = vmul.f32 %v5295, %v751
  %v5300 = vmul.f32 %v5296, %v747
  %v5301 = vmul.f32 %v5297, %v751
  %v5302 = vadd.f32 %v5298, %v770
  %v5303 = vadd.f32 %v5299, %v774
  %v5304 = vadd.f32 %v5300, %v770
  %v5305 = vadd.f32 %v5301, %v774
  %v5306 = vmax.f32 %v5302, 0.0
  %v5307 = vmax.f32 %v5303, 0.0
  %v5308 = vmax.f32 %v5304, 0.0
  %v5309 = vmax.f32 %v5305, 0.0
  %v5310 = vmul.f32 %v5080, %v797
  %v5311 = vmul.f32 %v5081, %v801
  %v5312 = vmul.f32 %v5073, %v797
  %v5313 = vmul.f32 %v5075, %v801
  %v5314 = vmul.f32 %v5054, %v819
  %v5315 = vmul.f32 %v5055, %v823
  %v5316 = vmul.f32 %v5047, %v819
  %v5317 = vmul.f32 %v5049, %v823
  %v5318 = vadd.f32 %v5310, %v5314
  %v5319 = vadd.f32 %v5311, %v5315
  %v5320 = vadd.f32 %v5312, %v5316
  %v5321 = vadd.f32 %v5313, %v5317
  %v5322 = vmul.f32 %v5066, %v845
  %v5323 = vmul.f32 %v5067, %v849
  %v5324 = vmul.f32 %v5059, %v845
  %v5325 = vmul.f32 %v5061, %v849
  %v5326 = vadd.f32 %v5318, %v5322
  %v5327 = vadd.f32 %v5319, %v5323
  %v5328 = vadd.f32 %v5320, %v5324
  %v5329 = vadd.f32 %v5321, %v5325
  %v5330 = vmul.f32 %v5018, %v872
  %v5331 = vmul.f32 %v5012, %v876
  %v5332 = vmul.f32 %v5019, %v872
  %v5333 = vmul.f32 %v5013, %v876
  %v5334 = vadd.f32 %v5326, %v5330
  %v5335 = vadd.f32 %v5327, %v5331
  %v5336 = vadd.f32 %v5328, %v5332
  %v5337 = vadd.f32 %v5329, %v5333
  %v5338 = vmul.f32 %v4981, %v898
  %v5339 = vmul.f32 %v4982, %v902
  %v5340 = vmul.f32 %v4983, %v898
  %v5341 = vmul.f32 %v4984, %v902
  %v5342 = vadd.f32 %v5334, %v5338
  %v5343 = vadd.f32 %v5335, %v5339
  %v5344 = vadd.f32 %v5336, %v5340
  %v5345 = vadd.f32 %v5337, %v5341
  %v5346 = vmul.f32 %v4986, %v924
  %v5347 = vmul.f32 %v4987, %v928
  %v5348 = vmul.f32 %v4988, %v924
  %v5349 = vmul.f32 %v4989, %v928
  %v5350 = vadd.f32 %v5342, %v5346
  %v5351 = vadd.f32 %v5343, %v5347
  %v5352 = vadd.f32 %v5344, %v5348
  %v5353 = vadd.f32 %v5345, %v5349
  %v5354 = vmul.f32 %v5038, %v951
  %v5355 = vmul.f32 %v5032, %v955
  %v5356 = vmul.f32 %v5039, %v951
  %v5357 = vmul.f32 %v5033, %v955
  %v5358 = vadd.f32 %v5350, %v5354
  %v5359 = vadd.f32 %v5351, %v5355
  %v5360 = vadd.f32 %v5352, %v5356
  %v5361 = vadd.f32 %v5353, %v5357
  %v5362 = vmul.f32 %v4991, %v977
  %v5363 = vmul.f32 %v4992, %v981
  %v5364 = vmul.f32 %v4993, %v977
  %v5365 = vmul.f32 %v4994, %v981
  %v5366 = vadd.f32 %v5358, %v5362
  %v5367 = vadd.f32 %v5359, %v5363
  %v5368 = vadd.f32 %v5360, %v5364
  %v5369 = vadd.f32 %v5361, %v5365
  %v5370 = vmul.f32 %v4996, %v1003
  %v5371 = vmul.f32 %v4997, %v1007
  %v5372 = vmul.f32 %v4998, %v1003
  %v5373 = vmul.f32 %v4999, %v1007
  %v5374 = vadd.f32 %v5366, %v5370
  %v5375 = vadd.f32 %v5367, %v5371
  %v5376 = vadd.f32 %v5368, %v5372
  %v5377 = vadd.f32 %v5369, %v5373
  %v5378 = vmul.f32 %v5374, %v1029
  %v5379 = vmul.f32 %v5375, %v1033
  %v5380 = vmul.f32 %v5376, %v1029
  %v5381 = vmul.f32 %v5377, %v1033
  %v5382 = vadd.f32 %v5378, %v1051
  %v5383 = vadd.f32 %v5379, %v1055
  %v5384 = vadd.f32 %v5380, %v1051
  %v5385 = vadd.f32 %v5381, %v1055
  %v5386 = vmax.f32 %v5382, 0.0
  %v5387 = vmax.f32 %v5383, 0.0
  %v5388 = vmax.f32 %v5384, 0.0
  %v5389 = vmax.f32 %v5385, 0.0
  %5394 = vrot.lane.b32.xlu0 %v5386, 16
  %v5395 = vpop.permute.xlu0 %5394
  %5396 = vrot.lane.b32.xlu0 %v5387, 16
  %v5397 = vpop.permute.xlu0 %5396
  %5398 = vrot.lane.b32.xlu0 %v5388, 16
  %v5399 = vpop.permute.xlu0 %5398
  %5400 = vrot.lane.b32.xlu0 %v5389, 16
  %v5401 = vpop.permute.xlu0 %5400
  %v5402 = vsel %vm73, %v5395, %v5397
  %v5403 = vsel %vm73, %v5399, %v5401
  %v5408 = vsel %vm73, 0.0, %v5395
  %v5409 = vsel %vm73, 0.0, %v5399
  %5410 = vrot.lane.b32.xlu0 %v5386, 112
  %v5411 = vpop.permute.xlu0 %5410
  %5412 = vrot.lane.b32.xlu0 %v5387, 112
  %v5413 = vpop.permute.xlu0 %5412
  %5414 = vrot.lane.b32.xlu0 %v5388, 112
  %v5415 = vpop.permute.xlu0 %5414
  %5416 = vrot.lane.b32.xlu0 %v5389, 112
  %v5417 = vpop.permute.xlu0 %5416
  %v5418 = vsel %vm456, %v5411, %v5413
  %v5419 = vsel %vm456, %v5415, %v5417
  %v5424 = vsel %vm463, %v5413, 0.0
  %v5425 = vsel %vm463, %v5417, 0.0
  %v5426 = vmul.f32 %v5408, %v1114
  %v5427 = vmul.f32 %v5402, %v1118
  %v5428 = vmul.f32 %v5409, %v1114
  %v5429 = vmul.f32 %v5403, %v1118
  %v5430 = vmul.f32 %v5386, %v1136
  %v5431 = vmul.f32 %v5387, %v1140
  %v5432 = vmul.f32 %v5388, %v1136
  %v5433 = vmul.f32 %v5389, %v1140
  %v5434 = vadd.f32 %v5426, %v5430
  %v5435 = vadd.f32 %v5427, %v5431
  %v5436 = vadd.f32 %v5428, %v5432
  %v5437 = vadd.f32 %v5429, %v5433
  %v5438 = vmul.f32 %v5418, %v1162
  %v5439 = vmul.f32 %v5424, %v1166
  %v5440 = vmul.f32 %v5419, %v1162
  %v5441 = vmul.f32 %v5425, %v1166
  %v5442 = vadd.f32 %v5434, %v5438
  %v5443 = vadd.f32 %v5435, %v5439
  %v5444 = vadd.f32 %v5436, %v5440
  %v5445 = vadd.f32 %v5437, %v5441
  %v5446 = vmul.f32 %v5408, %v1189
  %v5447 = vmul.f32 %v5402, %v1193
  %v5448 = vmul.f32 %v5409, %v1189
  %v5449 = vmul.f32 %v5403, %v1193
  %v5450 = vmul.f32 %v5386, %v1211
  %v5451 = vmul.f32 %v5387, %v1215
  %v5452 = vmul.f32 %v5388, %v1211
  %v5453 = vmul.f32 %v5389, %v1215
  %v5454 = vadd.f32 %v5446, %v5450
  %v5455 = vadd.f32 %v5447, %v5451
  %v5456 = vadd.f32 %v5448, %v5452
  %v5457 = vadd.f32 %v5449, %v5453
  %v5458 = vmul.f32 %v5418, %v1237
  %v5459 = vmul.f32 %v5424, %v1241
  %v5460 = vmul.f32 %v5419, %v1237
  %v5461 = vmul.f32 %v5425, %v1241
  %v5462 = vadd.f32 %v5454, %v5458
  %v5463 = vadd.f32 %v5455, %v5459
  %v5464 = vadd.f32 %v5456, %v5460
  %v5465 = vadd.f32 %v5457, %v5461
  %v5466 = vmul.f32 %v5408, %v1264
  %v5467 = vmul.f32 %v5402, %v1268
  %v5468 = vmul.f32 %v5409, %v1264
  %v5469 = vmul.f32 %v5403, %v1268
  %v5470 = vmul.f32 %v5386, %v1286
  %v5471 = vmul.f32 %v5387, %v1290
  %v5472 = vmul.f32 %v5388, %v1286
  %v5473 = vmul.f32 %v5389, %v1290
  %v5474 = vadd.f32 %v5466, %v5470
  %v5475 = vadd.f32 %v5467, %v5471
  %v5476 = vadd.f32 %v5468, %v5472
  %v5477 = vadd.f32 %v5469, %v5473
  %v5478 = vmul.f32 %v5418, %v1312
  %v5479 = vmul.f32 %v5424, %v1316
  %v5480 = vmul.f32 %v5419, %v1312
  %v5481 = vmul.f32 %v5425, %v1316
  %v5482 = vadd.f32 %v5474, %v5478
  %v5483 = vadd.f32 %v5475, %v5479
  %v5484 = vadd.f32 %v5476, %v5480
  %v5485 = vadd.f32 %v5477, %v5481
  %v5490 = vrot.slane %v5442, 7
  %v5491 = vrot.slane %v5443, 7
  %v5492 = vrot.slane %v5444, 7
  %v5493 = vsel %vm106, %v5490, %v5492
  %v5494 = vrot.slane %v5445, 7
  %v5495 = vsel %vm106, %v5491, %v5494
  %v5500 = vsel %vm106, 0.0, %v5490
  %v5501 = vsel %vm106, 0.0, %v5491
  %v5502 = vadd.f32 %v5462, %v5500
  %v5503 = vadd.f32 %v5463, %v5501
  %v5504 = vadd.f32 %v5464, %v5493
  %v5505 = vadd.f32 %v5465, %v5495
  %v5510 = vrot.slane %v5482, 1
  %v5511 = vrot.slane %v5484, 1
  %v5512 = vsel %vm715, %v5510, %v5511
  %v5513 = vrot.slane %v5483, 1
  %v5514 = vrot.slane %v5485, 1
  %v5515 = vsel %vm715, %v5513, %v5514
  %v5520 = vsel %vm726, %v5511, 0.0
  %v5521 = vsel %vm726, %v5514, 0.0
  %v5522 = vadd.f32 %v5502, %v5512
  %v5523 = vadd.f32 %v5503, %v5515
  %v5524 = vadd.f32 %v5504, %v5520
  %v5525 = vadd.f32 %v5505, %v5521
  %v5526 = vmul.f32 %v5522, %v1378
  %v5527 = vmul.f32 %v5523, %v1382
  %v5528 = vmul.f32 %v5524, %v1378
  %v5529 = vmul.f32 %v5525, %v1382
  %v5530 = vadd.f32 %v5526, %v1400
  %v5531 = vadd.f32 %v5527, %v1404
  %v5532 = vadd.f32 %v5528, %v1400
  %v5533 = vadd.f32 %v5529, %v1404
  %v5534 = vmax.f32 %v5530, 0.0
  %v5535 = vmax.f32 %v5531, 0.0
  %v5536 = vmax.f32 %v5532, 0.0
  %v5537 = vmax.f32 %v5533, 0.0
  %5542 = vrot.lane.b32.xlu0 %v5534, 96
  %v5543 = vpop.permute.xlu0 %5542
  %5544 = vrot.lane.b32.xlu0 %v5535, 96
  %v5545 = vpop.permute.xlu0 %5544
  %5546 = vrot.lane.b32.xlu0 %v5536, 96
  %v5547 = vpop.permute.xlu0 %5546
  %5548 = vrot.lane.b32.xlu0 %v5537, 96
  %v5549 = vpop.permute.xlu0 %5548
  %v5550 = vsel %vm1425, %v5543, %v5545
  %v5551 = vsel %vm1425, %v5547, %v5549
  %v5558 = vsel %vm1425, %v5307, %v5543
  %v5559 = vsel %vm1425, %v5309, %v5547
  %s5560 = scalar_lea.vmem %s7, 448
  %5561 = vst [vmem:[%s5560] sm:$0xff] %v5306
  %5562 = vst [vmem:[%s5560 + $0x8] sm:$0xff] %v5558
  %5563 = vst [vmem:[%s5560 + $0x10] sm:$0xff] %v5550
  %5564 = vst.msk [vmem:[%s5560 + $0x18] sm:$0xff] %vm1439, %v5545
  %5565 = vst [vmem:[%s5560 + $0x20] sm:$0x3f] %v5308
  %5566 = vst [vmem:[%s5560 + $0x28] sm:$0x3f] %v5559
  %5567 = vst [vmem:[%s5560 + $0x30] sm:$0x3f] %v5551
  %5568 = vst.msk [vmem:[%s5560 + $0x38] sm:$0x3f] %vm1444, %v5549
  // Predicated region
  $region30: #{local_feature_extractor.1} parent=0 // pred_check
    _
  $region31: #{local_feature_extractor.1} parent=0 // pred_check_branch
    %5570 = sbr.rel (0) target = $region33
  $region32: #{local_feature_extractor.1} parent=0 // pred_region
    _
  $region33: #{local_feature_extractor.1} parent=0 // pred_fallthru
    _
  // Predicated region
  $region34: #{local_feature_extractor.1} parent=0 // pred_check
    _
  $region35: #{local_feature_extractor.1} parent=0 // pred_check_branch
    %5572 = sbr.rel (0) target = $region37
  $region36: #{local_feature_extractor.1} parent=0 // pred_region
    _
  $region37: #{local_feature_extractor.1} parent=0 // pred_fallthru
    _

</llo_original>
